<compile_context>
chip_gen: v7x
topology: tpu7x:2x2x1
jax: 0.10.0
libtpu: 0.0.40
codegen_flags: <defaults>
</compile_context>

<pallas_src>
import functools

import numpy as np
import jax
import jax.numpy as jnp
from jax.experimental import pallas as pl
from jax.experimental.pallas import tpu as pltpu

# ----------------------------- configuration --------------------------------
DIM = 32                      # channels C
NUM_HEADS = 4
HEAD_DIM = DIM // NUM_HEADS   # 8
WINDOW = 8
N_WIN = WINDOW * WINDOW       # tokens per window N = 64
B = 2                         # image batch
H = W = 16                    # patch resolution (for building a shift mask)
SHIFT = WINDOW // 2
NW = (H // WINDOW) * (W // WINDOW)   # windows per image = 4
B_WIN = B * NW                       # num_windows * B = 8


# ------------------------------ Pallas kernel --------------------------------
def wmsa_kernel(x_ref, wq_ref, wk_ref, wv_ref, bq_ref, bk_ref, bv_ref,
                bias_ref, mask_ref, wproj_ref, bproj_ref, o_ref, *, use_mask):
    """One grid step = all windows of one image, all heads batched.

    x_ref    : (1, nw, N, C)       input windows of this image
    wq/wk/wv : (nh, C, hd)  bf16   head-batched weights (qk-scale folded into q)
    bq/bk/bv : (nh, 1, hd)  f32    head-batched biases  (scale folded into bq)
    bias_ref : (nh, N, N)   bf16   relative-position bias
    mask_ref : (nW, N, N)   bf16   shift mask (never read if use_mask=False)
    wproj_ref: (nh, hd, C)  bf16   output projection split into per-head row blocks
    bproj_ref: (1, C)       f32
    o_ref    : (1, nw*N, C) f32
    """
    _, nw, n, c = x_ref.shape
    nh, _, hd = wq_ref.shape
    m = nw * n

    x2d = x_ref[...].reshape(m, c).astype(jnp.bfloat16)

    def head_proj(w_ref, b_ref):
        # Per-head projections with the head index on a leading (cheap) axis —
        # no 8-lane-wide lane extracts anywhere.
        cols = [jnp.dot(x2d, w_ref[h], preferred_element_type=jnp.float32) + b_ref[h]
                for h in range(nh)]
        return jnp.stack(cols).astype(jnp.bfloat16).reshape(nh * nw, n, hd)

    q = head_proj(wq_ref, bq_ref)            # qk-scale already folded in
    k = head_proj(wk_ref, bk_ref)
    v = head_proj(wv_ref, bv_ref)

    # scores for every (head, window) pair at once: (nh*nw, N, N), f32
    s = jnp.einsum('bnd,bmd->bnm', q, k, preferred_element_type=jnp.float32)
    s = s.reshape(nh, nw, n, n) + bias_ref[...][:, None, :, :].astype(jnp.float32)
    if use_mask:
        s = s + mask_ref[...][None, :, :, :].astype(jnp.float32)
    s = s.reshape(nh * nw, n, n)

    # softmax with normalization deferred past the PV matmul
    s = s - jnp.max(s, axis=-1, keepdims=True)
    p = jnp.exp(s)
    denom = jnp.sum(p, axis=-1, keepdims=True)                 # (nh*nw, N, 1)

    ctx = jnp.einsum('bnm,bmd->bnd', p.astype(jnp.bfloat16), v,
                     preferred_element_type=jnp.float32)        # (nh*nw, N, hd)
    ctx = ctx * pl.reciprocal(denom, approx=True)               # EUP reciprocal
    ctx = ctx.reshape(nh, m, hd)

    # output projection: concat(heads) @ wproj == sum_h ctx_h @ wproj[h]
    out = jnp.zeros((m, c), jnp.float32)
    for h in range(nh):
        out = out + jnp.dot(ctx[h].astype(jnp.bfloat16), wproj_ref[h],
                            preferred_element_type=jnp.float32)
    o_ref[...] = (out + bproj_ref[...]).reshape(1, m, c)


def window_attention(x, params, mask=None):
    """Pallas W-MSA forward.  x: (num_windows*B, N, C); mask: (nW, N, N) or None."""
    b_, n, c = x.shape
    if mask is not None:
        nw = mask.shape[0]
        assert b_ % nw == 0
        gb = b_ // nw                               # images (grid steps)
        mask_in = mask.astype(jnp.bfloat16)
    else:
        gb = 2 if b_ % 2 == 0 else 1
        nw = b_ // gb
        mask_in = jnp.zeros((1, n, n), jnp.bfloat16)   # placeholder, never read
    m = nw * n
    x4 = x.reshape(gb, nw, n, c)                    # contiguous, free

    kernel = functools.partial(wmsa_kernel, use_mask=mask is not None)
    const3 = lambda i: (0, 0, 0)
    out = pl.pallas_call(
        kernel,
        grid=(gb,),
        in_specs=[
            pl.BlockSpec((1, nw, n, c), lambda i: (i, 0, 0, 0)),
            pl.BlockSpec(params['wq'].shape, const3),
            pl.BlockSpec(params['wk'].shape, const3),
            pl.BlockSpec(params['wv'].shape, const3),
            pl.BlockSpec(params['bq'].shape, const3),
            pl.BlockSpec(params['bk'].shape, const3),
            pl.BlockSpec(params['bv'].shape, const3),
            pl.BlockSpec(params['rel_bias'].shape, const3),
            pl.BlockSpec(mask_in.shape, const3),
            pl.BlockSpec(params['wproj'].shape, const3),
            pl.BlockSpec(params['bproj'].shape, lambda i: (0, 0)),
        ],
        out_specs=pl.BlockSpec((1, m, c), lambda i: (i, 0, 0)),
        out_shape=jax.ShapeDtypeStruct((gb, m, c), jnp.float32),
        compiler_params=pltpu.CompilerParams(dimension_semantics=("parallel",)),
    )(x4, params['wq'], params['wk'], params['wv'],
      params['bq'], params['bk'], params['bv'],
      params['rel_bias'], mask_in, params['wproj'], params['bproj'])
    return out.reshape(b_, n, c)                    # contiguous, free


# --------------------------- init / reference --------------------------------
def relative_position_index_np(ws):
    coords = np.stack(np.meshgrid(np.arange(ws), np.arange(ws), indexing='ij'))
    cf = coords.reshape(2, -1)
    rel = (cf[:, :, None] - cf[:, None, :]).transpose(1, 2, 0).astype(np.int64)
    rel[:, :, 0] += ws - 1
    rel[:, :, 1] += ws - 1
    rel[:, :, 0] *= 2 * ws - 1
    return rel.sum(-1)                                            # (N, N)


def calculate_mask_np(h, w, ws, shift):
    img_mask = np.zeros((1, h, w, 1), np.float32)
    cnt = 0
    for hs in (slice(0, -ws), slice(-ws, -shift), slice(-shift, None)):
        for wsl in (slice(0, -ws), slice(-ws, -shift), slice(-shift, None)):
            img_mask[:, hs, wsl, :] = cnt
            cnt += 1
    mw = img_mask.reshape(1, h // ws, ws, w // ws, ws, 1)
    mw = mw.transpose(0, 1, 3, 2, 4, 5).reshape(-1, ws * ws)
    attn_mask = mw[:, None, :] - mw[:, :, None]
    return np.where(attn_mask != 0, -100.0, 0.0).astype(np.float32)   # (nW, N, N)


def init_params(key):
    ks = jax.random.split(key, 5)
    scale = HEAD_DIM ** (-0.5)
    table = 0.02 * jax.random.normal(
        ks[0], ((2 * WINDOW - 1) ** 2, NUM_HEADS), jnp.float32)
    rpi = relative_position_index_np(WINDOW).reshape(-1)
    rel_bias = table[rpi].reshape(N_WIN, N_WIN, NUM_HEADS).transpose(2, 0, 1)

    wqkv = 0.02 * jax.random.normal(ks[1], (DIM, 3 * DIM), jnp.float32)
    bqkv = 0.02 * jax.random.normal(ks[2], (1, 3 * DIM), jnp.float32)
    wproj = 0.02 * jax.random.normal(ks[3], (DIM, DIM), jnp.float32)
    bproj = 0.02 * jax.random.normal(ks[4], (1, DIM), jnp.float32)

    # -------- one-time layout + scale transforms for the kernel --------------
    def split_w(cols):                     # (C, C) -> (nh, C, hd)
        return cols.reshape(DIM, NUM_HEADS, HEAD_DIM).transpose(1, 0, 2)

    def split_b(cols):                     # (C,)   -> (nh, 1, hd)
        return cols.reshape(NUM_HEADS, 1, HEAD_DIM)

    wq = split_w(wqkv[:, :DIM]) * scale
    wk = split_w(wqkv[:, DIM:2 * DIM])
    wv = split_w(wqkv[:, 2 * DIM:])
    bq = split_b(bqkv[0, :DIM]) * scale
    bk = split_b(bqkv[0, DIM:2 * DIM])
    bv = split_b(bqkv[0, 2 * DIM:])

    params = dict(
        wq=wq.astype(jnp.bfloat16), wk=wk.astype(jnp.bfloat16),
        wv=wv.astype(jnp.bfloat16),
        bq=bq, bk=bk, bv=bv,                                       # f32 adds
        rel_bias=rel_bias.astype(jnp.bfloat16),                    # (nh, N, N)
        wproj=wproj.reshape(NUM_HEADS, HEAD_DIM, DIM).astype(jnp.bfloat16),
        bproj=bproj)
    raw = dict(wqkv=wqkv, bqkv=bqkv, rel_bias=rel_bias,
               wproj=wproj, bproj=bproj, scale=scale)
    return params, raw


def window_attention_ref(x, raw, mask=None):
    """Pure-JAX f32 reference mirroring the PyTorch forward."""
    b_, n, c = x.shape
    nh, hd = NUM_HEADS, HEAD_DIM
    qkv = x @ raw['wqkv'] + raw['bqkv']
    qkv = qkv.reshape(b_, n, 3, nh, hd).transpose(2, 0, 3, 1, 4)
    q, k, v = qkv[0] * raw['scale'], qkv[1], qkv[2]
    attn = q @ jnp.swapaxes(k, -2, -1)                    # (B_, nh, N, N)
    attn = attn + raw['rel_bias'][None]
    if mask is not None:
        nw = mask.shape[0]
        attn = attn.reshape(b_ // nw, nw, nh, n, n) + mask[None, :, None]
        attn = attn.reshape(b_, nh, n, n)
    attn = jax.nn.softmax(attn, axis=-1)
    out = jnp.swapaxes(attn @ v, 1, 2).reshape(b_, n, c)
    return out @ raw['wproj'] + raw['bproj']


# ---------------------------------- main --------------------------------------
if __name__ == "__main__":
    key = jax.random.PRNGKey(0)
    params, raw = init_params(jax.random.fold_in(key, 1))

    # x: (num_windows*B, N, C) as WindowAttention.forward expects
    x = jax.random.normal(jax.random.fold_in(key, 2),
                          (B_WIN, N_WIN, DIM), jnp.float32)
    mask = jnp.asarray(calculate_mask_np(H, W, WINDOW, SHIFT))     # (nW, N, N)

    # non-shifted (mask=None) and shifted (mask given) window attention
    out_plain = jax.block_until_ready(window_attention(x, params, None))
    out_shift = jax.block_until_ready(window_attention(x, params, mask))

    ref_plain = window_attention_ref(x, raw, None)
    ref_shift = window_attention_ref(x, raw, mask)

    for out, ref in ((out_plain, ref_plain), (out_shift, ref_shift)):
        assert out.shape == (B_WIN, N_WIN, DIM)
        assert bool(jnp.all(jnp.isfinite(out)))
        err = float(jnp.max(jnp.abs(out - ref)))
        tol = 0.08 * float(jnp.max(jnp.abs(ref))) + 1e-6   # bf16-MXU tolerance
        assert err < tol, f"max abs err {err} exceeds tol {tol}"

    print("KERNEL_OK")
</pallas_src>

<mosaic_0001>
module attributes {stable_mosaic.version = 11 : i64} {
  func.func @wmsa_kernel(%arg0: i32, %arg1: memref<1x4x64x32xf32, #tpu.memory_space<vmem>>, %arg2: memref<4x32x8xbf16, #tpu.memory_space<vmem>>, %arg3: memref<4x32x8xbf16, #tpu.memory_space<vmem>>, %arg4: memref<4x32x8xbf16, #tpu.memory_space<vmem>>, %arg5: memref<4x1x8xf32, #tpu.memory_space<vmem>>, %arg6: memref<4x1x8xf32, #tpu.memory_space<vmem>>, %arg7: memref<4x1x8xf32, #tpu.memory_space<vmem>>, %arg8: memref<4x64x64xbf16, #tpu.memory_space<vmem>>, %arg9: memref<1x64x64xbf16, #tpu.memory_space<vmem>>, %arg10: memref<4x8x32xbf16, #tpu.memory_space<vmem>>, %arg11: memref<1x32xf32, #tpu.memory_space<vmem>>, %arg12: memref<1x256x32xf32, #tpu.memory_space<vmem>>) attributes {dimension_semantics = [#tpu.dimension_semantics<parallel>], iteration_bounds = array<i64: 2>, scalar_prefetch = 0 : i64, scratch_operands = 0 : i64, tpu.core_type = #tpu.core_type<tc>, window_params = [{transform_indices = @transform_0, window_bounds = array<i64: 1, 4, 64, 32>}, {pipeline_mode = #tpu.pipeline_mode<synchronous>, transform_indices = @transform_1, window_bounds = array<i64: 4, 32, 8>}, {pipeline_mode = #tpu.pipeline_mode<synchronous>, transform_indices = @transform_2, window_bounds = array<i64: 4, 32, 8>}, {pipeline_mode = #tpu.pipeline_mode<synchronous>, transform_indices = @transform_3, window_bounds = array<i64: 4, 32, 8>}, {pipeline_mode = #tpu.pipeline_mode<synchronous>, transform_indices = @transform_4, window_bounds = array<i64: 4, 1, 8>}, {pipeline_mode = #tpu.pipeline_mode<synchronous>, transform_indices = @transform_5, window_bounds = array<i64: 4, 1, 8>}, {pipeline_mode = #tpu.pipeline_mode<synchronous>, transform_indices = @transform_6, window_bounds = array<i64: 4, 1, 8>}, {pipeline_mode = #tpu.pipeline_mode<synchronous>, transform_indices = @transform_7, window_bounds = array<i64: 4, 64, 64>}, {pipeline_mode = #tpu.pipeline_mode<synchronous>, transform_indices = @transform_8, window_bounds = array<i64: 1, 64, 64>}, {pipeline_mode = #tpu.pipeline_mode<synchronous>, transform_indices = @transform_9, window_bounds = array<i64: 4, 8, 32>}, {pipeline_mode = #tpu.pipeline_mode<synchronous>, transform_indices = @transform_10, window_bounds = array<i64: 1, 32>}, {transform_indices = @transform_11, window_bounds = array<i64: 1, 256, 32>}]} {
    %c0 = arith.constant 0 : index
    %c0_0 = arith.constant 0 : index
    %c0_1 = arith.constant 0 : index
    %c0_2 = arith.constant 0 : index
    %0 = vector.load %arg1[%c0, %c0_0, %c0_1, %c0_2] : memref<1x4x64x32xf32, #tpu.memory_space<vmem>>, vector<1x4x64x32xf32>
    %1 = vector.shape_cast %0 : vector<1x4x64x32xf32> to vector<256x32xf32>
    %2 = arith.truncf %1 : vector<256x32xf32> to vector<256x32xbf16>
    %c0_3 = arith.constant 0 : index
    %c0_4 = arith.constant 0 : index
    %c0_5 = arith.constant 0 : index
    %3 = vector.load %arg2[%c0_3, %c0_4, %c0_5] : memref<4x32x8xbf16, #tpu.memory_space<vmem>>, vector<1x32x8xbf16>
    %4 = vector.shape_cast %3 : vector<1x32x8xbf16> to vector<32x8xbf16>
    %cst = arith.constant dense<0.000000e+00> : vector<256x8xf32>
    %5 = tpu.matmul %2, %4, %cst {dimension_numbers = #tpu.dot_dimension_numbers<[1], [0], [0], [1], [0, 0, 1, 1], [], []>} : vector<256x32xbf16>, vector<32x8xbf16>, vector<256x8xf32> -> vector<256x8xf32>
    %c0_6 = arith.constant 0 : index
    %c0_7 = arith.constant 0 : index
    %c0_8 = arith.constant 0 : index
    %6 = vector.load %arg5[%c0_6, %c0_7, %c0_8] : memref<4x1x8xf32, #tpu.memory_space<vmem>>, vector<1x1x8xf32>
    %7 = vector.shape_cast %6 : vector<1x1x8xf32> to vector<1x8xf32>
    %8 = vector.broadcast %7 : vector<1x8xf32> to vector<256x8xf32>
    %9 = arith.addf %5, %8 : vector<256x8xf32>
    %c1 = arith.constant 1 : index
    %c0_9 = arith.constant 0 : index
    %c0_10 = arith.constant 0 : index
    %10 = vector.load %arg2[%c1, %c0_9, %c0_10] : memref<4x32x8xbf16, #tpu.memory_space<vmem>>, vector<1x32x8xbf16>
    %11 = vector.shape_cast %10 : vector<1x32x8xbf16> to vector<32x8xbf16>
    %cst_11 = arith.constant dense<0.000000e+00> : vector<256x8xf32>
    %12 = tpu.matmul %2, %11, %cst_11 {dimension_numbers = #tpu.dot_dimension_numbers<[1], [0], [0], [1], [0, 0, 1, 1], [], []>} : vector<256x32xbf16>, vector<32x8xbf16>, vector<256x8xf32> -> vector<256x8xf32>
    %c1_12 = arith.constant 1 : index
    %c0_13 = arith.constant 0 : index
    %c0_14 = arith.constant 0 : index
    %13 = vector.load %arg5[%c1_12, %c0_13, %c0_14] : memref<4x1x8xf32, #tpu.memory_space<vmem>>, vector<1x1x8xf32>
    %14 = vector.shape_cast %13 : vector<1x1x8xf32> to vector<1x8xf32>
    %15 = vector.broadcast %14 : vector<1x8xf32> to vector<256x8xf32>
    %16 = arith.addf %12, %15 : vector<256x8xf32>
    %c2 = arith.constant 2 : index
    %c0_15 = arith.constant 0 : index
    %c0_16 = arith.constant 0 : index
    %17 = vector.load %arg2[%c2, %c0_15, %c0_16] : memref<4x32x8xbf16, #tpu.memory_space<vmem>>, vector<1x32x8xbf16>
    %18 = vector.shape_cast %17 : vector<1x32x8xbf16> to vector<32x8xbf16>
    %cst_17 = arith.constant dense<0.000000e+00> : vector<256x8xf32>
    %19 = tpu.matmul %2, %18, %cst_17 {dimension_numbers = #tpu.dot_dimension_numbers<[1], [0], [0], [1], [0, 0, 1, 1], [], []>} : vector<256x32xbf16>, vector<32x8xbf16>, vector<256x8xf32> -> vector<256x8xf32>
    %c2_18 = arith.constant 2 : index
    %c0_19 = arith.constant 0 : index
    %c0_20 = arith.constant 0 : index
    %20 = vector.load %arg5[%c2_18, %c0_19, %c0_20] : memref<4x1x8xf32, #tpu.memory_space<vmem>>, vector<1x1x8xf32>
    %21 = vector.shape_cast %20 : vector<1x1x8xf32> to vector<1x8xf32>
    %22 = vector.broadcast %21 : vector<1x8xf32> to vector<256x8xf32>
    %23 = arith.addf %19, %22 : vector<256x8xf32>
    %c3 = arith.constant 3 : index
    %c0_21 = arith.constant 0 : index
    %c0_22 = arith.constant 0 : index
    %24 = vector.load %arg2[%c3, %c0_21, %c0_22] : memref<4x32x8xbf16, #tpu.memory_space<vmem>>, vector<1x32x8xbf16>
    %25 = vector.shape_cast %24 : vector<1x32x8xbf16> to vector<32x8xbf16>
    %cst_23 = arith.constant dense<0.000000e+00> : vector<256x8xf32>
    %26 = tpu.matmul %2, %25, %cst_23 {dimension_numbers = #tpu.dot_dimension_numbers<[1], [0], [0], [1], [0, 0, 1, 1], [], []>} : vector<256x32xbf16>, vector<32x8xbf16>, vector<256x8xf32> -> vector<256x8xf32>
    %c3_24 = arith.constant 3 : index
    %c0_25 = arith.constant 0 : index
    %c0_26 = arith.constant 0 : index
    %27 = vector.load %arg5[%c3_24, %c0_25, %c0_26] : memref<4x1x8xf32, #tpu.memory_space<vmem>>, vector<1x1x8xf32>
    %28 = vector.shape_cast %27 : vector<1x1x8xf32> to vector<1x8xf32>
    %29 = vector.broadcast %28 : vector<1x8xf32> to vector<256x8xf32>
    %30 = arith.addf %26, %29 : vector<256x8xf32>
    %31 = vector.shape_cast %9 : vector<256x8xf32> to vector<1x256x8xf32>
    %32 = vector.shape_cast %16 : vector<256x8xf32> to vector<1x256x8xf32>
    %33 = vector.shape_cast %23 : vector<256x8xf32> to vector<1x256x8xf32>
    %34 = vector.shape_cast %30 : vector<256x8xf32> to vector<1x256x8xf32>
    %35 = tpu.concatenate %31, %32, %33, %34 in 0 : vector<1x256x8xf32>, vector<1x256x8xf32>, vector<1x256x8xf32>, vector<1x256x8xf32> -> vector<4x256x8xf32>
    %36 = arith.truncf %35 : vector<4x256x8xf32> to vector<4x256x8xbf16>
    %37 = vector.shape_cast %36 : vector<4x256x8xbf16> to vector<16x64x8xbf16>
    %c0_27 = arith.constant 0 : index
    %c0_28 = arith.constant 0 : index
    %c0_29 = arith.constant 0 : index
    %38 = vector.load %arg3[%c0_27, %c0_28, %c0_29] : memref<4x32x8xbf16, #tpu.memory_space<vmem>>, vector<1x32x8xbf16>
    %39 = vector.shape_cast %38 : vector<1x32x8xbf16> to vector<32x8xbf16>
    %cst_30 = arith.constant dense<0.000000e+00> : vector<256x8xf32>
    %40 = tpu.matmul %2, %39, %cst_30 {dimension_numbers = #tpu.dot_dimension_numbers<[1], [0], [0], [1], [0, 0, 1, 1], [], []>} : vector<256x32xbf16>, vector<32x8xbf16>, vector<256x8xf32> -> vector<256x8xf32>
    %c0_31 = arith.constant 0 : index
    %c0_32 = arith.constant 0 : index
    %c0_33 = arith.constant 0 : index
    %41 = vector.load %arg6[%c0_31, %c0_32, %c0_33] : memref<4x1x8xf32, #tpu.memory_space<vmem>>, vector<1x1x8xf32>
    %42 = vector.shape_cast %41 : vector<1x1x8xf32> to vector<1x8xf32>
    %43 = vector.broadcast %42 : vector<1x8xf32> to vector<256x8xf32>
    %44 = arith.addf %40, %43 : vector<256x8xf32>
    %c1_34 = arith.constant 1 : index
    %c0_35 = arith.constant 0 : index
    %c0_36 = arith.constant 0 : index
    %45 = vector.load %arg3[%c1_34, %c0_35, %c0_36] : memref<4x32x8xbf16, #tpu.memory_space<vmem>>, vector<1x32x8xbf16>
    %46 = vector.shape_cast %45 : vector<1x32x8xbf16> to vector<32x8xbf16>
    %cst_37 = arith.constant dense<0.000000e+00> : vector<256x8xf32>
    %47 = tpu.matmul %2, %46, %cst_37 {dimension_numbers = #tpu.dot_dimension_numbers<[1], [0], [0], [1], [0, 0, 1, 1], [], []>} : vector<256x32xbf16>, vector<32x8xbf16>, vector<256x8xf32> -> vector<256x8xf32>
    %c1_38 = arith.constant 1 : index
    %c0_39 = arith.constant 0 : index
    %c0_40 = arith.constant 0 : index
    %48 = vector.load %arg6[%c1_38, %c0_39, %c0_40] : memref<4x1x8xf32, #tpu.memory_space<vmem>>, vector<1x1x8xf32>
    %49 = vector.shape_cast %48 : vector<1x1x8xf32> to vector<1x8xf32>
    %50 = vector.broadcast %49 : vector<1x8xf32> to vector<256x8xf32>
    %51 = arith.addf %47, %50 : vector<256x8xf32>
    %c2_41 = arith.constant 2 : index
    %c0_42 = arith.constant 0 : index
    %c0_43 = arith.constant 0 : index
    %52 = vector.load %arg3[%c2_41, %c0_42, %c0_43] : memref<4x32x8xbf16, #tpu.memory_space<vmem>>, vector<1x32x8xbf16>
    %53 = vector.shape_cast %52 : vector<1x32x8xbf16> to vector<32x8xbf16>
    %cst_44 = arith.constant dense<0.000000e+00> : vector<256x8xf32>
    %54 = tpu.matmul %2, %53, %cst_44 {dimension_numbers = #tpu.dot_dimension_numbers<[1], [0], [0], [1], [0, 0, 1, 1], [], []>} : vector<256x32xbf16>, vector<32x8xbf16>, vector<256x8xf32> -> vector<256x8xf32>
    %c2_45 = arith.constant 2 : index
    %c0_46 = arith.constant 0 : index
    %c0_47 = arith.constant 0 : index
    %55 = vector.load %arg6[%c2_45, %c0_46, %c0_47] : memref<4x1x8xf32, #tpu.memory_space<vmem>>, vector<1x1x8xf32>
    %56 = vector.shape_cast %55 : vector<1x1x8xf32> to vector<1x8xf32>
    %57 = vector.broadcast %56 : vector<1x8xf32> to vector<256x8xf32>
    %58 = arith.addf %54, %57 : vector<256x8xf32>
    %c3_48 = arith.constant 3 : index
    %c0_49 = arith.constant 0 : index
    %c0_50 = arith.constant 0 : index
    %59 = vector.load %arg3[%c3_48, %c0_49, %c0_50] : memref<4x32x8xbf16, #tpu.memory_space<vmem>>, vector<1x32x8xbf16>
    %60 = vector.shape_cast %59 : vector<1x32x8xbf16> to vector<32x8xbf16>
    %cst_51 = arith.constant dense<0.000000e+00> : vector<256x8xf32>
    %61 = tpu.matmul %2, %60, %cst_51 {dimension_numbers = #tpu.dot_dimension_numbers<[1], [0], [0], [1], [0, 0, 1, 1], [], []>} : vector<256x32xbf16>, vector<32x8xbf16>, vector<256x8xf32> -> vector<256x8xf32>
    %c3_52 = arith.constant 3 : index
    %c0_53 = arith.constant 0 : index
    %c0_54 = arith.constant 0 : index
    %62 = vector.load %arg6[%c3_52, %c0_53, %c0_54] : memref<4x1x8xf32, #tpu.memory_space<vmem>>, vector<1x1x8xf32>
    %63 = vector.shape_cast %62 : vector<1x1x8xf32> to vector<1x8xf32>
    %64 = vector.broadcast %63 : vector<1x8xf32> to vector<256x8xf32>
    %65 = arith.addf %61, %64 : vector<256x8xf32>
    %66 = vector.shape_cast %44 : vector<256x8xf32> to vector<1x256x8xf32>
    %67 = vector.shape_cast %51 : vector<256x8xf32> to vector<1x256x8xf32>
    %68 = vector.shape_cast %58 : vector<256x8xf32> to vector<1x256x8xf32>
    %69 = vector.shape_cast %65 : vector<256x8xf32> to vector<1x256x8xf32>
    %70 = tpu.concatenate %66, %67, %68, %69 in 0 : vector<1x256x8xf32>, vector<1x256x8xf32>, vector<1x256x8xf32>, vector<1x256x8xf32> -> vector<4x256x8xf32>
    %71 = arith.truncf %70 : vector<4x256x8xf32> to vector<4x256x8xbf16>
    %72 = vector.shape_cast %71 : vector<4x256x8xbf16> to vector<16x64x8xbf16>
    %c0_55 = arith.constant 0 : index
    %c0_56 = arith.constant 0 : index
    %c0_57 = arith.constant 0 : index
    %73 = vector.load %arg4[%c0_55, %c0_56, %c0_57] : memref<4x32x8xbf16, #tpu.memory_space<vmem>>, vector<1x32x8xbf16>
    %74 = vector.shape_cast %73 : vector<1x32x8xbf16> to vector<32x8xbf16>
    %cst_58 = arith.constant dense<0.000000e+00> : vector<256x8xf32>
    %75 = tpu.matmul %2, %74, %cst_58 {dimension_numbers = #tpu.dot_dimension_numbers<[1], [0], [0], [1], [0, 0, 1, 1], [], []>} : vector<256x32xbf16>, vector<32x8xbf16>, vector<256x8xf32> -> vector<256x8xf32>
    %c0_59 = arith.constant 0 : index
    %c0_60 = arith.constant 0 : index
    %c0_61 = arith.constant 0 : index
    %76 = vector.load %arg7[%c0_59, %c0_60, %c0_61] : memref<4x1x8xf32, #tpu.memory_space<vmem>>, vector<1x1x8xf32>
    %77 = vector.shape_cast %76 : vector<1x1x8xf32> to vector<1x8xf32>
    %78 = vector.broadcast %77 : vector<1x8xf32> to vector<256x8xf32>
    %79 = arith.addf %75, %78 : vector<256x8xf32>
    %c1_62 = arith.constant 1 : index
    %c0_63 = arith.constant 0 : index
    %c0_64 = arith.constant 0 : index
    %80 = vector.load %arg4[%c1_62, %c0_63, %c0_64] : memref<4x32x8xbf16, #tpu.memory_space<vmem>>, vector<1x32x8xbf16>
    %81 = vector.shape_cast %80 : vector<1x32x8xbf16> to vector<32x8xbf16>
    %cst_65 = arith.constant dense<0.000000e+00> : vector<256x8xf32>
    %82 = tpu.matmul %2, %81, %cst_65 {dimension_numbers = #tpu.dot_dimension_numbers<[1], [0], [0], [1], [0, 0, 1, 1], [], []>} : vector<256x32xbf16>, vector<32x8xbf16>, vector<256x8xf32> -> vector<256x8xf32>
    %c1_66 = arith.constant 1 : index
    %c0_67 = arith.constant 0 : index
    %c0_68 = arith.constant 0 : index
    %83 = vector.load %arg7[%c1_66, %c0_67, %c0_68] : memref<4x1x8xf32, #tpu.memory_space<vmem>>, vector<1x1x8xf32>
    %84 = vector.shape_cast %83 : vector<1x1x8xf32> to vector<1x8xf32>
    %85 = vector.broadcast %84 : vector<1x8xf32> to vector<256x8xf32>
    %86 = arith.addf %82, %85 : vector<256x8xf32>
    %c2_69 = arith.constant 2 : index
    %c0_70 = arith.constant 0 : index
    %c0_71 = arith.constant 0 : index
    %87 = vector.load %arg4[%c2_69, %c0_70, %c0_71] : memref<4x32x8xbf16, #tpu.memory_space<vmem>>, vector<1x32x8xbf16>
    %88 = vector.shape_cast %87 : vector<1x32x8xbf16> to vector<32x8xbf16>
    %cst_72 = arith.constant dense<0.000000e+00> : vector<256x8xf32>
    %89 = tpu.matmul %2, %88, %cst_72 {dimension_numbers = #tpu.dot_dimension_numbers<[1], [0], [0], [1], [0, 0, 1, 1], [], []>} : vector<256x32xbf16>, vector<32x8xbf16>, vector<256x8xf32> -> vector<256x8xf32>
    %c2_73 = arith.constant 2 : index
    %c0_74 = arith.constant 0 : index
    %c0_75 = arith.constant 0 : index
    %90 = vector.load %arg7[%c2_73, %c0_74, %c0_75] : memref<4x1x8xf32, #tpu.memory_space<vmem>>, vector<1x1x8xf32>
    %91 = vector.shape_cast %90 : vector<1x1x8xf32> to vector<1x8xf32>
    %92 = vector.broadcast %91 : vector<1x8xf32> to vector<256x8xf32>
    %93 = arith.addf %89, %92 : vector<256x8xf32>
    %c3_76 = arith.constant 3 : index
    %c0_77 = arith.constant 0 : index
    %c0_78 = arith.constant 0 : index
    %94 = vector.load %arg4[%c3_76, %c0_77, %c0_78] : memref<4x32x8xbf16, #tpu.memory_space<vmem>>, vector<1x32x8xbf16>
    %95 = vector.shape_cast %94 : vector<1x32x8xbf16> to vector<32x8xbf16>
    %cst_79 = arith.constant dense<0.000000e+00> : vector<256x8xf32>
    %96 = tpu.matmul %2, %95, %cst_79 {dimension_numbers = #tpu.dot_dimension_numbers<[1], [0], [0], [1], [0, 0, 1, 1], [], []>} : vector<256x32xbf16>, vector<32x8xbf16>, vector<256x8xf32> -> vector<256x8xf32>
    %c3_80 = arith.constant 3 : index
    %c0_81 = arith.constant 0 : index
    %c0_82 = arith.constant 0 : index
    %97 = vector.load %arg7[%c3_80, %c0_81, %c0_82] : memref<4x1x8xf32, #tpu.memory_space<vmem>>, vector<1x1x8xf32>
    %98 = vector.shape_cast %97 : vector<1x1x8xf32> to vector<1x8xf32>
    %99 = vector.broadcast %98 : vector<1x8xf32> to vector<256x8xf32>
    %100 = arith.addf %96, %99 : vector<256x8xf32>
    %101 = vector.shape_cast %79 : vector<256x8xf32> to vector<1x256x8xf32>
    %102 = vector.shape_cast %86 : vector<256x8xf32> to vector<1x256x8xf32>
    %103 = vector.shape_cast %93 : vector<256x8xf32> to vector<1x256x8xf32>
    %104 = vector.shape_cast %100 : vector<256x8xf32> to vector<1x256x8xf32>
    %105 = tpu.concatenate %101, %102, %103, %104 in 0 : vector<1x256x8xf32>, vector<1x256x8xf32>, vector<1x256x8xf32>, vector<1x256x8xf32> -> vector<4x256x8xf32>
    %106 = arith.truncf %105 : vector<4x256x8xf32> to vector<4x256x8xbf16>
    %107 = vector.shape_cast %106 : vector<4x256x8xbf16> to vector<16x64x8xbf16>
    "tpu.trace_start"() <{level = 10 : i32, message = "bnd,bmd->bnm"}> : () -> ()
    %cst_83 = arith.constant dense<0.000000e+00> : vector<16x64x64xf32>
    %108 = tpu.matmul %37, %72, %cst_83 {dimension_numbers = #tpu.dot_dimension_numbers<[2], [2], [1], [1], [0, 0, 0, 1, 1, 1], [0], [0]>} : vector<16x64x8xbf16>, vector<16x64x8xbf16>, vector<16x64x64xf32> -> vector<16x64x64xf32>
    "tpu.trace_stop"() : () -> ()
    %109 = vector.shape_cast %108 : vector<16x64x64xf32> to vector<4x4x64x64xf32>
    %c0_84 = arith.constant 0 : index
    %c0_85 = arith.constant 0 : index
    %c0_86 = arith.constant 0 : index
    %110 = vector.load %arg8[%c0_84, %c0_85, %c0_86] : memref<4x64x64xbf16, #tpu.memory_space<vmem>>, vector<4x64x64xbf16>
    %111 = vector.shape_cast %110 : vector<4x64x64xbf16> to vector<4x1x64x64xbf16>
    %112 = arith.extf %111 : vector<4x1x64x64xbf16> to vector<4x1x64x64xf32>
    %113 = vector.broadcast %112 : vector<4x1x64x64xf32> to vector<4x4x64x64xf32>
    %114 = arith.addf %109, %113 : vector<4x4x64x64xf32>
    %115 = vector.shape_cast %114 : vector<4x4x64x64xf32> to vector<16x64x64xf32>
    %cst_87 = arith.constant dense<0xFF800000> : vector<16x64xf32>
    %116 = vector.multi_reduction <maximumf>, %115, %cst_87 [2] : vector<16x64x64xf32> to vector<16x64xf32>
    %117 = vector.shape_cast %116 : vector<16x64xf32> to vector<16x64x1xf32>
    %118 = vector.broadcast %117 : vector<16x64x1xf32> to vector<16x64x64xf32>
    %119 = arith.subf %115, %118 : vector<16x64x64xf32>
    %120 = math.exp %119 : vector<16x64x64xf32>
    %cst_88 = arith.constant dense<0.000000e+00> : vector<16x64xf32>
    %121 = vector.multi_reduction <add>, %120, %cst_88 [2] : vector<16x64x64xf32> to vector<16x64xf32>
    %122 = vector.shape_cast %121 : vector<16x64xf32> to vector<16x64x1xf32>
    %123 = arith.truncf %120 : vector<16x64x64xf32> to vector<16x64x64xbf16>
    "tpu.trace_start"() <{level = 10 : i32, message = "bnm,bmd->bnd"}> : () -> ()
    %cst_89 = arith.constant dense<0.000000e+00> : vector<16x64x8xf32>
    %124 = tpu.matmul %123, %107, %cst_89 {dimension_numbers = #tpu.dot_dimension_numbers<[2], [1], [1], [2], [0, 0, 0, 1, 1, 2], [0], [0]>} : vector<16x64x64xbf16>, vector<16x64x8xbf16>, vector<16x64x8xf32> -> vector<16x64x8xf32>
    "tpu.trace_stop"() : () -> ()
    %125 = tpu.reciprocal %122 {approx = true} : vector<16x64x1xf32> -> vector<16x64x1xf32>
    %126 = vector.broadcast %125 : vector<16x64x1xf32> to vector<16x64x8xf32>
    %127 = arith.mulf %124, %126 : vector<16x64x8xf32>
    %128 = vector.shape_cast %127 : vector<16x64x8xf32> to vector<4x256x8xf32>
    %cst_90 = arith.constant 0.000000e+00 : f32
    %129 = vector.broadcast %cst_90 : f32 to vector<256x32xf32>
    %130 = vector.extract_strided_slice %128 {offsets = [0, 0, 0], sizes = [1, 256, 8], strides = [1, 1, 1]} : vector<4x256x8xf32> to vector<1x256x8xf32>
    %131 = vector.shape_cast %130 : vector<1x256x8xf32> to vector<256x8xf32>
    %132 = arith.truncf %131 : vector<256x8xf32> to vector<256x8xbf16>
    %c0_91 = arith.constant 0 : index
    %c0_92 = arith.constant 0 : index
    %c0_93 = arith.constant 0 : index
    %133 = vector.load %arg10[%c0_91, %c0_92, %c0_93] : memref<4x8x32xbf16, #tpu.memory_space<vmem>>, vector<1x8x32xbf16>
    %134 = vector.shape_cast %133 : vector<1x8x32xbf16> to vector<8x32xbf16>
    %cst_94 = arith.constant dense<0.000000e+00> : vector<256x32xf32>
    %135 = tpu.matmul %132, %134, %cst_94 {dimension_numbers = #tpu.dot_dimension_numbers<[1], [0], [0], [1], [0, 0, 1, 1], [], []>} : vector<256x8xbf16>, vector<8x32xbf16>, vector<256x32xf32> -> vector<256x32xf32>
    %136 = arith.addf %129, %135 : vector<256x32xf32>
    %137 = vector.extract_strided_slice %128 {offsets = [1, 0, 0], sizes = [1, 256, 8], strides = [1, 1, 1]} : vector<4x256x8xf32> to vector<1x256x8xf32>
    %138 = vector.shape_cast %137 : vector<1x256x8xf32> to vector<256x8xf32>
    %139 = arith.truncf %138 : vector<256x8xf32> to vector<256x8xbf16>
    %c1_95 = arith.constant 1 : index
    %c0_96 = arith.constant 0 : index
    %c0_97 = arith.constant 0 : index
    %140 = vector.load %arg10[%c1_95, %c0_96, %c0_97] : memref<4x8x32xbf16, #tpu.memory_space<vmem>>, vector<1x8x32xbf16>
    %141 = vector.shape_cast %140 : vector<1x8x32xbf16> to vector<8x32xbf16>
    %cst_98 = arith.constant dense<0.000000e+00> : vector<256x32xf32>
    %142 = tpu.matmul %139, %141, %cst_98 {dimension_numbers = #tpu.dot_dimension_numbers<[1], [0], [0], [1], [0, 0, 1, 1], [], []>} : vector<256x8xbf16>, vector<8x32xbf16>, vector<256x32xf32> -> vector<256x32xf32>
    %143 = arith.addf %136, %142 : vector<256x32xf32>
    %144 = vector.extract_strided_slice %128 {offsets = [2, 0, 0], sizes = [1, 256, 8], strides = [1, 1, 1]} : vector<4x256x8xf32> to vector<1x256x8xf32>
    %145 = vector.shape_cast %144 : vector<1x256x8xf32> to vector<256x8xf32>
    %146 = arith.truncf %145 : vector<256x8xf32> to vector<256x8xbf16>
    %c2_99 = arith.constant 2 : index
    %c0_100 = arith.constant 0 : index
    %c0_101 = arith.constant 0 : index
    %147 = vector.load %arg10[%c2_99, %c0_100, %c0_101] : memref<4x8x32xbf16, #tpu.memory_space<vmem>>, vector<1x8x32xbf16>
    %148 = vector.shape_cast %147 : vector<1x8x32xbf16> to vector<8x32xbf16>
    %cst_102 = arith.constant dense<0.000000e+00> : vector<256x32xf32>
    %149 = tpu.matmul %146, %148, %cst_102 {dimension_numbers = #tpu.dot_dimension_numbers<[1], [0], [0], [1], [0, 0, 1, 1], [], []>} : vector<256x8xbf16>, vector<8x32xbf16>, vector<256x32xf32> -> vector<256x32xf32>
    %150 = arith.addf %143, %149 : vector<256x32xf32>
    %151 = vector.extract_strided_slice %128 {offsets = [3, 0, 0], sizes = [1, 256, 8], strides = [1, 1, 1]} : vector<4x256x8xf32> to vector<1x256x8xf32>
    %152 = vector.shape_cast %151 : vector<1x256x8xf32> to vector<256x8xf32>
    %153 = arith.truncf %152 : vector<256x8xf32> to vector<256x8xbf16>
    %c3_103 = arith.constant 3 : index
    %c0_104 = arith.constant 0 : index
    %c0_105 = arith.constant 0 : index
    %154 = vector.load %arg10[%c3_103, %c0_104, %c0_105] : memref<4x8x32xbf16, #tpu.memory_space<vmem>>, vector<1x8x32xbf16>
    %155 = vector.shape_cast %154 : vector<1x8x32xbf16> to vector<8x32xbf16>
    %cst_106 = arith.constant dense<0.000000e+00> : vector<256x32xf32>
    %156 = tpu.matmul %153, %155, %cst_106 {dimension_numbers = #tpu.dot_dimension_numbers<[1], [0], [0], [1], [0, 0, 1, 1], [], []>} : vector<256x8xbf16>, vector<8x32xbf16>, vector<256x32xf32> -> vector<256x32xf32>
    %157 = arith.addf %150, %156 : vector<256x32xf32>
    %c0_107 = arith.constant 0 : index
    %c0_108 = arith.constant 0 : index
    %158 = vector.load %arg11[%c0_107, %c0_108] : memref<1x32xf32, #tpu.memory_space<vmem>>, vector<1x32xf32>
    %159 = vector.broadcast %158 : vector<1x32xf32> to vector<256x32xf32>
    %160 = arith.addf %157, %159 : vector<256x32xf32>
    %161 = vector.shape_cast %160 : vector<256x32xf32> to vector<1x256x32xf32>
    %c0_109 = arith.constant 0 : index
    %c0_110 = arith.constant 0 : index
    %c0_111 = arith.constant 0 : index
    %162 = vector.load %arg12[%c0_109, %c0_110, %c0_111] : memref<1x256x32xf32, #tpu.memory_space<vmem>>, vector<1x256x32xf32>
    tpu.vector_store %arg12[%c0_109, %c0_110, %c0_111], %161 {strides = array<i32>} : memref<1x256x32xf32, #tpu.memory_space<vmem>>, vector<1x256x32xf32>,
    return
  }
  func.func @transform_0(%arg0: i32) -> (i32, i32, i32, i32) {
    %c0_i32 = arith.constant 0 : i32
    %c0_i32_0 = arith.constant 0 : i32
    %c0_i32_1 = arith.constant 0 : i32
    %c0_i32_2 = arith.constant 0 : i32
    return %arg0, %c0_i32, %c0_i32_0, %c0_i32_1 : i32, i32, i32, i32
  }
  func.func @transform_1(%arg0: i32) -> (i32, i32, i32) {
    %c0_i32 = arith.constant 0 : i32
    %c0_i32_0 = arith.constant 0 : i32
    %c0_i32_1 = arith.constant 0 : i32
    %c0_i32_2 = arith.constant 0 : i32
    return %c0_i32, %c0_i32_0, %c0_i32_1 : i32, i32, i32
  }
  func.func @transform_2(%arg0: i32) -> (i32, i32, i32) {
    %c0_i32 = arith.constant 0 : i32
    %c0_i32_0 = arith.constant 0 : i32
    %c0_i32_1 = arith.constant 0 : i32
    %c0_i32_2 = arith.constant 0 : i32
    return %c0_i32, %c0_i32_0, %c0_i32_1 : i32, i32, i32
  }
  func.func @transform_3(%arg0: i32) -> (i32, i32, i32) {
    %c0_i32 = arith.constant 0 : i32
    %c0_i32_0 = arith.constant 0 : i32
    %c0_i32_1 = arith.constant 0 : i32
    %c0_i32_2 = arith.constant 0 : i32
    return %c0_i32, %c0_i32_0, %c0_i32_1 : i32, i32, i32
  }
  func.func @transform_4(%arg0: i32) -> (i32, i32, i32) {
    %c0_i32 = arith.constant 0 : i32
    %c0_i32_0 = arith.constant 0 : i32
    %c0_i32_1 = arith.constant 0 : i32
    %c0_i32_2 = arith.constant 0 : i32
    return %c0_i32, %c0_i32_0, %c0_i32_1 : i32, i32, i32
  }
  func.func @transform_5(%arg0: i32) -> (i32, i32, i32) {
    %c0_i32 = arith.constant 0 : i32
    %c0_i32_0 = arith.constant 0 : i32
    %c0_i32_1 = arith.constant 0 : i32
    %c0_i32_2 = arith.constant 0 : i32
    return %c0_i32, %c0_i32_0, %c0_i32_1 : i32, i32, i32
  }
  func.func @transform_6(%arg0: i32) -> (i32, i32, i32) {
    %c0_i32 = arith.constant 0 : i32
    %c0_i32_0 = arith.constant 0 : i32
    %c0_i32_1 = arith.constant 0 : i32
    %c0_i32_2 = arith.constant 0 : i32
    return %c0_i32, %c0_i32_0, %c0_i32_1 : i32, i32, i32
  }
  func.func @transform_7(%arg0: i32) -> (i32, i32, i32) {
    %c0_i32 = arith.constant 0 : i32
    %c0_i32_0 = arith.constant 0 : i32
    %c0_i32_1 = arith.constant 0 : i32
    %c0_i32_2 = arith.constant 0 : i32
    return %c0_i32, %c0_i32_0, %c0_i32_1 : i32, i32, i32
  }
  func.func @transform_8(%arg0: i32) -> (i32, i32, i32) {
    %c0_i32 = arith.constant 0 : i32
    %c0_i32_0 = arith.constant 0 : i32
    %c0_i32_1 = arith.constant 0 : i32
    %c0_i32_2 = arith.constant 0 : i32
    return %c0_i32, %c0_i32_0, %c0_i32_1 : i32, i32, i32
  }
  func.func @transform_9(%arg0: i32) -> (i32, i32, i32) {
    %c0_i32 = arith.constant 0 : i32
    %c0_i32_0 = arith.constant 0 : i32
    %c0_i32_1 = arith.constant 0 : i32
    %c0_i32_2 = arith.constant 0 : i32
    return %c0_i32, %c0_i32_0, %c0_i32_1 : i32, i32, i32
  }
  func.func @transform_10(%arg0: i32) -> (i32, i32) {
    %c0_i32 = arith.constant 0 : i32
    %c0_i32_0 = arith.constant 0 : i32
    %c0_i32_1 = arith.constant 0 : i32
    return %c0_i32, %c0_i32_0 : i32, i32
  }
  func.func @transform_11(%arg0: i32) -> (i32, i32, i32) {
    %c0_i32 = arith.constant 0 : i32
    %c0_i32_0 = arith.constant 0 : i32
    %c0_i32_1 = arith.constant 0 : i32
    return %arg0, %c0_i32, %c0_i32_0 : i32, i32, i32
  }
}

</mosaic_0001>

<llo_original>
// kernel: tpu_custom_call.1
$region0: #{tpu_custom_call.1}
  #allocation0 [shape = 'u32[]', space=smem, size = 0x4, offset = 0x4, fixed_abs, tag = 'smem constant byte address 0x4 - core index']
  #allocation1 [shape = 'u32[144,128]{1,0:T(1,128)}', space=vmem, size = 0x12000, scoped, tag = 'internal scratch']
  %s0 = inlined_call_operand.vmem [shape: f32[2,4,64,32], index: 0, kind: input, shape index: {}]
  %s1 = inlined_call_operand.vmem [shape: bf16[4,32,8], index: 1, kind: input, shape index: {}]
  %s2 = inlined_call_operand.vmem [shape: bf16[4,32,8], index: 2, kind: input, shape index: {}]
  %s3 = inlined_call_operand.vmem [shape: bf16[4,32,8], index: 3, kind: input, shape index: {}]
  %s4 = inlined_call_operand.vmem [shape: f32[4,1,8], index: 4, kind: input, shape index: {}]
  %s5 = inlined_call_operand.vmem [shape: f32[4,1,8], index: 5, kind: input, shape index: {}]
  %s6 = inlined_call_operand.vmem [shape: f32[4,1,8], index: 6, kind: input, shape index: {}]
  %s7 = inlined_call_operand.vmem [shape: bf16[4,64,64], index: 7, kind: input, shape index: {}]
  %s8 = inlined_call_operand.vmem [shape: bf16[1,64,64], index: 8, kind: input, shape index: {}]
  %s9 = inlined_call_operand.vmem [shape: bf16[4,8,32], index: 9, kind: input, shape index: {}]
  %s10 = inlined_call_operand.vmem [shape: f32[1,32], index: 10, kind: input, shape index: {}]
  %s11 = inlined_call_operand.vmem [shape: f32[2,256,32], index: 11, kind: output, shape index: {}]
  %s12 = sld [smem:[#allocation0]]
  $region77: #{tpu_custom_call.1} parent=0
    _
  %s14 = ssub.s32 1, %s12
  %s15 = scalar_select 0, %s14, %s12
  loop: start=0, step=1, limit=4
  $region2: #{tpu_custom_call.1} parent=0 // loop_pre_header
    _
  $region3: #{tpu_custom_call.1} parent=0 // loop_header
    %s17 = sphi 0, %s21
    %p18 = scmp.ge.s32.totalorder %s17, 4
    %s27 = sphi 0, %s29
    %s30 = sphi 0, %s27
    %s31 = sphi 0, %s30
    %s47 = sphi 0, %s31
    %s51 = sphi 0, %s51
    %s53 = sphi 0, %s51
    %s54 = sphi 0, %s53
    %s68 = sphi 0, %s54
    %s72 = sphi 0, %s72
    %s74 = sphi 0, %s72
    %s75 = sphi 0, %s74
    %s89 = sphi 0, %s75
    %s93 = sphi 0, %s93
    %s95 = sphi 0, %s93
    %s96 = sphi 0, %s95
    %s110 = sphi 0, %s96
    %s114 = sphi 0, %s114
    %s116 = sphi 0, %s114
    %s117 = sphi 0, %s116
    %s131 = sphi 0, %s117
    %s135 = sphi 0, %s135
    %s137 = sphi 0, %s135
    %s138 = sphi 0, %s137
    %s152 = sphi 0, %s138
    %s156 = sphi 0, %s156
    %s158 = sphi 0, %s156
    %s159 = sphi 0, %s158
    %s173 = sphi 0, %s159
    %s177 = sphi 0, %s177
    %s179 = sphi 0, %s177
    %s180 = sphi 0, %s179
    %s194 = sphi 0, %s180
    %s198 = sphi 0, %s198
    %s200 = sphi 0, %s198
    %s201 = sphi 0, %s200
    %s215 = sphi 0, %s201
    %s219 = sphi 0, %s219
    %s221 = sphi 0, %s219
    %s222 = sphi 0, %s221
    %s236 = sphi 0, %s222
    %s240 = sphi 0, %s240
    %s242 = sphi 0, %s240
    %s243 = sphi 0, %s242
    %s257 = sphi 0, %s243
    %s263 = sphi 0, %s265
    %s266 = sphi 0, %s263
    %s267 = sphi 0, %s266
    %s283 = sphi 0, %s267
  $region4: #{tpu_custom_call.1} parent=0 // loop_header_branch
    %20 = sbr.rel (%p18) target = $region8
  $region5: #{tpu_custom_call.1} parent=0 // loop_body
    %s22 = ssub.s32 %s17, 1
    %s23 = ssub.s32 %s17, 2
    %s24 = sadd.s32 %s17, 1
    %s25 = ssub.s32 %s17, %s24
    %p26 = scmp.eq.s32.totalorder %s25, 0
    %s28 = sadd.s32 %s27, 1
    %s29 = scalar_select %p26, %s27, %s28
    %p32 = pneg %p26
    %p33 = scmp.eq.s32.totalorder %s17, 1
    %p34 = por %p32, %p33
    %p35 = scmp.ne.s32.totalorder %s27, %s30
    %p36 = scmp.eq.s32.totalorder %s17, 0
    %p37 = por %p35, %p36
    %p38 = scmp.ne.s32.totalorder %s27, %s30
    %p39 = scmp.eq.s32.totalorder %s22, 1
    %p40 = por %p38, %p39
    %p41 = scmp.ne.s32.totalorder %s30, %s31
    %p42 = scmp.eq.s32.totalorder %s22, 0
    %p43 = por %p41, %p42
    %p44 = scmp.ne.s32.totalorder %s30, %s31
    %p45 = scmp.eq.s32.totalorder %s23, 1
    %p46 = por %p44, %p45
    %p48 = scmp.ne.s32.totalorder %s31, %s47
    %p49 = scmp.eq.s32.totalorder %s23, 0
    %p50 = por %p48, %p49
    %s52 = sadd.s32 %s51, 1
    %p55 = scmp.eq.s32.totalorder %s17, 1
    %p56 = scmp.ne.s32.totalorder %s51, %s53
    %p57 = scmp.eq.s32.totalorder %s17, 0
    %p58 = por %p56, %p57
    %p59 = scmp.ne.s32.totalorder %s51, %s53
    %p60 = scmp.eq.s32.totalorder %s22, 1
    %p61 = por %p59, %p60
    %p62 = scmp.ne.s32.totalorder %s53, %s54
    %p63 = scmp.eq.s32.totalorder %s22, 0
    %p64 = por %p62, %p63
    %p65 = scmp.ne.s32.totalorder %s53, %s54
    %p66 = scmp.eq.s32.totalorder %s23, 1
    %p67 = por %p65, %p66
    %p69 = scmp.ne.s32.totalorder %s54, %s68
    %p70 = scmp.eq.s32.totalorder %s23, 0
    %p71 = por %p69, %p70
    %s73 = sadd.s32 %s72, 1
    %p76 = scmp.eq.s32.totalorder %s17, 1
    %p77 = scmp.ne.s32.totalorder %s72, %s74
    %p78 = scmp.eq.s32.totalorder %s17, 0
    %p79 = por %p77, %p78
    %p80 = scmp.ne.s32.totalorder %s72, %s74
    %p81 = scmp.eq.s32.totalorder %s22, 1
    %p82 = por %p80, %p81
    %p83 = scmp.ne.s32.totalorder %s74, %s75
    %p84 = scmp.eq.s32.totalorder %s22, 0
    %p85 = por %p83, %p84
    %p86 = scmp.ne.s32.totalorder %s74, %s75
    %p87 = scmp.eq.s32.totalorder %s23, 1
    %p88 = por %p86, %p87
    %p90 = scmp.ne.s32.totalorder %s75, %s89
    %p91 = scmp.eq.s32.totalorder %s23, 0
    %p92 = por %p90, %p91
    %s94 = sadd.s32 %s93, 1
    %p97 = scmp.eq.s32.totalorder %s17, 1
    %p98 = scmp.ne.s32.totalorder %s93, %s95
    %p99 = scmp.eq.s32.totalorder %s17, 0
    %p100 = por %p98, %p99
    %p101 = scmp.ne.s32.totalorder %s93, %s95
    %p102 = scmp.eq.s32.totalorder %s22, 1
    %p103 = por %p101, %p102
    %p104 = scmp.ne.s32.totalorder %s95, %s96
    %p105 = scmp.eq.s32.totalorder %s22, 0
    %p106 = por %p104, %p105
    %p107 = scmp.ne.s32.totalorder %s95, %s96
    %p108 = scmp.eq.s32.totalorder %s23, 1
    %p109 = por %p107, %p108
    %p111 = scmp.ne.s32.totalorder %s96, %s110
    %p112 = scmp.eq.s32.totalorder %s23, 0
    %p113 = por %p111, %p112
    %s115 = sadd.s32 %s114, 1
    %p118 = scmp.eq.s32.totalorder %s17, 1
    %p119 = scmp.ne.s32.totalorder %s114, %s116
    %p120 = scmp.eq.s32.totalorder %s17, 0
    %p121 = por %p119, %p120
    %p122 = scmp.ne.s32.totalorder %s114, %s116
    %p123 = scmp.eq.s32.totalorder %s22, 1
    %p124 = por %p122, %p123
    %p125 = scmp.ne.s32.totalorder %s116, %s117
    %p126 = scmp.eq.s32.totalorder %s22, 0
    %p127 = por %p125, %p126
    %p128 = scmp.ne.s32.totalorder %s116, %s117
    %p129 = scmp.eq.s32.totalorder %s23, 1
    %p130 = por %p128, %p129
    %p132 = scmp.ne.s32.totalorder %s117, %s131
    %p133 = scmp.eq.s32.totalorder %s23, 0
    %p134 = por %p132, %p133
    %s136 = sadd.s32 %s135, 1
    %p139 = scmp.eq.s32.totalorder %s17, 1
    %p140 = scmp.ne.s32.totalorder %s135, %s137
    %p141 = scmp.eq.s32.totalorder %s17, 0
    %p142 = por %p140, %p141
    %p143 = scmp.ne.s32.totalorder %s135, %s137
    %p144 = scmp.eq.s32.totalorder %s22, 1
    %p145 = por %p143, %p144
    %p146 = scmp.ne.s32.totalorder %s137, %s138
    %p147 = scmp.eq.s32.totalorder %s22, 0
    %p148 = por %p146, %p147
    %p149 = scmp.ne.s32.totalorder %s137, %s138
    %p150 = scmp.eq.s32.totalorder %s23, 1
    %p151 = por %p149, %p150
    %p153 = scmp.ne.s32.totalorder %s138, %s152
    %p154 = scmp.eq.s32.totalorder %s23, 0
    %p155 = por %p153, %p154
    %s157 = sadd.s32 %s156, 1
    %p160 = scmp.eq.s32.totalorder %s17, 1
    %p161 = scmp.ne.s32.totalorder %s156, %s158
    %p162 = scmp.eq.s32.totalorder %s17, 0
    %p163 = por %p161, %p162
    %p164 = scmp.ne.s32.totalorder %s156, %s158
    %p165 = scmp.eq.s32.totalorder %s22, 1
    %p166 = por %p164, %p165
    %p167 = scmp.ne.s32.totalorder %s158, %s159
    %p168 = scmp.eq.s32.totalorder %s22, 0
    %p169 = por %p167, %p168
    %p170 = scmp.ne.s32.totalorder %s158, %s159
    %p171 = scmp.eq.s32.totalorder %s23, 1
    %p172 = por %p170, %p171
    %p174 = scmp.ne.s32.totalorder %s159, %s173
    %p175 = scmp.eq.s32.totalorder %s23, 0
    %p176 = por %p174, %p175
    %s178 = sadd.s32 %s177, 1
    %p181 = scmp.eq.s32.totalorder %s17, 1
    %p182 = scmp.ne.s32.totalorder %s177, %s179
    %p183 = scmp.eq.s32.totalorder %s17, 0
    %p184 = por %p182, %p183
    %p185 = scmp.ne.s32.totalorder %s177, %s179
    %p186 = scmp.eq.s32.totalorder %s22, 1
    %p187 = por %p185, %p186
    %p188 = scmp.ne.s32.totalorder %s179, %s180
    %p189 = scmp.eq.s32.totalorder %s22, 0
    %p190 = por %p188, %p189
    %p191 = scmp.ne.s32.totalorder %s179, %s180
    %p192 = scmp.eq.s32.totalorder %s23, 1
    %p193 = por %p191, %p192
    %p195 = scmp.ne.s32.totalorder %s180, %s194
    %p196 = scmp.eq.s32.totalorder %s23, 0
    %p197 = por %p195, %p196
    %s199 = sadd.s32 %s198, 1
    %p202 = scmp.eq.s32.totalorder %s17, 1
    %p203 = scmp.ne.s32.totalorder %s198, %s200
    %p204 = scmp.eq.s32.totalorder %s17, 0
    %p205 = por %p203, %p204
    %p206 = scmp.ne.s32.totalorder %s198, %s200
    %p207 = scmp.eq.s32.totalorder %s22, 1
    %p208 = por %p206, %p207
    %p209 = scmp.ne.s32.totalorder %s200, %s201
    %p210 = scmp.eq.s32.totalorder %s22, 0
    %p211 = por %p209, %p210
    %p212 = scmp.ne.s32.totalorder %s200, %s201
    %p213 = scmp.eq.s32.totalorder %s23, 1
    %p214 = por %p212, %p213
    %p216 = scmp.ne.s32.totalorder %s201, %s215
    %p217 = scmp.eq.s32.totalorder %s23, 0
    %p218 = por %p216, %p217
    %s220 = sadd.s32 %s219, 1
    %p223 = scmp.eq.s32.totalorder %s17, 1
    %p224 = scmp.ne.s32.totalorder %s219, %s221
    %p225 = scmp.eq.s32.totalorder %s17, 0
    %p226 = por %p224, %p225
    %p227 = scmp.ne.s32.totalorder %s219, %s221
    %p228 = scmp.eq.s32.totalorder %s22, 1
    %p229 = por %p227, %p228
    %p230 = scmp.ne.s32.totalorder %s221, %s222
    %p231 = scmp.eq.s32.totalorder %s22, 0
    %p232 = por %p230, %p231
    %p233 = scmp.ne.s32.totalorder %s221, %s222
    %p234 = scmp.eq.s32.totalorder %s23, 1
    %p235 = por %p233, %p234
    %p237 = scmp.ne.s32.totalorder %s222, %s236
    %p238 = scmp.eq.s32.totalorder %s23, 0
    %p239 = por %p237, %p238
    %s241 = sadd.s32 %s240, 1
    %p244 = scmp.eq.s32.totalorder %s17, 1
    %p245 = scmp.ne.s32.totalorder %s240, %s242
    %p246 = scmp.eq.s32.totalorder %s17, 0
    %p247 = por %p245, %p246
    %p248 = scmp.ne.s32.totalorder %s240, %s242
    %p249 = scmp.eq.s32.totalorder %s22, 1
    %p250 = por %p248, %p249
    %p251 = scmp.ne.s32.totalorder %s242, %s243
    %p252 = scmp.eq.s32.totalorder %s22, 0
    %p253 = por %p251, %p252
    %p254 = scmp.ne.s32.totalorder %s242, %s243
    %p255 = scmp.eq.s32.totalorder %s23, 1
    %p256 = por %p254, %p255
    %p258 = scmp.ne.s32.totalorder %s243, %s257
    %p259 = scmp.eq.s32.totalorder %s23, 0
    %p260 = por %p258, %p259
    %s261 = ssub.s32 %s17, %s24
    %p262 = scmp.eq.s32.totalorder %s261, 0
    %s264 = sadd.s32 %s263, 1
    %s265 = scalar_select %p262, %s263, %s264
    %p268 = pneg %p262
    %p269 = scmp.eq.s32.totalorder %s17, 1
    %p270 = por %p268, %p269
    %p271 = scmp.ne.s32.totalorder %s263, %s266
    %p272 = scmp.eq.s32.totalorder %s17, 0
    %p273 = por %p271, %p272
    %p274 = scmp.ne.s32.totalorder %s263, %s266
    %p275 = scmp.eq.s32.totalorder %s22, 1
    %p276 = por %p274, %p275
    %p277 = scmp.ne.s32.totalorder %s266, %s267
    %p278 = scmp.eq.s32.totalorder %s22, 0
    %p279 = por %p277, %p278
    %p280 = scmp.ne.s32.totalorder %s266, %s267
    %p281 = scmp.eq.s32.totalorder %s23, 1
    %p282 = por %p280, %p281
    %p284 = scmp.ne.s32.totalorder %s267, %s283
    %p285 = scmp.eq.s32.totalorder %s23, 0
    %p286 = por %p284, %p285
    %p287 = scmp.le.s32.totalorder 1, %s17
    %p288 = scmp.lt.s32.totalorder %s17, 3
    %p289 = pnand %p287, %p288
    %p290 = pneg %p289
    // Predicated region
    $region9: #{tpu_custom_call.1} parent=5 // pred_check
      _
    $region10: #{tpu_custom_call.1} parent=5 // pred_check_branch
      %292 = sbr.rel (%p289) target = $region12
    $region11: #{tpu_custom_call.1} parent=5 // pred_region
      %s293 = ssub.s32 %s17, 1
      // Predicated region
      $region13: #{tpu_custom_call.1} parent=11 // pred_check
        %p294 = pneg %p64
      $region14: #{tpu_custom_call.1} parent=11 // pred_check_branch
        %296 = sbr.rel (%p294) target = $region16
      $region15: #{tpu_custom_call.1} parent=11 // pred_region
        _
      $region16: #{tpu_custom_call.1} parent=11 // pred_fallthru
        _
      // Predicated region
      $region17: #{tpu_custom_call.1} parent=11 // pred_check
        %p297 = pneg %p85
      $region18: #{tpu_custom_call.1} parent=11 // pred_check_branch
        %299 = sbr.rel (%p297) target = $region20
      $region19: #{tpu_custom_call.1} parent=11 // pred_region
        _
      $region20: #{tpu_custom_call.1} parent=11 // pred_fallthru
        _
      // Predicated region
      $region21: #{tpu_custom_call.1} parent=11 // pred_check
        %p300 = pneg %p106
      $region22: #{tpu_custom_call.1} parent=11 // pred_check_branch
        %302 = sbr.rel (%p300) target = $region24
      $region23: #{tpu_custom_call.1} parent=11 // pred_region
        _
      $region24: #{tpu_custom_call.1} parent=11 // pred_fallthru
        _
      // Predicated region
      $region25: #{tpu_custom_call.1} parent=11 // pred_check
        %p303 = pneg %p127
      $region26: #{tpu_custom_call.1} parent=11 // pred_check_branch
        %305 = sbr.rel (%p303) target = $region28
      $region27: #{tpu_custom_call.1} parent=11 // pred_region
        _
      $region28: #{tpu_custom_call.1} parent=11 // pred_fallthru
        _
      // Predicated region
      $region29: #{tpu_custom_call.1} parent=11 // pred_check
        %p306 = pneg %p148
      $region30: #{tpu_custom_call.1} parent=11 // pred_check_branch
        %308 = sbr.rel (%p306) target = $region32
      $region31: #{tpu_custom_call.1} parent=11 // pred_region
        _
      $region32: #{tpu_custom_call.1} parent=11 // pred_fallthru
        _
      // Predicated region
      $region33: #{tpu_custom_call.1} parent=11 // pred_check
        %p309 = pneg %p169
      $region34: #{tpu_custom_call.1} parent=11 // pred_check_branch
        %311 = sbr.rel (%p309) target = $region36
      $region35: #{tpu_custom_call.1} parent=11 // pred_region
        _
      $region36: #{tpu_custom_call.1} parent=11 // pred_fallthru
        _
      // Predicated region
      $region37: #{tpu_custom_call.1} parent=11 // pred_check
        %p312 = pneg %p190
      $region38: #{tpu_custom_call.1} parent=11 // pred_check_branch
        %314 = sbr.rel (%p312) target = $region40
      $region39: #{tpu_custom_call.1} parent=11 // pred_region
        _
      $region40: #{tpu_custom_call.1} parent=11 // pred_fallthru
        _
      // Predicated region
      $region41: #{tpu_custom_call.1} parent=11 // pred_check
        %p315 = pneg %p211
      $region42: #{tpu_custom_call.1} parent=11 // pred_check_branch
        %317 = sbr.rel (%p315) target = $region44
      $region43: #{tpu_custom_call.1} parent=11 // pred_region
        _
      $region44: #{tpu_custom_call.1} parent=11 // pred_fallthru
        _
      // Predicated region
      $region45: #{tpu_custom_call.1} parent=11 // pred_check
        %p318 = pneg %p232
      $region46: #{tpu_custom_call.1} parent=11 // pred_check_branch
        %320 = sbr.rel (%p318) target = $region48
      $region47: #{tpu_custom_call.1} parent=11 // pred_region
        _
      $region48: #{tpu_custom_call.1} parent=11 // pred_fallthru
        _
      // Predicated region
      $region49: #{tpu_custom_call.1} parent=11 // pred_check
        %p321 = pneg %p253
      $region50: #{tpu_custom_call.1} parent=11 // pred_check_branch
        %323 = sbr.rel (%p321) target = $region52
      $region51: #{tpu_custom_call.1} parent=11 // pred_region
        _
      $region52: #{tpu_custom_call.1} parent=11 // pred_fallthru
        _
    $region12: #{tpu_custom_call.1} parent=5 // pred_fallthru
      _
    %p324 = scmp.lt.s32.totalorder %s17, 2
    // Predicated region
    $region53: #{tpu_custom_call.1} parent=5 // pred_check
      %p325 = pneg %p324
    $region54: #{tpu_custom_call.1} parent=5 // pred_check_branch
      %327 = sbr.rel (%p325) target = $region56
    $region55: #{tpu_custom_call.1} parent=5 // pred_region
      // Predicated region
      $region57: #{tpu_custom_call.1} parent=55 // pred_check
        %p328 = pneg %p37
      $region58: #{tpu_custom_call.1} parent=55 // pred_check_branch
        %330 = sbr.rel (%p328) target = $region60
      $region59: #{tpu_custom_call.1} parent=55 // pred_region
        %p331 = scmp.lt.s32.totalorder %s17, 1
        %s332 = scalar_select %p331, %s17, 1
        %s333 = smul.addr %s332, 32
        %s334 = smul.addr %s333, 8
        %s335 = scalar_lea.vmem %s0, %s334
      $region60: #{tpu_custom_call.1} parent=55 // pred_fallthru
        _
    $region56: #{tpu_custom_call.1} parent=5 // pred_fallthru
      _
    %p336 = scmp.le.s32.totalorder 1, %s17
    %p337 = scmp.lt.s32.totalorder %s17, 3
    %p338 = pnand %p336, %p337
    %p339 = pneg %p338
    // Predicated region
    $region61: #{tpu_custom_call.1} parent=5 // pred_check
      _
    $region62: #{tpu_custom_call.1} parent=5 // pred_check_branch
      %341 = sbr.rel (%p338) target = $region64
    $region63: #{tpu_custom_call.1} parent=5 // pred_region
      %s342 = ssub.s32 %s17, 1
      %p343 = scmp.lt.s32.totalorder %s22, 1
      %s344 = scalar_select %p343, %s22, 1
      %s345 = smul.addr %s344, 32
      %s346 = smul.addr %s345, 8
      %s347 = scalar_lea.vmem %s0, %s346
      %p348 = pneg %p43
      %p349 = pneg %p40
      %p350 = pneg %p64
      %p351 = pneg %p61
      %p352 = pneg %p85
      %p353 = pneg %p82
      %p354 = pneg %p106
      %p355 = pneg %p103
      %p356 = pneg %p127
      %p357 = pneg %p124
      %p358 = pneg %p148
      %p359 = pneg %p145
      %p360 = pneg %p169
      %p361 = pneg %p166
      %p362 = pneg %p190
      %p363 = pneg %p187
      %p364 = pneg %p211
      %p365 = pneg %p208
      %p366 = pneg %p232
      %p367 = pneg %p229
      %p368 = pneg %p253
      %p369 = pneg %p250
      %p370 = pneg %p279
      %p371 = pneg %p276
      %p372 = scmp.lt.s32.totalorder %s22, 1
      %s373 = scalar_select %p372, %s22, 1
      %s374 = smul.addr %s373, 32
      %s375 = smul.addr %s374, 8
      %s376 = scalar_lea.vmem %s11, %s375
      %p377 = scmp.lt.s32.totalorder %s22, 1
      %s378 = scalar_select %p377, %s22, 1
      %s379 = smul.addr %s378, 32
      %s380 = smul.addr %s379, 8
      %s381 = scalar_lea.vmem %s0, %s380
      %p382 = scmp.lt.s32.totalorder %s22, 1
      %s383 = scalar_select %p382, %s22, 1
      %s384 = smul.addr %s383, 32
      %s385 = smul.addr %s384, 8
      %s386 = scalar_lea.vmem %s11, %s385
      %v388 = vld [vmem:[%s381] sm:$0xff]
      %v389 = vld [vmem:[%s381 + $0x8] sm:$0xff]
      %v390 = vld [vmem:[%s381 + $0x10] sm:$0xff]
      %v391 = vld [vmem:[%s381 + $0x18] sm:$0xff]
      %v392 = vld [vmem:[%s381 + $0x20] sm:$0xff]
      %v393 = vld [vmem:[%s381 + $0x28] sm:$0xff]
      %v394 = vld [vmem:[%s381 + $0x30] sm:$0xff]
      %v395 = vld [vmem:[%s381 + $0x38] sm:$0xff]
      %v396 = vld [vmem:[%s381 + $0x40] sm:$0xff]
      %v397 = vld [vmem:[%s381 + $0x48] sm:$0xff]
      %v398 = vld [vmem:[%s381 + $0x50] sm:$0xff]
      %v399 = vld [vmem:[%s381 + $0x58] sm:$0xff]
      %v400 = vld [vmem:[%s381 + $0x60] sm:$0xff]
      %v401 = vld [vmem:[%s381 + $0x68] sm:$0xff]
      %v402 = vld [vmem:[%s381 + $0x70] sm:$0xff]
      %v403 = vld [vmem:[%s381 + $0x78] sm:$0xff]
      %v404 = vld [vmem:[%s381 + $0x80] sm:$0xff]
      %v405 = vld [vmem:[%s381 + $0x88] sm:$0xff]
      %v406 = vld [vmem:[%s381 + $0x90] sm:$0xff]
      %v407 = vld [vmem:[%s381 + $0x98] sm:$0xff]
      %v408 = vld [vmem:[%s381 + $0xa0] sm:$0xff]
      %v409 = vld [vmem:[%s381 + $0xa8] sm:$0xff]
      %v410 = vld [vmem:[%s381 + $0xb0] sm:$0xff]
      %v411 = vld [vmem:[%s381 + $0xb8] sm:$0xff]
      %v412 = vld [vmem:[%s381 + $0xc0] sm:$0xff]
      %v413 = vld [vmem:[%s381 + $0xc8] sm:$0xff]
      %v414 = vld [vmem:[%s381 + $0xd0] sm:$0xff]
      %v415 = vld [vmem:[%s381 + $0xd8] sm:$0xff]
      %v416 = vld [vmem:[%s381 + $0xe0] sm:$0xff]
      %v417 = vld [vmem:[%s381 + $0xe8] sm:$0xff]
      %v418 = vld [vmem:[%s381 + $0xf0] sm:$0xff]
      %v419 = vld [vmem:[%s381 + $0xf8] sm:$0xff]
      %v420 = vpack.c.bf16 %v389, %v388
      %v421 = vpack.c.bf16 %v391, %v390
      %v422 = vpack.c.bf16 %v393, %v392
      %v423 = vpack.c.bf16 %v395, %v394
      %v424 = vpack.c.bf16 %v397, %v396
      %v425 = vpack.c.bf16 %v399, %v398
      %v426 = vpack.c.bf16 %v401, %v400
      %v427 = vpack.c.bf16 %v403, %v402
      %v428 = vpack.c.bf16 %v405, %v404
      %v429 = vpack.c.bf16 %v407, %v406
      %v430 = vpack.c.bf16 %v409, %v408
      %v431 = vpack.c.bf16 %v411, %v410
      %v432 = vpack.c.bf16 %v413, %v412
      %v433 = vpack.c.bf16 %v415, %v414
      %v434 = vpack.c.bf16 %v417, %v416
      %v435 = vpack.c.bf16 %v419, %v418
      %v436 = vld [vmem:[%s1] sm:$0xf]
      %v437 = vld [vmem:[%s1 + $0x4] sm:$0xf]
      %v438 = vld [vmem:[%s1 + $0x8] sm:$0xf]
      %v439 = vld [vmem:[%s1 + $0xc] sm:$0xf]
      %v440 = vld [vmem:[%s4] sm:$0x1]
      %v442 = vlaneseq
      %v443 = vshrl.u32 %v442, 7
      %v444 = vsub.s32 0, %v443
      %v445 = vrot.slane %v440, %v444
      %v451 = vunpack.c.l.b16 %v436
      %v452 = vunpack.c.l.b16 %v437
      %v453 = vunpack.c.l.b16 %v438
      %v454 = vunpack.c.l.b16 %v439
      %v455 = vpack.c.b16 %v452, %v451
      %v456 = vpack.c.b16 %v454, %v453
      %vm459 = vcmask 261120
      %v461 = vsel %vm459, %v420, 0
      %v464 = vsel %vm459, %v421, 0
      %v467 = vsel %vm459, %v422, 0
      %v470 = vsel %vm459, %v423, 0
      %v473 = vsel %vm459, %v424, 0
      %v476 = vsel %vm459, %v425, 0
      %v479 = vsel %vm459, %v426, 0
      %v482 = vsel %vm459, %v427, 0
      %v485 = vsel %vm459, %v428, 0
      %v488 = vsel %vm459, %v429, 0
      %v491 = vsel %vm459, %v430, 0
      %v494 = vsel %vm459, %v431, 0
      %v497 = vsel %vm459, %v432, 0
      %v500 = vsel %vm459, %v433, 0
      %v503 = vsel %vm459, %v434, 0
      %v506 = vsel %vm459, %v435, 0
      %508 = vmatprep.subr.bf16.mxu0 0
      %509 = vmatpush1.bf16.msra.mxu0 %v455
      %510 = vmatprep.subr.bf16.mxu0 0
      %511 = vmatpush1.bf16.msra.mxu0 %v456
      %512 = vmatprep.subr.bf16.mxu0 0
      %513 = vmatpush1.bf16.msra.mxu0 0
      %514 = vmatprep.subr.bf16.mxu0 0
      %515 = vmatpush1.bf16.msra.mxu0 0
      %516 = vmatprep.subr.bf16.mxu0 0
      %517 = vmatpush1.bf16.msra.mxu0 0
      %518 = vmatprep.subr.bf16.mxu0 0
      %519 = vmatpush1.bf16.msra.mxu0 0
      %520 = vmatprep.subr.bf16.mxu0 0
      %521 = vmatpush1.bf16.msra.mxu0 0
      %522 = vmatprep.subr.bf16.mxu0 0
      %523 = vmatpush1.bf16.msra.mxu0 0
      %524 = vmatprep.subr.bf16.mxu0 0
      %525 = vmatpush1.bf16.msra.mxu0 0
      %526 = vmatprep.subr.bf16.mxu0 0
      %527 = vmatpush1.bf16.msra.mxu0 0
      %528 = vmatprep.subr.bf16.mxu0 0
      %529 = vmatpush1.bf16.msra.mxu0 0
      %530 = vmatprep.subr.bf16.mxu0 0
      %531 = vmatpush1.bf16.msra.mxu0 0
      %532 = vmatprep.subr.bf16.mxu0 0
      %533 = vmatpush1.bf16.msra.mxu0 0
      %534 = vmatprep.subr.bf16.mxu0 0
      %535 = vmatpush1.bf16.msra.mxu0 0
      %536 = vmatprep.subr.bf16.mxu0 0
      %537 = vmatpush1.bf16.msra.mxu0 0
      %538 = vmatprep.subr.bf16.mxu0 0
      %539 = vmatpush1.bf16.msra.mxu0 0
      %540 = vmatprep.mubr.bf16.mxu0 0
      %541 = vmatmul.mubr.bf16.gmra.mrb[0].mxu0 %v461
      %v542 = vpop.f32.mrb[0].mxu0
      %v543 = vadd.f32 %v445, %v542
      %v544 = vpop.f32.mrb[0].mxu0
      %v545 = vpop.f32.mrb[0].mxu0
      %v546 = vadd.f32 %v445, %v545
      %v547 = vpop.f32.mrb[0].mxu0
      %548 = vmatprep.mubr.bf16.mxu0 0
      %549 = vmatmul.mubr.bf16.gmra.mrb[0].mxu0 %v464
      %v550 = vpop.f32.mrb[0].mxu0
      %v551 = vadd.f32 %v445, %v550
      %v552 = vpop.f32.mrb[0].mxu0
      %v553 = vpop.f32.mrb[0].mxu0
      %v554 = vadd.f32 %v445, %v553
      %v555 = vpop.f32.mrb[0].mxu0
      %556 = vmatprep.mubr.bf16.mxu0 0
      %557 = vmatmul.mubr.bf16.gmra.mrb[0].mxu0 %v467
      %v558 = vpop.f32.mrb[0].mxu0
      %v559 = vadd.f32 %v445, %v558
      %v560 = vpop.f32.mrb[0].mxu0
      %v561 = vpop.f32.mrb[0].mxu0
      %v562 = vadd.f32 %v445, %v561
      %v563 = vpop.f32.mrb[0].mxu0
      %564 = vmatprep.mubr.bf16.mxu0 0
      %565 = vmatmul.mubr.bf16.gmra.mrb[0].mxu0 %v470
      %v566 = vpop.f32.mrb[0].mxu0
      %v567 = vadd.f32 %v445, %v566
      %v568 = vpop.f32.mrb[0].mxu0
      %v569 = vpop.f32.mrb[0].mxu0
      %v570 = vadd.f32 %v445, %v569
      %v571 = vpop.f32.mrb[0].mxu0
      %572 = vmatprep.mubr.bf16.mxu0 0
      %573 = vmatmul.mubr.bf16.gmra.mrb[0].mxu0 %v473
      %v574 = vpop.f32.mrb[0].mxu0
      %v575 = vadd.f32 %v445, %v574
      %v576 = vpop.f32.mrb[0].mxu0
      %v577 = vpop.f32.mrb[0].mxu0
      %v578 = vadd.f32 %v445, %v577
      %v579 = vpop.f32.mrb[0].mxu0
      %580 = vmatprep.mubr.bf16.mxu0 0
      %581 = vmatmul.mubr.bf16.gmra.mrb[0].mxu0 %v476
      %v582 = vpop.f32.mrb[0].mxu0
      %v583 = vadd.f32 %v445, %v582
      %v584 = vpop.f32.mrb[0].mxu0
      %v585 = vpop.f32.mrb[0].mxu0
      %v586 = vadd.f32 %v445, %v585
      %v587 = vpop.f32.mrb[0].mxu0
      %588 = vmatprep.mubr.bf16.mxu0 0
      %589 = vmatmul.mubr.bf16.gmra.mrb[0].mxu0 %v479
      %v590 = vpop.f32.mrb[0].mxu0
      %v591 = vadd.f32 %v445, %v590
      %v592 = vpop.f32.mrb[0].mxu0
      %v593 = vpop.f32.mrb[0].mxu0
      %v594 = vadd.f32 %v445, %v593
      %v595 = vpop.f32.mrb[0].mxu0
      %596 = vmatprep.mubr.bf16.mxu0 0
      %597 = vmatmul.mubr.bf16.gmra.mrb[0].mxu0 %v482
      %v598 = vpop.f32.mrb[0].mxu0
      %v599 = vadd.f32 %v445, %v598
      %v600 = vpop.f32.mrb[0].mxu0
      %v601 = vpop.f32.mrb[0].mxu0
      %v602 = vadd.f32 %v445, %v601
      %v603 = vpop.f32.mrb[0].mxu0
      %604 = vmatprep.mubr.bf16.mxu0 0
      %605 = vmatmul.mubr.bf16.gmra.mrb[0].mxu0 %v485
      %v606 = vpop.f32.mrb[0].mxu0
      %v607 = vadd.f32 %v445, %v606
      %v608 = vpop.f32.mrb[0].mxu0
      %v609 = vpop.f32.mrb[0].mxu0
      %v610 = vadd.f32 %v445, %v609
      %v611 = vpop.f32.mrb[0].mxu0
      %612 = vmatprep.mubr.bf16.mxu0 0
      %613 = vmatmul.mubr.bf16.gmra.mrb[0].mxu0 %v488
      %v614 = vpop.f32.mrb[0].mxu0
      %v615 = vadd.f32 %v445, %v614
      %v616 = vpop.f32.mrb[0].mxu0
      %v617 = vpop.f32.mrb[0].mxu0
      %v618 = vadd.f32 %v445, %v617
      %v619 = vpop.f32.mrb[0].mxu0
      %620 = vmatprep.mubr.bf16.mxu0 0
      %621 = vmatmul.mubr.bf16.gmra.mrb[0].mxu0 %v491
      %v622 = vpop.f32.mrb[0].mxu0
      %v623 = vadd.f32 %v445, %v622
      %v624 = vpop.f32.mrb[0].mxu0
      %v625 = vpop.f32.mrb[0].mxu0
      %v626 = vadd.f32 %v445, %v625
      %v627 = vpop.f32.mrb[0].mxu0
      %628 = vmatprep.mubr.bf16.mxu0 0
      %629 = vmatmul.mubr.bf16.gmra.mrb[0].mxu0 %v494
      %v630 = vpop.f32.mrb[0].mxu0
      %v631 = vadd.f32 %v445, %v630
      %v632 = vpop.f32.mrb[0].mxu0
      %v633 = vpop.f32.mrb[0].mxu0
      %v634 = vadd.f32 %v445, %v633
      %v635 = vpop.f32.mrb[0].mxu0
      %636 = vmatprep.mubr.bf16.mxu0 0
      %637 = vmatmul.mubr.bf16.gmra.mrb[0].mxu0 %v497
      %v638 = vpop.f32.mrb[0].mxu0
      %v639 = vadd.f32 %v445, %v638
      %v640 = vpop.f32.mrb[0].mxu0
      %v641 = vpop.f32.mrb[0].mxu0
      %v642 = vadd.f32 %v445, %v641
      %v643 = vpop.f32.mrb[0].mxu0
      %644 = vmatprep.mubr.bf16.mxu0 0
      %645 = vmatmul.mubr.bf16.gmra.mrb[0].mxu0 %v500
      %v646 = vpop.f32.mrb[0].mxu0
      %v647 = vadd.f32 %v445, %v646
      %v648 = vpop.f32.mrb[0].mxu0
      %v649 = vpop.f32.mrb[0].mxu0
      %v650 = vadd.f32 %v445, %v649
      %v651 = vpop.f32.mrb[0].mxu0
      %652 = vmatprep.mubr.bf16.mxu0 0
      %653 = vmatmul.mubr.bf16.gmra.mrb[0].mxu0 %v503
      %v654 = vpop.f32.mrb[0].mxu0
      %v655 = vadd.f32 %v445, %v654
      %v656 = vpop.f32.mrb[0].mxu0
      %v657 = vpop.f32.mrb[0].mxu0
      %v658 = vadd.f32 %v445, %v657
      %v659 = vpop.f32.mrb[0].mxu0
      %660 = vmatprep.mubr.bf16.mxu0 0
      %661 = vmatmul.mubr.bf16.gmra.mrb[0].mxu0 %v506
      %v662 = vpop.f32.mrb[0].mxu0
      %v663 = vadd.f32 %v445, %v662
      %v664 = vpop.f32.mrb[0].mxu0
      %v665 = vpop.f32.mrb[0].mxu0
      %v666 = vadd.f32 %v445, %v665
      %v667 = vpop.f32.mrb[0].mxu0
      %668 = vdwg.mxu0
      %s669 = scalar_lea.vmem %s1, 16
      %v670 = vld [vmem:[%s669] sm:$0xf]
      %v671 = vld [vmem:[%s669 + $0x4] sm:$0xf]
      %v672 = vld [vmem:[%s669 + $0x8] sm:$0xf]
      %v673 = vld [vmem:[%s669 + $0xc] sm:$0xf]
      %s674 = scalar_lea.vmem %s4, 1
      %v675 = vld [vmem:[%s674] sm:$0x1]
      %v677 = vlaneseq
      %v678 = vshrl.u32 %v677, 7
      %v679 = vsub.s32 0, %v678
      %v680 = vrot.slane %v675, %v679
      %v686 = vunpack.c.l.b16 %v670
      %v687 = vunpack.c.l.b16 %v671
      %v688 = vunpack.c.l.b16 %v672
      %v689 = vunpack.c.l.b16 %v673
      %v690 = vpack.c.b16 %v687, %v686
      %v691 = vpack.c.b16 %v689, %v688
      %694 = vmatprep.subr.bf16.mxu0 0
      %695 = vmatpush1.bf16.msra.mxu0 %v690
      %696 = vmatprep.subr.bf16.mxu0 0
      %697 = vmatpush1.bf16.msra.mxu0 %v691
      %698 = vmatprep.subr.bf16.mxu0 0
      %699 = vmatpush1.bf16.msra.mxu0 0
      %700 = vmatprep.subr.bf16.mxu0 0
      %701 = vmatpush1.bf16.msra.mxu0 0
      %702 = vmatprep.subr.bf16.mxu0 0
      %703 = vmatpush1.bf16.msra.mxu0 0
      %704 = vmatprep.subr.bf16.mxu0 0
      %705 = vmatpush1.bf16.msra.mxu0 0
      %706 = vmatprep.subr.bf16.mxu0 0
      %707 = vmatpush1.bf16.msra.mxu0 0
      %708 = vmatprep.subr.bf16.mxu0 0
      %709 = vmatpush1.bf16.msra.mxu0 0
      %710 = vmatprep.subr.bf16.mxu0 0
      %711 = vmatpush1.bf16.msra.mxu0 0
      %712 = vmatprep.subr.bf16.mxu0 0
      %713 = vmatpush1.bf16.msra.mxu0 0
      %714 = vmatprep.subr.bf16.mxu0 0
      %715 = vmatpush1.bf16.msra.mxu0 0
      %716 = vmatprep.subr.bf16.mxu0 0
      %717 = vmatpush1.bf16.msra.mxu0 0
      %718 = vmatprep.subr.bf16.mxu0 0
      %719 = vmatpush1.bf16.msra.mxu0 0
      %720 = vmatprep.subr.bf16.mxu0 0
      %721 = vmatpush1.bf16.msra.mxu0 0
      %722 = vmatprep.subr.bf16.mxu0 0
      %723 = vmatpush1.bf16.msra.mxu0 0
      %724 = vmatprep.subr.bf16.mxu0 0
      %725 = vmatpush1.bf16.msra.mxu0 0
      %726 = vmatprep.mubr.bf16.mxu0 0
      %727 = vmatmul.mubr.bf16.gmra.mrb[0].mxu0 %v461
      %v728 = vpop.f32.mrb[0].mxu0
      %v729 = vadd.f32 %v680, %v728
      %v730 = vpop.f32.mrb[0].mxu0
      %v731 = vpop.f32.mrb[0].mxu0
      %v732 = vadd.f32 %v680, %v731
      %v733 = vpop.f32.mrb[0].mxu0
      %734 = vmatprep.mubr.bf16.mxu0 0
      %735 = vmatmul.mubr.bf16.gmra.mrb[0].mxu0 %v464
      %v736 = vpop.f32.mrb[0].mxu0
      %v737 = vadd.f32 %v680, %v736
      %v738 = vpop.f32.mrb[0].mxu0
      %v739 = vpop.f32.mrb[0].mxu0
      %v740 = vadd.f32 %v680, %v739
      %v741 = vpop.f32.mrb[0].mxu0
      %742 = vmatprep.mubr.bf16.mxu0 0
      %743 = vmatmul.mubr.bf16.gmra.mrb[0].mxu0 %v467
      %v744 = vpop.f32.mrb[0].mxu0
      %v745 = vadd.f32 %v680, %v744
      %v746 = vpop.f32.mrb[0].mxu0
      %v747 = vpop.f32.mrb[0].mxu0
      %v748 = vadd.f32 %v680, %v747
      %v749 = vpop.f32.mrb[0].mxu0
      %750 = vmatprep.mubr.bf16.mxu0 0
      %751 = vmatmul.mubr.bf16.gmra.mrb[0].mxu0 %v470
      %v752 = vpop.f32.mrb[0].mxu0
      %v753 = vadd.f32 %v680, %v752
      %v754 = vpop.f32.mrb[0].mxu0
      %v755 = vpop.f32.mrb[0].mxu0
      %v756 = vadd.f32 %v680, %v755
      %v757 = vpop.f32.mrb[0].mxu0
      %758 = vmatprep.mubr.bf16.mxu0 0
      %759 = vmatmul.mubr.bf16.gmra.mrb[0].mxu0 %v473
      %v760 = vpop.f32.mrb[0].mxu0
      %v761 = vadd.f32 %v680, %v760
      %v762 = vpop.f32.mrb[0].mxu0
      %v763 = vpop.f32.mrb[0].mxu0
      %v764 = vadd.f32 %v680, %v763
      %v765 = vpop.f32.mrb[0].mxu0
      %766 = vmatprep.mubr.bf16.mxu0 0
      %767 = vmatmul.mubr.bf16.gmra.mrb[0].mxu0 %v476
      %v768 = vpop.f32.mrb[0].mxu0
      %v769 = vadd.f32 %v680, %v768
      %v770 = vpop.f32.mrb[0].mxu0
      %v771 = vpop.f32.mrb[0].mxu0
      %v772 = vadd.f32 %v680, %v771
      %v773 = vpop.f32.mrb[0].mxu0
      %774 = vmatprep.mubr.bf16.mxu0 0
      %775 = vmatmul.mubr.bf16.gmra.mrb[0].mxu0 %v479
      %v776 = vpop.f32.mrb[0].mxu0
      %v777 = vadd.f32 %v680, %v776
      %v778 = vpop.f32.mrb[0].mxu0
      %v779 = vpop.f32.mrb[0].mxu0
      %v780 = vadd.f32 %v680, %v779
      %v781 = vpop.f32.mrb[0].mxu0
      %782 = vmatprep.mubr.bf16.mxu0 0
      %783 = vmatmul.mubr.bf16.gmra.mrb[0].mxu0 %v482
      %v784 = vpop.f32.mrb[0].mxu0
      %v785 = vadd.f32 %v680, %v784
      %v786 = vpop.f32.mrb[0].mxu0
      %v787 = vpop.f32.mrb[0].mxu0
      %v788 = vadd.f32 %v680, %v787
      %v789 = vpop.f32.mrb[0].mxu0
      %790 = vmatprep.mubr.bf16.mxu0 0
      %791 = vmatmul.mubr.bf16.gmra.mrb[0].mxu0 %v485
      %v792 = vpop.f32.mrb[0].mxu0
      %v793 = vadd.f32 %v680, %v792
      %v794 = vpop.f32.mrb[0].mxu0
      %v795 = vpop.f32.mrb[0].mxu0
      %v796 = vadd.f32 %v680, %v795
      %v797 = vpop.f32.mrb[0].mxu0
      %798 = vmatprep.mubr.bf16.mxu0 0
      %799 = vmatmul.mubr.bf16.gmra.mrb[0].mxu0 %v488
      %v800 = vpop.f32.mrb[0].mxu0
      %v801 = vadd.f32 %v680, %v800
      %v802 = vpop.f32.mrb[0].mxu0
      %v803 = vpop.f32.mrb[0].mxu0
      %v804 = vadd.f32 %v680, %v803
      %v805 = vpop.f32.mrb[0].mxu0
      %806 = vmatprep.mubr.bf16.mxu0 0
      %807 = vmatmul.mubr.bf16.gmra.mrb[0].mxu0 %v491
      %v808 = vpop.f32.mrb[0].mxu0
      %v809 = vadd.f32 %v680, %v808
      %v810 = vpop.f32.mrb[0].mxu0
      %v811 = vpop.f32.mrb[0].mxu0
      %v812 = vadd.f32 %v680, %v811
      %v813 = vpop.f32.mrb[0].mxu0
      %814 = vmatprep.mubr.bf16.mxu0 0
      %815 = vmatmul.mubr.bf16.gmra.mrb[0].mxu0 %v494
      %v816 = vpop.f32.mrb[0].mxu0
      %v817 = vadd.f32 %v680, %v816
      %v818 = vpop.f32.mrb[0].mxu0
      %v819 = vpop.f32.mrb[0].mxu0
      %v820 = vadd.f32 %v680, %v819
      %v821 = vpop.f32.mrb[0].mxu0
      %822 = vmatprep.mubr.bf16.mxu0 0
      %823 = vmatmul.mubr.bf16.gmra.mrb[0].mxu0 %v497
      %v824 = vpop.f32.mrb[0].mxu0
      %v825 = vadd.f32 %v680, %v824
      %v826 = vpop.f32.mrb[0].mxu0
      %v827 = vpop.f32.mrb[0].mxu0
      %v828 = vadd.f32 %v680, %v827
      %v829 = vpop.f32.mrb[0].mxu0
      %830 = vmatprep.mubr.bf16.mxu0 0
      %831 = vmatmul.mubr.bf16.gmra.mrb[0].mxu0 %v500
      %v832 = vpop.f32.mrb[0].mxu0
      %v833 = vadd.f32 %v680, %v832
      %v834 = vpop.f32.mrb[0].mxu0
      %v835 = vpop.f32.mrb[0].mxu0
      %v836 = vadd.f32 %v680, %v835
      %v837 = vpop.f32.mrb[0].mxu0
      %838 = vmatprep.mubr.bf16.mxu0 0
      %839 = vmatmul.mubr.bf16.gmra.mrb[0].mxu0 %v503
      %v840 = vpop.f32.mrb[0].mxu0
      %v841 = vadd.f32 %v680, %v840
      %v842 = vpop.f32.mrb[0].mxu0
      %v843 = vpop.f32.mrb[0].mxu0
      %v844 = vadd.f32 %v680, %v843
      %v845 = vpop.f32.mrb[0].mxu0
      %846 = vmatprep.mubr.bf16.mxu0 0
      %847 = vmatmul.mubr.bf16.gmra.mrb[0].mxu0 %v506
      %v848 = vpop.f32.mrb[0].mxu0
      %v849 = vadd.f32 %v680, %v848
      %v850 = vpop.f32.mrb[0].mxu0
      %v851 = vpop.f32.mrb[0].mxu0
      %v852 = vadd.f32 %v680, %v851
      %v853 = vpop.f32.mrb[0].mxu0
      %854 = vdwg.mxu0
      %s855 = scalar_lea.vmem %s1, 32
      %v856 = vld [vmem:[%s855] sm:$0xf]
      %v857 = vld [vmem:[%s855 + $0x4] sm:$0xf]
      %v858 = vld [vmem:[%s855 + $0x8] sm:$0xf]
      %v859 = vld [vmem:[%s855 + $0xc] sm:$0xf]
      %s860 = scalar_lea.vmem %s4, 2
      %v861 = vld [vmem:[%s860] sm:$0x1]
      %v863 = vlaneseq
      %v864 = vshrl.u32 %v863, 7
      %v865 = vsub.s32 0, %v864
      %v866 = vrot.slane %v861, %v865
      %v872 = vunpack.c.l.b16 %v856
      %v873 = vunpack.c.l.b16 %v857
      %v874 = vunpack.c.l.b16 %v858
      %v875 = vunpack.c.l.b16 %v859
      %v876 = vpack.c.b16 %v873, %v872
      %v877 = vpack.c.b16 %v875, %v874
      %880 = vmatprep.subr.bf16.mxu0 0
      %881 = vmatpush1.bf16.msra.mxu0 %v876
      %882 = vmatprep.subr.bf16.mxu0 0
      %883 = vmatpush1.bf16.msra.mxu0 %v877
      %884 = vmatprep.subr.bf16.mxu0 0
      %885 = vmatpush1.bf16.msra.mxu0 0
      %886 = vmatprep.subr.bf16.mxu0 0
      %887 = vmatpush1.bf16.msra.mxu0 0
      %888 = vmatprep.subr.bf16.mxu0 0
      %889 = vmatpush1.bf16.msra.mxu0 0
      %890 = vmatprep.subr.bf16.mxu0 0
      %891 = vmatpush1.bf16.msra.mxu0 0
      %892 = vmatprep.subr.bf16.mxu0 0
      %893 = vmatpush1.bf16.msra.mxu0 0
      %894 = vmatprep.subr.bf16.mxu0 0
      %895 = vmatpush1.bf16.msra.mxu0 0
      %896 = vmatprep.subr.bf16.mxu0 0
      %897 = vmatpush1.bf16.msra.mxu0 0
      %898 = vmatprep.subr.bf16.mxu0 0
      %899 = vmatpush1.bf16.msra.mxu0 0
      %900 = vmatprep.subr.bf16.mxu0 0
      %901 = vmatpush1.bf16.msra.mxu0 0
      %902 = vmatprep.subr.bf16.mxu0 0
      %903 = vmatpush1.bf16.msra.mxu0 0
      %904 = vmatprep.subr.bf16.mxu0 0
      %905 = vmatpush1.bf16.msra.mxu0 0
      %906 = vmatprep.subr.bf16.mxu0 0
      %907 = vmatpush1.bf16.msra.mxu0 0
      %908 = vmatprep.subr.bf16.mxu0 0
      %909 = vmatpush1.bf16.msra.mxu0 0
      %910 = vmatprep.subr.bf16.mxu0 0
      %911 = vmatpush1.bf16.msra.mxu0 0
      %912 = vmatprep.mubr.bf16.mxu0 0
      %913 = vmatmul.mubr.bf16.gmra.mrb[0].mxu0 %v461
      %v914 = vpop.f32.mrb[0].mxu0
      %v915 = vadd.f32 %v866, %v914
      %v916 = vpop.f32.mrb[0].mxu0
      %v917 = vpop.f32.mrb[0].mxu0
      %v918 = vadd.f32 %v866, %v917
      %v919 = vpop.f32.mrb[0].mxu0
      %920 = vmatprep.mubr.bf16.mxu0 0
      %921 = vmatmul.mubr.bf16.gmra.mrb[0].mxu0 %v464
      %v922 = vpop.f32.mrb[0].mxu0
      %v923 = vadd.f32 %v866, %v922
      %v924 = vpop.f32.mrb[0].mxu0
      %v925 = vpop.f32.mrb[0].mxu0
      %v926 = vadd.f32 %v866, %v925
      %v927 = vpop.f32.mrb[0].mxu0
      %928 = vmatprep.mubr.bf16.mxu0 0
      %929 = vmatmul.mubr.bf16.gmra.mrb[0].mxu0 %v467
      %v930 = vpop.f32.mrb[0].mxu0
      %v931 = vadd.f32 %v866, %v930
      %v932 = vpop.f32.mrb[0].mxu0
      %v933 = vpop.f32.mrb[0].mxu0
      %v934 = vadd.f32 %v866, %v933
      %v935 = vpop.f32.mrb[0].mxu0
      %936 = vmatprep.mubr.bf16.mxu0 0
      %937 = vmatmul.mubr.bf16.gmra.mrb[0].mxu0 %v470
      %v938 = vpop.f32.mrb[0].mxu0
      %v939 = vadd.f32 %v866, %v938
      %v940 = vpop.f32.mrb[0].mxu0
      %v941 = vpop.f32.mrb[0].mxu0
      %v942 = vadd.f32 %v866, %v941
      %v943 = vpop.f32.mrb[0].mxu0
      %944 = vmatprep.mubr.bf16.mxu0 0
      %945 = vmatmul.mubr.bf16.gmra.mrb[0].mxu0 %v473
      %v946 = vpop.f32.mrb[0].mxu0
      %v947 = vadd.f32 %v866, %v946
      %v948 = vpop.f32.mrb[0].mxu0
      %v949 = vpop.f32.mrb[0].mxu0
      %v950 = vadd.f32 %v866, %v949
      %v951 = vpop.f32.mrb[0].mxu0
      %952 = vmatprep.mubr.bf16.mxu0 0
      %953 = vmatmul.mubr.bf16.gmra.mrb[0].mxu0 %v476
      %v954 = vpop.f32.mrb[0].mxu0
      %v955 = vadd.f32 %v866, %v954
      %v956 = vpop.f32.mrb[0].mxu0
      %v957 = vpop.f32.mrb[0].mxu0
      %v958 = vadd.f32 %v866, %v957
      %v959 = vpop.f32.mrb[0].mxu0
      %960 = vmatprep.mubr.bf16.mxu0 0
      %961 = vmatmul.mubr.bf16.gmra.mrb[0].mxu0 %v479
      %v962 = vpop.f32.mrb[0].mxu0
      %v963 = vadd.f32 %v866, %v962
      %v964 = vpop.f32.mrb[0].mxu0
      %v965 = vpop.f32.mrb[0].mxu0
      %v966 = vadd.f32 %v866, %v965
      %v967 = vpop.f32.mrb[0].mxu0
      %968 = vmatprep.mubr.bf16.mxu0 0
      %969 = vmatmul.mubr.bf16.gmra.mrb[0].mxu0 %v482
      %v970 = vpop.f32.mrb[0].mxu0
      %v971 = vadd.f32 %v866, %v970
      %v972 = vpop.f32.mrb[0].mxu0
      %v973 = vpop.f32.mrb[0].mxu0
      %v974 = vadd.f32 %v866, %v973
      %v975 = vpop.f32.mrb[0].mxu0
      %976 = vmatprep.mubr.bf16.mxu0 0
      %977 = vmatmul.mubr.bf16.gmra.mrb[0].mxu0 %v485
      %v978 = vpop.f32.mrb[0].mxu0
      %v979 = vadd.f32 %v866, %v978
      %v980 = vpop.f32.mrb[0].mxu0
      %v981 = vpop.f32.mrb[0].mxu0
      %v982 = vadd.f32 %v866, %v981
      %v983 = vpop.f32.mrb[0].mxu0
      %984 = vmatprep.mubr.bf16.mxu0 0
      %985 = vmatmul.mubr.bf16.gmra.mrb[0].mxu0 %v488
      %v986 = vpop.f32.mrb[0].mxu0
      %v987 = vadd.f32 %v866, %v986
      %v988 = vpop.f32.mrb[0].mxu0
      %v989 = vpop.f32.mrb[0].mxu0
      %v990 = vadd.f32 %v866, %v989
      %v991 = vpop.f32.mrb[0].mxu0
      %992 = vmatprep.mubr.bf16.mxu0 0
      %993 = vmatmul.mubr.bf16.gmra.mrb[0].mxu0 %v491
      %v994 = vpop.f32.mrb[0].mxu0
      %v995 = vadd.f32 %v866, %v994
      %v996 = vpop.f32.mrb[0].mxu0
      %v997 = vpop.f32.mrb[0].mxu0
      %v998 = vadd.f32 %v866, %v997
      %v999 = vpop.f32.mrb[0].mxu0
      %1000 = vmatprep.mubr.bf16.mxu0 0
      %1001 = vmatmul.mubr.bf16.gmra.mrb[0].mxu0 %v494
      %v1002 = vpop.f32.mrb[0].mxu0
      %v1003 = vadd.f32 %v866, %v1002
      %v1004 = vpop.f32.mrb[0].mxu0
      %v1005 = vpop.f32.mrb[0].mxu0
      %v1006 = vadd.f32 %v866, %v1005
      %v1007 = vpop.f32.mrb[0].mxu0
      %1008 = vmatprep.mubr.bf16.mxu0 0
      %1009 = vmatmul.mubr.bf16.gmra.mrb[0].mxu0 %v497
      %v1010 = vpop.f32.mrb[0].mxu0
      %v1011 = vadd.f32 %v866, %v1010
      %v1012 = vpop.f32.mrb[0].mxu0
      %v1013 = vpop.f32.mrb[0].mxu0
      %v1014 = vadd.f32 %v866, %v1013
      %v1015 = vpop.f32.mrb[0].mxu0
      %1016 = vmatprep.mubr.bf16.mxu0 0
      %1017 = vmatmul.mubr.bf16.gmra.mrb[0].mxu0 %v500
      %v1018 = vpop.f32.mrb[0].mxu0
      %v1019 = vadd.f32 %v866, %v1018
      %v1020 = vpop.f32.mrb[0].mxu0
      %v1021 = vpop.f32.mrb[0].mxu0
      %v1022 = vadd.f32 %v866, %v1021
      %v1023 = vpop.f32.mrb[0].mxu0
      %1024 = vmatprep.mubr.bf16.mxu0 0
      %1025 = vmatmul.mubr.bf16.gmra.mrb[0].mxu0 %v503
      %v1026 = vpop.f32.mrb[0].mxu0
      %v1027 = vadd.f32 %v866, %v1026
      %v1028 = vpop.f32.mrb[0].mxu0
      %v1029 = vpop.f32.mrb[0].mxu0
      %v1030 = vadd.f32 %v866, %v1029
      %v1031 = vpop.f32.mrb[0].mxu0
      %1032 = vmatprep.mubr.bf16.mxu0 0
      %1033 = vmatmul.mubr.bf16.gmra.mrb[0].mxu0 %v506
      %v1034 = vpop.f32.mrb[0].mxu0
      %v1035 = vadd.f32 %v866, %v1034
      %v1036 = vpop.f32.mrb[0].mxu0
      %v1037 = vpop.f32.mrb[0].mxu0
      %v1038 = vadd.f32 %v866, %v1037
      %v1039 = vpop.f32.mrb[0].mxu0
      %1040 = vdwg.mxu0
      %s1041 = scalar_lea.vmem %s1, 48
      %v1042 = vld [vmem:[%s1041] sm:$0xf]
      %v1043 = vld [vmem:[%s1041 + $0x4] sm:$0xf]
      %v1044 = vld [vmem:[%s1041 + $0x8] sm:$0xf]
      %v1045 = vld [vmem:[%s1041 + $0xc] sm:$0xf]
      %s1046 = scalar_lea.vmem %s4, 3
      %v1047 = vld [vmem:[%s1046] sm:$0x1]
      %v1049 = vlaneseq
      %v1050 = vshrl.u32 %v1049, 7
      %v1051 = vsub.s32 0, %v1050
      %v1052 = vrot.slane %v1047, %v1051
      %v1058 = vunpack.c.l.b16 %v1042
      %v1059 = vunpack.c.l.b16 %v1043
      %v1060 = vunpack.c.l.b16 %v1044
      %v1061 = vunpack.c.l.b16 %v1045
      %v1062 = vpack.c.b16 %v1059, %v1058
      %v1063 = vpack.c.b16 %v1061, %v1060
      %1066 = vmatprep.subr.bf16.mxu0 0
      %1067 = vmatpush1.bf16.msra.mxu0 %v1062
      %1068 = vmatprep.subr.bf16.mxu0 0
      %1069 = vmatpush1.bf16.msra.mxu0 %v1063
      %1070 = vmatprep.subr.bf16.mxu0 0
      %1071 = vmatpush1.bf16.msra.mxu0 0
      %1072 = vmatprep.subr.bf16.mxu0 0
      %1073 = vmatpush1.bf16.msra.mxu0 0
      %1074 = vmatprep.subr.bf16.mxu0 0
      %1075 = vmatpush1.bf16.msra.mxu0 0
      %1076 = vmatprep.subr.bf16.mxu0 0
      %1077 = vmatpush1.bf16.msra.mxu0 0
      %1078 = vmatprep.subr.bf16.mxu0 0
      %1079 = vmatpush1.bf16.msra.mxu0 0
      %1080 = vmatprep.subr.bf16.mxu0 0
      %1081 = vmatpush1.bf16.msra.mxu0 0
      %1082 = vmatprep.subr.bf16.mxu0 0
      %1083 = vmatpush1.bf16.msra.mxu0 0
      %1084 = vmatprep.subr.bf16.mxu0 0
      %1085 = vmatpush1.bf16.msra.mxu0 0
      %1086 = vmatprep.subr.bf16.mxu0 0
      %1087 = vmatpush1.bf16.msra.mxu0 0
      %1088 = vmatprep.subr.bf16.mxu0 0
      %1089 = vmatpush1.bf16.msra.mxu0 0
      %1090 = vmatprep.subr.bf16.mxu0 0
      %1091 = vmatpush1.bf16.msra.mxu0 0
      %1092 = vmatprep.subr.bf16.mxu0 0
      %1093 = vmatpush1.bf16.msra.mxu0 0
      %1094 = vmatprep.subr.bf16.mxu0 0
      %1095 = vmatpush1.bf16.msra.mxu0 0
      %1096 = vmatprep.subr.bf16.mxu0 0
      %1097 = vmatpush1.bf16.msra.mxu0 0
      %1098 = vmatprep.mubr.bf16.mxu0 0
      %1099 = vmatmul.mubr.bf16.gmra.mrb[0].mxu0 %v461
      %v1100 = vpop.f32.mrb[0].mxu0
      %v1101 = vadd.f32 %v1052, %v1100
      %v1102 = vpop.f32.mrb[0].mxu0
      %v1103 = vpop.f32.mrb[0].mxu0
      %v1104 = vadd.f32 %v1052, %v1103
      %v1105 = vpop.f32.mrb[0].mxu0
      %1106 = vmatprep.mubr.bf16.mxu0 0
      %1107 = vmatmul.mubr.bf16.gmra.mrb[0].mxu0 %v464
      %v1108 = vpop.f32.mrb[0].mxu0
      %v1109 = vadd.f32 %v1052, %v1108
      %v1110 = vpop.f32.mrb[0].mxu0
      %v1111 = vpop.f32.mrb[0].mxu0
      %v1112 = vadd.f32 %v1052, %v1111
      %v1113 = vpop.f32.mrb[0].mxu0
      %1114 = vmatprep.mubr.bf16.mxu0 0
      %1115 = vmatmul.mubr.bf16.gmra.mrb[0].mxu0 %v467
      %v1116 = vpop.f32.mrb[0].mxu0
      %v1117 = vadd.f32 %v1052, %v1116
      %v1118 = vpop.f32.mrb[0].mxu0
      %v1119 = vpop.f32.mrb[0].mxu0
      %v1120 = vadd.f32 %v1052, %v1119
      %v1121 = vpop.f32.mrb[0].mxu0
      %1122 = vmatprep.mubr.bf16.mxu0 0
      %1123 = vmatmul.mubr.bf16.gmra.mrb[0].mxu0 %v470
      %v1124 = vpop.f32.mrb[0].mxu0
      %v1125 = vadd.f32 %v1052, %v1124
      %v1126 = vpop.f32.mrb[0].mxu0
      %v1127 = vpop.f32.mrb[0].mxu0
      %v1128 = vadd.f32 %v1052, %v1127
      %v1129 = vpop.f32.mrb[0].mxu0
      %1130 = vmatprep.mubr.bf16.mxu0 0
      %1131 = vmatmul.mubr.bf16.gmra.mrb[0].mxu0 %v473
      %v1132 = vpop.f32.mrb[0].mxu0
      %v1133 = vadd.f32 %v1052, %v1132
      %v1134 = vpop.f32.mrb[0].mxu0
      %v1135 = vpop.f32.mrb[0].mxu0
      %v1136 = vadd.f32 %v1052, %v1135
      %v1137 = vpop.f32.mrb[0].mxu0
      %1138 = vmatprep.mubr.bf16.mxu0 0
      %1139 = vmatmul.mubr.bf16.gmra.mrb[0].mxu0 %v476
      %v1140 = vpop.f32.mrb[0].mxu0
      %v1141 = vadd.f32 %v1052, %v1140
      %v1142 = vpop.f32.mrb[0].mxu0
      %v1143 = vpop.f32.mrb[0].mxu0
      %v1144 = vadd.f32 %v1052, %v1143
      %v1145 = vpop.f32.mrb[0].mxu0
      %1146 = vmatprep.mubr.bf16.mxu0 0
      %1147 = vmatmul.mubr.bf16.gmra.mrb[0].mxu0 %v479
      %v1148 = vpop.f32.mrb[0].mxu0
      %v1149 = vadd.f32 %v1052, %v1148
      %v1150 = vpop.f32.mrb[0].mxu0
      %v1151 = vpop.f32.mrb[0].mxu0
      %v1152 = vadd.f32 %v1052, %v1151
      %v1153 = vpop.f32.mrb[0].mxu0
      %1154 = vmatprep.mubr.bf16.mxu0 0
      %1155 = vmatmul.mubr.bf16.gmra.mrb[0].mxu0 %v482
      %v1156 = vpop.f32.mrb[0].mxu0
      %v1157 = vadd.f32 %v1052, %v1156
      %v1158 = vpop.f32.mrb[0].mxu0
      %v1159 = vpop.f32.mrb[0].mxu0
      %v1160 = vadd.f32 %v1052, %v1159
      %v1161 = vpop.f32.mrb[0].mxu0
      %1162 = vmatprep.mubr.bf16.mxu0 0
      %1163 = vmatmul.mubr.bf16.gmra.mrb[0].mxu0 %v485
      %v1164 = vpop.f32.mrb[0].mxu0
      %v1165 = vadd.f32 %v1052, %v1164
      %v1166 = vpop.f32.mrb[0].mxu0
      %v1167 = vpop.f32.mrb[0].mxu0
      %v1168 = vadd.f32 %v1052, %v1167
      %v1169 = vpop.f32.mrb[0].mxu0
      %1170 = vmatprep.mubr.bf16.mxu0 0
      %1171 = vmatmul.mubr.bf16.gmra.mrb[0].mxu0 %v488
      %v1172 = vpop.f32.mrb[0].mxu0
      %v1173 = vadd.f32 %v1052, %v1172
      %v1174 = vpop.f32.mrb[0].mxu0
      %v1175 = vpop.f32.mrb[0].mxu0
      %v1176 = vadd.f32 %v1052, %v1175
      %v1177 = vpop.f32.mrb[0].mxu0
      %1178 = vmatprep.mubr.bf16.mxu0 0
      %1179 = vmatmul.mubr.bf16.gmra.mrb[0].mxu0 %v491
      %v1180 = vpop.f32.mrb[0].mxu0
      %v1181 = vadd.f32 %v1052, %v1180
      %v1182 = vpop.f32.mrb[0].mxu0
      %v1183 = vpop.f32.mrb[0].mxu0
      %v1184 = vadd.f32 %v1052, %v1183
      %v1185 = vpop.f32.mrb[0].mxu0
      %1186 = vmatprep.mubr.bf16.mxu0 0
      %1187 = vmatmul.mubr.bf16.gmra.mrb[0].mxu0 %v494
      %v1188 = vpop.f32.mrb[0].mxu0
      %v1189 = vadd.f32 %v1052, %v1188
      %v1190 = vpop.f32.mrb[0].mxu0
      %v1191 = vpop.f32.mrb[0].mxu0
      %v1192 = vadd.f32 %v1052, %v1191
      %v1193 = vpop.f32.mrb[0].mxu0
      %1194 = vmatprep.mubr.bf16.mxu0 0
      %1195 = vmatmul.mubr.bf16.gmra.mrb[0].mxu0 %v497
      %v1196 = vpop.f32.mrb[0].mxu0
      %v1197 = vadd.f32 %v1052, %v1196
      %v1198 = vpop.f32.mrb[0].mxu0
      %v1199 = vpop.f32.mrb[0].mxu0
      %v1200 = vadd.f32 %v1052, %v1199
      %v1201 = vpop.f32.mrb[0].mxu0
      %1202 = vmatprep.mubr.bf16.mxu0 0
      %1203 = vmatmul.mubr.bf16.gmra.mrb[0].mxu0 %v500
      %v1204 = vpop.f32.mrb[0].mxu0
      %v1205 = vadd.f32 %v1052, %v1204
      %v1206 = vpop.f32.mrb[0].mxu0
      %v1207 = vpop.f32.mrb[0].mxu0
      %v1208 = vadd.f32 %v1052, %v1207
      %v1209 = vpop.f32.mrb[0].mxu0
      %1210 = vmatprep.mubr.bf16.mxu0 0
      %1211 = vmatmul.mubr.bf16.gmra.mrb[0].mxu0 %v503
      %v1212 = vpop.f32.mrb[0].mxu0
      %v1213 = vadd.f32 %v1052, %v1212
      %v1214 = vpop.f32.mrb[0].mxu0
      %v1215 = vpop.f32.mrb[0].mxu0
      %v1216 = vadd.f32 %v1052, %v1215
      %v1217 = vpop.f32.mrb[0].mxu0
      %1218 = vmatprep.mubr.bf16.mxu0 0
      %1219 = vmatmul.mubr.bf16.gmra.mrb[0].mxu0 %v506
      %v1220 = vpop.f32.mrb[0].mxu0
      %v1221 = vadd.f32 %v1052, %v1220
      %v1222 = vpop.f32.mrb[0].mxu0
      %v1223 = vpop.f32.mrb[0].mxu0
      %v1224 = vadd.f32 %v1052, %v1223
      %v1225 = vpop.f32.mrb[0].mxu0
      %1226 = vdwg.mxu0
      %v1227 = vpack.c.bf16 %v546, %v543
      %v1228 = vpack.c.bf16 %v554, %v551
      %v1229 = vpack.c.bf16 %v562, %v559
      %v1230 = vpack.c.bf16 %v570, %v567
      %v1231 = vpack.c.bf16 %v578, %v575
      %v1232 = vpack.c.bf16 %v586, %v583
      %v1233 = vpack.c.bf16 %v594, %v591
      %v1234 = vpack.c.bf16 %v602, %v599
      %v1235 = vpack.c.bf16 %v610, %v607
      %v1236 = vpack.c.bf16 %v618, %v615
      %v1237 = vpack.c.bf16 %v626, %v623
      %v1238 = vpack.c.bf16 %v634, %v631
      %v1239 = vpack.c.bf16 %v642, %v639
      %v1240 = vpack.c.bf16 %v650, %v647
      %v1241 = vpack.c.bf16 %v658, %v655
      %v1242 = vpack.c.bf16 %v666, %v663
      %v1243 = vpack.c.bf16 %v732, %v729
      %v1244 = vpack.c.bf16 %v740, %v737
      %v1245 = vpack.c.bf16 %v748, %v745
      %v1246 = vpack.c.bf16 %v756, %v753
      %v1247 = vpack.c.bf16 %v764, %v761
      %v1248 = vpack.c.bf16 %v772, %v769
      %v1249 = vpack.c.bf16 %v780, %v777
      %v1250 = vpack.c.bf16 %v788, %v785
      %v1251 = vpack.c.bf16 %v796, %v793
      %v1252 = vpack.c.bf16 %v804, %v801
      %v1253 = vpack.c.bf16 %v812, %v809
      %v1254 = vpack.c.bf16 %v820, %v817
      %v1255 = vpack.c.bf16 %v828, %v825
      %v1256 = vpack.c.bf16 %v836, %v833
      %v1257 = vpack.c.bf16 %v844, %v841
      %v1258 = vpack.c.bf16 %v852, %v849
      %v1259 = vpack.c.bf16 %v918, %v915
      %v1260 = vpack.c.bf16 %v926, %v923
      %v1261 = vpack.c.bf16 %v934, %v931
      %v1262 = vpack.c.bf16 %v942, %v939
      %v1263 = vpack.c.bf16 %v950, %v947
      %v1264 = vpack.c.bf16 %v958, %v955
      %v1265 = vpack.c.bf16 %v966, %v963
      %v1266 = vpack.c.bf16 %v974, %v971
      %v1267 = vpack.c.bf16 %v982, %v979
      %v1268 = vpack.c.bf16 %v990, %v987
      %v1269 = vpack.c.bf16 %v998, %v995
      %v1270 = vpack.c.bf16 %v1006, %v1003
      %v1271 = vpack.c.bf16 %v1014, %v1011
      %v1272 = vpack.c.bf16 %v1022, %v1019
      %v1273 = vpack.c.bf16 %v1030, %v1027
      %v1274 = vpack.c.bf16 %v1038, %v1035
      %v1275 = vpack.c.bf16 %v1104, %v1101
      %v1276 = vpack.c.bf16 %v1112, %v1109
      %v1277 = vpack.c.bf16 %v1120, %v1117
      %v1278 = vpack.c.bf16 %v1128, %v1125
      %v1279 = vpack.c.bf16 %v1136, %v1133
      %v1280 = vpack.c.bf16 %v1144, %v1141
      %v1281 = vpack.c.bf16 %v1152, %v1149
      %v1282 = vpack.c.bf16 %v1160, %v1157
      %v1283 = vpack.c.bf16 %v1168, %v1165
      %v1284 = vpack.c.bf16 %v1176, %v1173
      %v1285 = vpack.c.bf16 %v1184, %v1181
      %v1286 = vpack.c.bf16 %v1192, %v1189
      %v1287 = vpack.c.bf16 %v1200, %v1197
      %v1288 = vpack.c.bf16 %v1208, %v1205
      %v1289 = vpack.c.bf16 %v1216, %v1213
      %v1290 = vpack.c.bf16 %v1224, %v1221
      %v1291 = vld [vmem:[%s2] sm:$0xf]
      %v1292 = vld [vmem:[%s2 + $0x4] sm:$0xf]
      %v1293 = vld [vmem:[%s2 + $0x8] sm:$0xf]
      %v1294 = vld [vmem:[%s2 + $0xc] sm:$0xf]
      %v1295 = vld [vmem:[%s5] sm:$0x1]
      %v1297 = vlaneseq
      %v1298 = vshrl.u32 %v1297, 7
      %v1299 = vsub.s32 0, %v1298
      %v1300 = vrot.slane %v1295, %v1299
      %v1306 = vunpack.c.l.b16 %v1291
      %v1307 = vunpack.c.l.b16 %v1292
      %v1308 = vunpack.c.l.b16 %v1293
      %v1309 = vunpack.c.l.b16 %v1294
      %v1310 = vpack.c.b16 %v1307, %v1306
      %v1311 = vpack.c.b16 %v1309, %v1308
      %1314 = vmatprep.subr.bf16.mxu0 0
      %1315 = vmatpush1.bf16.msra.mxu0 %v1310
      %1316 = vmatprep.subr.bf16.mxu0 0
      %1317 = vmatpush1.bf16.msra.mxu0 %v1311
      %1318 = vmatprep.subr.bf16.mxu0 0
      %1319 = vmatpush1.bf16.msra.mxu0 0
      %1320 = vmatprep.subr.bf16.mxu0 0
      %1321 = vmatpush1.bf16.msra.mxu0 0
      %1322 = vmatprep.subr.bf16.mxu0 0
      %1323 = vmatpush1.bf16.msra.mxu0 0
      %1324 = vmatprep.subr.bf16.mxu0 0
      %1325 = vmatpush1.bf16.msra.mxu0 0
      %1326 = vmatprep.subr.bf16.mxu0 0
      %1327 = vmatpush1.bf16.msra.mxu0 0
      %1328 = vmatprep.subr.bf16.mxu0 0
      %1329 = vmatpush1.bf16.msra.mxu0 0
      %1330 = vmatprep.subr.bf16.mxu0 0
      %1331 = vmatpush1.bf16.msra.mxu0 0
      %1332 = vmatprep.subr.bf16.mxu0 0
      %1333 = vmatpush1.bf16.msra.mxu0 0
      %1334 = vmatprep.subr.bf16.mxu0 0
      %1335 = vmatpush1.bf16.msra.mxu0 0
      %1336 = vmatprep.subr.bf16.mxu0 0
      %1337 = vmatpush1.bf16.msra.mxu0 0
      %1338 = vmatprep.subr.bf16.mxu0 0
      %1339 = vmatpush1.bf16.msra.mxu0 0
      %1340 = vmatprep.subr.bf16.mxu0 0
      %1341 = vmatpush1.bf16.msra.mxu0 0
      %1342 = vmatprep.subr.bf16.mxu0 0
      %1343 = vmatpush1.bf16.msra.mxu0 0
      %1344 = vmatprep.subr.bf16.mxu0 0
      %1345 = vmatpush1.bf16.msra.mxu0 0
      %1346 = vmatprep.mubr.bf16.mxu0 0
      %1347 = vmatmul.mubr.bf16.gmra.mrb[0].mxu0 %v461
      %v1348 = vpop.f32.mrb[0].mxu0
      %v1349 = vadd.f32 %v1300, %v1348
      %v1350 = vpop.f32.mrb[0].mxu0
      %v1351 = vpop.f32.mrb[0].mxu0
      %v1352 = vadd.f32 %v1300, %v1351
      %v1353 = vpop.f32.mrb[0].mxu0
      %1354 = vmatprep.mubr.bf16.mxu0 0
      %1355 = vmatmul.mubr.bf16.gmra.mrb[0].mxu0 %v464
      %v1356 = vpop.f32.mrb[0].mxu0
      %v1357 = vadd.f32 %v1300, %v1356
      %v1358 = vpop.f32.mrb[0].mxu0
      %v1359 = vpop.f32.mrb[0].mxu0
      %v1360 = vadd.f32 %v1300, %v1359
      %v1361 = vpop.f32.mrb[0].mxu0
      %1362 = vmatprep.mubr.bf16.mxu0 0
      %1363 = vmatmul.mubr.bf16.gmra.mrb[0].mxu0 %v467
      %v1364 = vpop.f32.mrb[0].mxu0
      %v1365 = vadd.f32 %v1300, %v1364
      %v1366 = vpop.f32.mrb[0].mxu0
      %v1367 = vpop.f32.mrb[0].mxu0
      %v1368 = vadd.f32 %v1300, %v1367
      %v1369 = vpop.f32.mrb[0].mxu0
      %1370 = vmatprep.mubr.bf16.mxu0 0
      %1371 = vmatmul.mubr.bf16.gmra.mrb[0].mxu0 %v470
      %v1372 = vpop.f32.mrb[0].mxu0
      %v1373 = vadd.f32 %v1300, %v1372
      %v1374 = vpop.f32.mrb[0].mxu0
      %v1375 = vpop.f32.mrb[0].mxu0
      %v1376 = vadd.f32 %v1300, %v1375
      %v1377 = vpop.f32.mrb[0].mxu0
      %1378 = vmatprep.mubr.bf16.mxu0 0
      %1379 = vmatmul.mubr.bf16.gmra.mrb[0].mxu0 %v473
      %v1380 = vpop.f32.mrb[0].mxu0
      %v1381 = vadd.f32 %v1300, %v1380
      %v1382 = vpop.f32.mrb[0].mxu0
      %v1383 = vpop.f32.mrb[0].mxu0
      %v1384 = vadd.f32 %v1300, %v1383
      %v1385 = vpop.f32.mrb[0].mxu0
      %1386 = vmatprep.mubr.bf16.mxu0 0
      %1387 = vmatmul.mubr.bf16.gmra.mrb[0].mxu0 %v476
      %v1388 = vpop.f32.mrb[0].mxu0
      %v1389 = vadd.f32 %v1300, %v1388
      %v1390 = vpop.f32.mrb[0].mxu0
      %v1391 = vpop.f32.mrb[0].mxu0
      %v1392 = vadd.f32 %v1300, %v1391
      %v1393 = vpop.f32.mrb[0].mxu0
      %1394 = vmatprep.mubr.bf16.mxu0 0
      %1395 = vmatmul.mubr.bf16.gmra.mrb[0].mxu0 %v479
      %v1396 = vpop.f32.mrb[0].mxu0
      %v1397 = vadd.f32 %v1300, %v1396
      %v1398 = vpop.f32.mrb[0].mxu0
      %v1399 = vpop.f32.mrb[0].mxu0
      %v1400 = vadd.f32 %v1300, %v1399
      %v1401 = vpop.f32.mrb[0].mxu0
      %1402 = vmatprep.mubr.bf16.mxu0 0
      %1403 = vmatmul.mubr.bf16.gmra.mrb[0].mxu0 %v482
      %v1404 = vpop.f32.mrb[0].mxu0
      %v1405 = vadd.f32 %v1300, %v1404
      %v1406 = vpop.f32.mrb[0].mxu0
      %v1407 = vpop.f32.mrb[0].mxu0
      %v1408 = vadd.f32 %v1300, %v1407
      %v1409 = vpop.f32.mrb[0].mxu0
      %1410 = vmatprep.mubr.bf16.mxu0 0
      %1411 = vmatmul.mubr.bf16.gmra.mrb[0].mxu0 %v485
      %v1412 = vpop.f32.mrb[0].mxu0
      %v1413 = vadd.f32 %v1300, %v1412
      %v1414 = vpop.f32.mrb[0].mxu0
      %v1415 = vpop.f32.mrb[0].mxu0
      %v1416 = vadd.f32 %v1300, %v1415
      %v1417 = vpop.f32.mrb[0].mxu0
      %1418 = vmatprep.mubr.bf16.mxu0 0
      %1419 = vmatmul.mubr.bf16.gmra.mrb[0].mxu0 %v488
      %v1420 = vpop.f32.mrb[0].mxu0
      %v1421 = vadd.f32 %v1300, %v1420
      %v1422 = vpop.f32.mrb[0].mxu0
      %v1423 = vpop.f32.mrb[0].mxu0
      %v1424 = vadd.f32 %v1300, %v1423
      %v1425 = vpop.f32.mrb[0].mxu0
      %1426 = vmatprep.mubr.bf16.mxu0 0
      %1427 = vmatmul.mubr.bf16.gmra.mrb[0].mxu0 %v491
      %v1428 = vpop.f32.mrb[0].mxu0
      %v1429 = vadd.f32 %v1300, %v1428
      %v1430 = vpop.f32.mrb[0].mxu0
      %v1431 = vpop.f32.mrb[0].mxu0
      %v1432 = vadd.f32 %v1300, %v1431
      %v1433 = vpop.f32.mrb[0].mxu0
      %1434 = vmatprep.mubr.bf16.mxu0 0
      %1435 = vmatmul.mubr.bf16.gmra.mrb[0].mxu0 %v494
      %v1436 = vpop.f32.mrb[0].mxu0
      %v1437 = vadd.f32 %v1300, %v1436
      %v1438 = vpop.f32.mrb[0].mxu0
      %v1439 = vpop.f32.mrb[0].mxu0
      %v1440 = vadd.f32 %v1300, %v1439
      %v1441 = vpop.f32.mrb[0].mxu0
      %1442 = vmatprep.mubr.bf16.mxu0 0
      %1443 = vmatmul.mubr.bf16.gmra.mrb[0].mxu0 %v497
      %v1444 = vpop.f32.mrb[0].mxu0
      %v1445 = vadd.f32 %v1300, %v1444
      %v1446 = vpop.f32.mrb[0].mxu0
      %v1447 = vpop.f32.mrb[0].mxu0
      %v1448 = vadd.f32 %v1300, %v1447
      %v1449 = vpop.f32.mrb[0].mxu0
      %1450 = vmatprep.mubr.bf16.mxu0 0
      %1451 = vmatmul.mubr.bf16.gmra.mrb[0].mxu0 %v500
      %v1452 = vpop.f32.mrb[0].mxu0
      %v1453 = vadd.f32 %v1300, %v1452
      %v1454 = vpop.f32.mrb[0].mxu0
      %v1455 = vpop.f32.mrb[0].mxu0
      %v1456 = vadd.f32 %v1300, %v1455
      %v1457 = vpop.f32.mrb[0].mxu0
      %1458 = vmatprep.mubr.bf16.mxu0 0
      %1459 = vmatmul.mubr.bf16.gmra.mrb[0].mxu0 %v503
      %v1460 = vpop.f32.mrb[0].mxu0
      %v1461 = vadd.f32 %v1300, %v1460
      %v1462 = vpop.f32.mrb[0].mxu0
      %v1463 = vpop.f32.mrb[0].mxu0
      %v1464 = vadd.f32 %v1300, %v1463
      %v1465 = vpop.f32.mrb[0].mxu0
      %1466 = vmatprep.mubr.bf16.mxu0 0
      %1467 = vmatmul.mubr.bf16.gmra.mrb[0].mxu0 %v506
      %v1468 = vpop.f32.mrb[0].mxu0
      %v1469 = vadd.f32 %v1300, %v1468
      %v1470 = vpop.f32.mrb[0].mxu0
      %v1471 = vpop.f32.mrb[0].mxu0
      %v1472 = vadd.f32 %v1300, %v1471
      %v1473 = vpop.f32.mrb[0].mxu0
      %1474 = vdwg.mxu0
      %s1475 = scalar_lea.vmem %s2, 16
      %v1476 = vld [vmem:[%s1475] sm:$0xf]
      %v1477 = vld [vmem:[%s1475 + $0x4] sm:$0xf]
      %v1478 = vld [vmem:[%s1475 + $0x8] sm:$0xf]
      %v1479 = vld [vmem:[%s1475 + $0xc] sm:$0xf]
      %s1480 = scalar_lea.vmem %s5, 1
      %v1481 = vld [vmem:[%s1480] sm:$0x1]
      %v1483 = vlaneseq
      %v1484 = vshrl.u32 %v1483, 7
      %v1485 = vsub.s32 0, %v1484
      %v1486 = vrot.slane %v1481, %v1485
      %v1492 = vunpack.c.l.b16 %v1476
      %v1493 = vunpack.c.l.b16 %v1477
      %v1494 = vunpack.c.l.b16 %v1478
      %v1495 = vunpack.c.l.b16 %v1479
      %v1496 = vpack.c.b16 %v1493, %v1492
      %v1497 = vpack.c.b16 %v1495, %v1494
      %1500 = vmatprep.subr.bf16.mxu0 0
      %1501 = vmatpush1.bf16.msra.mxu0 %v1496
      %1502 = vmatprep.subr.bf16.mxu0 0
      %1503 = vmatpush1.bf16.msra.mxu0 %v1497
      %1504 = vmatprep.subr.bf16.mxu0 0
      %1505 = vmatpush1.bf16.msra.mxu0 0
      %1506 = vmatprep.subr.bf16.mxu0 0
      %1507 = vmatpush1.bf16.msra.mxu0 0
      %1508 = vmatprep.subr.bf16.mxu0 0
      %1509 = vmatpush1.bf16.msra.mxu0 0
      %1510 = vmatprep.subr.bf16.mxu0 0
      %1511 = vmatpush1.bf16.msra.mxu0 0
      %1512 = vmatprep.subr.bf16.mxu0 0
      %1513 = vmatpush1.bf16.msra.mxu0 0
      %1514 = vmatprep.subr.bf16.mxu0 0
      %1515 = vmatpush1.bf16.msra.mxu0 0
      %1516 = vmatprep.subr.bf16.mxu0 0
      %1517 = vmatpush1.bf16.msra.mxu0 0
      %1518 = vmatprep.subr.bf16.mxu0 0
      %1519 = vmatpush1.bf16.msra.mxu0 0
      %1520 = vmatprep.subr.bf16.mxu0 0
      %1521 = vmatpush1.bf16.msra.mxu0 0
      %1522 = vmatprep.subr.bf16.mxu0 0
      %1523 = vmatpush1.bf16.msra.mxu0 0
      %1524 = vmatprep.subr.bf16.mxu0 0
      %1525 = vmatpush1.bf16.msra.mxu0 0
      %1526 = vmatprep.subr.bf16.mxu0 0
      %1527 = vmatpush1.bf16.msra.mxu0 0
      %1528 = vmatprep.subr.bf16.mxu0 0
      %1529 = vmatpush1.bf16.msra.mxu0 0
      %1530 = vmatprep.subr.bf16.mxu0 0
      %1531 = vmatpush1.bf16.msra.mxu0 0
      %1532 = vmatprep.mubr.bf16.mxu0 0
      %1533 = vmatmul.mubr.bf16.gmra.mrb[0].mxu0 %v461
      %v1534 = vpop.f32.mrb[0].mxu0
      %v1535 = vadd.f32 %v1486, %v1534
      %v1536 = vpop.f32.mrb[0].mxu0
      %v1537 = vpop.f32.mrb[0].mxu0
      %v1538 = vadd.f32 %v1486, %v1537
      %v1539 = vpop.f32.mrb[0].mxu0
      %1540 = vmatprep.mubr.bf16.mxu0 0
      %1541 = vmatmul.mubr.bf16.gmra.mrb[0].mxu0 %v464
      %v1542 = vpop.f32.mrb[0].mxu0
      %v1543 = vadd.f32 %v1486, %v1542
      %v1544 = vpop.f32.mrb[0].mxu0
      %v1545 = vpop.f32.mrb[0].mxu0
      %v1546 = vadd.f32 %v1486, %v1545
      %v1547 = vpop.f32.mrb[0].mxu0
      %1548 = vmatprep.mubr.bf16.mxu0 0
      %1549 = vmatmul.mubr.bf16.gmra.mrb[0].mxu0 %v467
      %v1550 = vpop.f32.mrb[0].mxu0
      %v1551 = vadd.f32 %v1486, %v1550
      %v1552 = vpop.f32.mrb[0].mxu0
      %v1553 = vpop.f32.mrb[0].mxu0
      %v1554 = vadd.f32 %v1486, %v1553
      %v1555 = vpop.f32.mrb[0].mxu0
      %1556 = vmatprep.mubr.bf16.mxu0 0
      %1557 = vmatmul.mubr.bf16.gmra.mrb[0].mxu0 %v470
      %v1558 = vpop.f32.mrb[0].mxu0
      %v1559 = vadd.f32 %v1486, %v1558
      %v1560 = vpop.f32.mrb[0].mxu0
      %v1561 = vpop.f32.mrb[0].mxu0
      %v1562 = vadd.f32 %v1486, %v1561
      %v1563 = vpop.f32.mrb[0].mxu0
      %1564 = vmatprep.mubr.bf16.mxu0 0
      %1565 = vmatmul.mubr.bf16.gmra.mrb[0].mxu0 %v473
      %v1566 = vpop.f32.mrb[0].mxu0
      %v1567 = vadd.f32 %v1486, %v1566
      %v1568 = vpop.f32.mrb[0].mxu0
      %v1569 = vpop.f32.mrb[0].mxu0
      %v1570 = vadd.f32 %v1486, %v1569
      %v1571 = vpop.f32.mrb[0].mxu0
      %1572 = vmatprep.mubr.bf16.mxu0 0
      %1573 = vmatmul.mubr.bf16.gmra.mrb[0].mxu0 %v476
      %v1574 = vpop.f32.mrb[0].mxu0
      %v1575 = vadd.f32 %v1486, %v1574
      %v1576 = vpop.f32.mrb[0].mxu0
      %v1577 = vpop.f32.mrb[0].mxu0
      %v1578 = vadd.f32 %v1486, %v1577
      %v1579 = vpop.f32.mrb[0].mxu0
      %1580 = vmatprep.mubr.bf16.mxu0 0
      %1581 = vmatmul.mubr.bf16.gmra.mrb[0].mxu0 %v479
      %v1582 = vpop.f32.mrb[0].mxu0
      %v1583 = vadd.f32 %v1486, %v1582
      %v1584 = vpop.f32.mrb[0].mxu0
      %v1585 = vpop.f32.mrb[0].mxu0
      %v1586 = vadd.f32 %v1486, %v1585
      %v1587 = vpop.f32.mrb[0].mxu0
      %1588 = vmatprep.mubr.bf16.mxu0 0
      %1589 = vmatmul.mubr.bf16.gmra.mrb[0].mxu0 %v482
      %v1590 = vpop.f32.mrb[0].mxu0
      %v1591 = vadd.f32 %v1486, %v1590
      %v1592 = vpop.f32.mrb[0].mxu0
      %v1593 = vpop.f32.mrb[0].mxu0
      %v1594 = vadd.f32 %v1486, %v1593
      %v1595 = vpop.f32.mrb[0].mxu0
      %1596 = vmatprep.mubr.bf16.mxu0 0
      %1597 = vmatmul.mubr.bf16.gmra.mrb[0].mxu0 %v485
      %v1598 = vpop.f32.mrb[0].mxu0
      %v1599 = vadd.f32 %v1486, %v1598
      %v1600 = vpop.f32.mrb[0].mxu0
      %v1601 = vpop.f32.mrb[0].mxu0
      %v1602 = vadd.f32 %v1486, %v1601
      %v1603 = vpop.f32.mrb[0].mxu0
      %1604 = vmatprep.mubr.bf16.mxu0 0
      %1605 = vmatmul.mubr.bf16.gmra.mrb[0].mxu0 %v488
      %v1606 = vpop.f32.mrb[0].mxu0
      %v1607 = vadd.f32 %v1486, %v1606
      %v1608 = vpop.f32.mrb[0].mxu0
      %v1609 = vpop.f32.mrb[0].mxu0
      %v1610 = vadd.f32 %v1486, %v1609
      %v1611 = vpop.f32.mrb[0].mxu0
      %1612 = vmatprep.mubr.bf16.mxu0 0
      %1613 = vmatmul.mubr.bf16.gmra.mrb[0].mxu0 %v491
      %v1614 = vpop.f32.mrb[0].mxu0
      %v1615 = vadd.f32 %v1486, %v1614
      %v1616 = vpop.f32.mrb[0].mxu0
      %v1617 = vpop.f32.mrb[0].mxu0
      %v1618 = vadd.f32 %v1486, %v1617
      %v1619 = vpop.f32.mrb[0].mxu0
      %1620 = vmatprep.mubr.bf16.mxu0 0
      %1621 = vmatmul.mubr.bf16.gmra.mrb[0].mxu0 %v494
      %v1622 = vpop.f32.mrb[0].mxu0
      %v1623 = vadd.f32 %v1486, %v1622
      %v1624 = vpop.f32.mrb[0].mxu0
      %v1625 = vpop.f32.mrb[0].mxu0
      %v1626 = vadd.f32 %v1486, %v1625
      %v1627 = vpop.f32.mrb[0].mxu0
      %1628 = vmatprep.mubr.bf16.mxu0 0
      %1629 = vmatmul.mubr.bf16.gmra.mrb[0].mxu0 %v497
      %v1630 = vpop.f32.mrb[0].mxu0
      %v1631 = vadd.f32 %v1486, %v1630
      %v1632 = vpop.f32.mrb[0].mxu0
      %v1633 = vpop.f32.mrb[0].mxu0
      %v1634 = vadd.f32 %v1486, %v1633
      %v1635 = vpop.f32.mrb[0].mxu0
      %1636 = vmatprep.mubr.bf16.mxu0 0
      %1637 = vmatmul.mubr.bf16.gmra.mrb[0].mxu0 %v500
      %v1638 = vpop.f32.mrb[0].mxu0
      %v1639 = vadd.f32 %v1486, %v1638
      %v1640 = vpop.f32.mrb[0].mxu0
      %v1641 = vpop.f32.mrb[0].mxu0
      %v1642 = vadd.f32 %v1486, %v1641
      %v1643 = vpop.f32.mrb[0].mxu0
      %1644 = vmatprep.mubr.bf16.mxu0 0
      %1645 = vmatmul.mubr.bf16.gmra.mrb[0].mxu0 %v503
      %v1646 = vpop.f32.mrb[0].mxu0
      %v1647 = vadd.f32 %v1486, %v1646
      %v1648 = vpop.f32.mrb[0].mxu0
      %v1649 = vpop.f32.mrb[0].mxu0
      %v1650 = vadd.f32 %v1486, %v1649
      %v1651 = vpop.f32.mrb[0].mxu0
      %1652 = vmatprep.mubr.bf16.mxu0 0
      %1653 = vmatmul.mubr.bf16.gmra.mrb[0].mxu0 %v506
      %v1654 = vpop.f32.mrb[0].mxu0
      %v1655 = vadd.f32 %v1486, %v1654
      %v1656 = vpop.f32.mrb[0].mxu0
      %v1657 = vpop.f32.mrb[0].mxu0
      %v1658 = vadd.f32 %v1486, %v1657
      %v1659 = vpop.f32.mrb[0].mxu0
      %1660 = vdwg.mxu0
      %s1661 = scalar_lea.vmem %s2, 32
      %v1662 = vld [vmem:[%s1661] sm:$0xf]
      %v1663 = vld [vmem:[%s1661 + $0x4] sm:$0xf]
      %v1664 = vld [vmem:[%s1661 + $0x8] sm:$0xf]
      %v1665 = vld [vmem:[%s1661 + $0xc] sm:$0xf]
      %s1666 = scalar_lea.vmem %s5, 2
      %v1667 = vld [vmem:[%s1666] sm:$0x1]
      %v1669 = vlaneseq
      %v1670 = vshrl.u32 %v1669, 7
      %v1671 = vsub.s32 0, %v1670
      %v1672 = vrot.slane %v1667, %v1671
      %v1678 = vunpack.c.l.b16 %v1662
      %v1679 = vunpack.c.l.b16 %v1663
      %v1680 = vunpack.c.l.b16 %v1664
      %v1681 = vunpack.c.l.b16 %v1665
      %v1682 = vpack.c.b16 %v1679, %v1678
      %v1683 = vpack.c.b16 %v1681, %v1680
      %1686 = vmatprep.subr.bf16.mxu0 0
      %1687 = vmatpush1.bf16.msra.mxu0 %v1682
      %1688 = vmatprep.subr.bf16.mxu0 0
      %1689 = vmatpush1.bf16.msra.mxu0 %v1683
      %1690 = vmatprep.subr.bf16.mxu0 0
      %1691 = vmatpush1.bf16.msra.mxu0 0
      %1692 = vmatprep.subr.bf16.mxu0 0
      %1693 = vmatpush1.bf16.msra.mxu0 0
      %1694 = vmatprep.subr.bf16.mxu0 0
      %1695 = vmatpush1.bf16.msra.mxu0 0
      %1696 = vmatprep.subr.bf16.mxu0 0
      %1697 = vmatpush1.bf16.msra.mxu0 0
      %1698 = vmatprep.subr.bf16.mxu0 0
      %1699 = vmatpush1.bf16.msra.mxu0 0
      %1700 = vmatprep.subr.bf16.mxu0 0
      %1701 = vmatpush1.bf16.msra.mxu0 0
      %1702 = vmatprep.subr.bf16.mxu0 0
      %1703 = vmatpush1.bf16.msra.mxu0 0
      %1704 = vmatprep.subr.bf16.mxu0 0
      %1705 = vmatpush1.bf16.msra.mxu0 0
      %1706 = vmatprep.subr.bf16.mxu0 0
      %1707 = vmatpush1.bf16.msra.mxu0 0
      %1708 = vmatprep.subr.bf16.mxu0 0
      %1709 = vmatpush1.bf16.msra.mxu0 0
      %1710 = vmatprep.subr.bf16.mxu0 0
      %1711 = vmatpush1.bf16.msra.mxu0 0
      %1712 = vmatprep.subr.bf16.mxu0 0
      %1713 = vmatpush1.bf16.msra.mxu0 0
      %1714 = vmatprep.subr.bf16.mxu0 0
      %1715 = vmatpush1.bf16.msra.mxu0 0
      %1716 = vmatprep.subr.bf16.mxu0 0
      %1717 = vmatpush1.bf16.msra.mxu0 0
      %1718 = vmatprep.mubr.bf16.mxu0 0
      %1719 = vmatmul.mubr.bf16.gmra.mrb[0].mxu0 %v461
      %v1720 = vpop.f32.mrb[0].mxu0
      %v1721 = vadd.f32 %v1672, %v1720
      %v1722 = vpop.f32.mrb[0].mxu0
      %v1723 = vpop.f32.mrb[0].mxu0
      %v1724 = vadd.f32 %v1672, %v1723
      %v1725 = vpop.f32.mrb[0].mxu0
      %1726 = vmatprep.mubr.bf16.mxu0 0
      %1727 = vmatmul.mubr.bf16.gmra.mrb[0].mxu0 %v464
      %v1728 = vpop.f32.mrb[0].mxu0
      %v1729 = vadd.f32 %v1672, %v1728
      %v1730 = vpop.f32.mrb[0].mxu0
      %v1731 = vpop.f32.mrb[0].mxu0
      %v1732 = vadd.f32 %v1672, %v1731
      %v1733 = vpop.f32.mrb[0].mxu0
      %1734 = vmatprep.mubr.bf16.mxu0 0
      %1735 = vmatmul.mubr.bf16.gmra.mrb[0].mxu0 %v467
      %v1736 = vpop.f32.mrb[0].mxu0
      %v1737 = vadd.f32 %v1672, %v1736
      %v1738 = vpop.f32.mrb[0].mxu0
      %v1739 = vpop.f32.mrb[0].mxu0
      %v1740 = vadd.f32 %v1672, %v1739
      %v1741 = vpop.f32.mrb[0].mxu0
      %1742 = vmatprep.mubr.bf16.mxu0 0
      %1743 = vmatmul.mubr.bf16.gmra.mrb[0].mxu0 %v470
      %v1744 = vpop.f32.mrb[0].mxu0
      %v1745 = vadd.f32 %v1672, %v1744
      %v1746 = vpop.f32.mrb[0].mxu0
      %v1747 = vpop.f32.mrb[0].mxu0
      %v1748 = vadd.f32 %v1672, %v1747
      %v1749 = vpop.f32.mrb[0].mxu0
      %1750 = vmatprep.mubr.bf16.mxu0 0
      %1751 = vmatmul.mubr.bf16.gmra.mrb[0].mxu0 %v473
      %v1752 = vpop.f32.mrb[0].mxu0
      %v1753 = vadd.f32 %v1672, %v1752
      %v1754 = vpop.f32.mrb[0].mxu0
      %v1755 = vpop.f32.mrb[0].mxu0
      %v1756 = vadd.f32 %v1672, %v1755
      %v1757 = vpop.f32.mrb[0].mxu0
      %1758 = vmatprep.mubr.bf16.mxu0 0
      %1759 = vmatmul.mubr.bf16.gmra.mrb[0].mxu0 %v476
      %v1760 = vpop.f32.mrb[0].mxu0
      %v1761 = vadd.f32 %v1672, %v1760
      %v1762 = vpop.f32.mrb[0].mxu0
      %v1763 = vpop.f32.mrb[0].mxu0
      %v1764 = vadd.f32 %v1672, %v1763
      %v1765 = vpop.f32.mrb[0].mxu0
      %1766 = vmatprep.mubr.bf16.mxu0 0
      %1767 = vmatmul.mubr.bf16.gmra.mrb[0].mxu0 %v479
      %v1768 = vpop.f32.mrb[0].mxu0
      %v1769 = vadd.f32 %v1672, %v1768
      %v1770 = vpop.f32.mrb[0].mxu0
      %v1771 = vpop.f32.mrb[0].mxu0
      %v1772 = vadd.f32 %v1672, %v1771
      %v1773 = vpop.f32.mrb[0].mxu0
      %1774 = vmatprep.mubr.bf16.mxu0 0
      %1775 = vmatmul.mubr.bf16.gmra.mrb[0].mxu0 %v482
      %v1776 = vpop.f32.mrb[0].mxu0
      %v1777 = vadd.f32 %v1672, %v1776
      %v1778 = vpop.f32.mrb[0].mxu0
      %v1779 = vpop.f32.mrb[0].mxu0
      %v1780 = vadd.f32 %v1672, %v1779
      %v1781 = vpop.f32.mrb[0].mxu0
      %1782 = vmatprep.mubr.bf16.mxu0 0
      %1783 = vmatmul.mubr.bf16.gmra.mrb[0].mxu0 %v485
      %v1784 = vpop.f32.mrb[0].mxu0
      %v1785 = vadd.f32 %v1672, %v1784
      %v1786 = vpop.f32.mrb[0].mxu0
      %v1787 = vpop.f32.mrb[0].mxu0
      %v1788 = vadd.f32 %v1672, %v1787
      %v1789 = vpop.f32.mrb[0].mxu0
      %1790 = vmatprep.mubr.bf16.mxu0 0
      %1791 = vmatmul.mubr.bf16.gmra.mrb[0].mxu0 %v488
      %v1792 = vpop.f32.mrb[0].mxu0
      %v1793 = vadd.f32 %v1672, %v1792
      %v1794 = vpop.f32.mrb[0].mxu0
      %v1795 = vpop.f32.mrb[0].mxu0
      %v1796 = vadd.f32 %v1672, %v1795
      %v1797 = vpop.f32.mrb[0].mxu0
      %1798 = vmatprep.mubr.bf16.mxu0 0
      %1799 = vmatmul.mubr.bf16.gmra.mrb[0].mxu0 %v491
      %v1800 = vpop.f32.mrb[0].mxu0
      %v1801 = vadd.f32 %v1672, %v1800
      %v1802 = vpop.f32.mrb[0].mxu0
      %v1803 = vpop.f32.mrb[0].mxu0
      %v1804 = vadd.f32 %v1672, %v1803
      %v1805 = vpop.f32.mrb[0].mxu0
      %1806 = vmatprep.mubr.bf16.mxu0 0
      %1807 = vmatmul.mubr.bf16.gmra.mrb[0].mxu0 %v494
      %v1808 = vpop.f32.mrb[0].mxu0
      %v1809 = vadd.f32 %v1672, %v1808
      %v1810 = vpop.f32.mrb[0].mxu0
      %v1811 = vpop.f32.mrb[0].mxu0
      %v1812 = vadd.f32 %v1672, %v1811
      %v1813 = vpop.f32.mrb[0].mxu0
      %1814 = vmatprep.mubr.bf16.mxu0 0
      %1815 = vmatmul.mubr.bf16.gmra.mrb[0].mxu0 %v497
      %v1816 = vpop.f32.mrb[0].mxu0
      %v1817 = vadd.f32 %v1672, %v1816
      %v1818 = vpop.f32.mrb[0].mxu0
      %v1819 = vpop.f32.mrb[0].mxu0
      %v1820 = vadd.f32 %v1672, %v1819
      %v1821 = vpop.f32.mrb[0].mxu0
      %1822 = vmatprep.mubr.bf16.mxu0 0
      %1823 = vmatmul.mubr.bf16.gmra.mrb[0].mxu0 %v500
      %v1824 = vpop.f32.mrb[0].mxu0
      %v1825 = vadd.f32 %v1672, %v1824
      %v1826 = vpop.f32.mrb[0].mxu0
      %v1827 = vpop.f32.mrb[0].mxu0
      %v1828 = vadd.f32 %v1672, %v1827
      %v1829 = vpop.f32.mrb[0].mxu0
      %1830 = vmatprep.mubr.bf16.mxu0 0
      %1831 = vmatmul.mubr.bf16.gmra.mrb[0].mxu0 %v503
      %v1832 = vpop.f32.mrb[0].mxu0
      %v1833 = vadd.f32 %v1672, %v1832
      %v1834 = vpop.f32.mrb[0].mxu0
      %v1835 = vpop.f32.mrb[0].mxu0
      %v1836 = vadd.f32 %v1672, %v1835
      %v1837 = vpop.f32.mrb[0].mxu0
      %1838 = vmatprep.mubr.bf16.mxu0 0
      %1839 = vmatmul.mubr.bf16.gmra.mrb[0].mxu0 %v506
      %v1840 = vpop.f32.mrb[0].mxu0
      %v1841 = vadd.f32 %v1672, %v1840
      %v1842 = vpop.f32.mrb[0].mxu0
      %v1843 = vpop.f32.mrb[0].mxu0
      %v1844 = vadd.f32 %v1672, %v1843
      %v1845 = vpop.f32.mrb[0].mxu0
      %1846 = vdwg.mxu0
      %s1847 = scalar_lea.vmem %s2, 48
      %v1848 = vld [vmem:[%s1847] sm:$0xf]
      %v1849 = vld [vmem:[%s1847 + $0x4] sm:$0xf]
      %v1850 = vld [vmem:[%s1847 + $0x8] sm:$0xf]
      %v1851 = vld [vmem:[%s1847 + $0xc] sm:$0xf]
      %s1852 = scalar_lea.vmem %s5, 3
      %v1853 = vld [vmem:[%s1852] sm:$0x1]
      %v1855 = vlaneseq
      %v1856 = vshrl.u32 %v1855, 7
      %v1857 = vsub.s32 0, %v1856
      %v1858 = vrot.slane %v1853, %v1857
      %v1864 = vunpack.c.l.b16 %v1848
      %v1865 = vunpack.c.l.b16 %v1849
      %v1866 = vunpack.c.l.b16 %v1850
      %v1867 = vunpack.c.l.b16 %v1851
      %v1868 = vpack.c.b16 %v1865, %v1864
      %v1869 = vpack.c.b16 %v1867, %v1866
      %1872 = vmatprep.subr.bf16.mxu0 0
      %1873 = vmatpush1.bf16.msra.mxu0 %v1868
      %1874 = vmatprep.subr.bf16.mxu0 0
      %1875 = vmatpush1.bf16.msra.mxu0 %v1869
      %1876 = vmatprep.subr.bf16.mxu0 0
      %1877 = vmatpush1.bf16.msra.mxu0 0
      %1878 = vmatprep.subr.bf16.mxu0 0
      %1879 = vmatpush1.bf16.msra.mxu0 0
      %1880 = vmatprep.subr.bf16.mxu0 0
      %1881 = vmatpush1.bf16.msra.mxu0 0
      %1882 = vmatprep.subr.bf16.mxu0 0
      %1883 = vmatpush1.bf16.msra.mxu0 0
      %1884 = vmatprep.subr.bf16.mxu0 0
      %1885 = vmatpush1.bf16.msra.mxu0 0
      %1886 = vmatprep.subr.bf16.mxu0 0
      %1887 = vmatpush1.bf16.msra.mxu0 0
      %1888 = vmatprep.subr.bf16.mxu0 0
      %1889 = vmatpush1.bf16.msra.mxu0 0
      %1890 = vmatprep.subr.bf16.mxu0 0
      %1891 = vmatpush1.bf16.msra.mxu0 0
      %1892 = vmatprep.subr.bf16.mxu0 0
      %1893 = vmatpush1.bf16.msra.mxu0 0
      %1894 = vmatprep.subr.bf16.mxu0 0
      %1895 = vmatpush1.bf16.msra.mxu0 0
      %1896 = vmatprep.subr.bf16.mxu0 0
      %1897 = vmatpush1.bf16.msra.mxu0 0
      %1898 = vmatprep.subr.bf16.mxu0 0
      %1899 = vmatpush1.bf16.msra.mxu0 0
      %1900 = vmatprep.subr.bf16.mxu0 0
      %1901 = vmatpush1.bf16.msra.mxu0 0
      %1902 = vmatprep.subr.bf16.mxu0 0
      %1903 = vmatpush1.bf16.msra.mxu0 0
      %1904 = vmatprep.mubr.bf16.mxu0 0
      %1905 = vmatmul.mubr.bf16.gmra.mrb[0].mxu0 %v461
      %v1906 = vpop.f32.mrb[0].mxu0
      %v1907 = vadd.f32 %v1858, %v1906
      %v1908 = vpop.f32.mrb[0].mxu0
      %v1909 = vpop.f32.mrb[0].mxu0
      %v1910 = vadd.f32 %v1858, %v1909
      %v1911 = vpop.f32.mrb[0].mxu0
      %1912 = vmatprep.mubr.bf16.mxu0 0
      %1913 = vmatmul.mubr.bf16.gmra.mrb[0].mxu0 %v464
      %v1914 = vpop.f32.mrb[0].mxu0
      %v1915 = vadd.f32 %v1858, %v1914
      %v1916 = vpop.f32.mrb[0].mxu0
      %v1917 = vpop.f32.mrb[0].mxu0
      %v1918 = vadd.f32 %v1858, %v1917
      %v1919 = vpop.f32.mrb[0].mxu0
      %1920 = vmatprep.mubr.bf16.mxu0 0
      %1921 = vmatmul.mubr.bf16.gmra.mrb[0].mxu0 %v467
      %v1922 = vpop.f32.mrb[0].mxu0
      %v1923 = vadd.f32 %v1858, %v1922
      %v1924 = vpop.f32.mrb[0].mxu0
      %v1925 = vpop.f32.mrb[0].mxu0
      %v1926 = vadd.f32 %v1858, %v1925
      %v1927 = vpop.f32.mrb[0].mxu0
      %1928 = vmatprep.mubr.bf16.mxu0 0
      %1929 = vmatmul.mubr.bf16.gmra.mrb[0].mxu0 %v470
      %v1930 = vpop.f32.mrb[0].mxu0
      %v1931 = vadd.f32 %v1858, %v1930
      %v1932 = vpop.f32.mrb[0].mxu0
      %v1933 = vpop.f32.mrb[0].mxu0
      %v1934 = vadd.f32 %v1858, %v1933
      %v1935 = vpop.f32.mrb[0].mxu0
      %1936 = vmatprep.mubr.bf16.mxu0 0
      %1937 = vmatmul.mubr.bf16.gmra.mrb[0].mxu0 %v473
      %v1938 = vpop.f32.mrb[0].mxu0
      %v1939 = vadd.f32 %v1858, %v1938
      %v1940 = vpop.f32.mrb[0].mxu0
      %v1941 = vpop.f32.mrb[0].mxu0
      %v1942 = vadd.f32 %v1858, %v1941
      %v1943 = vpop.f32.mrb[0].mxu0
      %1944 = vmatprep.mubr.bf16.mxu0 0
      %1945 = vmatmul.mubr.bf16.gmra.mrb[0].mxu0 %v476
      %v1946 = vpop.f32.mrb[0].mxu0
      %v1947 = vadd.f32 %v1858, %v1946
      %v1948 = vpop.f32.mrb[0].mxu0
      %v1949 = vpop.f32.mrb[0].mxu0
      %v1950 = vadd.f32 %v1858, %v1949
      %v1951 = vpop.f32.mrb[0].mxu0
      %1952 = vmatprep.mubr.bf16.mxu0 0
      %1953 = vmatmul.mubr.bf16.gmra.mrb[0].mxu0 %v479
      %v1954 = vpop.f32.mrb[0].mxu0
      %v1955 = vadd.f32 %v1858, %v1954
      %v1956 = vpop.f32.mrb[0].mxu0
      %v1957 = vpop.f32.mrb[0].mxu0
      %v1958 = vadd.f32 %v1858, %v1957
      %v1959 = vpop.f32.mrb[0].mxu0
      %1960 = vmatprep.mubr.bf16.mxu0 0
      %1961 = vmatmul.mubr.bf16.gmra.mrb[0].mxu0 %v482
      %v1962 = vpop.f32.mrb[0].mxu0
      %v1963 = vadd.f32 %v1858, %v1962
      %v1964 = vpop.f32.mrb[0].mxu0
      %v1965 = vpop.f32.mrb[0].mxu0
      %v1966 = vadd.f32 %v1858, %v1965
      %v1967 = vpop.f32.mrb[0].mxu0
      %1968 = vmatprep.mubr.bf16.mxu0 0
      %1969 = vmatmul.mubr.bf16.gmra.mrb[0].mxu0 %v485
      %v1970 = vpop.f32.mrb[0].mxu0
      %v1971 = vadd.f32 %v1858, %v1970
      %v1972 = vpop.f32.mrb[0].mxu0
      %v1973 = vpop.f32.mrb[0].mxu0
      %v1974 = vadd.f32 %v1858, %v1973
      %v1975 = vpop.f32.mrb[0].mxu0
      %1976 = vmatprep.mubr.bf16.mxu0 0
      %1977 = vmatmul.mubr.bf16.gmra.mrb[0].mxu0 %v488
      %v1978 = vpop.f32.mrb[0].mxu0
      %v1979 = vadd.f32 %v1858, %v1978
      %v1980 = vpop.f32.mrb[0].mxu0
      %v1981 = vpop.f32.mrb[0].mxu0
      %v1982 = vadd.f32 %v1858, %v1981
      %v1983 = vpop.f32.mrb[0].mxu0
      %1984 = vmatprep.mubr.bf16.mxu0 0
      %1985 = vmatmul.mubr.bf16.gmra.mrb[0].mxu0 %v491
      %v1986 = vpop.f32.mrb[0].mxu0
      %v1987 = vadd.f32 %v1858, %v1986
      %v1988 = vpop.f32.mrb[0].mxu0
      %v1989 = vpop.f32.mrb[0].mxu0
      %v1990 = vadd.f32 %v1858, %v1989
      %v1991 = vpop.f32.mrb[0].mxu0
      %1992 = vmatprep.mubr.bf16.mxu0 0
      %1993 = vmatmul.mubr.bf16.gmra.mrb[0].mxu0 %v494
      %v1994 = vpop.f32.mrb[0].mxu0
      %v1995 = vadd.f32 %v1858, %v1994
      %v1996 = vpop.f32.mrb[0].mxu0
      %v1997 = vpop.f32.mrb[0].mxu0
      %v1998 = vadd.f32 %v1858, %v1997
      %v1999 = vpop.f32.mrb[0].mxu0
      %2000 = vmatprep.mubr.bf16.mxu0 0
      %2001 = vmatmul.mubr.bf16.gmra.mrb[0].mxu0 %v497
      %v2002 = vpop.f32.mrb[0].mxu0
      %v2003 = vadd.f32 %v1858, %v2002
      %v2004 = vpop.f32.mrb[0].mxu0
      %v2005 = vpop.f32.mrb[0].mxu0
      %v2006 = vadd.f32 %v1858, %v2005
      %v2007 = vpop.f32.mrb[0].mxu0
      %2008 = vmatprep.mubr.bf16.mxu0 0
      %2009 = vmatmul.mubr.bf16.gmra.mrb[0].mxu0 %v500
      %v2010 = vpop.f32.mrb[0].mxu0
      %v2011 = vadd.f32 %v1858, %v2010
      %v2012 = vpop.f32.mrb[0].mxu0
      %v2013 = vpop.f32.mrb[0].mxu0
      %v2014 = vadd.f32 %v1858, %v2013
      %v2015 = vpop.f32.mrb[0].mxu0
      %2016 = vmatprep.mubr.bf16.mxu0 0
      %2017 = vmatmul.mubr.bf16.gmra.mrb[0].mxu0 %v503
      %v2018 = vpop.f32.mrb[0].mxu0
      %v2019 = vadd.f32 %v1858, %v2018
      %v2020 = vpop.f32.mrb[0].mxu0
      %v2021 = vpop.f32.mrb[0].mxu0
      %v2022 = vadd.f32 %v1858, %v2021
      %v2023 = vpop.f32.mrb[0].mxu0
      %2024 = vmatprep.mubr.bf16.mxu0 0
      %2025 = vmatmul.mubr.bf16.gmra.mrb[0].mxu0 %v506
      %v2026 = vpop.f32.mrb[0].mxu0
      %v2027 = vadd.f32 %v1858, %v2026
      %v2028 = vpop.f32.mrb[0].mxu0
      %v2029 = vpop.f32.mrb[0].mxu0
      %v2030 = vadd.f32 %v1858, %v2029
      %v2031 = vpop.f32.mrb[0].mxu0
      %2032 = vdwg.mxu0
      %v2033 = vpack.c.bf16 %v1352, %v1349
      %v2034 = vpack.c.bf16 %v1360, %v1357
      %v2035 = vpack.c.bf16 %v1368, %v1365
      %v2036 = vpack.c.bf16 %v1376, %v1373
      %v2037 = vpack.c.bf16 %v1384, %v1381
      %v2038 = vpack.c.bf16 %v1392, %v1389
      %v2039 = vpack.c.bf16 %v1400, %v1397
      %v2040 = vpack.c.bf16 %v1408, %v1405
      %v2041 = vpack.c.bf16 %v1416, %v1413
      %v2042 = vpack.c.bf16 %v1424, %v1421
      %v2043 = vpack.c.bf16 %v1432, %v1429
      %v2044 = vpack.c.bf16 %v1440, %v1437
      %v2045 = vpack.c.bf16 %v1448, %v1445
      %v2046 = vpack.c.bf16 %v1456, %v1453
      %v2047 = vpack.c.bf16 %v1464, %v1461
      %v2048 = vpack.c.bf16 %v1472, %v1469
      %v2049 = vpack.c.bf16 %v1538, %v1535
      %v2050 = vpack.c.bf16 %v1546, %v1543
      %v2051 = vpack.c.bf16 %v1554, %v1551
      %v2052 = vpack.c.bf16 %v1562, %v1559
      %v2053 = vpack.c.bf16 %v1570, %v1567
      %v2054 = vpack.c.bf16 %v1578, %v1575
      %v2055 = vpack.c.bf16 %v1586, %v1583
      %v2056 = vpack.c.bf16 %v1594, %v1591
      %v2057 = vpack.c.bf16 %v1602, %v1599
      %v2058 = vpack.c.bf16 %v1610, %v1607
      %v2059 = vpack.c.bf16 %v1618, %v1615
      %v2060 = vpack.c.bf16 %v1626, %v1623
      %v2061 = vpack.c.bf16 %v1634, %v1631
      %v2062 = vpack.c.bf16 %v1642, %v1639
      %v2063 = vpack.c.bf16 %v1650, %v1647
      %v2064 = vpack.c.bf16 %v1658, %v1655
      %v2065 = vpack.c.bf16 %v1724, %v1721
      %v2066 = vpack.c.bf16 %v1732, %v1729
      %v2067 = vpack.c.bf16 %v1740, %v1737
      %v2068 = vpack.c.bf16 %v1748, %v1745
      %v2069 = vpack.c.bf16 %v1756, %v1753
      %v2070 = vpack.c.bf16 %v1764, %v1761
      %v2071 = vpack.c.bf16 %v1772, %v1769
      %v2072 = vpack.c.bf16 %v1780, %v1777
      %v2073 = vpack.c.bf16 %v1788, %v1785
      %v2074 = vpack.c.bf16 %v1796, %v1793
      %v2075 = vpack.c.bf16 %v1804, %v1801
      %v2076 = vpack.c.bf16 %v1812, %v1809
      %v2077 = vpack.c.bf16 %v1820, %v1817
      %v2078 = vpack.c.bf16 %v1828, %v1825
      %v2079 = vpack.c.bf16 %v1836, %v1833
      %v2080 = vpack.c.bf16 %v1844, %v1841
      %v2081 = vpack.c.bf16 %v1910, %v1907
      %v2082 = vpack.c.bf16 %v1918, %v1915
      %v2083 = vpack.c.bf16 %v1926, %v1923
      %v2084 = vpack.c.bf16 %v1934, %v1931
      %v2085 = vpack.c.bf16 %v1942, %v1939
      %v2086 = vpack.c.bf16 %v1950, %v1947
      %v2087 = vpack.c.bf16 %v1958, %v1955
      %v2088 = vpack.c.bf16 %v1966, %v1963
      %v2089 = vpack.c.bf16 %v1974, %v1971
      %v2090 = vpack.c.bf16 %v1982, %v1979
      %v2091 = vpack.c.bf16 %v1990, %v1987
      %v2092 = vpack.c.bf16 %v1998, %v1995
      %v2093 = vpack.c.bf16 %v2006, %v2003
      %v2094 = vpack.c.bf16 %v2014, %v2011
      %v2095 = vpack.c.bf16 %v2022, %v2019
      %v2096 = vpack.c.bf16 %v2030, %v2027
      %v2097 = vld [vmem:[%s3] sm:$0xf]
      %v2098 = vld [vmem:[%s3 + $0x4] sm:$0xf]
      %v2099 = vld [vmem:[%s3 + $0x8] sm:$0xf]
      %v2100 = vld [vmem:[%s3 + $0xc] sm:$0xf]
      %v2101 = vld [vmem:[%s6] sm:$0x1]
      %v2103 = vlaneseq
      %v2104 = vshrl.u32 %v2103, 7
      %v2105 = vsub.s32 0, %v2104
      %v2106 = vrot.slane %v2101, %v2105
      %v2112 = vunpack.c.l.b16 %v2097
      %v2113 = vunpack.c.l.b16 %v2098
      %v2114 = vunpack.c.l.b16 %v2099
      %v2115 = vunpack.c.l.b16 %v2100
      %v2116 = vpack.c.b16 %v2113, %v2112
      %v2117 = vpack.c.b16 %v2115, %v2114
      %2120 = vmatprep.subr.bf16.mxu0 0
      %2121 = vmatpush1.bf16.msra.mxu0 %v2116
      %2122 = vmatprep.subr.bf16.mxu0 0
      %2123 = vmatpush1.bf16.msra.mxu0 %v2117
      %2124 = vmatprep.subr.bf16.mxu0 0
      %2125 = vmatpush1.bf16.msra.mxu0 0
      %2126 = vmatprep.subr.bf16.mxu0 0
      %2127 = vmatpush1.bf16.msra.mxu0 0
      %2128 = vmatprep.subr.bf16.mxu0 0
      %2129 = vmatpush1.bf16.msra.mxu0 0
      %2130 = vmatprep.subr.bf16.mxu0 0
      %2131 = vmatpush1.bf16.msra.mxu0 0
      %2132 = vmatprep.subr.bf16.mxu0 0
      %2133 = vmatpush1.bf16.msra.mxu0 0
      %2134 = vmatprep.subr.bf16.mxu0 0
      %2135 = vmatpush1.bf16.msra.mxu0 0
      %2136 = vmatprep.subr.bf16.mxu0 0
      %2137 = vmatpush1.bf16.msra.mxu0 0
      %2138 = vmatprep.subr.bf16.mxu0 0
      %2139 = vmatpush1.bf16.msra.mxu0 0
      %2140 = vmatprep.subr.bf16.mxu0 0
      %2141 = vmatpush1.bf16.msra.mxu0 0
      %2142 = vmatprep.subr.bf16.mxu0 0
      %2143 = vmatpush1.bf16.msra.mxu0 0
      %2144 = vmatprep.subr.bf16.mxu0 0
      %2145 = vmatpush1.bf16.msra.mxu0 0
      %2146 = vmatprep.subr.bf16.mxu0 0
      %2147 = vmatpush1.bf16.msra.mxu0 0
      %2148 = vmatprep.subr.bf16.mxu0 0
      %2149 = vmatpush1.bf16.msra.mxu0 0
      %2150 = vmatprep.subr.bf16.mxu0 0
      %2151 = vmatpush1.bf16.msra.mxu0 0
      %2152 = vmatprep.mubr.bf16.mxu0 0
      %2153 = vmatmul.mubr.bf16.gmra.mrb[0].mxu0 %v461
      %v2154 = vpop.f32.mrb[0].mxu0
      %v2155 = vadd.f32 %v2106, %v2154
      %v2156 = vpop.f32.mrb[0].mxu0
      %v2157 = vpop.f32.mrb[0].mxu0
      %v2158 = vadd.f32 %v2106, %v2157
      %v2159 = vpop.f32.mrb[0].mxu0
      %2160 = vmatprep.mubr.bf16.mxu0 0
      %2161 = vmatmul.mubr.bf16.gmra.mrb[0].mxu0 %v464
      %v2162 = vpop.f32.mrb[0].mxu0
      %v2163 = vadd.f32 %v2106, %v2162
      %v2164 = vpop.f32.mrb[0].mxu0
      %v2165 = vpop.f32.mrb[0].mxu0
      %v2166 = vadd.f32 %v2106, %v2165
      %v2167 = vpop.f32.mrb[0].mxu0
      %2168 = vmatprep.mubr.bf16.mxu0 0
      %2169 = vmatmul.mubr.bf16.gmra.mrb[0].mxu0 %v467
      %v2170 = vpop.f32.mrb[0].mxu0
      %v2171 = vadd.f32 %v2106, %v2170
      %v2172 = vpop.f32.mrb[0].mxu0
      %v2173 = vpop.f32.mrb[0].mxu0
      %v2174 = vadd.f32 %v2106, %v2173
      %v2175 = vpop.f32.mrb[0].mxu0
      %2176 = vmatprep.mubr.bf16.mxu0 0
      %2177 = vmatmul.mubr.bf16.gmra.mrb[0].mxu0 %v470
      %v2178 = vpop.f32.mrb[0].mxu0
      %v2179 = vadd.f32 %v2106, %v2178
      %v2180 = vpop.f32.mrb[0].mxu0
      %v2181 = vpop.f32.mrb[0].mxu0
      %v2182 = vadd.f32 %v2106, %v2181
      %v2183 = vpop.f32.mrb[0].mxu0
      %2184 = vmatprep.mubr.bf16.mxu0 0
      %2185 = vmatmul.mubr.bf16.gmra.mrb[0].mxu0 %v473
      %v2186 = vpop.f32.mrb[0].mxu0
      %v2187 = vadd.f32 %v2106, %v2186
      %v2188 = vpop.f32.mrb[0].mxu0
      %v2189 = vpop.f32.mrb[0].mxu0
      %v2190 = vadd.f32 %v2106, %v2189
      %v2191 = vpop.f32.mrb[0].mxu0
      %2192 = vmatprep.mubr.bf16.mxu0 0
      %2193 = vmatmul.mubr.bf16.gmra.mrb[0].mxu0 %v476
      %v2194 = vpop.f32.mrb[0].mxu0
      %v2195 = vadd.f32 %v2106, %v2194
      %v2196 = vpop.f32.mrb[0].mxu0
      %v2197 = vpop.f32.mrb[0].mxu0
      %v2198 = vadd.f32 %v2106, %v2197
      %v2199 = vpop.f32.mrb[0].mxu0
      %2200 = vmatprep.mubr.bf16.mxu0 0
      %2201 = vmatmul.mubr.bf16.gmra.mrb[0].mxu0 %v479
      %v2202 = vpop.f32.mrb[0].mxu0
      %v2203 = vadd.f32 %v2106, %v2202
      %v2204 = vpop.f32.mrb[0].mxu0
      %v2205 = vpop.f32.mrb[0].mxu0
      %v2206 = vadd.f32 %v2106, %v2205
      %v2207 = vpop.f32.mrb[0].mxu0
      %2208 = vmatprep.mubr.bf16.mxu0 0
      %2209 = vmatmul.mubr.bf16.gmra.mrb[0].mxu0 %v482
      %v2210 = vpop.f32.mrb[0].mxu0
      %v2211 = vadd.f32 %v2106, %v2210
      %v2212 = vpop.f32.mrb[0].mxu0
      %v2213 = vpop.f32.mrb[0].mxu0
      %v2214 = vadd.f32 %v2106, %v2213
      %v2215 = vpop.f32.mrb[0].mxu0
      %2216 = vmatprep.mubr.bf16.mxu0 0
      %2217 = vmatmul.mubr.bf16.gmra.mrb[0].mxu0 %v485
      %v2218 = vpop.f32.mrb[0].mxu0
      %v2219 = vadd.f32 %v2106, %v2218
      %v2220 = vpop.f32.mrb[0].mxu0
      %v2221 = vpop.f32.mrb[0].mxu0
      %v2222 = vadd.f32 %v2106, %v2221
      %v2223 = vpop.f32.mrb[0].mxu0
      %2224 = vmatprep.mubr.bf16.mxu0 0
      %2225 = vmatmul.mubr.bf16.gmra.mrb[0].mxu0 %v488
      %v2226 = vpop.f32.mrb[0].mxu0
      %v2227 = vadd.f32 %v2106, %v2226
      %v2228 = vpop.f32.mrb[0].mxu0
      %v2229 = vpop.f32.mrb[0].mxu0
      %v2230 = vadd.f32 %v2106, %v2229
      %v2231 = vpop.f32.mrb[0].mxu0
      %2232 = vmatprep.mubr.bf16.mxu0 0
      %2233 = vmatmul.mubr.bf16.gmra.mrb[0].mxu0 %v491
      %v2234 = vpop.f32.mrb[0].mxu0
      %v2235 = vadd.f32 %v2106, %v2234
      %v2236 = vpop.f32.mrb[0].mxu0
      %v2237 = vpop.f32.mrb[0].mxu0
      %v2238 = vadd.f32 %v2106, %v2237
      %v2239 = vpop.f32.mrb[0].mxu0
      %2240 = vmatprep.mubr.bf16.mxu0 0
      %2241 = vmatmul.mubr.bf16.gmra.mrb[0].mxu0 %v494
      %v2242 = vpop.f32.mrb[0].mxu0
      %v2243 = vadd.f32 %v2106, %v2242
      %v2244 = vpop.f32.mrb[0].mxu0
      %v2245 = vpop.f32.mrb[0].mxu0
      %v2246 = vadd.f32 %v2106, %v2245
      %v2247 = vpop.f32.mrb[0].mxu0
      %2248 = vmatprep.mubr.bf16.mxu0 0
      %2249 = vmatmul.mubr.bf16.gmra.mrb[0].mxu0 %v497
      %v2250 = vpop.f32.mrb[0].mxu0
      %v2251 = vadd.f32 %v2106, %v2250
      %v2252 = vpop.f32.mrb[0].mxu0
      %v2253 = vpop.f32.mrb[0].mxu0
      %v2254 = vadd.f32 %v2106, %v2253
      %v2255 = vpop.f32.mrb[0].mxu0
      %2256 = vmatprep.mubr.bf16.mxu0 0
      %2257 = vmatmul.mubr.bf16.gmra.mrb[0].mxu0 %v500
      %v2258 = vpop.f32.mrb[0].mxu0
      %v2259 = vadd.f32 %v2106, %v2258
      %v2260 = vpop.f32.mrb[0].mxu0
      %v2261 = vpop.f32.mrb[0].mxu0
      %v2262 = vadd.f32 %v2106, %v2261
      %v2263 = vpop.f32.mrb[0].mxu0
      %2264 = vmatprep.mubr.bf16.mxu0 0
      %2265 = vmatmul.mubr.bf16.gmra.mrb[0].mxu0 %v503
      %v2266 = vpop.f32.mrb[0].mxu0
      %v2267 = vadd.f32 %v2106, %v2266
      %v2268 = vpop.f32.mrb[0].mxu0
      %v2269 = vpop.f32.mrb[0].mxu0
      %v2270 = vadd.f32 %v2106, %v2269
      %v2271 = vpop.f32.mrb[0].mxu0
      %2272 = vmatprep.mubr.bf16.mxu0 0
      %2273 = vmatmul.mubr.bf16.gmra.mrb[0].mxu0 %v506
      %v2274 = vpop.f32.mrb[0].mxu0
      %v2275 = vadd.f32 %v2106, %v2274
      %v2276 = vpop.f32.mrb[0].mxu0
      %v2277 = vpop.f32.mrb[0].mxu0
      %v2278 = vadd.f32 %v2106, %v2277
      %v2279 = vpop.f32.mrb[0].mxu0
      %2280 = vdwg.mxu0
      %s2281 = scalar_lea.vmem %s3, 16
      %v2282 = vld [vmem:[%s2281] sm:$0xf]
      %v2283 = vld [vmem:[%s2281 + $0x4] sm:$0xf]
      %v2284 = vld [vmem:[%s2281 + $0x8] sm:$0xf]
      %v2285 = vld [vmem:[%s2281 + $0xc] sm:$0xf]
      %s2286 = scalar_lea.vmem %s6, 1
      %v2287 = vld [vmem:[%s2286] sm:$0x1]
      %v2289 = vlaneseq
      %v2290 = vshrl.u32 %v2289, 7
      %v2291 = vsub.s32 0, %v2290
      %v2292 = vrot.slane %v2287, %v2291
      %v2298 = vunpack.c.l.b16 %v2282
      %v2299 = vunpack.c.l.b16 %v2283
      %v2300 = vunpack.c.l.b16 %v2284
      %v2301 = vunpack.c.l.b16 %v2285
      %v2302 = vpack.c.b16 %v2299, %v2298
      %v2303 = vpack.c.b16 %v2301, %v2300
      %2306 = vmatprep.subr.bf16.mxu0 0
      %2307 = vmatpush1.bf16.msra.mxu0 %v2302
      %2308 = vmatprep.subr.bf16.mxu0 0
      %2309 = vmatpush1.bf16.msra.mxu0 %v2303
      %2310 = vmatprep.subr.bf16.mxu0 0
      %2311 = vmatpush1.bf16.msra.mxu0 0
      %2312 = vmatprep.subr.bf16.mxu0 0
      %2313 = vmatpush1.bf16.msra.mxu0 0
      %2314 = vmatprep.subr.bf16.mxu0 0
      %2315 = vmatpush1.bf16.msra.mxu0 0
      %2316 = vmatprep.subr.bf16.mxu0 0
      %2317 = vmatpush1.bf16.msra.mxu0 0
      %2318 = vmatprep.subr.bf16.mxu0 0
      %2319 = vmatpush1.bf16.msra.mxu0 0
      %2320 = vmatprep.subr.bf16.mxu0 0
      %2321 = vmatpush1.bf16.msra.mxu0 0
      %2322 = vmatprep.subr.bf16.mxu0 0
      %2323 = vmatpush1.bf16.msra.mxu0 0
      %2324 = vmatprep.subr.bf16.mxu0 0
      %2325 = vmatpush1.bf16.msra.mxu0 0
      %2326 = vmatprep.subr.bf16.mxu0 0
      %2327 = vmatpush1.bf16.msra.mxu0 0
      %2328 = vmatprep.subr.bf16.mxu0 0
      %2329 = vmatpush1.bf16.msra.mxu0 0
      %2330 = vmatprep.subr.bf16.mxu0 0
      %2331 = vmatpush1.bf16.msra.mxu0 0
      %2332 = vmatprep.subr.bf16.mxu0 0
      %2333 = vmatpush1.bf16.msra.mxu0 0
      %2334 = vmatprep.subr.bf16.mxu0 0
      %2335 = vmatpush1.bf16.msra.mxu0 0
      %2336 = vmatprep.subr.bf16.mxu0 0
      %2337 = vmatpush1.bf16.msra.mxu0 0
      %2338 = vmatprep.mubr.bf16.mxu0 0
      %2339 = vmatmul.mubr.bf16.gmra.mrb[0].mxu0 %v461
      %v2340 = vpop.f32.mrb[0].mxu0
      %v2341 = vadd.f32 %v2292, %v2340
      %v2342 = vpop.f32.mrb[0].mxu0
      %v2343 = vpop.f32.mrb[0].mxu0
      %v2344 = vadd.f32 %v2292, %v2343
      %v2345 = vpop.f32.mrb[0].mxu0
      %2346 = vmatprep.mubr.bf16.mxu0 0
      %2347 = vmatmul.mubr.bf16.gmra.mrb[0].mxu0 %v464
      %v2348 = vpop.f32.mrb[0].mxu0
      %v2349 = vadd.f32 %v2292, %v2348
      %v2350 = vpop.f32.mrb[0].mxu0
      %v2351 = vpop.f32.mrb[0].mxu0
      %v2352 = vadd.f32 %v2292, %v2351
      %v2353 = vpop.f32.mrb[0].mxu0
      %2354 = vmatprep.mubr.bf16.mxu0 0
      %2355 = vmatmul.mubr.bf16.gmra.mrb[0].mxu0 %v467
      %v2356 = vpop.f32.mrb[0].mxu0
      %v2357 = vadd.f32 %v2292, %v2356
      %v2358 = vpop.f32.mrb[0].mxu0
      %v2359 = vpop.f32.mrb[0].mxu0
      %v2360 = vadd.f32 %v2292, %v2359
      %v2361 = vpop.f32.mrb[0].mxu0
      %2362 = vmatprep.mubr.bf16.mxu0 0
      %2363 = vmatmul.mubr.bf16.gmra.mrb[0].mxu0 %v470
      %v2364 = vpop.f32.mrb[0].mxu0
      %v2365 = vadd.f32 %v2292, %v2364
      %v2366 = vpop.f32.mrb[0].mxu0
      %v2367 = vpop.f32.mrb[0].mxu0
      %v2368 = vadd.f32 %v2292, %v2367
      %v2369 = vpop.f32.mrb[0].mxu0
      %2370 = vmatprep.mubr.bf16.mxu0 0
      %2371 = vmatmul.mubr.bf16.gmra.mrb[0].mxu0 %v473
      %v2372 = vpop.f32.mrb[0].mxu0
      %v2373 = vadd.f32 %v2292, %v2372
      %v2374 = vpop.f32.mrb[0].mxu0
      %v2375 = vpop.f32.mrb[0].mxu0
      %v2376 = vadd.f32 %v2292, %v2375
      %v2377 = vpop.f32.mrb[0].mxu0
      %2378 = vmatprep.mubr.bf16.mxu0 0
      %2379 = vmatmul.mubr.bf16.gmra.mrb[0].mxu0 %v476
      %v2380 = vpop.f32.mrb[0].mxu0
      %v2381 = vadd.f32 %v2292, %v2380
      %v2382 = vpop.f32.mrb[0].mxu0
      %v2383 = vpop.f32.mrb[0].mxu0
      %v2384 = vadd.f32 %v2292, %v2383
      %v2385 = vpop.f32.mrb[0].mxu0
      %2386 = vmatprep.mubr.bf16.mxu0 0
      %2387 = vmatmul.mubr.bf16.gmra.mrb[0].mxu0 %v479
      %v2388 = vpop.f32.mrb[0].mxu0
      %v2389 = vadd.f32 %v2292, %v2388
      %v2390 = vpop.f32.mrb[0].mxu0
      %v2391 = vpop.f32.mrb[0].mxu0
      %v2392 = vadd.f32 %v2292, %v2391
      %v2393 = vpop.f32.mrb[0].mxu0
      %2394 = vmatprep.mubr.bf16.mxu0 0
      %2395 = vmatmul.mubr.bf16.gmra.mrb[0].mxu0 %v482
      %v2396 = vpop.f32.mrb[0].mxu0
      %v2397 = vadd.f32 %v2292, %v2396
      %v2398 = vpop.f32.mrb[0].mxu0
      %v2399 = vpop.f32.mrb[0].mxu0
      %v2400 = vadd.f32 %v2292, %v2399
      %v2401 = vpop.f32.mrb[0].mxu0
      %2402 = vmatprep.mubr.bf16.mxu0 0
      %2403 = vmatmul.mubr.bf16.gmra.mrb[0].mxu0 %v485
      %v2404 = vpop.f32.mrb[0].mxu0
      %v2405 = vadd.f32 %v2292, %v2404
      %v2406 = vpop.f32.mrb[0].mxu0
      %v2407 = vpop.f32.mrb[0].mxu0
      %v2408 = vadd.f32 %v2292, %v2407
      %v2409 = vpop.f32.mrb[0].mxu0
      %2410 = vmatprep.mubr.bf16.mxu0 0
      %2411 = vmatmul.mubr.bf16.gmra.mrb[0].mxu0 %v488
      %v2412 = vpop.f32.mrb[0].mxu0
      %v2413 = vadd.f32 %v2292, %v2412
      %v2414 = vpop.f32.mrb[0].mxu0
      %v2415 = vpop.f32.mrb[0].mxu0
      %v2416 = vadd.f32 %v2292, %v2415
      %v2417 = vpop.f32.mrb[0].mxu0
      %2418 = vmatprep.mubr.bf16.mxu0 0
      %2419 = vmatmul.mubr.bf16.gmra.mrb[0].mxu0 %v491
      %v2420 = vpop.f32.mrb[0].mxu0
      %v2421 = vadd.f32 %v2292, %v2420
      %v2422 = vpop.f32.mrb[0].mxu0
      %v2423 = vpop.f32.mrb[0].mxu0
      %v2424 = vadd.f32 %v2292, %v2423
      %v2425 = vpop.f32.mrb[0].mxu0
      %2426 = vmatprep.mubr.bf16.mxu0 0
      %2427 = vmatmul.mubr.bf16.gmra.mrb[0].mxu0 %v494
      %v2428 = vpop.f32.mrb[0].mxu0
      %v2429 = vadd.f32 %v2292, %v2428
      %v2430 = vpop.f32.mrb[0].mxu0
      %v2431 = vpop.f32.mrb[0].mxu0
      %v2432 = vadd.f32 %v2292, %v2431
      %v2433 = vpop.f32.mrb[0].mxu0
      %2434 = vmatprep.mubr.bf16.mxu0 0
      %2435 = vmatmul.mubr.bf16.gmra.mrb[0].mxu0 %v497
      %v2436 = vpop.f32.mrb[0].mxu0
      %v2437 = vadd.f32 %v2292, %v2436
      %v2438 = vpop.f32.mrb[0].mxu0
      %v2439 = vpop.f32.mrb[0].mxu0
      %v2440 = vadd.f32 %v2292, %v2439
      %v2441 = vpop.f32.mrb[0].mxu0
      %2442 = vmatprep.mubr.bf16.mxu0 0
      %2443 = vmatmul.mubr.bf16.gmra.mrb[0].mxu0 %v500
      %v2444 = vpop.f32.mrb[0].mxu0
      %v2445 = vadd.f32 %v2292, %v2444
      %v2446 = vpop.f32.mrb[0].mxu0
      %v2447 = vpop.f32.mrb[0].mxu0
      %v2448 = vadd.f32 %v2292, %v2447
      %v2449 = vpop.f32.mrb[0].mxu0
      %2450 = vmatprep.mubr.bf16.mxu0 0
      %2451 = vmatmul.mubr.bf16.gmra.mrb[0].mxu0 %v503
      %v2452 = vpop.f32.mrb[0].mxu0
      %v2453 = vadd.f32 %v2292, %v2452
      %v2454 = vpop.f32.mrb[0].mxu0
      %v2455 = vpop.f32.mrb[0].mxu0
      %v2456 = vadd.f32 %v2292, %v2455
      %v2457 = vpop.f32.mrb[0].mxu0
      %2458 = vmatprep.mubr.bf16.mxu0 0
      %2459 = vmatmul.mubr.bf16.gmra.mrb[0].mxu0 %v506
      %v2460 = vpop.f32.mrb[0].mxu0
      %v2461 = vadd.f32 %v2292, %v2460
      %v2462 = vpop.f32.mrb[0].mxu0
      %v2463 = vpop.f32.mrb[0].mxu0
      %v2464 = vadd.f32 %v2292, %v2463
      %v2465 = vpop.f32.mrb[0].mxu0
      %2466 = vdwg.mxu0
      %s2467 = scalar_lea.vmem %s3, 32
      %v2468 = vld [vmem:[%s2467] sm:$0xf]
      %v2469 = vld [vmem:[%s2467 + $0x4] sm:$0xf]
      %v2470 = vld [vmem:[%s2467 + $0x8] sm:$0xf]
      %v2471 = vld [vmem:[%s2467 + $0xc] sm:$0xf]
      %s2472 = scalar_lea.vmem %s6, 2
      %v2473 = vld [vmem:[%s2472] sm:$0x1]
      %v2475 = vlaneseq
      %v2476 = vshrl.u32 %v2475, 7
      %v2477 = vsub.s32 0, %v2476
      %v2478 = vrot.slane %v2473, %v2477
      %v2484 = vunpack.c.l.b16 %v2468
      %v2485 = vunpack.c.l.b16 %v2469
      %v2486 = vunpack.c.l.b16 %v2470
      %v2487 = vunpack.c.l.b16 %v2471
      %v2488 = vpack.c.b16 %v2485, %v2484
      %v2489 = vpack.c.b16 %v2487, %v2486
      %2492 = vmatprep.subr.bf16.mxu0 0
      %2493 = vmatpush1.bf16.msra.mxu0 %v2488
      %2494 = vmatprep.subr.bf16.mxu0 0
      %2495 = vmatpush1.bf16.msra.mxu0 %v2489
      %2496 = vmatprep.subr.bf16.mxu0 0
      %2497 = vmatpush1.bf16.msra.mxu0 0
      %2498 = vmatprep.subr.bf16.mxu0 0
      %2499 = vmatpush1.bf16.msra.mxu0 0
      %2500 = vmatprep.subr.bf16.mxu0 0
      %2501 = vmatpush1.bf16.msra.mxu0 0
      %2502 = vmatprep.subr.bf16.mxu0 0
      %2503 = vmatpush1.bf16.msra.mxu0 0
      %2504 = vmatprep.subr.bf16.mxu0 0
      %2505 = vmatpush1.bf16.msra.mxu0 0
      %2506 = vmatprep.subr.bf16.mxu0 0
      %2507 = vmatpush1.bf16.msra.mxu0 0
      %2508 = vmatprep.subr.bf16.mxu0 0
      %2509 = vmatpush1.bf16.msra.mxu0 0
      %2510 = vmatprep.subr.bf16.mxu0 0
      %2511 = vmatpush1.bf16.msra.mxu0 0
      %2512 = vmatprep.subr.bf16.mxu0 0
      %2513 = vmatpush1.bf16.msra.mxu0 0
      %2514 = vmatprep.subr.bf16.mxu0 0
      %2515 = vmatpush1.bf16.msra.mxu0 0
      %2516 = vmatprep.subr.bf16.mxu0 0
      %2517 = vmatpush1.bf16.msra.mxu0 0
      %2518 = vmatprep.subr.bf16.mxu0 0
      %2519 = vmatpush1.bf16.msra.mxu0 0
      %2520 = vmatprep.subr.bf16.mxu0 0
      %2521 = vmatpush1.bf16.msra.mxu0 0
      %2522 = vmatprep.subr.bf16.mxu0 0
      %2523 = vmatpush1.bf16.msra.mxu0 0
      %2524 = vmatprep.mubr.bf16.mxu0 0
      %2525 = vmatmul.mubr.bf16.gmra.mrb[0].mxu0 %v461
      %v2526 = vpop.f32.mrb[0].mxu0
      %v2527 = vadd.f32 %v2478, %v2526
      %v2528 = vpop.f32.mrb[0].mxu0
      %v2529 = vpop.f32.mrb[0].mxu0
      %v2530 = vadd.f32 %v2478, %v2529
      %v2531 = vpop.f32.mrb[0].mxu0
      %2532 = vmatprep.mubr.bf16.mxu0 0
      %2533 = vmatmul.mubr.bf16.gmra.mrb[0].mxu0 %v464
      %v2534 = vpop.f32.mrb[0].mxu0
      %v2535 = vadd.f32 %v2478, %v2534
      %v2536 = vpop.f32.mrb[0].mxu0
      %v2537 = vpop.f32.mrb[0].mxu0
      %v2538 = vadd.f32 %v2478, %v2537
      %v2539 = vpop.f32.mrb[0].mxu0
      %2540 = vmatprep.mubr.bf16.mxu0 0
      %2541 = vmatmul.mubr.bf16.gmra.mrb[0].mxu0 %v467
      %v2542 = vpop.f32.mrb[0].mxu0
      %v2543 = vadd.f32 %v2478, %v2542
      %v2544 = vpop.f32.mrb[0].mxu0
      %v2545 = vpop.f32.mrb[0].mxu0
      %v2546 = vadd.f32 %v2478, %v2545
      %v2547 = vpop.f32.mrb[0].mxu0
      %2548 = vmatprep.mubr.bf16.mxu0 0
      %2549 = vmatmul.mubr.bf16.gmra.mrb[0].mxu0 %v470
      %v2550 = vpop.f32.mrb[0].mxu0
      %v2551 = vadd.f32 %v2478, %v2550
      %v2552 = vpop.f32.mrb[0].mxu0
      %v2553 = vpop.f32.mrb[0].mxu0
      %v2554 = vadd.f32 %v2478, %v2553
      %v2555 = vpop.f32.mrb[0].mxu0
      %2556 = vmatprep.mubr.bf16.mxu0 0
      %2557 = vmatmul.mubr.bf16.gmra.mrb[0].mxu0 %v473
      %v2558 = vpop.f32.mrb[0].mxu0
      %v2559 = vadd.f32 %v2478, %v2558
      %v2560 = vpop.f32.mrb[0].mxu0
      %v2561 = vpop.f32.mrb[0].mxu0
      %v2562 = vadd.f32 %v2478, %v2561
      %v2563 = vpop.f32.mrb[0].mxu0
      %2564 = vmatprep.mubr.bf16.mxu0 0
      %2565 = vmatmul.mubr.bf16.gmra.mrb[0].mxu0 %v476
      %v2566 = vpop.f32.mrb[0].mxu0
      %v2567 = vadd.f32 %v2478, %v2566
      %v2568 = vpop.f32.mrb[0].mxu0
      %v2569 = vpop.f32.mrb[0].mxu0
      %v2570 = vadd.f32 %v2478, %v2569
      %v2571 = vpop.f32.mrb[0].mxu0
      %2572 = vmatprep.mubr.bf16.mxu0 0
      %2573 = vmatmul.mubr.bf16.gmra.mrb[0].mxu0 %v479
      %v2574 = vpop.f32.mrb[0].mxu0
      %v2575 = vadd.f32 %v2478, %v2574
      %v2576 = vpop.f32.mrb[0].mxu0
      %v2577 = vpop.f32.mrb[0].mxu0
      %v2578 = vadd.f32 %v2478, %v2577
      %v2579 = vpop.f32.mrb[0].mxu0
      %2580 = vmatprep.mubr.bf16.mxu0 0
      %2581 = vmatmul.mubr.bf16.gmra.mrb[0].mxu0 %v482
      %v2582 = vpop.f32.mrb[0].mxu0
      %v2583 = vadd.f32 %v2478, %v2582
      %v2584 = vpop.f32.mrb[0].mxu0
      %v2585 = vpop.f32.mrb[0].mxu0
      %v2586 = vadd.f32 %v2478, %v2585
      %v2587 = vpop.f32.mrb[0].mxu0
      %2588 = vmatprep.mubr.bf16.mxu0 0
      %2589 = vmatmul.mubr.bf16.gmra.mrb[0].mxu0 %v485
      %v2590 = vpop.f32.mrb[0].mxu0
      %v2591 = vadd.f32 %v2478, %v2590
      %v2592 = vpop.f32.mrb[0].mxu0
      %v2593 = vpop.f32.mrb[0].mxu0
      %v2594 = vadd.f32 %v2478, %v2593
      %v2595 = vpop.f32.mrb[0].mxu0
      %2596 = vmatprep.mubr.bf16.mxu0 0
      %2597 = vmatmul.mubr.bf16.gmra.mrb[0].mxu0 %v488
      %v2598 = vpop.f32.mrb[0].mxu0
      %v2599 = vadd.f32 %v2478, %v2598
      %v2600 = vpop.f32.mrb[0].mxu0
      %v2601 = vpop.f32.mrb[0].mxu0
      %v2602 = vadd.f32 %v2478, %v2601
      %v2603 = vpop.f32.mrb[0].mxu0
      %2604 = vmatprep.mubr.bf16.mxu0 0
      %2605 = vmatmul.mubr.bf16.gmra.mrb[0].mxu0 %v491
      %v2606 = vpop.f32.mrb[0].mxu0
      %v2607 = vadd.f32 %v2478, %v2606
      %v2608 = vpop.f32.mrb[0].mxu0
      %v2609 = vpop.f32.mrb[0].mxu0
      %v2610 = vadd.f32 %v2478, %v2609
      %v2611 = vpop.f32.mrb[0].mxu0
      %2612 = vmatprep.mubr.bf16.mxu0 0
      %2613 = vmatmul.mubr.bf16.gmra.mrb[0].mxu0 %v494
      %v2614 = vpop.f32.mrb[0].mxu0
      %v2615 = vadd.f32 %v2478, %v2614
      %v2616 = vpop.f32.mrb[0].mxu0
      %v2617 = vpop.f32.mrb[0].mxu0
      %v2618 = vadd.f32 %v2478, %v2617
      %v2619 = vpop.f32.mrb[0].mxu0
      %2620 = vmatprep.mubr.bf16.mxu0 0
      %2621 = vmatmul.mubr.bf16.gmra.mrb[0].mxu0 %v497
      %v2622 = vpop.f32.mrb[0].mxu0
      %v2623 = vadd.f32 %v2478, %v2622
      %v2624 = vpop.f32.mrb[0].mxu0
      %v2625 = vpop.f32.mrb[0].mxu0
      %v2626 = vadd.f32 %v2478, %v2625
      %v2627 = vpop.f32.mrb[0].mxu0
      %2628 = vmatprep.mubr.bf16.mxu0 0
      %2629 = vmatmul.mubr.bf16.gmra.mrb[0].mxu0 %v500
      %v2630 = vpop.f32.mrb[0].mxu0
      %v2631 = vadd.f32 %v2478, %v2630
      %v2632 = vpop.f32.mrb[0].mxu0
      %v2633 = vpop.f32.mrb[0].mxu0
      %v2634 = vadd.f32 %v2478, %v2633
      %v2635 = vpop.f32.mrb[0].mxu0
      %2636 = vmatprep.mubr.bf16.mxu0 0
      %2637 = vmatmul.mubr.bf16.gmra.mrb[0].mxu0 %v503
      %v2638 = vpop.f32.mrb[0].mxu0
      %v2639 = vadd.f32 %v2478, %v2638
      %v2640 = vpop.f32.mrb[0].mxu0
      %v2641 = vpop.f32.mrb[0].mxu0
      %v2642 = vadd.f32 %v2478, %v2641
      %v2643 = vpop.f32.mrb[0].mxu0
      %2644 = vmatprep.mubr.bf16.mxu0 0
      %2645 = vmatmul.mubr.bf16.gmra.mrb[0].mxu0 %v506
      %v2646 = vpop.f32.mrb[0].mxu0
      %v2647 = vadd.f32 %v2478, %v2646
      %v2648 = vpop.f32.mrb[0].mxu0
      %v2649 = vpop.f32.mrb[0].mxu0
      %v2650 = vadd.f32 %v2478, %v2649
      %v2651 = vpop.f32.mrb[0].mxu0
      %2652 = vdwg.mxu0
      %s2653 = scalar_lea.vmem %s3, 48
      %v2654 = vld [vmem:[%s2653] sm:$0xf]
      %v2655 = vld [vmem:[%s2653 + $0x4] sm:$0xf]
      %v2656 = vld [vmem:[%s2653 + $0x8] sm:$0xf]
      %v2657 = vld [vmem:[%s2653 + $0xc] sm:$0xf]
      %s2658 = scalar_lea.vmem %s6, 3
      %v2659 = vld [vmem:[%s2658] sm:$0x1]
      %v2661 = vlaneseq
      %v2662 = vshrl.u32 %v2661, 7
      %v2663 = vsub.s32 0, %v2662
      %v2664 = vrot.slane %v2659, %v2663
      %v2670 = vunpack.c.l.b16 %v2654
      %v2671 = vunpack.c.l.b16 %v2655
      %v2672 = vunpack.c.l.b16 %v2656
      %v2673 = vunpack.c.l.b16 %v2657
      %v2674 = vpack.c.b16 %v2671, %v2670
      %v2675 = vpack.c.b16 %v2673, %v2672
      %2678 = vmatprep.subr.bf16.mxu0 0
      %2679 = vmatpush1.bf16.msra.mxu0 %v2674
      %2680 = vmatprep.subr.bf16.mxu0 0
      %2681 = vmatpush1.bf16.msra.mxu0 %v2675
      %2682 = vmatprep.subr.bf16.mxu0 0
      %2683 = vmatpush1.bf16.msra.mxu0 0
      %2684 = vmatprep.subr.bf16.mxu0 0
      %2685 = vmatpush1.bf16.msra.mxu0 0
      %2686 = vmatprep.subr.bf16.mxu0 0
      %2687 = vmatpush1.bf16.msra.mxu0 0
      %2688 = vmatprep.subr.bf16.mxu0 0
      %2689 = vmatpush1.bf16.msra.mxu0 0
      %2690 = vmatprep.subr.bf16.mxu0 0
      %2691 = vmatpush1.bf16.msra.mxu0 0
      %2692 = vmatprep.subr.bf16.mxu0 0
      %2693 = vmatpush1.bf16.msra.mxu0 0
      %2694 = vmatprep.subr.bf16.mxu0 0
      %2695 = vmatpush1.bf16.msra.mxu0 0
      %2696 = vmatprep.subr.bf16.mxu0 0
      %2697 = vmatpush1.bf16.msra.mxu0 0
      %2698 = vmatprep.subr.bf16.mxu0 0
      %2699 = vmatpush1.bf16.msra.mxu0 0
      %2700 = vmatprep.subr.bf16.mxu0 0
      %2701 = vmatpush1.bf16.msra.mxu0 0
      %2702 = vmatprep.subr.bf16.mxu0 0
      %2703 = vmatpush1.bf16.msra.mxu0 0
      %2704 = vmatprep.subr.bf16.mxu0 0
      %2705 = vmatpush1.bf16.msra.mxu0 0
      %2706 = vmatprep.subr.bf16.mxu0 0
      %2707 = vmatpush1.bf16.msra.mxu0 0
      %2708 = vmatprep.subr.bf16.mxu0 0
      %2709 = vmatpush1.bf16.msra.mxu0 0
      %2710 = vmatprep.mubr.bf16.mxu0 0
      %2711 = vmatmul.mubr.bf16.gmra.mrb[0].mxu0 %v461
      %v2712 = vpop.f32.mrb[0].mxu0
      %v2713 = vadd.f32 %v2664, %v2712
      %v2714 = vpop.f32.mrb[0].mxu0
      %v2715 = vpop.f32.mrb[0].mxu0
      %v2716 = vadd.f32 %v2664, %v2715
      %v2717 = vpop.f32.mrb[0].mxu0
      %2718 = vmatprep.mubr.bf16.mxu0 0
      %2719 = vmatmul.mubr.bf16.gmra.mrb[0].mxu0 %v464
      %v2720 = vpop.f32.mrb[0].mxu0
      %v2721 = vadd.f32 %v2664, %v2720
      %v2722 = vpop.f32.mrb[0].mxu0
      %v2723 = vpop.f32.mrb[0].mxu0
      %v2724 = vadd.f32 %v2664, %v2723
      %v2725 = vpop.f32.mrb[0].mxu0
      %2726 = vmatprep.mubr.bf16.mxu0 0
      %2727 = vmatmul.mubr.bf16.gmra.mrb[0].mxu0 %v467
      %v2728 = vpop.f32.mrb[0].mxu0
      %v2729 = vadd.f32 %v2664, %v2728
      %v2730 = vpop.f32.mrb[0].mxu0
      %v2731 = vpop.f32.mrb[0].mxu0
      %v2732 = vadd.f32 %v2664, %v2731
      %v2733 = vpop.f32.mrb[0].mxu0
      %2734 = vmatprep.mubr.bf16.mxu0 0
      %2735 = vmatmul.mubr.bf16.gmra.mrb[0].mxu0 %v470
      %v2736 = vpop.f32.mrb[0].mxu0
      %v2737 = vadd.f32 %v2664, %v2736
      %v2738 = vpop.f32.mrb[0].mxu0
      %v2739 = vpop.f32.mrb[0].mxu0
      %v2740 = vadd.f32 %v2664, %v2739
      %v2741 = vpop.f32.mrb[0].mxu0
      %2742 = vmatprep.mubr.bf16.mxu0 0
      %2743 = vmatmul.mubr.bf16.gmra.mrb[0].mxu0 %v473
      %v2744 = vpop.f32.mrb[0].mxu0
      %v2745 = vadd.f32 %v2664, %v2744
      %v2746 = vpop.f32.mrb[0].mxu0
      %v2747 = vpop.f32.mrb[0].mxu0
      %v2748 = vadd.f32 %v2664, %v2747
      %v2749 = vpop.f32.mrb[0].mxu0
      %2750 = vmatprep.mubr.bf16.mxu0 0
      %2751 = vmatmul.mubr.bf16.gmra.mrb[0].mxu0 %v476
      %v2752 = vpop.f32.mrb[0].mxu0
      %v2753 = vadd.f32 %v2664, %v2752
      %v2754 = vpop.f32.mrb[0].mxu0
      %v2755 = vpop.f32.mrb[0].mxu0
      %v2756 = vadd.f32 %v2664, %v2755
      %v2757 = vpop.f32.mrb[0].mxu0
      %2758 = vmatprep.mubr.bf16.mxu0 0
      %2759 = vmatmul.mubr.bf16.gmra.mrb[0].mxu0 %v479
      %v2760 = vpop.f32.mrb[0].mxu0
      %v2761 = vadd.f32 %v2664, %v2760
      %v2762 = vpop.f32.mrb[0].mxu0
      %v2763 = vpop.f32.mrb[0].mxu0
      %v2764 = vadd.f32 %v2664, %v2763
      %v2765 = vpop.f32.mrb[0].mxu0
      %2766 = vmatprep.mubr.bf16.mxu0 0
      %2767 = vmatmul.mubr.bf16.gmra.mrb[0].mxu0 %v482
      %v2768 = vpop.f32.mrb[0].mxu0
      %v2769 = vadd.f32 %v2664, %v2768
      %v2770 = vpop.f32.mrb[0].mxu0
      %v2771 = vpop.f32.mrb[0].mxu0
      %v2772 = vadd.f32 %v2664, %v2771
      %v2773 = vpop.f32.mrb[0].mxu0
      %2774 = vmatprep.mubr.bf16.mxu0 0
      %2775 = vmatmul.mubr.bf16.gmra.mrb[0].mxu0 %v485
      %v2776 = vpop.f32.mrb[0].mxu0
      %v2777 = vadd.f32 %v2664, %v2776
      %v2778 = vpop.f32.mrb[0].mxu0
      %v2779 = vpop.f32.mrb[0].mxu0
      %v2780 = vadd.f32 %v2664, %v2779
      %v2781 = vpop.f32.mrb[0].mxu0
      %2782 = vmatprep.mubr.bf16.mxu0 0
      %2783 = vmatmul.mubr.bf16.gmra.mrb[0].mxu0 %v488
      %v2784 = vpop.f32.mrb[0].mxu0
      %v2785 = vadd.f32 %v2664, %v2784
      %v2786 = vpop.f32.mrb[0].mxu0
      %v2787 = vpop.f32.mrb[0].mxu0
      %v2788 = vadd.f32 %v2664, %v2787
      %v2789 = vpop.f32.mrb[0].mxu0
      %2790 = vmatprep.mubr.bf16.mxu0 0
      %2791 = vmatmul.mubr.bf16.gmra.mrb[0].mxu0 %v491
      %v2792 = vpop.f32.mrb[0].mxu0
      %v2793 = vadd.f32 %v2664, %v2792
      %v2794 = vpop.f32.mrb[0].mxu0
      %v2795 = vpop.f32.mrb[0].mxu0
      %v2796 = vadd.f32 %v2664, %v2795
      %v2797 = vpop.f32.mrb[0].mxu0
      %2798 = vmatprep.mubr.bf16.mxu0 0
      %2799 = vmatmul.mubr.bf16.gmra.mrb[0].mxu0 %v494
      %v2800 = vpop.f32.mrb[0].mxu0
      %v2801 = vadd.f32 %v2664, %v2800
      %v2802 = vpop.f32.mrb[0].mxu0
      %v2803 = vpop.f32.mrb[0].mxu0
      %v2804 = vadd.f32 %v2664, %v2803
      %v2805 = vpop.f32.mrb[0].mxu0
      %2806 = vmatprep.mubr.bf16.mxu0 0
      %2807 = vmatmul.mubr.bf16.gmra.mrb[0].mxu0 %v497
      %v2808 = vpop.f32.mrb[0].mxu0
      %v2809 = vadd.f32 %v2664, %v2808
      %v2810 = vpop.f32.mrb[0].mxu0
      %v2811 = vpop.f32.mrb[0].mxu0
      %v2812 = vadd.f32 %v2664, %v2811
      %v2813 = vpop.f32.mrb[0].mxu0
      %2814 = vmatprep.mubr.bf16.mxu0 0
      %2815 = vmatmul.mubr.bf16.gmra.mrb[0].mxu0 %v500
      %v2816 = vpop.f32.mrb[0].mxu0
      %v2817 = vadd.f32 %v2664, %v2816
      %v2818 = vpop.f32.mrb[0].mxu0
      %v2819 = vpop.f32.mrb[0].mxu0
      %v2820 = vadd.f32 %v2664, %v2819
      %v2821 = vpop.f32.mrb[0].mxu0
      %2822 = vmatprep.mubr.bf16.mxu0 0
      %2823 = vmatmul.mubr.bf16.gmra.mrb[0].mxu0 %v503
      %v2824 = vpop.f32.mrb[0].mxu0
      %v2825 = vadd.f32 %v2664, %v2824
      %v2826 = vpop.f32.mrb[0].mxu0
      %v2827 = vpop.f32.mrb[0].mxu0
      %v2828 = vadd.f32 %v2664, %v2827
      %v2829 = vpop.f32.mrb[0].mxu0
      %2830 = vmatprep.mubr.bf16.mxu0 0
      %2831 = vmatmul.mubr.bf16.gmra.mrb[0].mxu0 %v506
      %v2832 = vpop.f32.mrb[0].mxu0
      %v2833 = vadd.f32 %v2664, %v2832
      %v2834 = vpop.f32.mrb[0].mxu0
      %v2835 = vpop.f32.mrb[0].mxu0
      %v2836 = vadd.f32 %v2664, %v2835
      %v2837 = vpop.f32.mrb[0].mxu0
      %2838 = vdwg.mxu0
      %v2839 = vpack.c.bf16 %v2158, %v2155
      %v2840 = vpack.c.bf16 %v2166, %v2163
      %v2841 = vpack.c.bf16 %v2174, %v2171
      %v2842 = vpack.c.bf16 %v2182, %v2179
      %v2843 = vpack.c.bf16 %v2190, %v2187
      %v2844 = vpack.c.bf16 %v2198, %v2195
      %v2845 = vpack.c.bf16 %v2206, %v2203
      %v2846 = vpack.c.bf16 %v2214, %v2211
      %v2847 = vpack.c.bf16 %v2222, %v2219
      %v2848 = vpack.c.bf16 %v2230, %v2227
      %v2849 = vpack.c.bf16 %v2238, %v2235
      %v2850 = vpack.c.bf16 %v2246, %v2243
      %v2851 = vpack.c.bf16 %v2254, %v2251
      %v2852 = vpack.c.bf16 %v2262, %v2259
      %v2853 = vpack.c.bf16 %v2270, %v2267
      %v2854 = vpack.c.bf16 %v2278, %v2275
      %v2855 = vpack.c.bf16 %v2344, %v2341
      %v2856 = vpack.c.bf16 %v2352, %v2349
      %v2857 = vpack.c.bf16 %v2360, %v2357
      %v2858 = vpack.c.bf16 %v2368, %v2365
      %v2859 = vpack.c.bf16 %v2376, %v2373
      %v2860 = vpack.c.bf16 %v2384, %v2381
      %v2861 = vpack.c.bf16 %v2392, %v2389
      %v2862 = vpack.c.bf16 %v2400, %v2397
      %v2863 = vpack.c.bf16 %v2408, %v2405
      %v2864 = vpack.c.bf16 %v2416, %v2413
      %v2865 = vpack.c.bf16 %v2424, %v2421
      %v2866 = vpack.c.bf16 %v2432, %v2429
      %v2867 = vpack.c.bf16 %v2440, %v2437
      %v2868 = vpack.c.bf16 %v2448, %v2445
      %v2869 = vpack.c.bf16 %v2456, %v2453
      %v2870 = vpack.c.bf16 %v2464, %v2461
      %v2871 = vpack.c.bf16 %v2530, %v2527
      %v2872 = vpack.c.bf16 %v2538, %v2535
      %v2873 = vpack.c.bf16 %v2546, %v2543
      %v2874 = vpack.c.bf16 %v2554, %v2551
      %v2875 = vpack.c.bf16 %v2562, %v2559
      %v2876 = vpack.c.bf16 %v2570, %v2567
      %v2877 = vpack.c.bf16 %v2578, %v2575
      %v2878 = vpack.c.bf16 %v2586, %v2583
      %v2879 = vpack.c.bf16 %v2594, %v2591
      %v2880 = vpack.c.bf16 %v2602, %v2599
      %v2881 = vpack.c.bf16 %v2610, %v2607
      %v2882 = vpack.c.bf16 %v2618, %v2615
      %v2883 = vpack.c.bf16 %v2626, %v2623
      %v2884 = vpack.c.bf16 %v2634, %v2631
      %v2885 = vpack.c.bf16 %v2642, %v2639
      %v2886 = vpack.c.bf16 %v2650, %v2647
      %v2887 = vpack.c.bf16 %v2716, %v2713
      %v2888 = vpack.c.bf16 %v2724, %v2721
      %v2889 = vpack.c.bf16 %v2732, %v2729
      %v2890 = vpack.c.bf16 %v2740, %v2737
      %v2891 = vpack.c.bf16 %v2748, %v2745
      %v2892 = vpack.c.bf16 %v2756, %v2753
      %v2893 = vpack.c.bf16 %v2764, %v2761
      %v2894 = vpack.c.bf16 %v2772, %v2769
      %v2895 = vpack.c.bf16 %v2780, %v2777
      %v2896 = vpack.c.bf16 %v2788, %v2785
      %v2897 = vpack.c.bf16 %v2796, %v2793
      %v2898 = vpack.c.bf16 %v2804, %v2801
      %v2899 = vpack.c.bf16 %v2812, %v2809
      %v2900 = vpack.c.bf16 %v2820, %v2817
      %v2901 = vpack.c.bf16 %v2828, %v2825
      %v2902 = vpack.c.bf16 %v2836, %v2833
      %vm2903 = vcmask 64512
      %v2905 = vsel %vm2903, %v1227, 0
      %v2908 = vsel %vm2903, %v1228, 0
      %v2911 = vsel %vm2903, %v1229, 0
      %v2914 = vsel %vm2903, %v1230, 0
      %v2917 = vsel %vm2903, %v2033, 0
      %v2920 = vsel %vm2903, %v2034, 0
      %v2923 = vsel %vm2903, %v2035, 0
      %v2926 = vsel %vm2903, %v2036, 0
      %2928 = vmatprep.subr.bf16.mxu0 0
      %2929 = vmatpush1.bf16.xpose.msra.mxu0 %v2917
      %2930 = vmatprep.subr.bf16.mxu0 0
      %2931 = vmatpush1.bf16.xpose.msra.mxu0 %v2920
      %2932 = vmatprep.subr.bf16.mxu0 0
      %2933 = vmatpush1.bf16.xpose.msra.mxu0 %v2923
      %2934 = vmatprep.subr.bf16.mxu0 0
      %2935 = vmatpush1.bf16.xpose.msra.mxu0 %v2926
      %2936 = vmatprep.subr.bf16.mxu0 0
      %2937 = vmatpush1.bf16.xpose.msra.mxu0 0
      %2938 = vmatprep.subr.bf16.mxu0 0
      %2939 = vmatpush1.bf16.xpose.msra.mxu0 0
      %2940 = vmatprep.subr.bf16.mxu0 0
      %2941 = vmatpush1.bf16.xpose.msra.mxu0 0
      %2942 = vmatprep.subr.bf16.mxu0 0
      %2943 = vmatpush1.bf16.xpose.msra.mxu0 0
      %2944 = vmatprep.subr.bf16.mxu0 0
      %2945 = vmatpush1.bf16.xpose.msra.mxu0 0
      %2946 = vmatprep.subr.bf16.mxu0 0
      %2947 = vmatpush1.bf16.xpose.msra.mxu0 0
      %2948 = vmatprep.subr.bf16.mxu0 0
      %2949 = vmatpush1.bf16.xpose.msra.mxu0 0
      %2950 = vmatprep.subr.bf16.mxu0 0
      %2951 = vmatpush1.bf16.xpose.msra.mxu0 0
      %2952 = vmatprep.subr.bf16.mxu0 0
      %2953 = vmatpush1.bf16.xpose.msra.mxu0 0
      %2954 = vmatprep.subr.bf16.mxu0 0
      %2955 = vmatpush1.bf16.xpose.msra.mxu0 0
      %2956 = vmatprep.subr.bf16.mxu0 0
      %2957 = vmatpush1.bf16.xpose.msra.mxu0 0
      %2958 = vmatprep.subr.bf16.mxu0 0
      %2959 = vmatpush1.bf16.xpose.msra.mxu0 0
      %2960 = vmatprep.mubr.bf16.mxu0 0
      %2961 = vmatmul.mubr.bf16.gmra.mrb[0].mxu0 %v2905
      %v2962 = vpop.f32.mrb[0].mxu0
      %v2963 = vadd.f32 0.0, %v2962
      %v2964 = vpop.f32.mrb[0].mxu0
      %v2965 = vpop.f32.mrb[0].mxu0
      %v2966 = vadd.f32 0.0, %v2965
      %v2967 = vpop.f32.mrb[0].mxu0
      %2968 = vmatprep.mubr.bf16.mxu0 0
      %2969 = vmatmul.mubr.bf16.gmra.mrb[0].mxu0 %v2908
      %v2970 = vpop.f32.mrb[0].mxu0
      %v2971 = vadd.f32 0.0, %v2970
      %v2972 = vpop.f32.mrb[0].mxu0
      %v2973 = vpop.f32.mrb[0].mxu0
      %v2974 = vadd.f32 0.0, %v2973
      %v2975 = vpop.f32.mrb[0].mxu0
      %2976 = vmatprep.mubr.bf16.mxu0 0
      %2977 = vmatmul.mubr.bf16.gmra.mrb[0].mxu0 %v2911
      %v2978 = vpop.f32.mrb[0].mxu0
      %v2979 = vadd.f32 0.0, %v2978
      %v2980 = vpop.f32.mrb[0].mxu0
      %v2981 = vpop.f32.mrb[0].mxu0
      %v2982 = vadd.f32 0.0, %v2981
      %v2983 = vpop.f32.mrb[0].mxu0
      %2984 = vmatprep.mubr.bf16.mxu0 0
      %2985 = vmatmul.mubr.bf16.gmra.mrb[0].mxu0 %v2914
      %v2986 = vpop.f32.mrb[0].mxu0
      %v2987 = vadd.f32 0.0, %v2986
      %v2988 = vpop.f32.mrb[0].mxu0
      %v2989 = vpop.f32.mrb[0].mxu0
      %v2990 = vadd.f32 0.0, %v2989
      %v2991 = vpop.f32.mrb[0].mxu0
      %2992 = vdwg.mxu0
      %v2994 = vsel %vm2903, %v1231, 0
      %v2997 = vsel %vm2903, %v1232, 0
      %v3000 = vsel %vm2903, %v1233, 0
      %v3003 = vsel %vm2903, %v1234, 0
      %v3006 = vsel %vm2903, %v2037, 0
      %v3009 = vsel %vm2903, %v2038, 0
      %v3012 = vsel %vm2903, %v2039, 0
      %v3015 = vsel %vm2903, %v2040, 0
      %3017 = vmatprep.subr.bf16.mxu0 0
      %3018 = vmatpush1.bf16.xpose.msra.mxu0 %v3006
      %3019 = vmatprep.subr.bf16.mxu0 0
      %3020 = vmatpush1.bf16.xpose.msra.mxu0 %v3009
      %3021 = vmatprep.subr.bf16.mxu0 0
      %3022 = vmatpush1.bf16.xpose.msra.mxu0 %v3012
      %3023 = vmatprep.subr.bf16.mxu0 0
      %3024 = vmatpush1.bf16.xpose.msra.mxu0 %v3015
      %3025 = vmatprep.subr.bf16.mxu0 0
      %3026 = vmatpush1.bf16.xpose.msra.mxu0 0
      %3027 = vmatprep.subr.bf16.mxu0 0
      %3028 = vmatpush1.bf16.xpose.msra.mxu0 0
      %3029 = vmatprep.subr.bf16.mxu0 0
      %3030 = vmatpush1.bf16.xpose.msra.mxu0 0
      %3031 = vmatprep.subr.bf16.mxu0 0
      %3032 = vmatpush1.bf16.xpose.msra.mxu0 0
      %3033 = vmatprep.subr.bf16.mxu0 0
      %3034 = vmatpush1.bf16.xpose.msra.mxu0 0
      %3035 = vmatprep.subr.bf16.mxu0 0
      %3036 = vmatpush1.bf16.xpose.msra.mxu0 0
      %3037 = vmatprep.subr.bf16.mxu0 0
      %3038 = vmatpush1.bf16.xpose.msra.mxu0 0
      %3039 = vmatprep.subr.bf16.mxu0 0
      %3040 = vmatpush1.bf16.xpose.msra.mxu0 0
      %3041 = vmatprep.subr.bf16.mxu0 0
      %3042 = vmatpush1.bf16.xpose.msra.mxu0 0
      %3043 = vmatprep.subr.bf16.mxu0 0
      %3044 = vmatpush1.bf16.xpose.msra.mxu0 0
      %3045 = vmatprep.subr.bf16.mxu0 0
      %3046 = vmatpush1.bf16.xpose.msra.mxu0 0
      %3047 = vmatprep.subr.bf16.mxu0 0
      %3048 = vmatpush1.bf16.xpose.msra.mxu0 0
      %3049 = vmatprep.mubr.bf16.mxu0 0
      %3050 = vmatmul.mubr.bf16.gmra.mrb[0].mxu0 %v2994
      %v3051 = vpop.f32.mrb[0].mxu0
      %v3052 = vadd.f32 0.0, %v3051
      %v3053 = vpop.f32.mrb[0].mxu0
      %v3054 = vpop.f32.mrb[0].mxu0
      %v3055 = vadd.f32 0.0, %v3054
      %v3056 = vpop.f32.mrb[0].mxu0
      %3057 = vmatprep.mubr.bf16.mxu0 0
      %3058 = vmatmul.mubr.bf16.gmra.mrb[0].mxu0 %v2997
      %v3059 = vpop.f32.mrb[0].mxu0
      %v3060 = vadd.f32 0.0, %v3059
      %v3061 = vpop.f32.mrb[0].mxu0
      %v3062 = vpop.f32.mrb[0].mxu0
      %v3063 = vadd.f32 0.0, %v3062
      %v3064 = vpop.f32.mrb[0].mxu0
      %3065 = vmatprep.mubr.bf16.mxu0 0
      %3066 = vmatmul.mubr.bf16.gmra.mrb[0].mxu0 %v3000
      %v3067 = vpop.f32.mrb[0].mxu0
      %v3068 = vadd.f32 0.0, %v3067
      %v3069 = vpop.f32.mrb[0].mxu0
      %v3070 = vpop.f32.mrb[0].mxu0
      %v3071 = vadd.f32 0.0, %v3070
      %v3072 = vpop.f32.mrb[0].mxu0
      %3073 = vmatprep.mubr.bf16.mxu0 0
      %3074 = vmatmul.mubr.bf16.gmra.mrb[0].mxu0 %v3003
      %v3075 = vpop.f32.mrb[0].mxu0
      %v3076 = vadd.f32 0.0, %v3075
      %v3077 = vpop.f32.mrb[0].mxu0
      %v3078 = vpop.f32.mrb[0].mxu0
      %v3079 = vadd.f32 0.0, %v3078
      %v3080 = vpop.f32.mrb[0].mxu0
      %3081 = vdwg.mxu0
      %v3083 = vsel %vm2903, %v1235, 0
      %v3086 = vsel %vm2903, %v1236, 0
      %v3089 = vsel %vm2903, %v1237, 0
      %v3092 = vsel %vm2903, %v1238, 0
      %v3095 = vsel %vm2903, %v2041, 0
      %v3098 = vsel %vm2903, %v2042, 0
      %v3101 = vsel %vm2903, %v2043, 0
      %v3104 = vsel %vm2903, %v2044, 0
      %3106 = vmatprep.subr.bf16.mxu0 0
      %3107 = vmatpush1.bf16.xpose.msra.mxu0 %v3095
      %3108 = vmatprep.subr.bf16.mxu0 0
      %3109 = vmatpush1.bf16.xpose.msra.mxu0 %v3098
      %3110 = vmatprep.subr.bf16.mxu0 0
      %3111 = vmatpush1.bf16.xpose.msra.mxu0 %v3101
      %3112 = vmatprep.subr.bf16.mxu0 0
      %3113 = vmatpush1.bf16.xpose.msra.mxu0 %v3104
      %3114 = vmatprep.subr.bf16.mxu0 0
      %3115 = vmatpush1.bf16.xpose.msra.mxu0 0
      %3116 = vmatprep.subr.bf16.mxu0 0
      %3117 = vmatpush1.bf16.xpose.msra.mxu0 0
      %3118 = vmatprep.subr.bf16.mxu0 0
      %3119 = vmatpush1.bf16.xpose.msra.mxu0 0
      %3120 = vmatprep.subr.bf16.mxu0 0
      %3121 = vmatpush1.bf16.xpose.msra.mxu0 0
      %3122 = vmatprep.subr.bf16.mxu0 0
      %3123 = vmatpush1.bf16.xpose.msra.mxu0 0
      %3124 = vmatprep.subr.bf16.mxu0 0
      %3125 = vmatpush1.bf16.xpose.msra.mxu0 0
      %3126 = vmatprep.subr.bf16.mxu0 0
      %3127 = vmatpush1.bf16.xpose.msra.mxu0 0
      %3128 = vmatprep.subr.bf16.mxu0 0
      %3129 = vmatpush1.bf16.xpose.msra.mxu0 0
      %3130 = vmatprep.subr.bf16.mxu0 0
      %3131 = vmatpush1.bf16.xpose.msra.mxu0 0
      %3132 = vmatprep.subr.bf16.mxu0 0
      %3133 = vmatpush1.bf16.xpose.msra.mxu0 0
      %3134 = vmatprep.subr.bf16.mxu0 0
      %3135 = vmatpush1.bf16.xpose.msra.mxu0 0
      %3136 = vmatprep.subr.bf16.mxu0 0
      %3137 = vmatpush1.bf16.xpose.msra.mxu0 0
      %3138 = vmatprep.mubr.bf16.mxu0 0
      %3139 = vmatmul.mubr.bf16.gmra.mrb[0].mxu0 %v3083
      %v3140 = vpop.f32.mrb[0].mxu0
      %v3141 = vadd.f32 0.0, %v3140
      %v3142 = vpop.f32.mrb[0].mxu0
      %v3143 = vpop.f32.mrb[0].mxu0
      %v3144 = vadd.f32 0.0, %v3143
      %v3145 = vpop.f32.mrb[0].mxu0
      %3146 = vmatprep.mubr.bf16.mxu0 0
      %3147 = vmatmul.mubr.bf16.gmra.mrb[0].mxu0 %v3086
      %v3148 = vpop.f32.mrb[0].mxu0
      %v3149 = vadd.f32 0.0, %v3148
      %v3150 = vpop.f32.mrb[0].mxu0
      %v3151 = vpop.f32.mrb[0].mxu0
      %v3152 = vadd.f32 0.0, %v3151
      %v3153 = vpop.f32.mrb[0].mxu0
      %3154 = vmatprep.mubr.bf16.mxu0 0
      %3155 = vmatmul.mubr.bf16.gmra.mrb[0].mxu0 %v3089
      %v3156 = vpop.f32.mrb[0].mxu0
      %v3157 = vadd.f32 0.0, %v3156
      %v3158 = vpop.f32.mrb[0].mxu0
      %v3159 = vpop.f32.mrb[0].mxu0
      %v3160 = vadd.f32 0.0, %v3159
      %v3161 = vpop.f32.mrb[0].mxu0
      %3162 = vmatprep.mubr.bf16.mxu0 0
      %3163 = vmatmul.mubr.bf16.gmra.mrb[0].mxu0 %v3092
      %v3164 = vpop.f32.mrb[0].mxu0
      %v3165 = vadd.f32 0.0, %v3164
      %v3166 = vpop.f32.mrb[0].mxu0
      %v3167 = vpop.f32.mrb[0].mxu0
      %v3168 = vadd.f32 0.0, %v3167
      %v3169 = vpop.f32.mrb[0].mxu0
      %3170 = vdwg.mxu0
      %v3172 = vsel %vm2903, %v1239, 0
      %v3175 = vsel %vm2903, %v1240, 0
      %v3178 = vsel %vm2903, %v1241, 0
      %v3181 = vsel %vm2903, %v1242, 0
      %v3184 = vsel %vm2903, %v2045, 0
      %v3187 = vsel %vm2903, %v2046, 0
      %v3190 = vsel %vm2903, %v2047, 0
      %v3193 = vsel %vm2903, %v2048, 0
      %3195 = vmatprep.subr.bf16.mxu0 0
      %3196 = vmatpush1.bf16.xpose.msra.mxu0 %v3184
      %3197 = vmatprep.subr.bf16.mxu0 0
      %3198 = vmatpush1.bf16.xpose.msra.mxu0 %v3187
      %3199 = vmatprep.subr.bf16.mxu0 0
      %3200 = vmatpush1.bf16.xpose.msra.mxu0 %v3190
      %3201 = vmatprep.subr.bf16.mxu0 0
      %3202 = vmatpush1.bf16.xpose.msra.mxu0 %v3193
      %3203 = vmatprep.subr.bf16.mxu0 0
      %3204 = vmatpush1.bf16.xpose.msra.mxu0 0
      %3205 = vmatprep.subr.bf16.mxu0 0
      %3206 = vmatpush1.bf16.xpose.msra.mxu0 0
      %3207 = vmatprep.subr.bf16.mxu0 0
      %3208 = vmatpush1.bf16.xpose.msra.mxu0 0
      %3209 = vmatprep.subr.bf16.mxu0 0
      %3210 = vmatpush1.bf16.xpose.msra.mxu0 0
      %3211 = vmatprep.subr.bf16.mxu0 0
      %3212 = vmatpush1.bf16.xpose.msra.mxu0 0
      %3213 = vmatprep.subr.bf16.mxu0 0
      %3214 = vmatpush1.bf16.xpose.msra.mxu0 0
      %3215 = vmatprep.subr.bf16.mxu0 0
      %3216 = vmatpush1.bf16.xpose.msra.mxu0 0
      %3217 = vmatprep.subr.bf16.mxu0 0
      %3218 = vmatpush1.bf16.xpose.msra.mxu0 0
      %3219 = vmatprep.subr.bf16.mxu0 0
      %3220 = vmatpush1.bf16.xpose.msra.mxu0 0
      %3221 = vmatprep.subr.bf16.mxu0 0
      %3222 = vmatpush1.bf16.xpose.msra.mxu0 0
      %3223 = vmatprep.subr.bf16.mxu0 0
      %3224 = vmatpush1.bf16.xpose.msra.mxu0 0
      %3225 = vmatprep.subr.bf16.mxu0 0
      %3226 = vmatpush1.bf16.xpose.msra.mxu0 0
      %3227 = vmatprep.mubr.bf16.mxu0 0
      %3228 = vmatmul.mubr.bf16.gmra.mrb[0].mxu0 %v3172
      %v3229 = vpop.f32.mrb[0].mxu0
      %v3230 = vadd.f32 0.0, %v3229
      %v3231 = vpop.f32.mrb[0].mxu0
      %v3232 = vpop.f32.mrb[0].mxu0
      %v3233 = vadd.f32 0.0, %v3232
      %v3234 = vpop.f32.mrb[0].mxu0
      %3235 = vmatprep.mubr.bf16.mxu0 0
      %3236 = vmatmul.mubr.bf16.gmra.mrb[0].mxu0 %v3175
      %v3237 = vpop.f32.mrb[0].mxu0
      %v3238 = vadd.f32 0.0, %v3237
      %v3239 = vpop.f32.mrb[0].mxu0
      %v3240 = vpop.f32.mrb[0].mxu0
      %v3241 = vadd.f32 0.0, %v3240
      %v3242 = vpop.f32.mrb[0].mxu0
      %3243 = vmatprep.mubr.bf16.mxu0 0
      %3244 = vmatmul.mubr.bf16.gmra.mrb[0].mxu0 %v3178
      %v3245 = vpop.f32.mrb[0].mxu0
      %v3246 = vadd.f32 0.0, %v3245
      %v3247 = vpop.f32.mrb[0].mxu0
      %v3248 = vpop.f32.mrb[0].mxu0
      %v3249 = vadd.f32 0.0, %v3248
      %v3250 = vpop.f32.mrb[0].mxu0
      %3251 = vmatprep.mubr.bf16.mxu0 0
      %3252 = vmatmul.mubr.bf16.gmra.mrb[0].mxu0 %v3181
      %v3253 = vpop.f32.mrb[0].mxu0
      %v3254 = vadd.f32 0.0, %v3253
      %v3255 = vpop.f32.mrb[0].mxu0
      %v3256 = vpop.f32.mrb[0].mxu0
      %v3257 = vadd.f32 0.0, %v3256
      %v3258 = vpop.f32.mrb[0].mxu0
      %3259 = vdwg.mxu0
      %v3261 = vsel %vm2903, %v1243, 0
      %v3264 = vsel %vm2903, %v1244, 0
      %v3267 = vsel %vm2903, %v1245, 0
      %v3270 = vsel %vm2903, %v1246, 0
      %v3273 = vsel %vm2903, %v2049, 0
      %v3276 = vsel %vm2903, %v2050, 0
      %v3279 = vsel %vm2903, %v2051, 0
      %v3282 = vsel %vm2903, %v2052, 0
      %3284 = vmatprep.subr.bf16.mxu0 0
      %3285 = vmatpush1.bf16.xpose.msra.mxu0 %v3273
      %3286 = vmatprep.subr.bf16.mxu0 0
      %3287 = vmatpush1.bf16.xpose.msra.mxu0 %v3276
      %3288 = vmatprep.subr.bf16.mxu0 0
      %3289 = vmatpush1.bf16.xpose.msra.mxu0 %v3279
      %3290 = vmatprep.subr.bf16.mxu0 0
      %3291 = vmatpush1.bf16.xpose.msra.mxu0 %v3282
      %3292 = vmatprep.subr.bf16.mxu0 0
      %3293 = vmatpush1.bf16.xpose.msra.mxu0 0
      %3294 = vmatprep.subr.bf16.mxu0 0
      %3295 = vmatpush1.bf16.xpose.msra.mxu0 0
      %3296 = vmatprep.subr.bf16.mxu0 0
      %3297 = vmatpush1.bf16.xpose.msra.mxu0 0
      %3298 = vmatprep.subr.bf16.mxu0 0
      %3299 = vmatpush1.bf16.xpose.msra.mxu0 0
      %3300 = vmatprep.subr.bf16.mxu0 0
      %3301 = vmatpush1.bf16.xpose.msra.mxu0 0
      %3302 = vmatprep.subr.bf16.mxu0 0
      %3303 = vmatpush1.bf16.xpose.msra.mxu0 0
      %3304 = vmatprep.subr.bf16.mxu0 0
      %3305 = vmatpush1.bf16.xpose.msra.mxu0 0
      %3306 = vmatprep.subr.bf16.mxu0 0
      %3307 = vmatpush1.bf16.xpose.msra.mxu0 0
      %3308 = vmatprep.subr.bf16.mxu0 0
      %3309 = vmatpush1.bf16.xpose.msra.mxu0 0
      %3310 = vmatprep.subr.bf16.mxu0 0
      %3311 = vmatpush1.bf16.xpose.msra.mxu0 0
      %3312 = vmatprep.subr.bf16.mxu0 0
      %3313 = vmatpush1.bf16.xpose.msra.mxu0 0
      %3314 = vmatprep.subr.bf16.mxu0 0
      %3315 = vmatpush1.bf16.xpose.msra.mxu0 0
      %3316 = vmatprep.mubr.bf16.mxu0 0
      %3317 = vmatmul.mubr.bf16.gmra.mrb[0].mxu0 %v3261
      %v3318 = vpop.f32.mrb[0].mxu0
      %v3319 = vadd.f32 0.0, %v3318
      %v3320 = vpop.f32.mrb[0].mxu0
      %v3321 = vpop.f32.mrb[0].mxu0
      %v3322 = vadd.f32 0.0, %v3321
      %v3323 = vpop.f32.mrb[0].mxu0
      %3324 = vmatprep.mubr.bf16.mxu0 0
      %3325 = vmatmul.mubr.bf16.gmra.mrb[0].mxu0 %v3264
      %v3326 = vpop.f32.mrb[0].mxu0
      %v3327 = vadd.f32 0.0, %v3326
      %v3328 = vpop.f32.mrb[0].mxu0
      %v3329 = vpop.f32.mrb[0].mxu0
      %v3330 = vadd.f32 0.0, %v3329
      %v3331 = vpop.f32.mrb[0].mxu0
      %3332 = vmatprep.mubr.bf16.mxu0 0
      %3333 = vmatmul.mubr.bf16.gmra.mrb[0].mxu0 %v3267
      %v3334 = vpop.f32.mrb[0].mxu0
      %v3335 = vadd.f32 0.0, %v3334
      %v3336 = vpop.f32.mrb[0].mxu0
      %v3337 = vpop.f32.mrb[0].mxu0
      %v3338 = vadd.f32 0.0, %v3337
      %v3339 = vpop.f32.mrb[0].mxu0
      %3340 = vmatprep.mubr.bf16.mxu0 0
      %3341 = vmatmul.mubr.bf16.gmra.mrb[0].mxu0 %v3270
      %v3342 = vpop.f32.mrb[0].mxu0
      %v3343 = vadd.f32 0.0, %v3342
      %v3344 = vpop.f32.mrb[0].mxu0
      %v3345 = vpop.f32.mrb[0].mxu0
      %v3346 = vadd.f32 0.0, %v3345
      %v3347 = vpop.f32.mrb[0].mxu0
      %3348 = vdwg.mxu0
      %v3350 = vsel %vm2903, %v1247, 0
      %v3353 = vsel %vm2903, %v1248, 0
      %v3356 = vsel %vm2903, %v1249, 0
      %v3359 = vsel %vm2903, %v1250, 0
      %v3362 = vsel %vm2903, %v2053, 0
      %v3365 = vsel %vm2903, %v2054, 0
      %v3368 = vsel %vm2903, %v2055, 0
      %v3371 = vsel %vm2903, %v2056, 0
      %3373 = vmatprep.subr.bf16.mxu0 0
      %3374 = vmatpush1.bf16.xpose.msra.mxu0 %v3362
      %3375 = vmatprep.subr.bf16.mxu0 0
      %3376 = vmatpush1.bf16.xpose.msra.mxu0 %v3365
      %3377 = vmatprep.subr.bf16.mxu0 0
      %3378 = vmatpush1.bf16.xpose.msra.mxu0 %v3368
      %3379 = vmatprep.subr.bf16.mxu0 0
      %3380 = vmatpush1.bf16.xpose.msra.mxu0 %v3371
      %3381 = vmatprep.subr.bf16.mxu0 0
      %3382 = vmatpush1.bf16.xpose.msra.mxu0 0
      %3383 = vmatprep.subr.bf16.mxu0 0
      %3384 = vmatpush1.bf16.xpose.msra.mxu0 0
      %3385 = vmatprep.subr.bf16.mxu0 0
      %3386 = vmatpush1.bf16.xpose.msra.mxu0 0
      %3387 = vmatprep.subr.bf16.mxu0 0
      %3388 = vmatpush1.bf16.xpose.msra.mxu0 0
      %3389 = vmatprep.subr.bf16.mxu0 0
      %3390 = vmatpush1.bf16.xpose.msra.mxu0 0
      %3391 = vmatprep.subr.bf16.mxu0 0
      %3392 = vmatpush1.bf16.xpose.msra.mxu0 0
      %3393 = vmatprep.subr.bf16.mxu0 0
      %3394 = vmatpush1.bf16.xpose.msra.mxu0 0
      %3395 = vmatprep.subr.bf16.mxu0 0
      %3396 = vmatpush1.bf16.xpose.msra.mxu0 0
      %3397 = vmatprep.subr.bf16.mxu0 0
      %3398 = vmatpush1.bf16.xpose.msra.mxu0 0
      %3399 = vmatprep.subr.bf16.mxu0 0
      %3400 = vmatpush1.bf16.xpose.msra.mxu0 0
      %3401 = vmatprep.subr.bf16.mxu0 0
      %3402 = vmatpush1.bf16.xpose.msra.mxu0 0
      %3403 = vmatprep.subr.bf16.mxu0 0
      %3404 = vmatpush1.bf16.xpose.msra.mxu0 0
      %3405 = vmatprep.mubr.bf16.mxu0 0
      %3406 = vmatmul.mubr.bf16.gmra.mrb[0].mxu0 %v3350
      %v3407 = vpop.f32.mrb[0].mxu0
      %v3408 = vadd.f32 0.0, %v3407
      %v3409 = vpop.f32.mrb[0].mxu0
      %v3410 = vpop.f32.mrb[0].mxu0
      %v3411 = vadd.f32 0.0, %v3410
      %v3412 = vpop.f32.mrb[0].mxu0
      %3413 = vmatprep.mubr.bf16.mxu0 0
      %3414 = vmatmul.mubr.bf16.gmra.mrb[0].mxu0 %v3353
      %v3415 = vpop.f32.mrb[0].mxu0
      %v3416 = vadd.f32 0.0, %v3415
      %v3417 = vpop.f32.mrb[0].mxu0
      %v3418 = vpop.f32.mrb[0].mxu0
      %v3419 = vadd.f32 0.0, %v3418
      %v3420 = vpop.f32.mrb[0].mxu0
      %3421 = vmatprep.mubr.bf16.mxu0 0
      %3422 = vmatmul.mubr.bf16.gmra.mrb[0].mxu0 %v3356
      %v3423 = vpop.f32.mrb[0].mxu0
      %v3424 = vadd.f32 0.0, %v3423
      %v3425 = vpop.f32.mrb[0].mxu0
      %v3426 = vpop.f32.mrb[0].mxu0
      %v3427 = vadd.f32 0.0, %v3426
      %v3428 = vpop.f32.mrb[0].mxu0
      %3429 = vmatprep.mubr.bf16.mxu0 0
      %3430 = vmatmul.mubr.bf16.gmra.mrb[0].mxu0 %v3359
      %v3431 = vpop.f32.mrb[0].mxu0
      %v3432 = vadd.f32 0.0, %v3431
      %v3433 = vpop.f32.mrb[0].mxu0
      %v3434 = vpop.f32.mrb[0].mxu0
      %v3435 = vadd.f32 0.0, %v3434
      %v3436 = vpop.f32.mrb[0].mxu0
      %3437 = vdwg.mxu0
      %v3439 = vsel %vm2903, %v1251, 0
      %v3442 = vsel %vm2903, %v1252, 0
      %v3445 = vsel %vm2903, %v1253, 0
      %v3448 = vsel %vm2903, %v1254, 0
      %v3451 = vsel %vm2903, %v2057, 0
      %v3454 = vsel %vm2903, %v2058, 0
      %v3457 = vsel %vm2903, %v2059, 0
      %v3460 = vsel %vm2903, %v2060, 0
      %3462 = vmatprep.subr.bf16.mxu0 0
      %3463 = vmatpush1.bf16.xpose.msra.mxu0 %v3451
      %3464 = vmatprep.subr.bf16.mxu0 0
      %3465 = vmatpush1.bf16.xpose.msra.mxu0 %v3454
      %3466 = vmatprep.subr.bf16.mxu0 0
      %3467 = vmatpush1.bf16.xpose.msra.mxu0 %v3457
      %3468 = vmatprep.subr.bf16.mxu0 0
      %3469 = vmatpush1.bf16.xpose.msra.mxu0 %v3460
      %3470 = vmatprep.subr.bf16.mxu0 0
      %3471 = vmatpush1.bf16.xpose.msra.mxu0 0
      %3472 = vmatprep.subr.bf16.mxu0 0
      %3473 = vmatpush1.bf16.xpose.msra.mxu0 0
      %3474 = vmatprep.subr.bf16.mxu0 0
      %3475 = vmatpush1.bf16.xpose.msra.mxu0 0
      %3476 = vmatprep.subr.bf16.mxu0 0
      %3477 = vmatpush1.bf16.xpose.msra.mxu0 0
      %3478 = vmatprep.subr.bf16.mxu0 0
      %3479 = vmatpush1.bf16.xpose.msra.mxu0 0
      %3480 = vmatprep.subr.bf16.mxu0 0
      %3481 = vmatpush1.bf16.xpose.msra.mxu0 0
      %3482 = vmatprep.subr.bf16.mxu0 0
      %3483 = vmatpush1.bf16.xpose.msra.mxu0 0
      %3484 = vmatprep.subr.bf16.mxu0 0
      %3485 = vmatpush1.bf16.xpose.msra.mxu0 0
      %3486 = vmatprep.subr.bf16.mxu0 0
      %3487 = vmatpush1.bf16.xpose.msra.mxu0 0
      %3488 = vmatprep.subr.bf16.mxu0 0
      %3489 = vmatpush1.bf16.xpose.msra.mxu0 0
      %3490 = vmatprep.subr.bf16.mxu0 0
      %3491 = vmatpush1.bf16.xpose.msra.mxu0 0
      %3492 = vmatprep.subr.bf16.mxu0 0
      %3493 = vmatpush1.bf16.xpose.msra.mxu0 0
      %3494 = vmatprep.mubr.bf16.mxu0 0
      %3495 = vmatmul.mubr.bf16.gmra.mrb[0].mxu0 %v3439
      %v3496 = vpop.f32.mrb[0].mxu0
      %v3497 = vadd.f32 0.0, %v3496
      %v3498 = vpop.f32.mrb[0].mxu0
      %v3499 = vpop.f32.mrb[0].mxu0
      %v3500 = vadd.f32 0.0, %v3499
      %v3501 = vpop.f32.mrb[0].mxu0
      %3502 = vmatprep.mubr.bf16.mxu0 0
      %3503 = vmatmul.mubr.bf16.gmra.mrb[0].mxu0 %v3442
      %v3504 = vpop.f32.mrb[0].mxu0
      %v3505 = vadd.f32 0.0, %v3504
      %v3506 = vpop.f32.mrb[0].mxu0
      %v3507 = vpop.f32.mrb[0].mxu0
      %v3508 = vadd.f32 0.0, %v3507
      %v3509 = vpop.f32.mrb[0].mxu0
      %3510 = vmatprep.mubr.bf16.mxu0 0
      %3511 = vmatmul.mubr.bf16.gmra.mrb[0].mxu0 %v3445
      %v3512 = vpop.f32.mrb[0].mxu0
      %v3513 = vadd.f32 0.0, %v3512
      %v3514 = vpop.f32.mrb[0].mxu0
      %v3515 = vpop.f32.mrb[0].mxu0
      %v3516 = vadd.f32 0.0, %v3515
      %v3517 = vpop.f32.mrb[0].mxu0
      %3518 = vmatprep.mubr.bf16.mxu0 0
      %3519 = vmatmul.mubr.bf16.gmra.mrb[0].mxu0 %v3448
      %v3520 = vpop.f32.mrb[0].mxu0
      %v3521 = vadd.f32 0.0, %v3520
      %v3522 = vpop.f32.mrb[0].mxu0
      %v3523 = vpop.f32.mrb[0].mxu0
      %v3524 = vadd.f32 0.0, %v3523
      %v3525 = vpop.f32.mrb[0].mxu0
      %3526 = vdwg.mxu0
      %v3528 = vsel %vm2903, %v1255, 0
      %v3531 = vsel %vm2903, %v1256, 0
      %v3534 = vsel %vm2903, %v1257, 0
      %v3537 = vsel %vm2903, %v1258, 0
      %v3540 = vsel %vm2903, %v2061, 0
      %v3543 = vsel %vm2903, %v2062, 0
      %v3546 = vsel %vm2903, %v2063, 0
      %v3549 = vsel %vm2903, %v2064, 0
      %3551 = vmatprep.subr.bf16.mxu0 0
      %3552 = vmatpush1.bf16.xpose.msra.mxu0 %v3540
      %3553 = vmatprep.subr.bf16.mxu0 0
      %3554 = vmatpush1.bf16.xpose.msra.mxu0 %v3543
      %3555 = vmatprep.subr.bf16.mxu0 0
      %3556 = vmatpush1.bf16.xpose.msra.mxu0 %v3546
      %3557 = vmatprep.subr.bf16.mxu0 0
      %3558 = vmatpush1.bf16.xpose.msra.mxu0 %v3549
      %3559 = vmatprep.subr.bf16.mxu0 0
      %3560 = vmatpush1.bf16.xpose.msra.mxu0 0
      %3561 = vmatprep.subr.bf16.mxu0 0
      %3562 = vmatpush1.bf16.xpose.msra.mxu0 0
      %3563 = vmatprep.subr.bf16.mxu0 0
      %3564 = vmatpush1.bf16.xpose.msra.mxu0 0
      %3565 = vmatprep.subr.bf16.mxu0 0
      %3566 = vmatpush1.bf16.xpose.msra.mxu0 0
      %3567 = vmatprep.subr.bf16.mxu0 0
      %3568 = vmatpush1.bf16.xpose.msra.mxu0 0
      %3569 = vmatprep.subr.bf16.mxu0 0
      %3570 = vmatpush1.bf16.xpose.msra.mxu0 0
      %3571 = vmatprep.subr.bf16.mxu0 0
      %3572 = vmatpush1.bf16.xpose.msra.mxu0 0
      %3573 = vmatprep.subr.bf16.mxu0 0
      %3574 = vmatpush1.bf16.xpose.msra.mxu0 0
      %3575 = vmatprep.subr.bf16.mxu0 0
      %3576 = vmatpush1.bf16.xpose.msra.mxu0 0
      %3577 = vmatprep.subr.bf16.mxu0 0
      %3578 = vmatpush1.bf16.xpose.msra.mxu0 0
      %3579 = vmatprep.subr.bf16.mxu0 0
      %3580 = vmatpush1.bf16.xpose.msra.mxu0 0
      %3581 = vmatprep.subr.bf16.mxu0 0
      %3582 = vmatpush1.bf16.xpose.msra.mxu0 0
      %3583 = vmatprep.mubr.bf16.mxu0 0
      %3584 = vmatmul.mubr.bf16.gmra.mrb[0].mxu0 %v3528
      %v3585 = vpop.f32.mrb[0].mxu0
      %v3586 = vadd.f32 0.0, %v3585
      %v3587 = vpop.f32.mrb[0].mxu0
      %v3588 = vpop.f32.mrb[0].mxu0
      %v3589 = vadd.f32 0.0, %v3588
      %v3590 = vpop.f32.mrb[0].mxu0
      %3591 = vmatprep.mubr.bf16.mxu0 0
      %3592 = vmatmul.mubr.bf16.gmra.mrb[0].mxu0 %v3531
      %v3593 = vpop.f32.mrb[0].mxu0
      %v3594 = vadd.f32 0.0, %v3593
      %v3595 = vpop.f32.mrb[0].mxu0
      %v3596 = vpop.f32.mrb[0].mxu0
      %v3597 = vadd.f32 0.0, %v3596
      %v3598 = vpop.f32.mrb[0].mxu0
      %3599 = vmatprep.mubr.bf16.mxu0 0
      %3600 = vmatmul.mubr.bf16.gmra.mrb[0].mxu0 %v3534
      %v3601 = vpop.f32.mrb[0].mxu0
      %v3602 = vadd.f32 0.0, %v3601
      %v3603 = vpop.f32.mrb[0].mxu0
      %v3604 = vpop.f32.mrb[0].mxu0
      %v3605 = vadd.f32 0.0, %v3604
      %v3606 = vpop.f32.mrb[0].mxu0
      %3607 = vmatprep.mubr.bf16.mxu0 0
      %3608 = vmatmul.mubr.bf16.gmra.mrb[0].mxu0 %v3537
      %v3609 = vpop.f32.mrb[0].mxu0
      %v3610 = vadd.f32 0.0, %v3609
      %v3611 = vpop.f32.mrb[0].mxu0
      %v3612 = vpop.f32.mrb[0].mxu0
      %v3613 = vadd.f32 0.0, %v3612
      %v3614 = vpop.f32.mrb[0].mxu0
      %3615 = vdwg.mxu0
      %v3617 = vsel %vm2903, %v1259, 0
      %v3620 = vsel %vm2903, %v1260, 0
      %v3623 = vsel %vm2903, %v1261, 0
      %v3626 = vsel %vm2903, %v1262, 0
      %v3629 = vsel %vm2903, %v2065, 0
      %v3632 = vsel %vm2903, %v2066, 0
      %v3635 = vsel %vm2903, %v2067, 0
      %v3638 = vsel %vm2903, %v2068, 0
      %3640 = vmatprep.subr.bf16.mxu0 0
      %3641 = vmatpush1.bf16.xpose.msra.mxu0 %v3629
      %3642 = vmatprep.subr.bf16.mxu0 0
      %3643 = vmatpush1.bf16.xpose.msra.mxu0 %v3632
      %3644 = vmatprep.subr.bf16.mxu0 0
      %3645 = vmatpush1.bf16.xpose.msra.mxu0 %v3635
      %3646 = vmatprep.subr.bf16.mxu0 0
      %3647 = vmatpush1.bf16.xpose.msra.mxu0 %v3638
      %3648 = vmatprep.subr.bf16.mxu0 0
      %3649 = vmatpush1.bf16.xpose.msra.mxu0 0
      %3650 = vmatprep.subr.bf16.mxu0 0
      %3651 = vmatpush1.bf16.xpose.msra.mxu0 0
      %3652 = vmatprep.subr.bf16.mxu0 0
      %3653 = vmatpush1.bf16.xpose.msra.mxu0 0
      %3654 = vmatprep.subr.bf16.mxu0 0
      %3655 = vmatpush1.bf16.xpose.msra.mxu0 0
      %3656 = vmatprep.subr.bf16.mxu0 0
      %3657 = vmatpush1.bf16.xpose.msra.mxu0 0
      %3658 = vmatprep.subr.bf16.mxu0 0
      %3659 = vmatpush1.bf16.xpose.msra.mxu0 0
      %3660 = vmatprep.subr.bf16.mxu0 0
      %3661 = vmatpush1.bf16.xpose.msra.mxu0 0
      %3662 = vmatprep.subr.bf16.mxu0 0
      %3663 = vmatpush1.bf16.xpose.msra.mxu0 0
      %3664 = vmatprep.subr.bf16.mxu0 0
      %3665 = vmatpush1.bf16.xpose.msra.mxu0 0
      %3666 = vmatprep.subr.bf16.mxu0 0
      %3667 = vmatpush1.bf16.xpose.msra.mxu0 0
      %3668 = vmatprep.subr.bf16.mxu0 0
      %3669 = vmatpush1.bf16.xpose.msra.mxu0 0
      %3670 = vmatprep.subr.bf16.mxu0 0
      %3671 = vmatpush1.bf16.xpose.msra.mxu0 0
      %3672 = vmatprep.mubr.bf16.mxu0 0
      %3673 = vmatmul.mubr.bf16.gmra.mrb[0].mxu0 %v3617
      %v3674 = vpop.f32.mrb[0].mxu0
      %v3675 = vadd.f32 0.0, %v3674
      %v3676 = vpop.f32.mrb[0].mxu0
      %v3677 = vpop.f32.mrb[0].mxu0
      %v3678 = vadd.f32 0.0, %v3677
      %v3679 = vpop.f32.mrb[0].mxu0
      %3680 = vmatprep.mubr.bf16.mxu0 0
      %3681 = vmatmul.mubr.bf16.gmra.mrb[0].mxu0 %v3620
      %v3682 = vpop.f32.mrb[0].mxu0
      %v3683 = vadd.f32 0.0, %v3682
      %v3684 = vpop.f32.mrb[0].mxu0
      %v3685 = vpop.f32.mrb[0].mxu0
      %v3686 = vadd.f32 0.0, %v3685
      %v3687 = vpop.f32.mrb[0].mxu0
      %3688 = vmatprep.mubr.bf16.mxu0 0
      %3689 = vmatmul.mubr.bf16.gmra.mrb[0].mxu0 %v3623
      %v3690 = vpop.f32.mrb[0].mxu0
      %v3691 = vadd.f32 0.0, %v3690
      %v3692 = vpop.f32.mrb[0].mxu0
      %v3693 = vpop.f32.mrb[0].mxu0
      %v3694 = vadd.f32 0.0, %v3693
      %v3695 = vpop.f32.mrb[0].mxu0
      %3696 = vmatprep.mubr.bf16.mxu0 0
      %3697 = vmatmul.mubr.bf16.gmra.mrb[0].mxu0 %v3626
      %v3698 = vpop.f32.mrb[0].mxu0
      %v3699 = vadd.f32 0.0, %v3698
      %v3700 = vpop.f32.mrb[0].mxu0
      %v3701 = vpop.f32.mrb[0].mxu0
      %v3702 = vadd.f32 0.0, %v3701
      %v3703 = vpop.f32.mrb[0].mxu0
      %3704 = vdwg.mxu0
      %v3706 = vsel %vm2903, %v1263, 0
      %v3709 = vsel %vm2903, %v1264, 0
      %v3712 = vsel %vm2903, %v1265, 0
      %v3715 = vsel %vm2903, %v1266, 0
      %v3718 = vsel %vm2903, %v2069, 0
      %v3721 = vsel %vm2903, %v2070, 0
      %v3724 = vsel %vm2903, %v2071, 0
      %v3727 = vsel %vm2903, %v2072, 0
      %3729 = vmatprep.subr.bf16.mxu0 0
      %3730 = vmatpush1.bf16.xpose.msra.mxu0 %v3718
      %3731 = vmatprep.subr.bf16.mxu0 0
      %3732 = vmatpush1.bf16.xpose.msra.mxu0 %v3721
      %3733 = vmatprep.subr.bf16.mxu0 0
      %3734 = vmatpush1.bf16.xpose.msra.mxu0 %v3724
      %3735 = vmatprep.subr.bf16.mxu0 0
      %3736 = vmatpush1.bf16.xpose.msra.mxu0 %v3727
      %3737 = vmatprep.subr.bf16.mxu0 0
      %3738 = vmatpush1.bf16.xpose.msra.mxu0 0
      %3739 = vmatprep.subr.bf16.mxu0 0
      %3740 = vmatpush1.bf16.xpose.msra.mxu0 0
      %3741 = vmatprep.subr.bf16.mxu0 0
      %3742 = vmatpush1.bf16.xpose.msra.mxu0 0
      %3743 = vmatprep.subr.bf16.mxu0 0
      %3744 = vmatpush1.bf16.xpose.msra.mxu0 0
      %3745 = vmatprep.subr.bf16.mxu0 0
      %3746 = vmatpush1.bf16.xpose.msra.mxu0 0
      %3747 = vmatprep.subr.bf16.mxu0 0
      %3748 = vmatpush1.bf16.xpose.msra.mxu0 0
      %3749 = vmatprep.subr.bf16.mxu0 0
      %3750 = vmatpush1.bf16.xpose.msra.mxu0 0
      %3751 = vmatprep.subr.bf16.mxu0 0
      %3752 = vmatpush1.bf16.xpose.msra.mxu0 0
      %3753 = vmatprep.subr.bf16.mxu0 0
      %3754 = vmatpush1.bf16.xpose.msra.mxu0 0
      %3755 = vmatprep.subr.bf16.mxu0 0
      %3756 = vmatpush1.bf16.xpose.msra.mxu0 0
      %3757 = vmatprep.subr.bf16.mxu0 0
      %3758 = vmatpush1.bf16.xpose.msra.mxu0 0
      %3759 = vmatprep.subr.bf16.mxu0 0
      %3760 = vmatpush1.bf16.xpose.msra.mxu0 0
      %3761 = vmatprep.mubr.bf16.mxu0 0
      %3762 = vmatmul.mubr.bf16.gmra.mrb[0].mxu0 %v3706
      %v3763 = vpop.f32.mrb[0].mxu0
      %v3764 = vadd.f32 0.0, %v3763
      %v3765 = vpop.f32.mrb[0].mxu0
      %v3766 = vpop.f32.mrb[0].mxu0
      %v3767 = vadd.f32 0.0, %v3766
      %v3768 = vpop.f32.mrb[0].mxu0
      %3769 = vmatprep.mubr.bf16.mxu0 0
      %3770 = vmatmul.mubr.bf16.gmra.mrb[0].mxu0 %v3709
      %v3771 = vpop.f32.mrb[0].mxu0
      %v3772 = vadd.f32 0.0, %v3771
      %v3773 = vpop.f32.mrb[0].mxu0
      %v3774 = vpop.f32.mrb[0].mxu0
      %v3775 = vadd.f32 0.0, %v3774
      %v3776 = vpop.f32.mrb[0].mxu0
      %3777 = vmatprep.mubr.bf16.mxu0 0
      %3778 = vmatmul.mubr.bf16.gmra.mrb[0].mxu0 %v3712
      %v3779 = vpop.f32.mrb[0].mxu0
      %v3780 = vadd.f32 0.0, %v3779
      %v3781 = vpop.f32.mrb[0].mxu0
      %v3782 = vpop.f32.mrb[0].mxu0
      %v3783 = vadd.f32 0.0, %v3782
      %v3784 = vpop.f32.mrb[0].mxu0
      %3785 = vmatprep.mubr.bf16.mxu0 0
      %3786 = vmatmul.mubr.bf16.gmra.mrb[0].mxu0 %v3715
      %v3787 = vpop.f32.mrb[0].mxu0
      %v3788 = vadd.f32 0.0, %v3787
      %v3789 = vpop.f32.mrb[0].mxu0
      %v3790 = vpop.f32.mrb[0].mxu0
      %v3791 = vadd.f32 0.0, %v3790
      %v3792 = vpop.f32.mrb[0].mxu0
      %3793 = vdwg.mxu0
      %v3795 = vsel %vm2903, %v1267, 0
      %v3798 = vsel %vm2903, %v1268, 0
      %v3801 = vsel %vm2903, %v1269, 0
      %v3804 = vsel %vm2903, %v1270, 0
      %v3807 = vsel %vm2903, %v2073, 0
      %v3810 = vsel %vm2903, %v2074, 0
      %v3813 = vsel %vm2903, %v2075, 0
      %v3816 = vsel %vm2903, %v2076, 0
      %3818 = vmatprep.subr.bf16.mxu0 0
      %3819 = vmatpush1.bf16.xpose.msra.mxu0 %v3807
      %3820 = vmatprep.subr.bf16.mxu0 0
      %3821 = vmatpush1.bf16.xpose.msra.mxu0 %v3810
      %3822 = vmatprep.subr.bf16.mxu0 0
      %3823 = vmatpush1.bf16.xpose.msra.mxu0 %v3813
      %3824 = vmatprep.subr.bf16.mxu0 0
      %3825 = vmatpush1.bf16.xpose.msra.mxu0 %v3816
      %3826 = vmatprep.subr.bf16.mxu0 0
      %3827 = vmatpush1.bf16.xpose.msra.mxu0 0
      %3828 = vmatprep.subr.bf16.mxu0 0
      %3829 = vmatpush1.bf16.xpose.msra.mxu0 0
      %3830 = vmatprep.subr.bf16.mxu0 0
      %3831 = vmatpush1.bf16.xpose.msra.mxu0 0
      %3832 = vmatprep.subr.bf16.mxu0 0
      %3833 = vmatpush1.bf16.xpose.msra.mxu0 0
      %3834 = vmatprep.subr.bf16.mxu0 0
      %3835 = vmatpush1.bf16.xpose.msra.mxu0 0
      %3836 = vmatprep.subr.bf16.mxu0 0
      %3837 = vmatpush1.bf16.xpose.msra.mxu0 0
      %3838 = vmatprep.subr.bf16.mxu0 0
      %3839 = vmatpush1.bf16.xpose.msra.mxu0 0
      %3840 = vmatprep.subr.bf16.mxu0 0
      %3841 = vmatpush1.bf16.xpose.msra.mxu0 0
      %3842 = vmatprep.subr.bf16.mxu0 0
      %3843 = vmatpush1.bf16.xpose.msra.mxu0 0
      %3844 = vmatprep.subr.bf16.mxu0 0
      %3845 = vmatpush1.bf16.xpose.msra.mxu0 0
      %3846 = vmatprep.subr.bf16.mxu0 0
      %3847 = vmatpush1.bf16.xpose.msra.mxu0 0
      %3848 = vmatprep.subr.bf16.mxu0 0
      %3849 = vmatpush1.bf16.xpose.msra.mxu0 0
      %3850 = vmatprep.mubr.bf16.mxu0 0
      %3851 = vmatmul.mubr.bf16.gmra.mrb[0].mxu0 %v3795
      %v3852 = vpop.f32.mrb[0].mxu0
      %v3853 = vadd.f32 0.0, %v3852
      %v3854 = vpop.f32.mrb[0].mxu0
      %v3855 = vpop.f32.mrb[0].mxu0
      %v3856 = vadd.f32 0.0, %v3855
      %v3857 = vpop.f32.mrb[0].mxu0
      %3858 = vmatprep.mubr.bf16.mxu0 0
      %3859 = vmatmul.mubr.bf16.gmra.mrb[0].mxu0 %v3798
      %v3860 = vpop.f32.mrb[0].mxu0
      %v3861 = vadd.f32 0.0, %v3860
      %v3862 = vpop.f32.mrb[0].mxu0
      %v3863 = vpop.f32.mrb[0].mxu0
      %v3864 = vadd.f32 0.0, %v3863
      %v3865 = vpop.f32.mrb[0].mxu0
      %3866 = vmatprep.mubr.bf16.mxu0 0
      %3867 = vmatmul.mubr.bf16.gmra.mrb[0].mxu0 %v3801
      %v3868 = vpop.f32.mrb[0].mxu0
      %v3869 = vadd.f32 0.0, %v3868
      %v3870 = vpop.f32.mrb[0].mxu0
      %v3871 = vpop.f32.mrb[0].mxu0
      %v3872 = vadd.f32 0.0, %v3871
      %v3873 = vpop.f32.mrb[0].mxu0
      %3874 = vmatprep.mubr.bf16.mxu0 0
      %3875 = vmatmul.mubr.bf16.gmra.mrb[0].mxu0 %v3804
      %v3876 = vpop.f32.mrb[0].mxu0
      %v3877 = vadd.f32 0.0, %v3876
      %v3878 = vpop.f32.mrb[0].mxu0
      %v3879 = vpop.f32.mrb[0].mxu0
      %v3880 = vadd.f32 0.0, %v3879
      %v3881 = vpop.f32.mrb[0].mxu0
      %3882 = vdwg.mxu0
      %v3884 = vsel %vm2903, %v1271, 0
      %v3887 = vsel %vm2903, %v1272, 0
      %v3890 = vsel %vm2903, %v1273, 0
      %v3893 = vsel %vm2903, %v1274, 0
      %v3896 = vsel %vm2903, %v2077, 0
      %v3899 = vsel %vm2903, %v2078, 0
      %v3902 = vsel %vm2903, %v2079, 0
      %v3905 = vsel %vm2903, %v2080, 0
      %3907 = vmatprep.subr.bf16.mxu0 0
      %3908 = vmatpush1.bf16.xpose.msra.mxu0 %v3896
      %3909 = vmatprep.subr.bf16.mxu0 0
      %3910 = vmatpush1.bf16.xpose.msra.mxu0 %v3899
      %3911 = vmatprep.subr.bf16.mxu0 0
      %3912 = vmatpush1.bf16.xpose.msra.mxu0 %v3902
      %3913 = vmatprep.subr.bf16.mxu0 0
      %3914 = vmatpush1.bf16.xpose.msra.mxu0 %v3905
      %3915 = vmatprep.subr.bf16.mxu0 0
      %3916 = vmatpush1.bf16.xpose.msra.mxu0 0
      %3917 = vmatprep.subr.bf16.mxu0 0
      %3918 = vmatpush1.bf16.xpose.msra.mxu0 0
      %3919 = vmatprep.subr.bf16.mxu0 0
      %3920 = vmatpush1.bf16.xpose.msra.mxu0 0
      %3921 = vmatprep.subr.bf16.mxu0 0
      %3922 = vmatpush1.bf16.xpose.msra.mxu0 0
      %3923 = vmatprep.subr.bf16.mxu0 0
      %3924 = vmatpush1.bf16.xpose.msra.mxu0 0
      %3925 = vmatprep.subr.bf16.mxu0 0
      %3926 = vmatpush1.bf16.xpose.msra.mxu0 0
      %3927 = vmatprep.subr.bf16.mxu0 0
      %3928 = vmatpush1.bf16.xpose.msra.mxu0 0
      %3929 = vmatprep.subr.bf16.mxu0 0
      %3930 = vmatpush1.bf16.xpose.msra.mxu0 0
      %3931 = vmatprep.subr.bf16.mxu0 0
      %3932 = vmatpush1.bf16.xpose.msra.mxu0 0
      %3933 = vmatprep.subr.bf16.mxu0 0
      %3934 = vmatpush1.bf16.xpose.msra.mxu0 0
      %3935 = vmatprep.subr.bf16.mxu0 0
      %3936 = vmatpush1.bf16.xpose.msra.mxu0 0
      %3937 = vmatprep.subr.bf16.mxu0 0
      %3938 = vmatpush1.bf16.xpose.msra.mxu0 0
      %3939 = vmatprep.mubr.bf16.mxu0 0
      %3940 = vmatmul.mubr.bf16.gmra.mrb[0].mxu0 %v3884
      %v3941 = vpop.f32.mrb[0].mxu0
      %v3942 = vadd.f32 0.0, %v3941
      %v3943 = vpop.f32.mrb[0].mxu0
      %v3944 = vpop.f32.mrb[0].mxu0
      %v3945 = vadd.f32 0.0, %v3944
      %v3946 = vpop.f32.mrb[0].mxu0
      %3947 = vmatprep.mubr.bf16.mxu0 0
      %3948 = vmatmul.mubr.bf16.gmra.mrb[0].mxu0 %v3887
      %v3949 = vpop.f32.mrb[0].mxu0
      %v3950 = vadd.f32 0.0, %v3949
      %v3951 = vpop.f32.mrb[0].mxu0
      %v3952 = vpop.f32.mrb[0].mxu0
      %v3953 = vadd.f32 0.0, %v3952
      %v3954 = vpop.f32.mrb[0].mxu0
      %3955 = vmatprep.mubr.bf16.mxu0 0
      %3956 = vmatmul.mubr.bf16.gmra.mrb[0].mxu0 %v3890
      %v3957 = vpop.f32.mrb[0].mxu0
      %v3958 = vadd.f32 0.0, %v3957
      %v3959 = vpop.f32.mrb[0].mxu0
      %v3960 = vpop.f32.mrb[0].mxu0
      %v3961 = vadd.f32 0.0, %v3960
      %v3962 = vpop.f32.mrb[0].mxu0
      %3963 = vmatprep.mubr.bf16.mxu0 0
      %3964 = vmatmul.mubr.bf16.gmra.mrb[0].mxu0 %v3893
      %v3965 = vpop.f32.mrb[0].mxu0
      %v3966 = vadd.f32 0.0, %v3965
      %v3967 = vpop.f32.mrb[0].mxu0
      %v3968 = vpop.f32.mrb[0].mxu0
      %v3969 = vadd.f32 0.0, %v3968
      %v3970 = vpop.f32.mrb[0].mxu0
      %3971 = vdwg.mxu0
      %v3973 = vsel %vm2903, %v1275, 0
      %v3976 = vsel %vm2903, %v1276, 0
      %v3979 = vsel %vm2903, %v1277, 0
      %v3982 = vsel %vm2903, %v1278, 0
      %v3985 = vsel %vm2903, %v2081, 0
      %v3988 = vsel %vm2903, %v2082, 0
      %v3991 = vsel %vm2903, %v2083, 0
      %v3994 = vsel %vm2903, %v2084, 0
      %3996 = vmatprep.subr.bf16.mxu0 0
      %3997 = vmatpush1.bf16.xpose.msra.mxu0 %v3985
      %3998 = vmatprep.subr.bf16.mxu0 0
      %3999 = vmatpush1.bf16.xpose.msra.mxu0 %v3988
      %4000 = vmatprep.subr.bf16.mxu0 0
      %4001 = vmatpush1.bf16.xpose.msra.mxu0 %v3991
      %4002 = vmatprep.subr.bf16.mxu0 0
      %4003 = vmatpush1.bf16.xpose.msra.mxu0 %v3994
      %4004 = vmatprep.subr.bf16.mxu0 0
      %4005 = vmatpush1.bf16.xpose.msra.mxu0 0
      %4006 = vmatprep.subr.bf16.mxu0 0
      %4007 = vmatpush1.bf16.xpose.msra.mxu0 0
      %4008 = vmatprep.subr.bf16.mxu0 0
      %4009 = vmatpush1.bf16.xpose.msra.mxu0 0
      %4010 = vmatprep.subr.bf16.mxu0 0
      %4011 = vmatpush1.bf16.xpose.msra.mxu0 0
      %4012 = vmatprep.subr.bf16.mxu0 0
      %4013 = vmatpush1.bf16.xpose.msra.mxu0 0
      %4014 = vmatprep.subr.bf16.mxu0 0
      %4015 = vmatpush1.bf16.xpose.msra.mxu0 0
      %4016 = vmatprep.subr.bf16.mxu0 0
      %4017 = vmatpush1.bf16.xpose.msra.mxu0 0
      %4018 = vmatprep.subr.bf16.mxu0 0
      %4019 = vmatpush1.bf16.xpose.msra.mxu0 0
      %4020 = vmatprep.subr.bf16.mxu0 0
      %4021 = vmatpush1.bf16.xpose.msra.mxu0 0
      %4022 = vmatprep.subr.bf16.mxu0 0
      %4023 = vmatpush1.bf16.xpose.msra.mxu0 0
      %4024 = vmatprep.subr.bf16.mxu0 0
      %4025 = vmatpush1.bf16.xpose.msra.mxu0 0
      %4026 = vmatprep.subr.bf16.mxu0 0
      %4027 = vmatpush1.bf16.xpose.msra.mxu0 0
      %4028 = vmatprep.mubr.bf16.mxu0 0
      %4029 = vmatmul.mubr.bf16.gmra.mrb[0].mxu0 %v3973
      %v4030 = vpop.f32.mrb[0].mxu0
      %v4031 = vadd.f32 0.0, %v4030
      %v4032 = vpop.f32.mrb[0].mxu0
      %v4033 = vpop.f32.mrb[0].mxu0
      %v4034 = vadd.f32 0.0, %v4033
      %v4035 = vpop.f32.mrb[0].mxu0
      %4036 = vmatprep.mubr.bf16.mxu0 0
      %4037 = vmatmul.mubr.bf16.gmra.mrb[0].mxu0 %v3976
      %v4038 = vpop.f32.mrb[0].mxu0
      %v4039 = vadd.f32 0.0, %v4038
      %v4040 = vpop.f32.mrb[0].mxu0
      %v4041 = vpop.f32.mrb[0].mxu0
      %v4042 = vadd.f32 0.0, %v4041
      %v4043 = vpop.f32.mrb[0].mxu0
      %4044 = vmatprep.mubr.bf16.mxu0 0
      %4045 = vmatmul.mubr.bf16.gmra.mrb[0].mxu0 %v3979
      %v4046 = vpop.f32.mrb[0].mxu0
      %v4047 = vadd.f32 0.0, %v4046
      %v4048 = vpop.f32.mrb[0].mxu0
      %v4049 = vpop.f32.mrb[0].mxu0
      %v4050 = vadd.f32 0.0, %v4049
      %v4051 = vpop.f32.mrb[0].mxu0
      %4052 = vmatprep.mubr.bf16.mxu0 0
      %4053 = vmatmul.mubr.bf16.gmra.mrb[0].mxu0 %v3982
      %v4054 = vpop.f32.mrb[0].mxu0
      %v4055 = vadd.f32 0.0, %v4054
      %v4056 = vpop.f32.mrb[0].mxu0
      %v4057 = vpop.f32.mrb[0].mxu0
      %v4058 = vadd.f32 0.0, %v4057
      %v4059 = vpop.f32.mrb[0].mxu0
      %4060 = vdwg.mxu0
      %v4062 = vsel %vm2903, %v1279, 0
      %v4065 = vsel %vm2903, %v1280, 0
      %v4068 = vsel %vm2903, %v1281, 0
      %v4071 = vsel %vm2903, %v1282, 0
      %v4074 = vsel %vm2903, %v2085, 0
      %v4077 = vsel %vm2903, %v2086, 0
      %v4080 = vsel %vm2903, %v2087, 0
      %v4083 = vsel %vm2903, %v2088, 0
      %4085 = vmatprep.subr.bf16.mxu0 0
      %4086 = vmatpush1.bf16.xpose.msra.mxu0 %v4074
      %4087 = vmatprep.subr.bf16.mxu0 0
      %4088 = vmatpush1.bf16.xpose.msra.mxu0 %v4077
      %4089 = vmatprep.subr.bf16.mxu0 0
      %4090 = vmatpush1.bf16.xpose.msra.mxu0 %v4080
      %4091 = vmatprep.subr.bf16.mxu0 0
      %4092 = vmatpush1.bf16.xpose.msra.mxu0 %v4083
      %4093 = vmatprep.subr.bf16.mxu0 0
      %4094 = vmatpush1.bf16.xpose.msra.mxu0 0
      %4095 = vmatprep.subr.bf16.mxu0 0
      %4096 = vmatpush1.bf16.xpose.msra.mxu0 0
      %4097 = vmatprep.subr.bf16.mxu0 0
      %4098 = vmatpush1.bf16.xpose.msra.mxu0 0
      %4099 = vmatprep.subr.bf16.mxu0 0
      %4100 = vmatpush1.bf16.xpose.msra.mxu0 0
      %4101 = vmatprep.subr.bf16.mxu0 0
      %4102 = vmatpush1.bf16.xpose.msra.mxu0 0
      %4103 = vmatprep.subr.bf16.mxu0 0
      %4104 = vmatpush1.bf16.xpose.msra.mxu0 0
      %4105 = vmatprep.subr.bf16.mxu0 0
      %4106 = vmatpush1.bf16.xpose.msra.mxu0 0
      %4107 = vmatprep.subr.bf16.mxu0 0
      %4108 = vmatpush1.bf16.xpose.msra.mxu0 0
      %4109 = vmatprep.subr.bf16.mxu0 0
      %4110 = vmatpush1.bf16.xpose.msra.mxu0 0
      %4111 = vmatprep.subr.bf16.mxu0 0
      %4112 = vmatpush1.bf16.xpose.msra.mxu0 0
      %4113 = vmatprep.subr.bf16.mxu0 0
      %4114 = vmatpush1.bf16.xpose.msra.mxu0 0
      %4115 = vmatprep.subr.bf16.mxu0 0
      %4116 = vmatpush1.bf16.xpose.msra.mxu0 0
      %4117 = vmatprep.mubr.bf16.mxu0 0
      %4118 = vmatmul.mubr.bf16.gmra.mrb[0].mxu0 %v4062
      %v4119 = vpop.f32.mrb[0].mxu0
      %v4120 = vadd.f32 0.0, %v4119
      %v4121 = vpop.f32.mrb[0].mxu0
      %v4122 = vpop.f32.mrb[0].mxu0
      %v4123 = vadd.f32 0.0, %v4122
      %v4124 = vpop.f32.mrb[0].mxu0
      %4125 = vmatprep.mubr.bf16.mxu0 0
      %4126 = vmatmul.mubr.bf16.gmra.mrb[0].mxu0 %v4065
      %v4127 = vpop.f32.mrb[0].mxu0
      %v4128 = vadd.f32 0.0, %v4127
      %v4129 = vpop.f32.mrb[0].mxu0
      %v4130 = vpop.f32.mrb[0].mxu0
      %v4131 = vadd.f32 0.0, %v4130
      %v4132 = vpop.f32.mrb[0].mxu0
      %4133 = vmatprep.mubr.bf16.mxu0 0
      %4134 = vmatmul.mubr.bf16.gmra.mrb[0].mxu0 %v4068
      %v4135 = vpop.f32.mrb[0].mxu0
      %v4136 = vadd.f32 0.0, %v4135
      %v4137 = vpop.f32.mrb[0].mxu0
      %v4138 = vpop.f32.mrb[0].mxu0
      %v4139 = vadd.f32 0.0, %v4138
      %v4140 = vpop.f32.mrb[0].mxu0
      %4141 = vmatprep.mubr.bf16.mxu0 0
      %4142 = vmatmul.mubr.bf16.gmra.mrb[0].mxu0 %v4071
      %v4143 = vpop.f32.mrb[0].mxu0
      %v4144 = vadd.f32 0.0, %v4143
      %v4145 = vpop.f32.mrb[0].mxu0
      %v4146 = vpop.f32.mrb[0].mxu0
      %v4147 = vadd.f32 0.0, %v4146
      %v4148 = vpop.f32.mrb[0].mxu0
      %4149 = vdwg.mxu0
      %v4151 = vsel %vm2903, %v1283, 0
      %v4154 = vsel %vm2903, %v1284, 0
      %v4157 = vsel %vm2903, %v1285, 0
      %v4160 = vsel %vm2903, %v1286, 0
      %v4163 = vsel %vm2903, %v2089, 0
      %v4166 = vsel %vm2903, %v2090, 0
      %v4169 = vsel %vm2903, %v2091, 0
      %v4172 = vsel %vm2903, %v2092, 0
      %4174 = vmatprep.subr.bf16.mxu0 0
      %4175 = vmatpush1.bf16.xpose.msra.mxu0 %v4163
      %4176 = vmatprep.subr.bf16.mxu0 0
      %4177 = vmatpush1.bf16.xpose.msra.mxu0 %v4166
      %4178 = vmatprep.subr.bf16.mxu0 0
      %4179 = vmatpush1.bf16.xpose.msra.mxu0 %v4169
      %4180 = vmatprep.subr.bf16.mxu0 0
      %4181 = vmatpush1.bf16.xpose.msra.mxu0 %v4172
      %4182 = vmatprep.subr.bf16.mxu0 0
      %4183 = vmatpush1.bf16.xpose.msra.mxu0 0
      %4184 = vmatprep.subr.bf16.mxu0 0
      %4185 = vmatpush1.bf16.xpose.msra.mxu0 0
      %4186 = vmatprep.subr.bf16.mxu0 0
      %4187 = vmatpush1.bf16.xpose.msra.mxu0 0
      %4188 = vmatprep.subr.bf16.mxu0 0
      %4189 = vmatpush1.bf16.xpose.msra.mxu0 0
      %4190 = vmatprep.subr.bf16.mxu0 0
      %4191 = vmatpush1.bf16.xpose.msra.mxu0 0
      %4192 = vmatprep.subr.bf16.mxu0 0
      %4193 = vmatpush1.bf16.xpose.msra.mxu0 0
      %4194 = vmatprep.subr.bf16.mxu0 0
      %4195 = vmatpush1.bf16.xpose.msra.mxu0 0
      %4196 = vmatprep.subr.bf16.mxu0 0
      %4197 = vmatpush1.bf16.xpose.msra.mxu0 0
      %4198 = vmatprep.subr.bf16.mxu0 0
      %4199 = vmatpush1.bf16.xpose.msra.mxu0 0
      %4200 = vmatprep.subr.bf16.mxu0 0
      %4201 = vmatpush1.bf16.xpose.msra.mxu0 0
      %4202 = vmatprep.subr.bf16.mxu0 0
      %4203 = vmatpush1.bf16.xpose.msra.mxu0 0
      %4204 = vmatprep.subr.bf16.mxu0 0
      %4205 = vmatpush1.bf16.xpose.msra.mxu0 0
      %4206 = vmatprep.mubr.bf16.mxu0 0
      %4207 = vmatmul.mubr.bf16.gmra.mrb[0].mxu0 %v4151
      %v4208 = vpop.f32.mrb[0].mxu0
      %v4209 = vadd.f32 0.0, %v4208
      %v4210 = vpop.f32.mrb[0].mxu0
      %v4211 = vpop.f32.mrb[0].mxu0
      %v4212 = vadd.f32 0.0, %v4211
      %v4213 = vpop.f32.mrb[0].mxu0
      %4214 = vmatprep.mubr.bf16.mxu0 0
      %4215 = vmatmul.mubr.bf16.gmra.mrb[0].mxu0 %v4154
      %v4216 = vpop.f32.mrb[0].mxu0
      %v4217 = vadd.f32 0.0, %v4216
      %v4218 = vpop.f32.mrb[0].mxu0
      %v4219 = vpop.f32.mrb[0].mxu0
      %v4220 = vadd.f32 0.0, %v4219
      %v4221 = vpop.f32.mrb[0].mxu0
      %4222 = vmatprep.mubr.bf16.mxu0 0
      %4223 = vmatmul.mubr.bf16.gmra.mrb[0].mxu0 %v4157
      %v4224 = vpop.f32.mrb[0].mxu0
      %v4225 = vadd.f32 0.0, %v4224
      %v4226 = vpop.f32.mrb[0].mxu0
      %v4227 = vpop.f32.mrb[0].mxu0
      %v4228 = vadd.f32 0.0, %v4227
      %v4229 = vpop.f32.mrb[0].mxu0
      %4230 = vmatprep.mubr.bf16.mxu0 0
      %4231 = vmatmul.mubr.bf16.gmra.mrb[0].mxu0 %v4160
      %v4232 = vpop.f32.mrb[0].mxu0
      %v4233 = vadd.f32 0.0, %v4232
      %v4234 = vpop.f32.mrb[0].mxu0
      %v4235 = vpop.f32.mrb[0].mxu0
      %v4236 = vadd.f32 0.0, %v4235
      %v4237 = vpop.f32.mrb[0].mxu0
      %4238 = vdwg.mxu0
      %v4240 = vsel %vm2903, %v1287, 0
      %v4243 = vsel %vm2903, %v1288, 0
      %v4246 = vsel %vm2903, %v1289, 0
      %v4249 = vsel %vm2903, %v1290, 0
      %v4252 = vsel %vm2903, %v2093, 0
      %v4255 = vsel %vm2903, %v2094, 0
      %v4258 = vsel %vm2903, %v2095, 0
      %v4261 = vsel %vm2903, %v2096, 0
      %4263 = vmatprep.subr.bf16.mxu0 0
      %4264 = vmatpush1.bf16.xpose.msra.mxu0 %v4252
      %4265 = vmatprep.subr.bf16.mxu0 0
      %4266 = vmatpush1.bf16.xpose.msra.mxu0 %v4255
      %4267 = vmatprep.subr.bf16.mxu0 0
      %4268 = vmatpush1.bf16.xpose.msra.mxu0 %v4258
      %4269 = vmatprep.subr.bf16.mxu0 0
      %4270 = vmatpush1.bf16.xpose.msra.mxu0 %v4261
      %4271 = vmatprep.subr.bf16.mxu0 0
      %4272 = vmatpush1.bf16.xpose.msra.mxu0 0
      %4273 = vmatprep.subr.bf16.mxu0 0
      %4274 = vmatpush1.bf16.xpose.msra.mxu0 0
      %4275 = vmatprep.subr.bf16.mxu0 0
      %4276 = vmatpush1.bf16.xpose.msra.mxu0 0
      %4277 = vmatprep.subr.bf16.mxu0 0
      %4278 = vmatpush1.bf16.xpose.msra.mxu0 0
      %4279 = vmatprep.subr.bf16.mxu0 0
      %4280 = vmatpush1.bf16.xpose.msra.mxu0 0
      %4281 = vmatprep.subr.bf16.mxu0 0
      %4282 = vmatpush1.bf16.xpose.msra.mxu0 0
      %4283 = vmatprep.subr.bf16.mxu0 0
      %4284 = vmatpush1.bf16.xpose.msra.mxu0 0
      %4285 = vmatprep.subr.bf16.mxu0 0
      %4286 = vmatpush1.bf16.xpose.msra.mxu0 0
      %4287 = vmatprep.subr.bf16.mxu0 0
      %4288 = vmatpush1.bf16.xpose.msra.mxu0 0
      %4289 = vmatprep.subr.bf16.mxu0 0
      %4290 = vmatpush1.bf16.xpose.msra.mxu0 0
      %4291 = vmatprep.subr.bf16.mxu0 0
      %4292 = vmatpush1.bf16.xpose.msra.mxu0 0
      %4293 = vmatprep.subr.bf16.mxu0 0
      %4294 = vmatpush1.bf16.xpose.msra.mxu0 0
      %4295 = vmatprep.mubr.bf16.mxu0 0
      %4296 = vmatmul.mubr.bf16.gmra.mrb[0].mxu0 %v4240
      %v4297 = vpop.f32.mrb[0].mxu0
      %v4298 = vadd.f32 0.0, %v4297
      %v4299 = vpop.f32.mrb[0].mxu0
      %v4300 = vpop.f32.mrb[0].mxu0
      %v4301 = vadd.f32 0.0, %v4300
      %v4302 = vpop.f32.mrb[0].mxu0
      %4303 = vmatprep.mubr.bf16.mxu0 0
      %4304 = vmatmul.mubr.bf16.gmra.mrb[0].mxu0 %v4243
      %v4305 = vpop.f32.mrb[0].mxu0
      %v4306 = vadd.f32 0.0, %v4305
      %v4307 = vpop.f32.mrb[0].mxu0
      %v4308 = vpop.f32.mrb[0].mxu0
      %v4309 = vadd.f32 0.0, %v4308
      %v4310 = vpop.f32.mrb[0].mxu0
      %4311 = vmatprep.mubr.bf16.mxu0 0
      %4312 = vmatmul.mubr.bf16.gmra.mrb[0].mxu0 %v4246
      %v4313 = vpop.f32.mrb[0].mxu0
      %v4314 = vadd.f32 0.0, %v4313
      %v4315 = vpop.f32.mrb[0].mxu0
      %v4316 = vpop.f32.mrb[0].mxu0
      %v4317 = vadd.f32 0.0, %v4316
      %v4318 = vpop.f32.mrb[0].mxu0
      %4319 = vmatprep.mubr.bf16.mxu0 0
      %4320 = vmatmul.mubr.bf16.gmra.mrb[0].mxu0 %v4249
      %v4321 = vpop.f32.mrb[0].mxu0
      %v4322 = vadd.f32 0.0, %v4321
      %v4323 = vpop.f32.mrb[0].mxu0
      %v4324 = vpop.f32.mrb[0].mxu0
      %v4325 = vadd.f32 0.0, %v4324
      %v4326 = vpop.f32.mrb[0].mxu0
      %4327 = vdwg.mxu0
      %v4328 = vld [vmem:[%s7] sm:$0xf]
      %v4329 = vld [vmem:[%s7 + $0x4] sm:$0xf]
      %v4330 = vld [vmem:[%s7 + $0x8] sm:$0xf]
      %v4331 = vld [vmem:[%s7 + $0xc] sm:$0xf]
      %v4332 = vld [vmem:[%s7 + $0x10] sm:$0xf]
      %v4333 = vld [vmem:[%s7 + $0x14] sm:$0xf]
      %v4334 = vld [vmem:[%s7 + $0x18] sm:$0xf]
      %v4335 = vld [vmem:[%s7 + $0x1c] sm:$0xf]
      %v4336 = vld [vmem:[%s7 + $0x20] sm:$0xf]
      %v4337 = vld [vmem:[%s7 + $0x24] sm:$0xf]
      %v4338 = vld [vmem:[%s7 + $0x28] sm:$0xf]
      %v4339 = vld [vmem:[%s7 + $0x2c] sm:$0xf]
      %v4340 = vld [vmem:[%s7 + $0x30] sm:$0xf]
      %v4341 = vld [vmem:[%s7 + $0x34] sm:$0xf]
      %v4342 = vld [vmem:[%s7 + $0x38] sm:$0xf]
      %v4343 = vld [vmem:[%s7 + $0x3c] sm:$0xf]
      %v4344 = vld [vmem:[%s7 + $0x40] sm:$0xf]
      %v4345 = vld [vmem:[%s7 + $0x44] sm:$0xf]
      %v4346 = vld [vmem:[%s7 + $0x48] sm:$0xf]
      %v4347 = vld [vmem:[%s7 + $0x4c] sm:$0xf]
      %v4348 = vld [vmem:[%s7 + $0x50] sm:$0xf]
      %v4349 = vld [vmem:[%s7 + $0x54] sm:$0xf]
      %v4350 = vld [vmem:[%s7 + $0x58] sm:$0xf]
      %v4351 = vld [vmem:[%s7 + $0x5c] sm:$0xf]
      %v4352 = vld [vmem:[%s7 + $0x60] sm:$0xf]
      %v4353 = vld [vmem:[%s7 + $0x64] sm:$0xf]
      %v4354 = vld [vmem:[%s7 + $0x68] sm:$0xf]
      %v4355 = vld [vmem:[%s7 + $0x6c] sm:$0xf]
      %v4356 = vld [vmem:[%s7 + $0x70] sm:$0xf]
      %v4357 = vld [vmem:[%s7 + $0x74] sm:$0xf]
      %v4358 = vld [vmem:[%s7 + $0x78] sm:$0xf]
      %v4359 = vld [vmem:[%s7 + $0x7c] sm:$0xf]
      %v4360 = vunpack.c.l.bf16 %v4328
      %v4361 = vunpack.c.l.bf16 %v4329
      %v4362 = vunpack.c.l.bf16 %v4330
      %v4363 = vunpack.c.l.bf16 %v4331
      %v4364 = vunpack.c.l.bf16 %v4332
      %v4365 = vunpack.c.l.bf16 %v4333
      %v4366 = vunpack.c.l.bf16 %v4334
      %v4367 = vunpack.c.l.bf16 %v4335
      %v4368 = vunpack.c.l.bf16 %v4336
      %v4369 = vunpack.c.l.bf16 %v4337
      %v4370 = vunpack.c.l.bf16 %v4338
      %v4371 = vunpack.c.l.bf16 %v4339
      %v4372 = vunpack.c.l.bf16 %v4340
      %v4373 = vunpack.c.l.bf16 %v4341
      %v4374 = vunpack.c.l.bf16 %v4342
      %v4375 = vunpack.c.l.bf16 %v4343
      %v4376 = vunpack.c.l.bf16 %v4344
      %v4377 = vunpack.c.l.bf16 %v4345
      %v4378 = vunpack.c.l.bf16 %v4346
      %v4379 = vunpack.c.l.bf16 %v4347
      %v4380 = vunpack.c.l.bf16 %v4348
      %v4381 = vunpack.c.l.bf16 %v4349
      %v4382 = vunpack.c.l.bf16 %v4350
      %v4383 = vunpack.c.l.bf16 %v4351
      %v4384 = vunpack.c.l.bf16 %v4352
      %v4385 = vunpack.c.l.bf16 %v4353
      %v4386 = vunpack.c.l.bf16 %v4354
      %v4387 = vunpack.c.l.bf16 %v4355
      %v4388 = vunpack.c.l.bf16 %v4356
      %v4389 = vunpack.c.l.bf16 %v4357
      %v4390 = vunpack.c.l.bf16 %v4358
      %v4391 = vunpack.c.l.bf16 %v4359
      %v4392 = vadd.f32 %v2963, %v4360
      %v4393 = vadd.f32 %v2966, %v4361
      %v4394 = vadd.f32 %v2971, %v4362
      %v4395 = vadd.f32 %v2974, %v4363
      %v4396 = vadd.f32 %v2979, %v4364
      %v4397 = vadd.f32 %v2982, %v4365
      %v4398 = vadd.f32 %v2987, %v4366
      %v4399 = vadd.f32 %v2990, %v4367
      %v4400 = vadd.f32 %v3052, %v4360
      %v4401 = vadd.f32 %v3055, %v4361
      %v4402 = vadd.f32 %v3060, %v4362
      %v4403 = vadd.f32 %v3063, %v4363
      %v4404 = vadd.f32 %v3068, %v4364
      %v4405 = vadd.f32 %v3071, %v4365
      %v4406 = vadd.f32 %v3076, %v4366
      %v4407 = vadd.f32 %v3079, %v4367
      %v4408 = vadd.f32 %v3141, %v4360
      %v4409 = vadd.f32 %v3144, %v4361
      %v4410 = vadd.f32 %v3149, %v4362
      %v4411 = vadd.f32 %v3152, %v4363
      %v4412 = vadd.f32 %v3157, %v4364
      %v4413 = vadd.f32 %v3160, %v4365
      %v4414 = vadd.f32 %v3165, %v4366
      %v4415 = vadd.f32 %v3168, %v4367
      %v4416 = vadd.f32 %v3230, %v4360
      %v4417 = vadd.f32 %v3233, %v4361
      %v4418 = vadd.f32 %v3238, %v4362
      %v4419 = vadd.f32 %v3241, %v4363
      %v4420 = vadd.f32 %v3246, %v4364
      %v4421 = vadd.f32 %v3249, %v4365
      %v4422 = vadd.f32 %v3254, %v4366
      %v4423 = vadd.f32 %v3257, %v4367
      %v4424 = vadd.f32 %v3319, %v4368
      %v4425 = vadd.f32 %v3322, %v4369
      %v4426 = vadd.f32 %v3327, %v4370
      %v4427 = vadd.f32 %v3330, %v4371
      %v4428 = vadd.f32 %v3335, %v4372
      %v4429 = vadd.f32 %v3338, %v4373
      %v4430 = vadd.f32 %v3343, %v4374
      %v4431 = vadd.f32 %v3346, %v4375
      %v4432 = vadd.f32 %v3408, %v4368
      %v4433 = vadd.f32 %v3411, %v4369
      %v4434 = vadd.f32 %v3416, %v4370
      %v4435 = vadd.f32 %v3419, %v4371
      %v4436 = vadd.f32 %v3424, %v4372
      %v4437 = vadd.f32 %v3427, %v4373
      %v4438 = vadd.f32 %v3432, %v4374
      %v4439 = vadd.f32 %v3435, %v4375
      %v4440 = vadd.f32 %v3497, %v4368
      %v4441 = vadd.f32 %v3500, %v4369
      %v4442 = vadd.f32 %v3505, %v4370
      %v4443 = vadd.f32 %v3508, %v4371
      %v4444 = vadd.f32 %v3513, %v4372
      %v4445 = vadd.f32 %v3516, %v4373
      %v4446 = vadd.f32 %v3521, %v4374
      %v4447 = vadd.f32 %v3524, %v4375
      %v4448 = vadd.f32 %v3586, %v4368
      %v4449 = vadd.f32 %v3589, %v4369
      %v4450 = vadd.f32 %v3594, %v4370
      %v4451 = vadd.f32 %v3597, %v4371
      %v4452 = vadd.f32 %v3602, %v4372
      %v4453 = vadd.f32 %v3605, %v4373
      %v4454 = vadd.f32 %v3610, %v4374
      %v4455 = vadd.f32 %v3613, %v4375
      %v4456 = vadd.f32 %v3675, %v4376
      %v4457 = vadd.f32 %v3678, %v4377
      %v4458 = vadd.f32 %v3683, %v4378
      %v4459 = vadd.f32 %v3686, %v4379
      %v4460 = vadd.f32 %v3691, %v4380
      %v4461 = vadd.f32 %v3694, %v4381
      %v4462 = vadd.f32 %v3699, %v4382
      %v4463 = vadd.f32 %v3702, %v4383
      %v4464 = vadd.f32 %v3764, %v4376
      %v4465 = vadd.f32 %v3767, %v4377
      %v4466 = vadd.f32 %v3772, %v4378
      %v4467 = vadd.f32 %v3775, %v4379
      %v4468 = vadd.f32 %v3780, %v4380
      %v4469 = vadd.f32 %v3783, %v4381
      %v4470 = vadd.f32 %v3788, %v4382
      %v4471 = vadd.f32 %v3791, %v4383
      %v4472 = vadd.f32 %v3853, %v4376
      %v4473 = vadd.f32 %v3856, %v4377
      %v4474 = vadd.f32 %v3861, %v4378
      %v4475 = vadd.f32 %v3864, %v4379
      %v4476 = vadd.f32 %v3869, %v4380
      %v4477 = vadd.f32 %v3872, %v4381
      %v4478 = vadd.f32 %v3877, %v4382
      %v4479 = vadd.f32 %v3880, %v4383
      %v4480 = vadd.f32 %v3942, %v4376
      %v4481 = vadd.f32 %v3945, %v4377
      %v4482 = vadd.f32 %v3950, %v4378
      %v4483 = vadd.f32 %v3953, %v4379
      %v4484 = vadd.f32 %v3958, %v4380
      %v4485 = vadd.f32 %v3961, %v4381
      %v4486 = vadd.f32 %v3966, %v4382
      %v4487 = vadd.f32 %v3969, %v4383
      %v4488 = vadd.f32 %v4031, %v4384
      %v4489 = vadd.f32 %v4034, %v4385
      %v4490 = vadd.f32 %v4039, %v4386
      %v4491 = vadd.f32 %v4042, %v4387
      %v4492 = vadd.f32 %v4047, %v4388
      %v4493 = vadd.f32 %v4050, %v4389
      %v4494 = vadd.f32 %v4055, %v4390
      %v4495 = vadd.f32 %v4058, %v4391
      %v4496 = vadd.f32 %v4120, %v4384
      %v4497 = vadd.f32 %v4123, %v4385
      %v4498 = vadd.f32 %v4128, %v4386
      %v4499 = vadd.f32 %v4131, %v4387
      %v4500 = vadd.f32 %v4136, %v4388
      %v4501 = vadd.f32 %v4139, %v4389
      %v4502 = vadd.f32 %v4144, %v4390
      %v4503 = vadd.f32 %v4147, %v4391
      %v4504 = vadd.f32 %v4209, %v4384
      %v4505 = vadd.f32 %v4212, %v4385
      %v4506 = vadd.f32 %v4217, %v4386
      %v4507 = vadd.f32 %v4220, %v4387
      %v4508 = vadd.f32 %v4225, %v4388
      %v4509 = vadd.f32 %v4228, %v4389
      %v4510 = vadd.f32 %v4233, %v4390
      %v4511 = vadd.f32 %v4236, %v4391
      %v4512 = vadd.f32 %v4298, %v4384
      %v4513 = vadd.f32 %v4301, %v4385
      %v4514 = vadd.f32 %v4306, %v4386
      %v4515 = vadd.f32 %v4309, %v4387
      %v4516 = vadd.f32 %v4314, %v4388
      %v4517 = vadd.f32 %v4317, %v4389
      %v4518 = vadd.f32 %v4322, %v4390
      %v4519 = vadd.f32 %v4325, %v4391
      %vm4520 = vcmask 523264
      %v4521 = vsel %vm4520, %v4392, -inf
      %4522 = vmax.xlane.f32.xlu0 %v4521
      %v4523 = vpop.xlane.xlu0 %4522
      %v4524 = vsel %vm4520, %v4393, -inf
      %4525 = vmax.xlane.f32.xlu0 %v4524
      %v4526 = vpop.xlane.xlu0 %4525
      %v4527 = vsel %vm4520, %v4394, -inf
      %4528 = vmax.xlane.f32.xlu0 %v4527
      %v4529 = vpop.xlane.xlu0 %4528
      %v4530 = vsel %vm4520, %v4395, -inf
      %4531 = vmax.xlane.f32.xlu0 %v4530
      %v4532 = vpop.xlane.xlu0 %4531
      %v4533 = vsel %vm4520, %v4396, -inf
      %4534 = vmax.xlane.f32.xlu0 %v4533
      %v4535 = vpop.xlane.xlu0 %4534
      %v4536 = vsel %vm4520, %v4397, -inf
      %4537 = vmax.xlane.f32.xlu0 %v4536
      %v4538 = vpop.xlane.xlu0 %4537
      %v4539 = vsel %vm4520, %v4398, -inf
      %4540 = vmax.xlane.f32.xlu0 %v4539
      %v4541 = vpop.xlane.xlu0 %4540
      %v4542 = vsel %vm4520, %v4399, -inf
      %4543 = vmax.xlane.f32.xlu0 %v4542
      %v4544 = vpop.xlane.xlu0 %4543
      %v4545 = vsel %vm4520, %v4400, -inf
      %4546 = vmax.xlane.f32.xlu0 %v4545
      %v4547 = vpop.xlane.xlu0 %4546
      %v4548 = vsel %vm4520, %v4401, -inf
      %4549 = vmax.xlane.f32.xlu0 %v4548
      %v4550 = vpop.xlane.xlu0 %4549
      %v4551 = vsel %vm4520, %v4402, -inf
      %4552 = vmax.xlane.f32.xlu0 %v4551
      %v4553 = vpop.xlane.xlu0 %4552
      %v4554 = vsel %vm4520, %v4403, -inf
      %4555 = vmax.xlane.f32.xlu0 %v4554
      %v4556 = vpop.xlane.xlu0 %4555
      %v4557 = vsel %vm4520, %v4404, -inf
      %4558 = vmax.xlane.f32.xlu0 %v4557
      %v4559 = vpop.xlane.xlu0 %4558
      %v4560 = vsel %vm4520, %v4405, -inf
      %4561 = vmax.xlane.f32.xlu0 %v4560
      %v4562 = vpop.xlane.xlu0 %4561
      %v4563 = vsel %vm4520, %v4406, -inf
      %4564 = vmax.xlane.f32.xlu0 %v4563
      %v4565 = vpop.xlane.xlu0 %4564
      %v4566 = vsel %vm4520, %v4407, -inf
      %4567 = vmax.xlane.f32.xlu0 %v4566
      %v4568 = vpop.xlane.xlu0 %4567
      %v4569 = vsel %vm4520, %v4408, -inf
      %4570 = vmax.xlane.f32.xlu0 %v4569
      %v4571 = vpop.xlane.xlu0 %4570
      %v4572 = vsel %vm4520, %v4409, -inf
      %4573 = vmax.xlane.f32.xlu0 %v4572
      %v4574 = vpop.xlane.xlu0 %4573
      %v4575 = vsel %vm4520, %v4410, -inf
      %4576 = vmax.xlane.f32.xlu0 %v4575
      %v4577 = vpop.xlane.xlu0 %4576
      %v4578 = vsel %vm4520, %v4411, -inf
      %4579 = vmax.xlane.f32.xlu0 %v4578
      %v4580 = vpop.xlane.xlu0 %4579
      %v4581 = vsel %vm4520, %v4412, -inf
      %4582 = vmax.xlane.f32.xlu0 %v4581
      %v4583 = vpop.xlane.xlu0 %4582
      %v4584 = vsel %vm4520, %v4413, -inf
      %4585 = vmax.xlane.f32.xlu0 %v4584
      %v4586 = vpop.xlane.xlu0 %4585
      %v4587 = vsel %vm4520, %v4414, -inf
      %4588 = vmax.xlane.f32.xlu0 %v4587
      %v4589 = vpop.xlane.xlu0 %4588
      %v4590 = vsel %vm4520, %v4415, -inf
      %4591 = vmax.xlane.f32.xlu0 %v4590
      %v4592 = vpop.xlane.xlu0 %4591
      %v4593 = vsel %vm4520, %v4416, -inf
      %4594 = vmax.xlane.f32.xlu0 %v4593
      %v4595 = vpop.xlane.xlu0 %4594
      %v4596 = vsel %vm4520, %v4417, -inf
      %4597 = vmax.xlane.f32.xlu0 %v4596
      %v4598 = vpop.xlane.xlu0 %4597
      %v4599 = vsel %vm4520, %v4418, -inf
      %4600 = vmax.xlane.f32.xlu0 %v4599
      %v4601 = vpop.xlane.xlu0 %4600
      %v4602 = vsel %vm4520, %v4419, -inf
      %4603 = vmax.xlane.f32.xlu0 %v4602
      %v4604 = vpop.xlane.xlu0 %4603
      %v4605 = vsel %vm4520, %v4420, -inf
      %4606 = vmax.xlane.f32.xlu0 %v4605
      %v4607 = vpop.xlane.xlu0 %4606
      %v4608 = vsel %vm4520, %v4421, -inf
      %4609 = vmax.xlane.f32.xlu0 %v4608
      %v4610 = vpop.xlane.xlu0 %4609
      %v4611 = vsel %vm4520, %v4422, -inf
      %4612 = vmax.xlane.f32.xlu0 %v4611
      %v4613 = vpop.xlane.xlu0 %4612
      %v4614 = vsel %vm4520, %v4423, -inf
      %4615 = vmax.xlane.f32.xlu0 %v4614
      %v4616 = vpop.xlane.xlu0 %4615
      %v4617 = vsel %vm4520, %v4424, -inf
      %4618 = vmax.xlane.f32.xlu0 %v4617
      %v4619 = vpop.xlane.xlu0 %4618
      %v4620 = vsel %vm4520, %v4425, -inf
      %4621 = vmax.xlane.f32.xlu0 %v4620
      %v4622 = vpop.xlane.xlu0 %4621
      %v4623 = vsel %vm4520, %v4426, -inf
      %4624 = vmax.xlane.f32.xlu0 %v4623
      %v4625 = vpop.xlane.xlu0 %4624
      %v4626 = vsel %vm4520, %v4427, -inf
      %4627 = vmax.xlane.f32.xlu0 %v4626
      %v4628 = vpop.xlane.xlu0 %4627
      %v4629 = vsel %vm4520, %v4428, -inf
      %4630 = vmax.xlane.f32.xlu0 %v4629
      %v4631 = vpop.xlane.xlu0 %4630
      %v4632 = vsel %vm4520, %v4429, -inf
      %4633 = vmax.xlane.f32.xlu0 %v4632
      %v4634 = vpop.xlane.xlu0 %4633
      %v4635 = vsel %vm4520, %v4430, -inf
      %4636 = vmax.xlane.f32.xlu0 %v4635
      %v4637 = vpop.xlane.xlu0 %4636
      %v4638 = vsel %vm4520, %v4431, -inf
      %4639 = vmax.xlane.f32.xlu0 %v4638
      %v4640 = vpop.xlane.xlu0 %4639
      %v4641 = vsel %vm4520, %v4432, -inf
      %4642 = vmax.xlane.f32.xlu0 %v4641
      %v4643 = vpop.xlane.xlu0 %4642
      %v4644 = vsel %vm4520, %v4433, -inf
      %4645 = vmax.xlane.f32.xlu0 %v4644
      %v4646 = vpop.xlane.xlu0 %4645
      %v4647 = vsel %vm4520, %v4434, -inf
      %4648 = vmax.xlane.f32.xlu0 %v4647
      %v4649 = vpop.xlane.xlu0 %4648
      %v4650 = vsel %vm4520, %v4435, -inf
      %4651 = vmax.xlane.f32.xlu0 %v4650
      %v4652 = vpop.xlane.xlu0 %4651
      %v4653 = vsel %vm4520, %v4436, -inf
      %4654 = vmax.xlane.f32.xlu0 %v4653
      %v4655 = vpop.xlane.xlu0 %4654
      %v4656 = vsel %vm4520, %v4437, -inf
      %4657 = vmax.xlane.f32.xlu0 %v4656
      %v4658 = vpop.xlane.xlu0 %4657
      %v4659 = vsel %vm4520, %v4438, -inf
      %4660 = vmax.xlane.f32.xlu0 %v4659
      %v4661 = vpop.xlane.xlu0 %4660
      %v4662 = vsel %vm4520, %v4439, -inf
      %4663 = vmax.xlane.f32.xlu0 %v4662
      %v4664 = vpop.xlane.xlu0 %4663
      %v4665 = vsel %vm4520, %v4440, -inf
      %4666 = vmax.xlane.f32.xlu0 %v4665
      %v4667 = vpop.xlane.xlu0 %4666
      %v4668 = vsel %vm4520, %v4441, -inf
      %4669 = vmax.xlane.f32.xlu0 %v4668
      %v4670 = vpop.xlane.xlu0 %4669
      %v4671 = vsel %vm4520, %v4442, -inf
      %4672 = vmax.xlane.f32.xlu0 %v4671
      %v4673 = vpop.xlane.xlu0 %4672
      %v4674 = vsel %vm4520, %v4443, -inf
      %4675 = vmax.xlane.f32.xlu0 %v4674
      %v4676 = vpop.xlane.xlu0 %4675
      %v4677 = vsel %vm4520, %v4444, -inf
      %4678 = vmax.xlane.f32.xlu0 %v4677
      %v4679 = vpop.xlane.xlu0 %4678
      %v4680 = vsel %vm4520, %v4445, -inf
      %4681 = vmax.xlane.f32.xlu0 %v4680
      %v4682 = vpop.xlane.xlu0 %4681
      %v4683 = vsel %vm4520, %v4446, -inf
      %4684 = vmax.xlane.f32.xlu0 %v4683
      %v4685 = vpop.xlane.xlu0 %4684
      %v4686 = vsel %vm4520, %v4447, -inf
      %4687 = vmax.xlane.f32.xlu0 %v4686
      %v4688 = vpop.xlane.xlu0 %4687
      %v4689 = vsel %vm4520, %v4448, -inf
      %4690 = vmax.xlane.f32.xlu0 %v4689
      %v4691 = vpop.xlane.xlu0 %4690
      %v4692 = vsel %vm4520, %v4449, -inf
      %4693 = vmax.xlane.f32.xlu0 %v4692
      %v4694 = vpop.xlane.xlu0 %4693
      %v4695 = vsel %vm4520, %v4450, -inf
      %4696 = vmax.xlane.f32.xlu0 %v4695
      %v4697 = vpop.xlane.xlu0 %4696
      %v4698 = vsel %vm4520, %v4451, -inf
      %4699 = vmax.xlane.f32.xlu0 %v4698
      %v4700 = vpop.xlane.xlu0 %4699
      %v4701 = vsel %vm4520, %v4452, -inf
      %4702 = vmax.xlane.f32.xlu0 %v4701
      %v4703 = vpop.xlane.xlu0 %4702
      %v4704 = vsel %vm4520, %v4453, -inf
      %4705 = vmax.xlane.f32.xlu0 %v4704
      %v4706 = vpop.xlane.xlu0 %4705
      %v4707 = vsel %vm4520, %v4454, -inf
      %4708 = vmax.xlane.f32.xlu0 %v4707
      %v4709 = vpop.xlane.xlu0 %4708
      %v4710 = vsel %vm4520, %v4455, -inf
      %4711 = vmax.xlane.f32.xlu0 %v4710
      %v4712 = vpop.xlane.xlu0 %4711
      %v4713 = vsel %vm4520, %v4456, -inf
      %4714 = vmax.xlane.f32.xlu0 %v4713
      %v4715 = vpop.xlane.xlu0 %4714
      %v4716 = vsel %vm4520, %v4457, -inf
      %4717 = vmax.xlane.f32.xlu0 %v4716
      %v4718 = vpop.xlane.xlu0 %4717
      %v4719 = vsel %vm4520, %v4458, -inf
      %4720 = vmax.xlane.f32.xlu0 %v4719
      %v4721 = vpop.xlane.xlu0 %4720
      %v4722 = vsel %vm4520, %v4459, -inf
      %4723 = vmax.xlane.f32.xlu0 %v4722
      %v4724 = vpop.xlane.xlu0 %4723
      %v4725 = vsel %vm4520, %v4460, -inf
      %4726 = vmax.xlane.f32.xlu0 %v4725
      %v4727 = vpop.xlane.xlu0 %4726
      %v4728 = vsel %vm4520, %v4461, -inf
      %4729 = vmax.xlane.f32.xlu0 %v4728
      %v4730 = vpop.xlane.xlu0 %4729
      %v4731 = vsel %vm4520, %v4462, -inf
      %4732 = vmax.xlane.f32.xlu0 %v4731
      %v4733 = vpop.xlane.xlu0 %4732
      %v4734 = vsel %vm4520, %v4463, -inf
      %4735 = vmax.xlane.f32.xlu0 %v4734
      %v4736 = vpop.xlane.xlu0 %4735
      %v4737 = vsel %vm4520, %v4464, -inf
      %4738 = vmax.xlane.f32.xlu0 %v4737
      %v4739 = vpop.xlane.xlu0 %4738
      %v4740 = vsel %vm4520, %v4465, -inf
      %4741 = vmax.xlane.f32.xlu0 %v4740
      %v4742 = vpop.xlane.xlu0 %4741
      %v4743 = vsel %vm4520, %v4466, -inf
      %4744 = vmax.xlane.f32.xlu0 %v4743
      %v4745 = vpop.xlane.xlu0 %4744
      %v4746 = vsel %vm4520, %v4467, -inf
      %4747 = vmax.xlane.f32.xlu0 %v4746
      %v4748 = vpop.xlane.xlu0 %4747
      %v4749 = vsel %vm4520, %v4468, -inf
      %4750 = vmax.xlane.f32.xlu0 %v4749
      %v4751 = vpop.xlane.xlu0 %4750
      %v4752 = vsel %vm4520, %v4469, -inf
      %4753 = vmax.xlane.f32.xlu0 %v4752
      %v4754 = vpop.xlane.xlu0 %4753
      %v4755 = vsel %vm4520, %v4470, -inf
      %4756 = vmax.xlane.f32.xlu0 %v4755
      %v4757 = vpop.xlane.xlu0 %4756
      %v4758 = vsel %vm4520, %v4471, -inf
      %4759 = vmax.xlane.f32.xlu0 %v4758
      %v4760 = vpop.xlane.xlu0 %4759
      %v4761 = vsel %vm4520, %v4472, -inf
      %4762 = vmax.xlane.f32.xlu0 %v4761
      %v4763 = vpop.xlane.xlu0 %4762
      %v4764 = vsel %vm4520, %v4473, -inf
      %4765 = vmax.xlane.f32.xlu0 %v4764
      %v4766 = vpop.xlane.xlu0 %4765
      %v4767 = vsel %vm4520, %v4474, -inf
      %4768 = vmax.xlane.f32.xlu0 %v4767
      %v4769 = vpop.xlane.xlu0 %4768
      %v4770 = vsel %vm4520, %v4475, -inf
      %4771 = vmax.xlane.f32.xlu0 %v4770
      %v4772 = vpop.xlane.xlu0 %4771
      %v4773 = vsel %vm4520, %v4476, -inf
      %4774 = vmax.xlane.f32.xlu0 %v4773
      %v4775 = vpop.xlane.xlu0 %4774
      %v4776 = vsel %vm4520, %v4477, -inf
      %4777 = vmax.xlane.f32.xlu0 %v4776
      %v4778 = vpop.xlane.xlu0 %4777
      %v4779 = vsel %vm4520, %v4478, -inf
      %4780 = vmax.xlane.f32.xlu0 %v4779
      %v4781 = vpop.xlane.xlu0 %4780
      %v4782 = vsel %vm4520, %v4479, -inf
      %4783 = vmax.xlane.f32.xlu0 %v4782
      %v4784 = vpop.xlane.xlu0 %4783
      %v4785 = vsel %vm4520, %v4480, -inf
      %4786 = vmax.xlane.f32.xlu0 %v4785
      %v4787 = vpop.xlane.xlu0 %4786
      %v4788 = vsel %vm4520, %v4481, -inf
      %4789 = vmax.xlane.f32.xlu0 %v4788
      %v4790 = vpop.xlane.xlu0 %4789
      %v4791 = vsel %vm4520, %v4482, -inf
      %4792 = vmax.xlane.f32.xlu0 %v4791
      %v4793 = vpop.xlane.xlu0 %4792
      %v4794 = vsel %vm4520, %v4483, -inf
      %4795 = vmax.xlane.f32.xlu0 %v4794
      %v4796 = vpop.xlane.xlu0 %4795
      %v4797 = vsel %vm4520, %v4484, -inf
      %4798 = vmax.xlane.f32.xlu0 %v4797
      %v4799 = vpop.xlane.xlu0 %4798
      %v4800 = vsel %vm4520, %v4485, -inf
      %4801 = vmax.xlane.f32.xlu0 %v4800
      %v4802 = vpop.xlane.xlu0 %4801
      %v4803 = vsel %vm4520, %v4486, -inf
      %4804 = vmax.xlane.f32.xlu0 %v4803
      %v4805 = vpop.xlane.xlu0 %4804
      %v4806 = vsel %vm4520, %v4487, -inf
      %4807 = vmax.xlane.f32.xlu0 %v4806
      %v4808 = vpop.xlane.xlu0 %4807
      %v4809 = vsel %vm4520, %v4488, -inf
      %4810 = vmax.xlane.f32.xlu0 %v4809
      %v4811 = vpop.xlane.xlu0 %4810
      %v4812 = vsel %vm4520, %v4489, -inf
      %4813 = vmax.xlane.f32.xlu0 %v4812
      %v4814 = vpop.xlane.xlu0 %4813
      %v4815 = vsel %vm4520, %v4490, -inf
      %4816 = vmax.xlane.f32.xlu0 %v4815
      %v4817 = vpop.xlane.xlu0 %4816
      %v4818 = vsel %vm4520, %v4491, -inf
      %4819 = vmax.xlane.f32.xlu0 %v4818
      %v4820 = vpop.xlane.xlu0 %4819
      %v4821 = vsel %vm4520, %v4492, -inf
      %4822 = vmax.xlane.f32.xlu0 %v4821
      %v4823 = vpop.xlane.xlu0 %4822
      %v4824 = vsel %vm4520, %v4493, -inf
      %4825 = vmax.xlane.f32.xlu0 %v4824
      %v4826 = vpop.xlane.xlu0 %4825
      %v4827 = vsel %vm4520, %v4494, -inf
      %4828 = vmax.xlane.f32.xlu0 %v4827
      %v4829 = vpop.xlane.xlu0 %4828
      %v4830 = vsel %vm4520, %v4495, -inf
      %4831 = vmax.xlane.f32.xlu0 %v4830
      %v4832 = vpop.xlane.xlu0 %4831
      %v4833 = vsel %vm4520, %v4496, -inf
      %4834 = vmax.xlane.f32.xlu0 %v4833
      %v4835 = vpop.xlane.xlu0 %4834
      %v4836 = vsel %vm4520, %v4497, -inf
      %4837 = vmax.xlane.f32.xlu0 %v4836
      %v4838 = vpop.xlane.xlu0 %4837
      %v4839 = vsel %vm4520, %v4498, -inf
      %4840 = vmax.xlane.f32.xlu0 %v4839
      %v4841 = vpop.xlane.xlu0 %4840
      %v4842 = vsel %vm4520, %v4499, -inf
      %4843 = vmax.xlane.f32.xlu0 %v4842
      %v4844 = vpop.xlane.xlu0 %4843
      %v4845 = vsel %vm4520, %v4500, -inf
      %4846 = vmax.xlane.f32.xlu0 %v4845
      %v4847 = vpop.xlane.xlu0 %4846
      %v4848 = vsel %vm4520, %v4501, -inf
      %4849 = vmax.xlane.f32.xlu0 %v4848
      %v4850 = vpop.xlane.xlu0 %4849
      %v4851 = vsel %vm4520, %v4502, -inf
      %4852 = vmax.xlane.f32.xlu0 %v4851
      %v4853 = vpop.xlane.xlu0 %4852
      %v4854 = vsel %vm4520, %v4503, -inf
      %4855 = vmax.xlane.f32.xlu0 %v4854
      %v4856 = vpop.xlane.xlu0 %4855
      %v4857 = vsel %vm4520, %v4504, -inf
      %4858 = vmax.xlane.f32.xlu0 %v4857
      %v4859 = vpop.xlane.xlu0 %4858
      %v4860 = vsel %vm4520, %v4505, -inf
      %4861 = vmax.xlane.f32.xlu0 %v4860
      %v4862 = vpop.xlane.xlu0 %4861
      %v4863 = vsel %vm4520, %v4506, -inf
      %4864 = vmax.xlane.f32.xlu0 %v4863
      %v4865 = vpop.xlane.xlu0 %4864
      %v4866 = vsel %vm4520, %v4507, -inf
      %4867 = vmax.xlane.f32.xlu0 %v4866
      %v4868 = vpop.xlane.xlu0 %4867
      %v4869 = vsel %vm4520, %v4508, -inf
      %4870 = vmax.xlane.f32.xlu0 %v4869
      %v4871 = vpop.xlane.xlu0 %4870
      %v4872 = vsel %vm4520, %v4509, -inf
      %4873 = vmax.xlane.f32.xlu0 %v4872
      %v4874 = vpop.xlane.xlu0 %4873
      %v4875 = vsel %vm4520, %v4510, -inf
      %4876 = vmax.xlane.f32.xlu0 %v4875
      %v4877 = vpop.xlane.xlu0 %4876
      %v4878 = vsel %vm4520, %v4511, -inf
      %4879 = vmax.xlane.f32.xlu0 %v4878
      %v4880 = vpop.xlane.xlu0 %4879
      %v4881 = vsel %vm4520, %v4512, -inf
      %4882 = vmax.xlane.f32.xlu0 %v4881
      %v4883 = vpop.xlane.xlu0 %4882
      %v4884 = vsel %vm4520, %v4513, -inf
      %4885 = vmax.xlane.f32.xlu0 %v4884
      %v4886 = vpop.xlane.xlu0 %4885
      %v4887 = vsel %vm4520, %v4514, -inf
      %4888 = vmax.xlane.f32.xlu0 %v4887
      %v4889 = vpop.xlane.xlu0 %4888
      %v4890 = vsel %vm4520, %v4515, -inf
      %4891 = vmax.xlane.f32.xlu0 %v4890
      %v4892 = vpop.xlane.xlu0 %4891
      %v4893 = vsel %vm4520, %v4516, -inf
      %4894 = vmax.xlane.f32.xlu0 %v4893
      %v4895 = vpop.xlane.xlu0 %4894
      %v4896 = vsel %vm4520, %v4517, -inf
      %4897 = vmax.xlane.f32.xlu0 %v4896
      %v4898 = vpop.xlane.xlu0 %4897
      %v4899 = vsel %vm4520, %v4518, -inf
      %4900 = vmax.xlane.f32.xlu0 %v4899
      %v4901 = vpop.xlane.xlu0 %4900
      %v4902 = vsel %vm4520, %v4519, -inf
      %4903 = vmax.xlane.f32.xlu0 %v4902
      %v4904 = vpop.xlane.xlu0 %4903
      %v4905 = vsub.f32 %v4392, %v4523
      %v4906 = vsub.f32 %v4393, %v4526
      %v4907 = vsub.f32 %v4394, %v4529
      %v4908 = vsub.f32 %v4395, %v4532
      %v4909 = vsub.f32 %v4396, %v4535
      %v4910 = vsub.f32 %v4397, %v4538
      %v4911 = vsub.f32 %v4398, %v4541
      %v4912 = vsub.f32 %v4399, %v4544
      %v4913 = vsub.f32 %v4400, %v4547
      %v4914 = vsub.f32 %v4401, %v4550
      %v4915 = vsub.f32 %v4402, %v4553
      %v4916 = vsub.f32 %v4403, %v4556
      %v4917 = vsub.f32 %v4404, %v4559
      %v4918 = vsub.f32 %v4405, %v4562
      %v4919 = vsub.f32 %v4406, %v4565
      %v4920 = vsub.f32 %v4407, %v4568
      %v4921 = vsub.f32 %v4408, %v4571
      %v4922 = vsub.f32 %v4409, %v4574
      %v4923 = vsub.f32 %v4410, %v4577
      %v4924 = vsub.f32 %v4411, %v4580
      %v4925 = vsub.f32 %v4412, %v4583
      %v4926 = vsub.f32 %v4413, %v4586
      %v4927 = vsub.f32 %v4414, %v4589
      %v4928 = vsub.f32 %v4415, %v4592
      %v4929 = vsub.f32 %v4416, %v4595
      %v4930 = vsub.f32 %v4417, %v4598
      %v4931 = vsub.f32 %v4418, %v4601
      %v4932 = vsub.f32 %v4419, %v4604
      %v4933 = vsub.f32 %v4420, %v4607
      %v4934 = vsub.f32 %v4421, %v4610
      %v4935 = vsub.f32 %v4422, %v4613
      %v4936 = vsub.f32 %v4423, %v4616
      %v4937 = vsub.f32 %v4424, %v4619
      %v4938 = vsub.f32 %v4425, %v4622
      %v4939 = vsub.f32 %v4426, %v4625
      %v4940 = vsub.f32 %v4427, %v4628
      %v4941 = vsub.f32 %v4428, %v4631
      %v4942 = vsub.f32 %v4429, %v4634
      %v4943 = vsub.f32 %v4430, %v4637
      %v4944 = vsub.f32 %v4431, %v4640
      %v4945 = vsub.f32 %v4432, %v4643
      %v4946 = vsub.f32 %v4433, %v4646
      %v4947 = vsub.f32 %v4434, %v4649
      %v4948 = vsub.f32 %v4435, %v4652
      %v4949 = vsub.f32 %v4436, %v4655
      %v4950 = vsub.f32 %v4437, %v4658
      %v4951 = vsub.f32 %v4438, %v4661
      %v4952 = vsub.f32 %v4439, %v4664
      %v4953 = vsub.f32 %v4440, %v4667
      %v4954 = vsub.f32 %v4441, %v4670
      %v4955 = vsub.f32 %v4442, %v4673
      %v4956 = vsub.f32 %v4443, %v4676
      %v4957 = vsub.f32 %v4444, %v4679
      %v4958 = vsub.f32 %v4445, %v4682
      %v4959 = vsub.f32 %v4446, %v4685
      %v4960 = vsub.f32 %v4447, %v4688
      %v4961 = vsub.f32 %v4448, %v4691
      %v4962 = vsub.f32 %v4449, %v4694
      %v4963 = vsub.f32 %v4450, %v4697
      %v4964 = vsub.f32 %v4451, %v4700
      %v4965 = vsub.f32 %v4452, %v4703
      %v4966 = vsub.f32 %v4453, %v4706
      %v4967 = vsub.f32 %v4454, %v4709
      %v4968 = vsub.f32 %v4455, %v4712
      %v4969 = vsub.f32 %v4456, %v4715
      %v4970 = vsub.f32 %v4457, %v4718
      %v4971 = vsub.f32 %v4458, %v4721
      %v4972 = vsub.f32 %v4459, %v4724
      %v4973 = vsub.f32 %v4460, %v4727
      %v4974 = vsub.f32 %v4461, %v4730
      %v4975 = vsub.f32 %v4462, %v4733
      %v4976 = vsub.f32 %v4463, %v4736
      %v4977 = vsub.f32 %v4464, %v4739
      %v4978 = vsub.f32 %v4465, %v4742
      %v4979 = vsub.f32 %v4466, %v4745
      %v4980 = vsub.f32 %v4467, %v4748
      %v4981 = vsub.f32 %v4468, %v4751
      %v4982 = vsub.f32 %v4469, %v4754
      %v4983 = vsub.f32 %v4470, %v4757
      %v4984 = vsub.f32 %v4471, %v4760
      %v4985 = vsub.f32 %v4472, %v4763
      %v4986 = vsub.f32 %v4473, %v4766
      %v4987 = vsub.f32 %v4474, %v4769
      %v4988 = vsub.f32 %v4475, %v4772
      %v4989 = vsub.f32 %v4476, %v4775
      %v4990 = vsub.f32 %v4477, %v4778
      %v4991 = vsub.f32 %v4478, %v4781
      %v4992 = vsub.f32 %v4479, %v4784
      %v4993 = vsub.f32 %v4480, %v4787
      %v4994 = vsub.f32 %v4481, %v4790
      %v4995 = vsub.f32 %v4482, %v4793
      %v4996 = vsub.f32 %v4483, %v4796
      %v4997 = vsub.f32 %v4484, %v4799
      %v4998 = vsub.f32 %v4485, %v4802
      %v4999 = vsub.f32 %v4486, %v4805
      %v5000 = vsub.f32 %v4487, %v4808
      %v5001 = vsub.f32 %v4488, %v4811
      %v5002 = vsub.f32 %v4489, %v4814
      %v5003 = vsub.f32 %v4490, %v4817
      %v5004 = vsub.f32 %v4491, %v4820
      %v5005 = vsub.f32 %v4492, %v4823
      %v5006 = vsub.f32 %v4493, %v4826
      %v5007 = vsub.f32 %v4494, %v4829
      %v5008 = vsub.f32 %v4495, %v4832
      %v5009 = vsub.f32 %v4496, %v4835
      %v5010 = vsub.f32 %v4497, %v4838
      %v5011 = vsub.f32 %v4498, %v4841
      %v5012 = vsub.f32 %v4499, %v4844
      %v5013 = vsub.f32 %v4500, %v4847
      %v5014 = vsub.f32 %v4501, %v4850
      %v5015 = vsub.f32 %v4502, %v4853
      %v5016 = vsub.f32 %v4503, %v4856
      %v5017 = vsub.f32 %v4504, %v4859
      %v5018 = vsub.f32 %v4505, %v4862
      %v5019 = vsub.f32 %v4506, %v4865
      %v5020 = vsub.f32 %v4507, %v4868
      %v5021 = vsub.f32 %v4508, %v4871
      %v5022 = vsub.f32 %v4509, %v4874
      %v5023 = vsub.f32 %v4510, %v4877
      %v5024 = vsub.f32 %v4511, %v4880
      %v5025 = vsub.f32 %v4512, %v4883
      %v5026 = vsub.f32 %v4513, %v4886
      %v5027 = vsub.f32 %v4514, %v4889
      %v5028 = vsub.f32 %v4515, %v4892
      %v5029 = vsub.f32 %v4516, %v4895
      %v5030 = vsub.f32 %v4517, %v4898
      %v5031 = vsub.f32 %v4518, %v4901
      %v5032 = vsub.f32 %v4519, %v4904
      %v5033 = vmul.f32 %v4905, 1.442695
      %v5034 = vpow.pop %v5033
      %v5035 = vmul.f32 %v4906, 1.442695
      %v5036 = vpow.pop %v5035
      %v5037 = vmul.f32 %v4907, 1.442695
      %v5038 = vpow.pop %v5037
      %v5039 = vmul.f32 %v4908, 1.442695
      %v5040 = vpow.pop %v5039
      %v5041 = vmul.f32 %v4909, 1.442695
      %v5042 = vpow.pop %v5041
      %v5043 = vmul.f32 %v4910, 1.442695
      %v5044 = vpow.pop %v5043
      %v5045 = vmul.f32 %v4911, 1.442695
      %v5046 = vpow.pop %v5045
      %v5047 = vmul.f32 %v4912, 1.442695
      %v5048 = vpow.pop %v5047
      %v5049 = vmul.f32 %v4913, 1.442695
      %v5050 = vpow.pop %v5049
      %v5051 = vmul.f32 %v4914, 1.442695
      %v5052 = vpow.pop %v5051
      %v5053 = vmul.f32 %v4915, 1.442695
      %v5054 = vpow.pop %v5053
      %v5055 = vmul.f32 %v4916, 1.442695
      %v5056 = vpow.pop %v5055
      %v5057 = vmul.f32 %v4917, 1.442695
      %v5058 = vpow.pop %v5057
      %v5059 = vmul.f32 %v4918, 1.442695
      %v5060 = vpow.pop %v5059
      %v5061 = vmul.f32 %v4919, 1.442695
      %v5062 = vpow.pop %v5061
      %v5063 = vmul.f32 %v4920, 1.442695
      %v5064 = vpow.pop %v5063
      %v5065 = vmul.f32 %v4921, 1.442695
      %v5066 = vpow.pop %v5065
      %v5067 = vmul.f32 %v4922, 1.442695
      %v5068 = vpow.pop %v5067
      %v5069 = vmul.f32 %v4923, 1.442695
      %v5070 = vpow.pop %v5069
      %v5071 = vmul.f32 %v4924, 1.442695
      %v5072 = vpow.pop %v5071
      %v5073 = vmul.f32 %v4925, 1.442695
      %v5074 = vpow.pop %v5073
      %v5075 = vmul.f32 %v4926, 1.442695
      %v5076 = vpow.pop %v5075
      %v5077 = vmul.f32 %v4927, 1.442695
      %v5078 = vpow.pop %v5077
      %v5079 = vmul.f32 %v4928, 1.442695
      %v5080 = vpow.pop %v5079
      %v5081 = vmul.f32 %v4929, 1.442695
      %v5082 = vpow.pop %v5081
      %v5083 = vmul.f32 %v4930, 1.442695
      %v5084 = vpow.pop %v5083
      %v5085 = vmul.f32 %v4931, 1.442695
      %v5086 = vpow.pop %v5085
      %v5087 = vmul.f32 %v4932, 1.442695
      %v5088 = vpow.pop %v5087
      %v5089 = vmul.f32 %v4933, 1.442695
      %v5090 = vpow.pop %v5089
      %v5091 = vmul.f32 %v4934, 1.442695
      %v5092 = vpow.pop %v5091
      %v5093 = vmul.f32 %v4935, 1.442695
      %v5094 = vpow.pop %v5093
      %v5095 = vmul.f32 %v4936, 1.442695
      %v5096 = vpow.pop %v5095
      %v5097 = vmul.f32 %v4937, 1.442695
      %v5098 = vpow.pop %v5097
      %v5099 = vmul.f32 %v4938, 1.442695
      %v5100 = vpow.pop %v5099
      %v5101 = vmul.f32 %v4939, 1.442695
      %v5102 = vpow.pop %v5101
      %v5103 = vmul.f32 %v4940, 1.442695
      %v5104 = vpow.pop %v5103
      %v5105 = vmul.f32 %v4941, 1.442695
      %v5106 = vpow.pop %v5105
      %v5107 = vmul.f32 %v4942, 1.442695
      %v5108 = vpow.pop %v5107
      %v5109 = vmul.f32 %v4943, 1.442695
      %v5110 = vpow.pop %v5109
      %v5111 = vmul.f32 %v4944, 1.442695
      %v5112 = vpow.pop %v5111
      %v5113 = vmul.f32 %v4945, 1.442695
      %v5114 = vpow.pop %v5113
      %v5115 = vmul.f32 %v4946, 1.442695
      %v5116 = vpow.pop %v5115
      %v5117 = vmul.f32 %v4947, 1.442695
      %v5118 = vpow.pop %v5117
      %v5119 = vmul.f32 %v4948, 1.442695
      %v5120 = vpow.pop %v5119
      %v5121 = vmul.f32 %v4949, 1.442695
      %v5122 = vpow.pop %v5121
      %v5123 = vmul.f32 %v4950, 1.442695
      %v5124 = vpow.pop %v5123
      %v5125 = vmul.f32 %v4951, 1.442695
      %v5126 = vpow.pop %v5125
      %v5127 = vmul.f32 %v4952, 1.442695
      %v5128 = vpow.pop %v5127
      %v5129 = vmul.f32 %v4953, 1.442695
      %v5130 = vpow.pop %v5129
      %v5131 = vmul.f32 %v4954, 1.442695
      %v5132 = vpow.pop %v5131
      %v5133 = vmul.f32 %v4955, 1.442695
      %v5134 = vpow.pop %v5133
      %v5135 = vmul.f32 %v4956, 1.442695
      %v5136 = vpow.pop %v5135
      %v5137 = vmul.f32 %v4957, 1.442695
      %v5138 = vpow.pop %v5137
      %v5139 = vmul.f32 %v4958, 1.442695
      %v5140 = vpow.pop %v5139
      %v5141 = vmul.f32 %v4959, 1.442695
      %v5142 = vpow.pop %v5141
      %v5143 = vmul.f32 %v4960, 1.442695
      %v5144 = vpow.pop %v5143
      %v5145 = vmul.f32 %v4961, 1.442695
      %v5146 = vpow.pop %v5145
      %v5147 = vmul.f32 %v4962, 1.442695
      %v5148 = vpow.pop %v5147
      %v5149 = vmul.f32 %v4963, 1.442695
      %v5150 = vpow.pop %v5149
      %v5151 = vmul.f32 %v4964, 1.442695
      %v5152 = vpow.pop %v5151
      %v5153 = vmul.f32 %v4965, 1.442695
      %v5154 = vpow.pop %v5153
      %v5155 = vmul.f32 %v4966, 1.442695
      %v5156 = vpow.pop %v5155
      %v5157 = vmul.f32 %v4967, 1.442695
      %v5158 = vpow.pop %v5157
      %v5159 = vmul.f32 %v4968, 1.442695
      %v5160 = vpow.pop %v5159
      %v5161 = vmul.f32 %v4969, 1.442695
      %v5162 = vpow.pop %v5161
      %v5163 = vmul.f32 %v4970, 1.442695
      %v5164 = vpow.pop %v5163
      %v5165 = vmul.f32 %v4971, 1.442695
      %v5166 = vpow.pop %v5165
      %v5167 = vmul.f32 %v4972, 1.442695
      %v5168 = vpow.pop %v5167
      %v5169 = vmul.f32 %v4973, 1.442695
      %v5170 = vpow.pop %v5169
      %v5171 = vmul.f32 %v4974, 1.442695
      %v5172 = vpow.pop %v5171
      %v5173 = vmul.f32 %v4975, 1.442695
      %v5174 = vpow.pop %v5173
      %v5175 = vmul.f32 %v4976, 1.442695
      %v5176 = vpow.pop %v5175
      %v5177 = vmul.f32 %v4977, 1.442695
      %v5178 = vpow.pop %v5177
      %v5179 = vmul.f32 %v4978, 1.442695
      %v5180 = vpow.pop %v5179
      %v5181 = vmul.f32 %v4979, 1.442695
      %v5182 = vpow.pop %v5181
      %v5183 = vmul.f32 %v4980, 1.442695
      %v5184 = vpow.pop %v5183
      %v5185 = vmul.f32 %v4981, 1.442695
      %v5186 = vpow.pop %v5185
      %v5187 = vmul.f32 %v4982, 1.442695
      %v5188 = vpow.pop %v5187
      %v5189 = vmul.f32 %v4983, 1.442695
      %v5190 = vpow.pop %v5189
      %v5191 = vmul.f32 %v4984, 1.442695
      %v5192 = vpow.pop %v5191
      %v5193 = vmul.f32 %v4985, 1.442695
      %v5194 = vpow.pop %v5193
      %v5195 = vmul.f32 %v4986, 1.442695
      %v5196 = vpow.pop %v5195
      %v5197 = vmul.f32 %v4987, 1.442695
      %v5198 = vpow.pop %v5197
      %v5199 = vmul.f32 %v4988, 1.442695
      %v5200 = vpow.pop %v5199
      %v5201 = vmul.f32 %v4989, 1.442695
      %v5202 = vpow.pop %v5201
      %v5203 = vmul.f32 %v4990, 1.442695
      %v5204 = vpow.pop %v5203
      %v5205 = vmul.f32 %v4991, 1.442695
      %v5206 = vpow.pop %v5205
      %v5207 = vmul.f32 %v4992, 1.442695
      %v5208 = vpow.pop %v5207
      %v5209 = vmul.f32 %v4993, 1.442695
      %v5210 = vpow.pop %v5209
      %v5211 = vmul.f32 %v4994, 1.442695
      %v5212 = vpow.pop %v5211
      %v5213 = vmul.f32 %v4995, 1.442695
      %v5214 = vpow.pop %v5213
      %v5215 = vmul.f32 %v4996, 1.442695
      %v5216 = vpow.pop %v5215
      %v5217 = vmul.f32 %v4997, 1.442695
      %v5218 = vpow.pop %v5217
      %v5219 = vmul.f32 %v4998, 1.442695
      %v5220 = vpow.pop %v5219
      %v5221 = vmul.f32 %v4999, 1.442695
      %v5222 = vpow.pop %v5221
      %v5223 = vmul.f32 %v5000, 1.442695
      %v5224 = vpow.pop %v5223
      %v5225 = vmul.f32 %v5001, 1.442695
      %v5226 = vpow.pop %v5225
      %v5227 = vmul.f32 %v5002, 1.442695
      %v5228 = vpow.pop %v5227
      %v5229 = vmul.f32 %v5003, 1.442695
      %v5230 = vpow.pop %v5229
      %v5231 = vmul.f32 %v5004, 1.442695
      %v5232 = vpow.pop %v5231
      %v5233 = vmul.f32 %v5005, 1.442695
      %v5234 = vpow.pop %v5233
      %v5235 = vmul.f32 %v5006, 1.442695
      %v5236 = vpow.pop %v5235
      %v5237 = vmul.f32 %v5007, 1.442695
      %v5238 = vpow.pop %v5237
      %v5239 = vmul.f32 %v5008, 1.442695
      %v5240 = vpow.pop %v5239
      %v5241 = vmul.f32 %v5009, 1.442695
      %v5242 = vpow.pop %v5241
      %v5243 = vmul.f32 %v5010, 1.442695
      %v5244 = vpow.pop %v5243
      %v5245 = vmul.f32 %v5011, 1.442695
      %v5246 = vpow.pop %v5245
      %v5247 = vmul.f32 %v5012, 1.442695
      %v5248 = vpow.pop %v5247
      %v5249 = vmul.f32 %v5013, 1.442695
      %v5250 = vpow.pop %v5249
      %v5251 = vmul.f32 %v5014, 1.442695
      %v5252 = vpow.pop %v5251
      %v5253 = vmul.f32 %v5015, 1.442695
      %v5254 = vpow.pop %v5253
      %v5255 = vmul.f32 %v5016, 1.442695
      %v5256 = vpow.pop %v5255
      %v5257 = vmul.f32 %v5017, 1.442695
      %v5258 = vpow.pop %v5257
      %v5259 = vmul.f32 %v5018, 1.442695
      %v5260 = vpow.pop %v5259
      %v5261 = vmul.f32 %v5019, 1.442695
      %v5262 = vpow.pop %v5261
      %v5263 = vmul.f32 %v5020, 1.442695
      %v5264 = vpow.pop %v5263
      %v5265 = vmul.f32 %v5021, 1.442695
      %v5266 = vpow.pop %v5265
      %v5267 = vmul.f32 %v5022, 1.442695
      %v5268 = vpow.pop %v5267
      %v5269 = vmul.f32 %v5023, 1.442695
      %v5270 = vpow.pop %v5269
      %v5271 = vmul.f32 %v5024, 1.442695
      %v5272 = vpow.pop %v5271
      %v5273 = vmul.f32 %v5025, 1.442695
      %v5274 = vpow.pop %v5273
      %v5275 = vmul.f32 %v5026, 1.442695
      %v5276 = vpow.pop %v5275
      %v5277 = vmul.f32 %v5027, 1.442695
      %v5278 = vpow.pop %v5277
      %v5279 = vmul.f32 %v5028, 1.442695
      %v5280 = vpow.pop %v5279
      %v5281 = vmul.f32 %v5029, 1.442695
      %v5282 = vpow.pop %v5281
      %v5283 = vmul.f32 %v5030, 1.442695
      %v5284 = vpow.pop %v5283
      %v5285 = vmul.f32 %v5031, 1.442695
      %v5286 = vpow.pop %v5285
      %v5287 = vmul.f32 %v5032, 1.442695
      %v5288 = vpow.pop %v5287
      %v5289 = vsel %vm4520, %v5034, 0.0
      %5290 = vadd.xlane.f32.xlu0 %v5289
      %v5291 = vpop.xlane.xlu0 %5290
      %v5292 = vsel %vm4520, %v5036, 0.0
      %5293 = vadd.xlane.f32.xlu0 %v5292
      %v5294 = vpop.xlane.xlu0 %5293
      %v5295 = vsel %vm4520, %v5038, 0.0
      %5296 = vadd.xlane.f32.xlu0 %v5295
      %v5297 = vpop.xlane.xlu0 %5296
      %v5298 = vsel %vm4520, %v5040, 0.0
      %5299 = vadd.xlane.f32.xlu0 %v5298
      %v5300 = vpop.xlane.xlu0 %5299
      %v5301 = vsel %vm4520, %v5042, 0.0
      %5302 = vadd.xlane.f32.xlu0 %v5301
      %v5303 = vpop.xlane.xlu0 %5302
      %v5304 = vsel %vm4520, %v5044, 0.0
      %5305 = vadd.xlane.f32.xlu0 %v5304
      %v5306 = vpop.xlane.xlu0 %5305
      %v5307 = vsel %vm4520, %v5046, 0.0
      %5308 = vadd.xlane.f32.xlu0 %v5307
      %v5309 = vpop.xlane.xlu0 %5308
      %v5310 = vsel %vm4520, %v5048, 0.0
      %5311 = vadd.xlane.f32.xlu0 %v5310
      %v5312 = vpop.xlane.xlu0 %5311
      %v5313 = vsel %vm4520, %v5050, 0.0
      %5314 = vadd.xlane.f32.xlu0 %v5313
      %v5315 = vpop.xlane.xlu0 %5314
      %v5316 = vsel %vm4520, %v5052, 0.0
      %5317 = vadd.xlane.f32.xlu0 %v5316
      %v5318 = vpop.xlane.xlu0 %5317
      %v5319 = vsel %vm4520, %v5054, 0.0
      %5320 = vadd.xlane.f32.xlu0 %v5319
      %v5321 = vpop.xlane.xlu0 %5320
      %v5322 = vsel %vm4520, %v5056, 0.0
      %5323 = vadd.xlane.f32.xlu0 %v5322
      %v5324 = vpop.xlane.xlu0 %5323
      %v5325 = vsel %vm4520, %v5058, 0.0
      %5326 = vadd.xlane.f32.xlu0 %v5325
      %v5327 = vpop.xlane.xlu0 %5326
      %v5328 = vsel %vm4520, %v5060, 0.0
      %5329 = vadd.xlane.f32.xlu0 %v5328
      %v5330 = vpop.xlane.xlu0 %5329
      %v5331 = vsel %vm4520, %v5062, 0.0
      %5332 = vadd.xlane.f32.xlu0 %v5331
      %v5333 = vpop.xlane.xlu0 %5332
      %v5334 = vsel %vm4520, %v5064, 0.0
      %5335 = vadd.xlane.f32.xlu0 %v5334
      %v5336 = vpop.xlane.xlu0 %5335
      %v5337 = vsel %vm4520, %v5066, 0.0
      %5338 = vadd.xlane.f32.xlu0 %v5337
      %v5339 = vpop.xlane.xlu0 %5338
      %v5340 = vsel %vm4520, %v5068, 0.0
      %5341 = vadd.xlane.f32.xlu0 %v5340
      %v5342 = vpop.xlane.xlu0 %5341
      %v5343 = vsel %vm4520, %v5070, 0.0
      %5344 = vadd.xlane.f32.xlu0 %v5343
      %v5345 = vpop.xlane.xlu0 %5344
      %v5346 = vsel %vm4520, %v5072, 0.0
      %5347 = vadd.xlane.f32.xlu0 %v5346
      %v5348 = vpop.xlane.xlu0 %5347
      %v5349 = vsel %vm4520, %v5074, 0.0
      %5350 = vadd.xlane.f32.xlu0 %v5349
      %v5351 = vpop.xlane.xlu0 %5350
      %v5352 = vsel %vm4520, %v5076, 0.0
      %5353 = vadd.xlane.f32.xlu0 %v5352
      %v5354 = vpop.xlane.xlu0 %5353
      %v5355 = vsel %vm4520, %v5078, 0.0
      %5356 = vadd.xlane.f32.xlu0 %v5355
      %v5357 = vpop.xlane.xlu0 %5356
      %v5358 = vsel %vm4520, %v5080, 0.0
      %5359 = vadd.xlane.f32.xlu0 %v5358
      %v5360 = vpop.xlane.xlu0 %5359
      %v5361 = vsel %vm4520, %v5082, 0.0
      %5362 = vadd.xlane.f32.xlu0 %v5361
      %v5363 = vpop.xlane.xlu0 %5362
      %v5364 = vsel %vm4520, %v5084, 0.0
      %5365 = vadd.xlane.f32.xlu0 %v5364
      %v5366 = vpop.xlane.xlu0 %5365
      %v5367 = vsel %vm4520, %v5086, 0.0
      %5368 = vadd.xlane.f32.xlu0 %v5367
      %v5369 = vpop.xlane.xlu0 %5368
      %v5370 = vsel %vm4520, %v5088, 0.0
      %5371 = vadd.xlane.f32.xlu0 %v5370
      %v5372 = vpop.xlane.xlu0 %5371
      %v5373 = vsel %vm4520, %v5090, 0.0
      %5374 = vadd.xlane.f32.xlu0 %v5373
      %v5375 = vpop.xlane.xlu0 %5374
      %v5376 = vsel %vm4520, %v5092, 0.0
      %5377 = vadd.xlane.f32.xlu0 %v5376
      %v5378 = vpop.xlane.xlu0 %5377
      %v5379 = vsel %vm4520, %v5094, 0.0
      %5380 = vadd.xlane.f32.xlu0 %v5379
      %v5381 = vpop.xlane.xlu0 %5380
      %v5382 = vsel %vm4520, %v5096, 0.0
      %5383 = vadd.xlane.f32.xlu0 %v5382
      %v5384 = vpop.xlane.xlu0 %5383
      %v5385 = vsel %vm4520, %v5098, 0.0
      %5386 = vadd.xlane.f32.xlu0 %v5385
      %v5387 = vpop.xlane.xlu0 %5386
      %v5388 = vsel %vm4520, %v5100, 0.0
      %5389 = vadd.xlane.f32.xlu0 %v5388
      %v5390 = vpop.xlane.xlu0 %5389
      %v5391 = vsel %vm4520, %v5102, 0.0
      %5392 = vadd.xlane.f32.xlu0 %v5391
      %v5393 = vpop.xlane.xlu0 %5392
      %v5394 = vsel %vm4520, %v5104, 0.0
      %5395 = vadd.xlane.f32.xlu0 %v5394
      %v5396 = vpop.xlane.xlu0 %5395
      %v5397 = vsel %vm4520, %v5106, 0.0
      %5398 = vadd.xlane.f32.xlu0 %v5397
      %v5399 = vpop.xlane.xlu0 %5398
      %v5400 = vsel %vm4520, %v5108, 0.0
      %5401 = vadd.xlane.f32.xlu0 %v5400
      %v5402 = vpop.xlane.xlu0 %5401
      %v5403 = vsel %vm4520, %v5110, 0.0
      %5404 = vadd.xlane.f32.xlu0 %v5403
      %v5405 = vpop.xlane.xlu0 %5404
      %v5406 = vsel %vm4520, %v5112, 0.0
      %5407 = vadd.xlane.f32.xlu0 %v5406
      %v5408 = vpop.xlane.xlu0 %5407
      %v5409 = vsel %vm4520, %v5114, 0.0
      %5410 = vadd.xlane.f32.xlu0 %v5409
      %v5411 = vpop.xlane.xlu0 %5410
      %v5412 = vsel %vm4520, %v5116, 0.0
      %5413 = vadd.xlane.f32.xlu0 %v5412
      %v5414 = vpop.xlane.xlu0 %5413
      %v5415 = vsel %vm4520, %v5118, 0.0
      %5416 = vadd.xlane.f32.xlu0 %v5415
      %v5417 = vpop.xlane.xlu0 %5416
      %v5418 = vsel %vm4520, %v5120, 0.0
      %5419 = vadd.xlane.f32.xlu0 %v5418
      %v5420 = vpop.xlane.xlu0 %5419
      %v5421 = vsel %vm4520, %v5122, 0.0
      %5422 = vadd.xlane.f32.xlu0 %v5421
      %v5423 = vpop.xlane.xlu0 %5422
      %v5424 = vsel %vm4520, %v5124, 0.0
      %5425 = vadd.xlane.f32.xlu0 %v5424
      %v5426 = vpop.xlane.xlu0 %5425
      %v5427 = vsel %vm4520, %v5126, 0.0
      %5428 = vadd.xlane.f32.xlu0 %v5427
      %v5429 = vpop.xlane.xlu0 %5428
      %v5430 = vsel %vm4520, %v5128, 0.0
      %5431 = vadd.xlane.f32.xlu0 %v5430
      %v5432 = vpop.xlane.xlu0 %5431
      %v5433 = vsel %vm4520, %v5130, 0.0
      %5434 = vadd.xlane.f32.xlu0 %v5433
      %v5435 = vpop.xlane.xlu0 %5434
      %v5436 = vsel %vm4520, %v5132, 0.0
      %5437 = vadd.xlane.f32.xlu0 %v5436
      %v5438 = vpop.xlane.xlu0 %5437
      %v5439 = vsel %vm4520, %v5134, 0.0
      %5440 = vadd.xlane.f32.xlu0 %v5439
      %v5441 = vpop.xlane.xlu0 %5440
      %v5442 = vsel %vm4520, %v5136, 0.0
      %5443 = vadd.xlane.f32.xlu0 %v5442
      %v5444 = vpop.xlane.xlu0 %5443
      %v5445 = vsel %vm4520, %v5138, 0.0
      %5446 = vadd.xlane.f32.xlu0 %v5445
      %v5447 = vpop.xlane.xlu0 %5446
      %v5448 = vsel %vm4520, %v5140, 0.0
      %5449 = vadd.xlane.f32.xlu0 %v5448
      %v5450 = vpop.xlane.xlu0 %5449
      %v5451 = vsel %vm4520, %v5142, 0.0
      %5452 = vadd.xlane.f32.xlu0 %v5451
      %v5453 = vpop.xlane.xlu0 %5452
      %v5454 = vsel %vm4520, %v5144, 0.0
      %5455 = vadd.xlane.f32.xlu0 %v5454
      %v5456 = vpop.xlane.xlu0 %5455
      %v5457 = vsel %vm4520, %v5146, 0.0
      %5458 = vadd.xlane.f32.xlu0 %v5457
      %v5459 = vpop.xlane.xlu0 %5458
      %v5460 = vsel %vm4520, %v5148, 0.0
      %5461 = vadd.xlane.f32.xlu0 %v5460
      %v5462 = vpop.xlane.xlu0 %5461
      %v5463 = vsel %vm4520, %v5150, 0.0
      %5464 = vadd.xlane.f32.xlu0 %v5463
      %v5465 = vpop.xlane.xlu0 %5464
      %v5466 = vsel %vm4520, %v5152, 0.0
      %5467 = vadd.xlane.f32.xlu0 %v5466
      %v5468 = vpop.xlane.xlu0 %5467
      %v5469 = vsel %vm4520, %v5154, 0.0
      %5470 = vadd.xlane.f32.xlu0 %v5469
      %v5471 = vpop.xlane.xlu0 %5470
      %v5472 = vsel %vm4520, %v5156, 0.0
      %5473 = vadd.xlane.f32.xlu0 %v5472
      %v5474 = vpop.xlane.xlu0 %5473
      %v5475 = vsel %vm4520, %v5158, 0.0
      %5476 = vadd.xlane.f32.xlu0 %v5475
      %v5477 = vpop.xlane.xlu0 %5476
      %v5478 = vsel %vm4520, %v5160, 0.0
      %5479 = vadd.xlane.f32.xlu0 %v5478
      %v5480 = vpop.xlane.xlu0 %5479
      %v5481 = vsel %vm4520, %v5162, 0.0
      %5482 = vadd.xlane.f32.xlu0 %v5481
      %v5483 = vpop.xlane.xlu0 %5482
      %v5484 = vsel %vm4520, %v5164, 0.0
      %5485 = vadd.xlane.f32.xlu0 %v5484
      %v5486 = vpop.xlane.xlu0 %5485
      %v5487 = vsel %vm4520, %v5166, 0.0
      %5488 = vadd.xlane.f32.xlu0 %v5487
      %v5489 = vpop.xlane.xlu0 %5488
      %v5490 = vsel %vm4520, %v5168, 0.0
      %5491 = vadd.xlane.f32.xlu0 %v5490
      %v5492 = vpop.xlane.xlu0 %5491
      %v5493 = vsel %vm4520, %v5170, 0.0
      %5494 = vadd.xlane.f32.xlu0 %v5493
      %v5495 = vpop.xlane.xlu0 %5494
      %v5496 = vsel %vm4520, %v5172, 0.0
      %5497 = vadd.xlane.f32.xlu0 %v5496
      %v5498 = vpop.xlane.xlu0 %5497
      %v5499 = vsel %vm4520, %v5174, 0.0
      %5500 = vadd.xlane.f32.xlu0 %v5499
      %v5501 = vpop.xlane.xlu0 %5500
      %v5502 = vsel %vm4520, %v5176, 0.0
      %5503 = vadd.xlane.f32.xlu0 %v5502
      %v5504 = vpop.xlane.xlu0 %5503
      %v5505 = vsel %vm4520, %v5178, 0.0
      %5506 = vadd.xlane.f32.xlu0 %v5505
      %v5507 = vpop.xlane.xlu0 %5506
      %v5508 = vsel %vm4520, %v5180, 0.0
      %5509 = vadd.xlane.f32.xlu0 %v5508
      %v5510 = vpop.xlane.xlu0 %5509
      %v5511 = vsel %vm4520, %v5182, 0.0
      %5512 = vadd.xlane.f32.xlu0 %v5511
      %v5513 = vpop.xlane.xlu0 %5512
      %v5514 = vsel %vm4520, %v5184, 0.0
      %5515 = vadd.xlane.f32.xlu0 %v5514
      %v5516 = vpop.xlane.xlu0 %5515
      %v5517 = vsel %vm4520, %v5186, 0.0
      %5518 = vadd.xlane.f32.xlu0 %v5517
      %v5519 = vpop.xlane.xlu0 %5518
      %v5520 = vsel %vm4520, %v5188, 0.0
      %5521 = vadd.xlane.f32.xlu0 %v5520
      %v5522 = vpop.xlane.xlu0 %5521
      %v5523 = vsel %vm4520, %v5190, 0.0
      %5524 = vadd.xlane.f32.xlu0 %v5523
      %v5525 = vpop.xlane.xlu0 %5524
      %v5526 = vsel %vm4520, %v5192, 0.0
      %5527 = vadd.xlane.f32.xlu0 %v5526
      %v5528 = vpop.xlane.xlu0 %5527
      %v5529 = vsel %vm4520, %v5194, 0.0
      %5530 = vadd.xlane.f32.xlu0 %v5529
      %v5531 = vpop.xlane.xlu0 %5530
      %v5532 = vsel %vm4520, %v5196, 0.0
      %5533 = vadd.xlane.f32.xlu0 %v5532
      %v5534 = vpop.xlane.xlu0 %5533
      %v5535 = vsel %vm4520, %v5198, 0.0
      %5536 = vadd.xlane.f32.xlu0 %v5535
      %v5537 = vpop.xlane.xlu0 %5536
      %v5538 = vsel %vm4520, %v5200, 0.0
      %5539 = vadd.xlane.f32.xlu0 %v5538
      %v5540 = vpop.xlane.xlu0 %5539
      %v5541 = vsel %vm4520, %v5202, 0.0
      %5542 = vadd.xlane.f32.xlu0 %v5541
      %v5543 = vpop.xlane.xlu0 %5542
      %v5544 = vsel %vm4520, %v5204, 0.0
      %5545 = vadd.xlane.f32.xlu0 %v5544
      %v5546 = vpop.xlane.xlu0 %5545
      %v5547 = vsel %vm4520, %v5206, 0.0
      %5548 = vadd.xlane.f32.xlu0 %v5547
      %v5549 = vpop.xlane.xlu0 %5548
      %v5550 = vsel %vm4520, %v5208, 0.0
      %5551 = vadd.xlane.f32.xlu0 %v5550
      %v5552 = vpop.xlane.xlu0 %5551
      %v5553 = vsel %vm4520, %v5210, 0.0
      %5554 = vadd.xlane.f32.xlu0 %v5553
      %v5555 = vpop.xlane.xlu0 %5554
      %v5556 = vsel %vm4520, %v5212, 0.0
      %5557 = vadd.xlane.f32.xlu0 %v5556
      %v5558 = vpop.xlane.xlu0 %5557
      %v5559 = vsel %vm4520, %v5214, 0.0
      %5560 = vadd.xlane.f32.xlu0 %v5559
      %v5561 = vpop.xlane.xlu0 %5560
      %v5562 = vsel %vm4520, %v5216, 0.0
      %5563 = vadd.xlane.f32.xlu0 %v5562
      %v5564 = vpop.xlane.xlu0 %5563
      %v5565 = vsel %vm4520, %v5218, 0.0
      %5566 = vadd.xlane.f32.xlu0 %v5565
      %v5567 = vpop.xlane.xlu0 %5566
      %v5568 = vsel %vm4520, %v5220, 0.0
      %5569 = vadd.xlane.f32.xlu0 %v5568
      %v5570 = vpop.xlane.xlu0 %5569
      %v5571 = vsel %vm4520, %v5222, 0.0
      %5572 = vadd.xlane.f32.xlu0 %v5571
      %v5573 = vpop.xlane.xlu0 %5572
      %v5574 = vsel %vm4520, %v5224, 0.0
      %5575 = vadd.xlane.f32.xlu0 %v5574
      %v5576 = vpop.xlane.xlu0 %5575
      %v5577 = vsel %vm4520, %v5226, 0.0
      %5578 = vadd.xlane.f32.xlu0 %v5577
      %v5579 = vpop.xlane.xlu0 %5578
      %v5580 = vsel %vm4520, %v5228, 0.0
      %5581 = vadd.xlane.f32.xlu0 %v5580
      %v5582 = vpop.xlane.xlu0 %5581
      %v5583 = vsel %vm4520, %v5230, 0.0
      %5584 = vadd.xlane.f32.xlu0 %v5583
      %v5585 = vpop.xlane.xlu0 %5584
      %v5586 = vsel %vm4520, %v5232, 0.0
      %5587 = vadd.xlane.f32.xlu0 %v5586
      %v5588 = vpop.xlane.xlu0 %5587
      %v5589 = vsel %vm4520, %v5234, 0.0
      %5590 = vadd.xlane.f32.xlu0 %v5589
      %v5591 = vpop.xlane.xlu0 %5590
      %v5592 = vsel %vm4520, %v5236, 0.0
      %5593 = vadd.xlane.f32.xlu0 %v5592
      %v5594 = vpop.xlane.xlu0 %5593
      %v5595 = vsel %vm4520, %v5238, 0.0
      %5596 = vadd.xlane.f32.xlu0 %v5595
      %v5597 = vpop.xlane.xlu0 %5596
      %v5598 = vsel %vm4520, %v5240, 0.0
      %5599 = vadd.xlane.f32.xlu0 %v5598
      %v5600 = vpop.xlane.xlu0 %5599
      %v5601 = vsel %vm4520, %v5242, 0.0
      %5602 = vadd.xlane.f32.xlu0 %v5601
      %v5603 = vpop.xlane.xlu0 %5602
      %v5604 = vsel %vm4520, %v5244, 0.0
      %5605 = vadd.xlane.f32.xlu0 %v5604
      %v5606 = vpop.xlane.xlu0 %5605
      %v5607 = vsel %vm4520, %v5246, 0.0
      %5608 = vadd.xlane.f32.xlu0 %v5607
      %v5609 = vpop.xlane.xlu0 %5608
      %v5610 = vsel %vm4520, %v5248, 0.0
      %5611 = vadd.xlane.f32.xlu0 %v5610
      %v5612 = vpop.xlane.xlu0 %5611
      %v5613 = vsel %vm4520, %v5250, 0.0
      %5614 = vadd.xlane.f32.xlu0 %v5613
      %v5615 = vpop.xlane.xlu0 %5614
      %v5616 = vsel %vm4520, %v5252, 0.0
      %5617 = vadd.xlane.f32.xlu0 %v5616
      %v5618 = vpop.xlane.xlu0 %5617
      %v5619 = vsel %vm4520, %v5254, 0.0
      %5620 = vadd.xlane.f32.xlu0 %v5619
      %v5621 = vpop.xlane.xlu0 %5620
      %v5622 = vsel %vm4520, %v5256, 0.0
      %5623 = vadd.xlane.f32.xlu0 %v5622
      %v5624 = vpop.xlane.xlu0 %5623
      %v5625 = vsel %vm4520, %v5258, 0.0
      %5626 = vadd.xlane.f32.xlu0 %v5625
      %v5627 = vpop.xlane.xlu0 %5626
      %v5628 = vsel %vm4520, %v5260, 0.0
      %5629 = vadd.xlane.f32.xlu0 %v5628
      %v5630 = vpop.xlane.xlu0 %5629
      %v5631 = vsel %vm4520, %v5262, 0.0
      %5632 = vadd.xlane.f32.xlu0 %v5631
      %v5633 = vpop.xlane.xlu0 %5632
      %v5634 = vsel %vm4520, %v5264, 0.0
      %5635 = vadd.xlane.f32.xlu0 %v5634
      %v5636 = vpop.xlane.xlu0 %5635
      %v5637 = vsel %vm4520, %v5266, 0.0
      %5638 = vadd.xlane.f32.xlu0 %v5637
      %v5639 = vpop.xlane.xlu0 %5638
      %v5640 = vsel %vm4520, %v5268, 0.0
      %5641 = vadd.xlane.f32.xlu0 %v5640
      %v5642 = vpop.xlane.xlu0 %5641
      %v5643 = vsel %vm4520, %v5270, 0.0
      %5644 = vadd.xlane.f32.xlu0 %v5643
      %v5645 = vpop.xlane.xlu0 %5644
      %v5646 = vsel %vm4520, %v5272, 0.0
      %5647 = vadd.xlane.f32.xlu0 %v5646
      %v5648 = vpop.xlane.xlu0 %5647
      %v5649 = vsel %vm4520, %v5274, 0.0
      %5650 = vadd.xlane.f32.xlu0 %v5649
      %v5651 = vpop.xlane.xlu0 %5650
      %v5652 = vsel %vm4520, %v5276, 0.0
      %5653 = vadd.xlane.f32.xlu0 %v5652
      %v5654 = vpop.xlane.xlu0 %5653
      %v5655 = vsel %vm4520, %v5278, 0.0
      %5656 = vadd.xlane.f32.xlu0 %v5655
      %v5657 = vpop.xlane.xlu0 %5656
      %v5658 = vsel %vm4520, %v5280, 0.0
      %5659 = vadd.xlane.f32.xlu0 %v5658
      %v5660 = vpop.xlane.xlu0 %5659
      %v5661 = vsel %vm4520, %v5282, 0.0
      %5662 = vadd.xlane.f32.xlu0 %v5661
      %v5663 = vpop.xlane.xlu0 %5662
      %v5664 = vsel %vm4520, %v5284, 0.0
      %5665 = vadd.xlane.f32.xlu0 %v5664
      %v5666 = vpop.xlane.xlu0 %5665
      %v5667 = vsel %vm4520, %v5286, 0.0
      %5668 = vadd.xlane.f32.xlu0 %v5667
      %v5669 = vpop.xlane.xlu0 %5668
      %v5670 = vsel %vm4520, %v5288, 0.0
      %5671 = vadd.xlane.f32.xlu0 %v5670
      %v5672 = vpop.xlane.xlu0 %5671
      %v5673 = vpack.c.bf16 %v5036, %v5034
      %v5674 = vpack.c.bf16 %v5040, %v5038
      %v5675 = vpack.c.bf16 %v5044, %v5042
      %v5676 = vpack.c.bf16 %v5048, %v5046
      %v5677 = vpack.c.bf16 %v5052, %v5050
      %v5678 = vpack.c.bf16 %v5056, %v5054
      %v5679 = vpack.c.bf16 %v5060, %v5058
      %v5680 = vpack.c.bf16 %v5064, %v5062
      %v5681 = vpack.c.bf16 %v5068, %v5066
      %v5682 = vpack.c.bf16 %v5072, %v5070
      %v5683 = vpack.c.bf16 %v5076, %v5074
      %v5684 = vpack.c.bf16 %v5080, %v5078
      %v5685 = vpack.c.bf16 %v5084, %v5082
      %v5686 = vpack.c.bf16 %v5088, %v5086
      %v5687 = vpack.c.bf16 %v5092, %v5090
      %v5688 = vpack.c.bf16 %v5096, %v5094
      %v5689 = vpack.c.bf16 %v5100, %v5098
      %v5690 = vpack.c.bf16 %v5104, %v5102
      %v5691 = vpack.c.bf16 %v5108, %v5106
      %v5692 = vpack.c.bf16 %v5112, %v5110
      %v5693 = vpack.c.bf16 %v5116, %v5114
      %v5694 = vpack.c.bf16 %v5120, %v5118
      %v5695 = vpack.c.bf16 %v5124, %v5122
      %v5696 = vpack.c.bf16 %v5128, %v5126
      %v5697 = vpack.c.bf16 %v5132, %v5130
      %v5698 = vpack.c.bf16 %v5136, %v5134
      %v5699 = vpack.c.bf16 %v5140, %v5138
      %v5700 = vpack.c.bf16 %v5144, %v5142
      %v5701 = vpack.c.bf16 %v5148, %v5146
      %v5702 = vpack.c.bf16 %v5152, %v5150
      %v5703 = vpack.c.bf16 %v5156, %v5154
      %v5704 = vpack.c.bf16 %v5160, %v5158
      %v5705 = vpack.c.bf16 %v5164, %v5162
      %v5706 = vpack.c.bf16 %v5168, %v5166
      %v5707 = vpack.c.bf16 %v5172, %v5170
      %v5708 = vpack.c.bf16 %v5176, %v5174
      %v5709 = vpack.c.bf16 %v5180, %v5178
      %v5710 = vpack.c.bf16 %v5184, %v5182
      %v5711 = vpack.c.bf16 %v5188, %v5186
      %v5712 = vpack.c.bf16 %v5192, %v5190
      %v5713 = vpack.c.bf16 %v5196, %v5194
      %v5714 = vpack.c.bf16 %v5200, %v5198
      %v5715 = vpack.c.bf16 %v5204, %v5202
      %v5716 = vpack.c.bf16 %v5208, %v5206
      %v5717 = vpack.c.bf16 %v5212, %v5210
      %v5718 = vpack.c.bf16 %v5216, %v5214
      %v5719 = vpack.c.bf16 %v5220, %v5218
      %v5720 = vpack.c.bf16 %v5224, %v5222
      %v5721 = vpack.c.bf16 %v5228, %v5226
      %v5722 = vpack.c.bf16 %v5232, %v5230
      %v5723 = vpack.c.bf16 %v5236, %v5234
      %v5724 = vpack.c.bf16 %v5240, %v5238
      %v5725 = vpack.c.bf16 %v5244, %v5242
      %v5726 = vpack.c.bf16 %v5248, %v5246
      %v5727 = vpack.c.bf16 %v5252, %v5250
      %v5728 = vpack.c.bf16 %v5256, %v5254
      %v5729 = vpack.c.bf16 %v5260, %v5258
      %v5730 = vpack.c.bf16 %v5264, %v5262
      %v5731 = vpack.c.bf16 %v5268, %v5266
      %v5732 = vpack.c.bf16 %v5272, %v5270
      %v5733 = vpack.c.bf16 %v5276, %v5274
      %v5734 = vpack.c.bf16 %v5280, %v5278
      %v5735 = vpack.c.bf16 %v5284, %v5282
      %v5736 = vpack.c.bf16 %v5288, %v5286
      %v5738 = vsel %vm4520, %v5673, 0
      %v5741 = vsel %vm4520, %v5674, 0
      %v5744 = vsel %vm4520, %v5675, 0
      %v5747 = vsel %vm4520, %v5676, 0
      %5749 = vmatprep.subr.bf16.mxu0 0
      %5750 = vmatpush1.bf16.msra.mxu0 %v2839
      %5751 = vmatprep.subr.bf16.mxu0 0
      %5752 = vmatpush1.bf16.msra.mxu0 %v2840
      %5753 = vmatprep.subr.bf16.mxu0 0
      %5754 = vmatpush1.bf16.msra.mxu0 %v2841
      %5755 = vmatprep.subr.bf16.mxu0 0
      %5756 = vmatpush1.bf16.msra.mxu0 %v2842
      %5757 = vmatprep.subr.bf16.mxu0 0
      %5758 = vmatpush1.bf16.msra.mxu0 0
      %5759 = vmatprep.subr.bf16.mxu0 0
      %5760 = vmatpush1.bf16.msra.mxu0 0
      %5761 = vmatprep.subr.bf16.mxu0 0
      %5762 = vmatpush1.bf16.msra.mxu0 0
      %5763 = vmatprep.subr.bf16.mxu0 0
      %5764 = vmatpush1.bf16.msra.mxu0 0
      %5765 = vmatprep.subr.bf16.mxu0 0
      %5766 = vmatpush1.bf16.msra.mxu0 0
      %5767 = vmatprep.subr.bf16.mxu0 0
      %5768 = vmatpush1.bf16.msra.mxu0 0
      %5769 = vmatprep.subr.bf16.mxu0 0
      %5770 = vmatpush1.bf16.msra.mxu0 0
      %5771 = vmatprep.subr.bf16.mxu0 0
      %5772 = vmatpush1.bf16.msra.mxu0 0
      %5773 = vmatprep.subr.bf16.mxu0 0
      %5774 = vmatpush1.bf16.msra.mxu0 0
      %5775 = vmatprep.subr.bf16.mxu0 0
      %5776 = vmatpush1.bf16.msra.mxu0 0
      %5777 = vmatprep.subr.bf16.mxu0 0
      %5778 = vmatpush1.bf16.msra.mxu0 0
      %5779 = vmatprep.subr.bf16.mxu0 0
      %5780 = vmatpush1.bf16.msra.mxu0 0
      %5781 = vmatprep.mubr.bf16.mxu0 0
      %5782 = vmatmul.mubr.bf16.gmra.mrb[0].mxu0 %v5738
      %v5783 = vpop.f32.mrb[0].mxu0
      %v5784 = vadd.f32 0.0, %v5783
      %v5785 = vpop.f32.mrb[0].mxu0
      %v5786 = vpop.f32.mrb[0].mxu0
      %v5787 = vadd.f32 0.0, %v5786
      %v5788 = vpop.f32.mrb[0].mxu0
      %5789 = vmatprep.mubr.bf16.mxu0 0
      %5790 = vmatmul.mubr.bf16.gmra.mrb[0].mxu0 %v5741
      %v5791 = vpop.f32.mrb[0].mxu0
      %v5792 = vadd.f32 0.0, %v5791
      %v5793 = vpop.f32.mrb[0].mxu0
      %v5794 = vpop.f32.mrb[0].mxu0
      %v5795 = vadd.f32 0.0, %v5794
      %v5796 = vpop.f32.mrb[0].mxu0
      %5797 = vmatprep.mubr.bf16.mxu0 0
      %5798 = vmatmul.mubr.bf16.gmra.mrb[0].mxu0 %v5744
      %v5799 = vpop.f32.mrb[0].mxu0
      %v5800 = vadd.f32 0.0, %v5799
      %v5801 = vpop.f32.mrb[0].mxu0
      %v5802 = vpop.f32.mrb[0].mxu0
      %v5803 = vadd.f32 0.0, %v5802
      %v5804 = vpop.f32.mrb[0].mxu0
      %5805 = vmatprep.mubr.bf16.mxu0 0
      %5806 = vmatmul.mubr.bf16.gmra.mrb[0].mxu0 %v5747
      %v5807 = vpop.f32.mrb[0].mxu0
      %v5808 = vadd.f32 0.0, %v5807
      %v5809 = vpop.f32.mrb[0].mxu0
      %v5810 = vpop.f32.mrb[0].mxu0
      %v5811 = vadd.f32 0.0, %v5810
      %v5812 = vpop.f32.mrb[0].mxu0
      %5813 = vdwg.mxu0
      %v5815 = vsel %vm4520, %v5677, 0
      %v5818 = vsel %vm4520, %v5678, 0
      %v5821 = vsel %vm4520, %v5679, 0
      %v5824 = vsel %vm4520, %v5680, 0
      %5826 = vmatprep.subr.bf16.mxu0 0
      %5827 = vmatpush1.bf16.msra.mxu0 %v2843
      %5828 = vmatprep.subr.bf16.mxu0 0
      %5829 = vmatpush1.bf16.msra.mxu0 %v2844
      %5830 = vmatprep.subr.bf16.mxu0 0
      %5831 = vmatpush1.bf16.msra.mxu0 %v2845
      %5832 = vmatprep.subr.bf16.mxu0 0
      %5833 = vmatpush1.bf16.msra.mxu0 %v2846
      %5834 = vmatprep.subr.bf16.mxu0 0
      %5835 = vmatpush1.bf16.msra.mxu0 0
      %5836 = vmatprep.subr.bf16.mxu0 0
      %5837 = vmatpush1.bf16.msra.mxu0 0
      %5838 = vmatprep.subr.bf16.mxu0 0
      %5839 = vmatpush1.bf16.msra.mxu0 0
      %5840 = vmatprep.subr.bf16.mxu0 0
      %5841 = vmatpush1.bf16.msra.mxu0 0
      %5842 = vmatprep.subr.bf16.mxu0 0
      %5843 = vmatpush1.bf16.msra.mxu0 0
      %5844 = vmatprep.subr.bf16.mxu0 0
      %5845 = vmatpush1.bf16.msra.mxu0 0
      %5846 = vmatprep.subr.bf16.mxu0 0
      %5847 = vmatpush1.bf16.msra.mxu0 0
      %5848 = vmatprep.subr.bf16.mxu0 0
      %5849 = vmatpush1.bf16.msra.mxu0 0
      %5850 = vmatprep.subr.bf16.mxu0 0
      %5851 = vmatpush1.bf16.msra.mxu0 0
      %5852 = vmatprep.subr.bf16.mxu0 0
      %5853 = vmatpush1.bf16.msra.mxu0 0
      %5854 = vmatprep.subr.bf16.mxu0 0
      %5855 = vmatpush1.bf16.msra.mxu0 0
      %5856 = vmatprep.subr.bf16.mxu0 0
      %5857 = vmatpush1.bf16.msra.mxu0 0
      %5858 = vmatprep.mubr.bf16.mxu0 0
      %5859 = vmatmul.mubr.bf16.gmra.mrb[0].mxu0 %v5815
      %v5860 = vpop.f32.mrb[0].mxu0
      %v5861 = vadd.f32 0.0, %v5860
      %v5862 = vpop.f32.mrb[0].mxu0
      %v5863 = vpop.f32.mrb[0].mxu0
      %v5864 = vadd.f32 0.0, %v5863
      %v5865 = vpop.f32.mrb[0].mxu0
      %5866 = vmatprep.mubr.bf16.mxu0 0
      %5867 = vmatmul.mubr.bf16.gmra.mrb[0].mxu0 %v5818
      %v5868 = vpop.f32.mrb[0].mxu0
      %v5869 = vadd.f32 0.0, %v5868
      %v5870 = vpop.f32.mrb[0].mxu0
      %v5871 = vpop.f32.mrb[0].mxu0
      %v5872 = vadd.f32 0.0, %v5871
      %v5873 = vpop.f32.mrb[0].mxu0
      %5874 = vmatprep.mubr.bf16.mxu0 0
      %5875 = vmatmul.mubr.bf16.gmra.mrb[0].mxu0 %v5821
      %v5876 = vpop.f32.mrb[0].mxu0
      %v5877 = vadd.f32 0.0, %v5876
      %v5878 = vpop.f32.mrb[0].mxu0
      %v5879 = vpop.f32.mrb[0].mxu0
      %v5880 = vadd.f32 0.0, %v5879
      %v5881 = vpop.f32.mrb[0].mxu0
      %5882 = vmatprep.mubr.bf16.mxu0 0
      %5883 = vmatmul.mubr.bf16.gmra.mrb[0].mxu0 %v5824
      %v5884 = vpop.f32.mrb[0].mxu0
      %v5885 = vadd.f32 0.0, %v5884
      %v5886 = vpop.f32.mrb[0].mxu0
      %v5887 = vpop.f32.mrb[0].mxu0
      %v5888 = vadd.f32 0.0, %v5887
      %v5889 = vpop.f32.mrb[0].mxu0
      %5890 = vdwg.mxu0
      %v5892 = vsel %vm4520, %v5681, 0
      %v5895 = vsel %vm4520, %v5682, 0
      %v5898 = vsel %vm4520, %v5683, 0
      %v5901 = vsel %vm4520, %v5684, 0
      %5903 = vmatprep.subr.bf16.mxu0 0
      %5904 = vmatpush1.bf16.msra.mxu0 %v2847
      %5905 = vmatprep.subr.bf16.mxu0 0
      %5906 = vmatpush1.bf16.msra.mxu0 %v2848
      %5907 = vmatprep.subr.bf16.mxu0 0
      %5908 = vmatpush1.bf16.msra.mxu0 %v2849
      %5909 = vmatprep.subr.bf16.mxu0 0
      %5910 = vmatpush1.bf16.msra.mxu0 %v2850
      %5911 = vmatprep.subr.bf16.mxu0 0
      %5912 = vmatpush1.bf16.msra.mxu0 0
      %5913 = vmatprep.subr.bf16.mxu0 0
      %5914 = vmatpush1.bf16.msra.mxu0 0
      %5915 = vmatprep.subr.bf16.mxu0 0
      %5916 = vmatpush1.bf16.msra.mxu0 0
      %5917 = vmatprep.subr.bf16.mxu0 0
      %5918 = vmatpush1.bf16.msra.mxu0 0
      %5919 = vmatprep.subr.bf16.mxu0 0
      %5920 = vmatpush1.bf16.msra.mxu0 0
      %5921 = vmatprep.subr.bf16.mxu0 0
      %5922 = vmatpush1.bf16.msra.mxu0 0
      %5923 = vmatprep.subr.bf16.mxu0 0
      %5924 = vmatpush1.bf16.msra.mxu0 0
      %5925 = vmatprep.subr.bf16.mxu0 0
      %5926 = vmatpush1.bf16.msra.mxu0 0
      %5927 = vmatprep.subr.bf16.mxu0 0
      %5928 = vmatpush1.bf16.msra.mxu0 0
      %5929 = vmatprep.subr.bf16.mxu0 0
      %5930 = vmatpush1.bf16.msra.mxu0 0
      %5931 = vmatprep.subr.bf16.mxu0 0
      %5932 = vmatpush1.bf16.msra.mxu0 0
      %5933 = vmatprep.subr.bf16.mxu0 0
      %5934 = vmatpush1.bf16.msra.mxu0 0
      %5935 = vmatprep.mubr.bf16.mxu0 0
      %5936 = vmatmul.mubr.bf16.gmra.mrb[0].mxu0 %v5892
      %v5937 = vpop.f32.mrb[0].mxu0
      %v5938 = vadd.f32 0.0, %v5937
      %v5939 = vpop.f32.mrb[0].mxu0
      %v5940 = vpop.f32.mrb[0].mxu0
      %v5941 = vadd.f32 0.0, %v5940
      %v5942 = vpop.f32.mrb[0].mxu0
      %5943 = vmatprep.mubr.bf16.mxu0 0
      %5944 = vmatmul.mubr.bf16.gmra.mrb[0].mxu0 %v5895
      %v5945 = vpop.f32.mrb[0].mxu0
      %v5946 = vadd.f32 0.0, %v5945
      %v5947 = vpop.f32.mrb[0].mxu0
      %v5948 = vpop.f32.mrb[0].mxu0
      %v5949 = vadd.f32 0.0, %v5948
      %v5950 = vpop.f32.mrb[0].mxu0
      %5951 = vmatprep.mubr.bf16.mxu0 0
      %5952 = vmatmul.mubr.bf16.gmra.mrb[0].mxu0 %v5898
      %v5953 = vpop.f32.mrb[0].mxu0
      %v5954 = vadd.f32 0.0, %v5953
      %v5955 = vpop.f32.mrb[0].mxu0
      %v5956 = vpop.f32.mrb[0].mxu0
      %v5957 = vadd.f32 0.0, %v5956
      %v5958 = vpop.f32.mrb[0].mxu0
      %5959 = vmatprep.mubr.bf16.mxu0 0
      %5960 = vmatmul.mubr.bf16.gmra.mrb[0].mxu0 %v5901
      %v5961 = vpop.f32.mrb[0].mxu0
      %v5962 = vadd.f32 0.0, %v5961
      %v5963 = vpop.f32.mrb[0].mxu0
      %v5964 = vpop.f32.mrb[0].mxu0
      %v5965 = vadd.f32 0.0, %v5964
      %v5966 = vpop.f32.mrb[0].mxu0
      %5967 = vdwg.mxu0
      %v5969 = vsel %vm4520, %v5685, 0
      %v5972 = vsel %vm4520, %v5686, 0
      %v5975 = vsel %vm4520, %v5687, 0
      %v5978 = vsel %vm4520, %v5688, 0
      %5980 = vmatprep.subr.bf16.mxu0 0
      %5981 = vmatpush1.bf16.msra.mxu0 %v2851
      %5982 = vmatprep.subr.bf16.mxu0 0
      %5983 = vmatpush1.bf16.msra.mxu0 %v2852
      %5984 = vmatprep.subr.bf16.mxu0 0
      %5985 = vmatpush1.bf16.msra.mxu0 %v2853
      %5986 = vmatprep.subr.bf16.mxu0 0
      %5987 = vmatpush1.bf16.msra.mxu0 %v2854
      %5988 = vmatprep.subr.bf16.mxu0 0
      %5989 = vmatpush1.bf16.msra.mxu0 0
      %5990 = vmatprep.subr.bf16.mxu0 0
      %5991 = vmatpush1.bf16.msra.mxu0 0
      %5992 = vmatprep.subr.bf16.mxu0 0
      %5993 = vmatpush1.bf16.msra.mxu0 0
      %5994 = vmatprep.subr.bf16.mxu0 0
      %5995 = vmatpush1.bf16.msra.mxu0 0
      %5996 = vmatprep.subr.bf16.mxu0 0
      %5997 = vmatpush1.bf16.msra.mxu0 0
      %5998 = vmatprep.subr.bf16.mxu0 0
      %5999 = vmatpush1.bf16.msra.mxu0 0
      %6000 = vmatprep.subr.bf16.mxu0 0
      %6001 = vmatpush1.bf16.msra.mxu0 0
      %6002 = vmatprep.subr.bf16.mxu0 0
      %6003 = vmatpush1.bf16.msra.mxu0 0
      %6004 = vmatprep.subr.bf16.mxu0 0
      %6005 = vmatpush1.bf16.msra.mxu0 0
      %6006 = vmatprep.subr.bf16.mxu0 0
      %6007 = vmatpush1.bf16.msra.mxu0 0
      %6008 = vmatprep.subr.bf16.mxu0 0
      %6009 = vmatpush1.bf16.msra.mxu0 0
      %6010 = vmatprep.subr.bf16.mxu0 0
      %6011 = vmatpush1.bf16.msra.mxu0 0
      %6012 = vmatprep.mubr.bf16.mxu0 0
      %6013 = vmatmul.mubr.bf16.gmra.mrb[0].mxu0 %v5969
      %v6014 = vpop.f32.mrb[0].mxu0
      %v6015 = vadd.f32 0.0, %v6014
      %v6016 = vpop.f32.mrb[0].mxu0
      %v6017 = vpop.f32.mrb[0].mxu0
      %v6018 = vadd.f32 0.0, %v6017
      %v6019 = vpop.f32.mrb[0].mxu0
      %6020 = vmatprep.mubr.bf16.mxu0 0
      %6021 = vmatmul.mubr.bf16.gmra.mrb[0].mxu0 %v5972
      %v6022 = vpop.f32.mrb[0].mxu0
      %v6023 = vadd.f32 0.0, %v6022
      %v6024 = vpop.f32.mrb[0].mxu0
      %v6025 = vpop.f32.mrb[0].mxu0
      %v6026 = vadd.f32 0.0, %v6025
      %v6027 = vpop.f32.mrb[0].mxu0
      %6028 = vmatprep.mubr.bf16.mxu0 0
      %6029 = vmatmul.mubr.bf16.gmra.mrb[0].mxu0 %v5975
      %v6030 = vpop.f32.mrb[0].mxu0
      %v6031 = vadd.f32 0.0, %v6030
      %v6032 = vpop.f32.mrb[0].mxu0
      %v6033 = vpop.f32.mrb[0].mxu0
      %v6034 = vadd.f32 0.0, %v6033
      %v6035 = vpop.f32.mrb[0].mxu0
      %6036 = vmatprep.mubr.bf16.mxu0 0
      %6037 = vmatmul.mubr.bf16.gmra.mrb[0].mxu0 %v5978
      %v6038 = vpop.f32.mrb[0].mxu0
      %v6039 = vadd.f32 0.0, %v6038
      %v6040 = vpop.f32.mrb[0].mxu0
      %v6041 = vpop.f32.mrb[0].mxu0
      %v6042 = vadd.f32 0.0, %v6041
      %v6043 = vpop.f32.mrb[0].mxu0
      %6044 = vdwg.mxu0
      %v6046 = vsel %vm4520, %v5689, 0
      %v6049 = vsel %vm4520, %v5690, 0
      %v6052 = vsel %vm4520, %v5691, 0
      %v6055 = vsel %vm4520, %v5692, 0
      %6057 = vmatprep.subr.bf16.mxu0 0
      %6058 = vmatpush1.bf16.msra.mxu0 %v2855
      %6059 = vmatprep.subr.bf16.mxu0 0
      %6060 = vmatpush1.bf16.msra.mxu0 %v2856
      %6061 = vmatprep.subr.bf16.mxu0 0
      %6062 = vmatpush1.bf16.msra.mxu0 %v2857
      %6063 = vmatprep.subr.bf16.mxu0 0
      %6064 = vmatpush1.bf16.msra.mxu0 %v2858
      %6065 = vmatprep.subr.bf16.mxu0 0
      %6066 = vmatpush1.bf16.msra.mxu0 0
      %6067 = vmatprep.subr.bf16.mxu0 0
      %6068 = vmatpush1.bf16.msra.mxu0 0
      %6069 = vmatprep.subr.bf16.mxu0 0
      %6070 = vmatpush1.bf16.msra.mxu0 0
      %6071 = vmatprep.subr.bf16.mxu0 0
      %6072 = vmatpush1.bf16.msra.mxu0 0
      %6073 = vmatprep.subr.bf16.mxu0 0
      %6074 = vmatpush1.bf16.msra.mxu0 0
      %6075 = vmatprep.subr.bf16.mxu0 0
      %6076 = vmatpush1.bf16.msra.mxu0 0
      %6077 = vmatprep.subr.bf16.mxu0 0
      %6078 = vmatpush1.bf16.msra.mxu0 0
      %6079 = vmatprep.subr.bf16.mxu0 0
      %6080 = vmatpush1.bf16.msra.mxu0 0
      %6081 = vmatprep.subr.bf16.mxu0 0
      %6082 = vmatpush1.bf16.msra.mxu0 0
      %6083 = vmatprep.subr.bf16.mxu0 0
      %6084 = vmatpush1.bf16.msra.mxu0 0
      %6085 = vmatprep.subr.bf16.mxu0 0
      %6086 = vmatpush1.bf16.msra.mxu0 0
      %6087 = vmatprep.subr.bf16.mxu0 0
      %6088 = vmatpush1.bf16.msra.mxu0 0
      %6089 = vmatprep.mubr.bf16.mxu0 0
      %6090 = vmatmul.mubr.bf16.gmra.mrb[0].mxu0 %v6046
      %v6091 = vpop.f32.mrb[0].mxu0
      %v6092 = vadd.f32 0.0, %v6091
      %v6093 = vpop.f32.mrb[0].mxu0
      %v6094 = vpop.f32.mrb[0].mxu0
      %v6095 = vadd.f32 0.0, %v6094
      %v6096 = vpop.f32.mrb[0].mxu0
      %6097 = vmatprep.mubr.bf16.mxu0 0
      %6098 = vmatmul.mubr.bf16.gmra.mrb[0].mxu0 %v6049
      %v6099 = vpop.f32.mrb[0].mxu0
      %v6100 = vadd.f32 0.0, %v6099
      %v6101 = vpop.f32.mrb[0].mxu0
      %v6102 = vpop.f32.mrb[0].mxu0
      %v6103 = vadd.f32 0.0, %v6102
      %v6104 = vpop.f32.mrb[0].mxu0
      %6105 = vmatprep.mubr.bf16.mxu0 0
      %6106 = vmatmul.mubr.bf16.gmra.mrb[0].mxu0 %v6052
      %v6107 = vpop.f32.mrb[0].mxu0
      %v6108 = vadd.f32 0.0, %v6107
      %v6109 = vpop.f32.mrb[0].mxu0
      %v6110 = vpop.f32.mrb[0].mxu0
      %v6111 = vadd.f32 0.0, %v6110
      %v6112 = vpop.f32.mrb[0].mxu0
      %6113 = vmatprep.mubr.bf16.mxu0 0
      %6114 = vmatmul.mubr.bf16.gmra.mrb[0].mxu0 %v6055
      %v6115 = vpop.f32.mrb[0].mxu0
      %v6116 = vadd.f32 0.0, %v6115
      %v6117 = vpop.f32.mrb[0].mxu0
      %v6118 = vpop.f32.mrb[0].mxu0
      %v6119 = vadd.f32 0.0, %v6118
      %v6120 = vpop.f32.mrb[0].mxu0
      %6121 = vdwg.mxu0
      %v6123 = vsel %vm4520, %v5693, 0
      %v6126 = vsel %vm4520, %v5694, 0
      %v6129 = vsel %vm4520, %v5695, 0
      %v6132 = vsel %vm4520, %v5696, 0
      %6134 = vmatprep.subr.bf16.mxu0 0
      %6135 = vmatpush1.bf16.msra.mxu0 %v2859
      %6136 = vmatprep.subr.bf16.mxu0 0
      %6137 = vmatpush1.bf16.msra.mxu0 %v2860
      %6138 = vmatprep.subr.bf16.mxu0 0
      %6139 = vmatpush1.bf16.msra.mxu0 %v2861
      %6140 = vmatprep.subr.bf16.mxu0 0
      %6141 = vmatpush1.bf16.msra.mxu0 %v2862
      %6142 = vmatprep.subr.bf16.mxu0 0
      %6143 = vmatpush1.bf16.msra.mxu0 0
      %6144 = vmatprep.subr.bf16.mxu0 0
      %6145 = vmatpush1.bf16.msra.mxu0 0
      %6146 = vmatprep.subr.bf16.mxu0 0
      %6147 = vmatpush1.bf16.msra.mxu0 0
      %6148 = vmatprep.subr.bf16.mxu0 0
      %6149 = vmatpush1.bf16.msra.mxu0 0
      %6150 = vmatprep.subr.bf16.mxu0 0
      %6151 = vmatpush1.bf16.msra.mxu0 0
      %6152 = vmatprep.subr.bf16.mxu0 0
      %6153 = vmatpush1.bf16.msra.mxu0 0
      %6154 = vmatprep.subr.bf16.mxu0 0
      %6155 = vmatpush1.bf16.msra.mxu0 0
      %6156 = vmatprep.subr.bf16.mxu0 0
      %6157 = vmatpush1.bf16.msra.mxu0 0
      %6158 = vmatprep.subr.bf16.mxu0 0
      %6159 = vmatpush1.bf16.msra.mxu0 0
      %6160 = vmatprep.subr.bf16.mxu0 0
      %6161 = vmatpush1.bf16.msra.mxu0 0
      %6162 = vmatprep.subr.bf16.mxu0 0
      %6163 = vmatpush1.bf16.msra.mxu0 0
      %6164 = vmatprep.subr.bf16.mxu0 0
      %6165 = vmatpush1.bf16.msra.mxu0 0
      %6166 = vmatprep.mubr.bf16.mxu0 0
      %6167 = vmatmul.mubr.bf16.gmra.mrb[0].mxu0 %v6123
      %v6168 = vpop.f32.mrb[0].mxu0
      %v6169 = vadd.f32 0.0, %v6168
      %v6170 = vpop.f32.mrb[0].mxu0
      %v6171 = vpop.f32.mrb[0].mxu0
      %v6172 = vadd.f32 0.0, %v6171
      %v6173 = vpop.f32.mrb[0].mxu0
      %6174 = vmatprep.mubr.bf16.mxu0 0
      %6175 = vmatmul.mubr.bf16.gmra.mrb[0].mxu0 %v6126
      %v6176 = vpop.f32.mrb[0].mxu0
      %v6177 = vadd.f32 0.0, %v6176
      %v6178 = vpop.f32.mrb[0].mxu0
      %v6179 = vpop.f32.mrb[0].mxu0
      %v6180 = vadd.f32 0.0, %v6179
      %v6181 = vpop.f32.mrb[0].mxu0
      %6182 = vmatprep.mubr.bf16.mxu0 0
      %6183 = vmatmul.mubr.bf16.gmra.mrb[0].mxu0 %v6129
      %v6184 = vpop.f32.mrb[0].mxu0
      %v6185 = vadd.f32 0.0, %v6184
      %v6186 = vpop.f32.mrb[0].mxu0
      %v6187 = vpop.f32.mrb[0].mxu0
      %v6188 = vadd.f32 0.0, %v6187
      %v6189 = vpop.f32.mrb[0].mxu0
      %6190 = vmatprep.mubr.bf16.mxu0 0
      %6191 = vmatmul.mubr.bf16.gmra.mrb[0].mxu0 %v6132
      %v6192 = vpop.f32.mrb[0].mxu0
      %v6193 = vadd.f32 0.0, %v6192
      %v6194 = vpop.f32.mrb[0].mxu0
      %v6195 = vpop.f32.mrb[0].mxu0
      %v6196 = vadd.f32 0.0, %v6195
      %v6197 = vpop.f32.mrb[0].mxu0
      %6198 = vdwg.mxu0
      %v6200 = vsel %vm4520, %v5697, 0
      %v6203 = vsel %vm4520, %v5698, 0
      %v6206 = vsel %vm4520, %v5699, 0
      %v6209 = vsel %vm4520, %v5700, 0
      %6211 = vmatprep.subr.bf16.mxu0 0
      %6212 = vmatpush1.bf16.msra.mxu0 %v2863
      %6213 = vmatprep.subr.bf16.mxu0 0
      %6214 = vmatpush1.bf16.msra.mxu0 %v2864
      %6215 = vmatprep.subr.bf16.mxu0 0
      %6216 = vmatpush1.bf16.msra.mxu0 %v2865
      %6217 = vmatprep.subr.bf16.mxu0 0
      %6218 = vmatpush1.bf16.msra.mxu0 %v2866
      %6219 = vmatprep.subr.bf16.mxu0 0
      %6220 = vmatpush1.bf16.msra.mxu0 0
      %6221 = vmatprep.subr.bf16.mxu0 0
      %6222 = vmatpush1.bf16.msra.mxu0 0
      %6223 = vmatprep.subr.bf16.mxu0 0
      %6224 = vmatpush1.bf16.msra.mxu0 0
      %6225 = vmatprep.subr.bf16.mxu0 0
      %6226 = vmatpush1.bf16.msra.mxu0 0
      %6227 = vmatprep.subr.bf16.mxu0 0
      %6228 = vmatpush1.bf16.msra.mxu0 0
      %6229 = vmatprep.subr.bf16.mxu0 0
      %6230 = vmatpush1.bf16.msra.mxu0 0
      %6231 = vmatprep.subr.bf16.mxu0 0
      %6232 = vmatpush1.bf16.msra.mxu0 0
      %6233 = vmatprep.subr.bf16.mxu0 0
      %6234 = vmatpush1.bf16.msra.mxu0 0
      %6235 = vmatprep.subr.bf16.mxu0 0
      %6236 = vmatpush1.bf16.msra.mxu0 0
      %6237 = vmatprep.subr.bf16.mxu0 0
      %6238 = vmatpush1.bf16.msra.mxu0 0
      %6239 = vmatprep.subr.bf16.mxu0 0
      %6240 = vmatpush1.bf16.msra.mxu0 0
      %6241 = vmatprep.subr.bf16.mxu0 0
      %6242 = vmatpush1.bf16.msra.mxu0 0
      %6243 = vmatprep.mubr.bf16.mxu0 0
      %6244 = vmatmul.mubr.bf16.gmra.mrb[0].mxu0 %v6200
      %v6245 = vpop.f32.mrb[0].mxu0
      %v6246 = vadd.f32 0.0, %v6245
      %v6247 = vpop.f32.mrb[0].mxu0
      %v6248 = vpop.f32.mrb[0].mxu0
      %v6249 = vadd.f32 0.0, %v6248
      %v6250 = vpop.f32.mrb[0].mxu0
      %6251 = vmatprep.mubr.bf16.mxu0 0
      %6252 = vmatmul.mubr.bf16.gmra.mrb[0].mxu0 %v6203
      %v6253 = vpop.f32.mrb[0].mxu0
      %v6254 = vadd.f32 0.0, %v6253
      %v6255 = vpop.f32.mrb[0].mxu0
      %v6256 = vpop.f32.mrb[0].mxu0
      %v6257 = vadd.f32 0.0, %v6256
      %v6258 = vpop.f32.mrb[0].mxu0
      %6259 = vmatprep.mubr.bf16.mxu0 0
      %6260 = vmatmul.mubr.bf16.gmra.mrb[0].mxu0 %v6206
      %v6261 = vpop.f32.mrb[0].mxu0
      %v6262 = vadd.f32 0.0, %v6261
      %v6263 = vpop.f32.mrb[0].mxu0
      %v6264 = vpop.f32.mrb[0].mxu0
      %v6265 = vadd.f32 0.0, %v6264
      %v6266 = vpop.f32.mrb[0].mxu0
      %6267 = vmatprep.mubr.bf16.mxu0 0
      %6268 = vmatmul.mubr.bf16.gmra.mrb[0].mxu0 %v6209
      %v6269 = vpop.f32.mrb[0].mxu0
      %v6270 = vadd.f32 0.0, %v6269
      %v6271 = vpop.f32.mrb[0].mxu0
      %v6272 = vpop.f32.mrb[0].mxu0
      %v6273 = vadd.f32 0.0, %v6272
      %v6274 = vpop.f32.mrb[0].mxu0
      %6275 = vdwg.mxu0
      %v6277 = vsel %vm4520, %v5701, 0
      %v6280 = vsel %vm4520, %v5702, 0
      %v6283 = vsel %vm4520, %v5703, 0
      %v6286 = vsel %vm4520, %v5704, 0
      %6288 = vmatprep.subr.bf16.mxu0 0
      %6289 = vmatpush1.bf16.msra.mxu0 %v2867
      %6290 = vmatprep.subr.bf16.mxu0 0
      %6291 = vmatpush1.bf16.msra.mxu0 %v2868
      %6292 = vmatprep.subr.bf16.mxu0 0
      %6293 = vmatpush1.bf16.msra.mxu0 %v2869
      %6294 = vmatprep.subr.bf16.mxu0 0
      %6295 = vmatpush1.bf16.msra.mxu0 %v2870
      %6296 = vmatprep.subr.bf16.mxu0 0
      %6297 = vmatpush1.bf16.msra.mxu0 0
      %6298 = vmatprep.subr.bf16.mxu0 0
      %6299 = vmatpush1.bf16.msra.mxu0 0
      %6300 = vmatprep.subr.bf16.mxu0 0
      %6301 = vmatpush1.bf16.msra.mxu0 0
      %6302 = vmatprep.subr.bf16.mxu0 0
      %6303 = vmatpush1.bf16.msra.mxu0 0
      %6304 = vmatprep.subr.bf16.mxu0 0
      %6305 = vmatpush1.bf16.msra.mxu0 0
      %6306 = vmatprep.subr.bf16.mxu0 0
      %6307 = vmatpush1.bf16.msra.mxu0 0
      %6308 = vmatprep.subr.bf16.mxu0 0
      %6309 = vmatpush1.bf16.msra.mxu0 0
      %6310 = vmatprep.subr.bf16.mxu0 0
      %6311 = vmatpush1.bf16.msra.mxu0 0
      %6312 = vmatprep.subr.bf16.mxu0 0
      %6313 = vmatpush1.bf16.msra.mxu0 0
      %6314 = vmatprep.subr.bf16.mxu0 0
      %6315 = vmatpush1.bf16.msra.mxu0 0
      %6316 = vmatprep.subr.bf16.mxu0 0
      %6317 = vmatpush1.bf16.msra.mxu0 0
      %6318 = vmatprep.subr.bf16.mxu0 0
      %6319 = vmatpush1.bf16.msra.mxu0 0
      %6320 = vmatprep.mubr.bf16.mxu0 0
      %6321 = vmatmul.mubr.bf16.gmra.mrb[0].mxu0 %v6277
      %v6322 = vpop.f32.mrb[0].mxu0
      %v6323 = vadd.f32 0.0, %v6322
      %v6324 = vpop.f32.mrb[0].mxu0
      %v6325 = vpop.f32.mrb[0].mxu0
      %v6326 = vadd.f32 0.0, %v6325
      %v6327 = vpop.f32.mrb[0].mxu0
      %6328 = vmatprep.mubr.bf16.mxu0 0
      %6329 = vmatmul.mubr.bf16.gmra.mrb[0].mxu0 %v6280
      %v6330 = vpop.f32.mrb[0].mxu0
      %v6331 = vadd.f32 0.0, %v6330
      %v6332 = vpop.f32.mrb[0].mxu0
      %v6333 = vpop.f32.mrb[0].mxu0
      %v6334 = vadd.f32 0.0, %v6333
      %v6335 = vpop.f32.mrb[0].mxu0
      %6336 = vmatprep.mubr.bf16.mxu0 0
      %6337 = vmatmul.mubr.bf16.gmra.mrb[0].mxu0 %v6283
      %v6338 = vpop.f32.mrb[0].mxu0
      %v6339 = vadd.f32 0.0, %v6338
      %v6340 = vpop.f32.mrb[0].mxu0
      %v6341 = vpop.f32.mrb[0].mxu0
      %v6342 = vadd.f32 0.0, %v6341
      %v6343 = vpop.f32.mrb[0].mxu0
      %6344 = vmatprep.mubr.bf16.mxu0 0
      %6345 = vmatmul.mubr.bf16.gmra.mrb[0].mxu0 %v6286
      %v6346 = vpop.f32.mrb[0].mxu0
      %v6347 = vadd.f32 0.0, %v6346
      %v6348 = vpop.f32.mrb[0].mxu0
      %v6349 = vpop.f32.mrb[0].mxu0
      %v6350 = vadd.f32 0.0, %v6349
      %v6351 = vpop.f32.mrb[0].mxu0
      %6352 = vdwg.mxu0
      %v6354 = vsel %vm4520, %v5705, 0
      %v6357 = vsel %vm4520, %v5706, 0
      %v6360 = vsel %vm4520, %v5707, 0
      %v6363 = vsel %vm4520, %v5708, 0
      %6365 = vmatprep.subr.bf16.mxu0 0
      %6366 = vmatpush1.bf16.msra.mxu0 %v2871
      %6367 = vmatprep.subr.bf16.mxu0 0
      %6368 = vmatpush1.bf16.msra.mxu0 %v2872
      %6369 = vmatprep.subr.bf16.mxu0 0
      %6370 = vmatpush1.bf16.msra.mxu0 %v2873
      %6371 = vmatprep.subr.bf16.mxu0 0
      %6372 = vmatpush1.bf16.msra.mxu0 %v2874
      %6373 = vmatprep.subr.bf16.mxu0 0
      %6374 = vmatpush1.bf16.msra.mxu0 0
      %6375 = vmatprep.subr.bf16.mxu0 0
      %6376 = vmatpush1.bf16.msra.mxu0 0
      %6377 = vmatprep.subr.bf16.mxu0 0
      %6378 = vmatpush1.bf16.msra.mxu0 0
      %6379 = vmatprep.subr.bf16.mxu0 0
      %6380 = vmatpush1.bf16.msra.mxu0 0
      %6381 = vmatprep.subr.bf16.mxu0 0
      %6382 = vmatpush1.bf16.msra.mxu0 0
      %6383 = vmatprep.subr.bf16.mxu0 0
      %6384 = vmatpush1.bf16.msra.mxu0 0
      %6385 = vmatprep.subr.bf16.mxu0 0
      %6386 = vmatpush1.bf16.msra.mxu0 0
      %6387 = vmatprep.subr.bf16.mxu0 0
      %6388 = vmatpush1.bf16.msra.mxu0 0
      %6389 = vmatprep.subr.bf16.mxu0 0
      %6390 = vmatpush1.bf16.msra.mxu0 0
      %6391 = vmatprep.subr.bf16.mxu0 0
      %6392 = vmatpush1.bf16.msra.mxu0 0
      %6393 = vmatprep.subr.bf16.mxu0 0
      %6394 = vmatpush1.bf16.msra.mxu0 0
      %6395 = vmatprep.subr.bf16.mxu0 0
      %6396 = vmatpush1.bf16.msra.mxu0 0
      %6397 = vmatprep.mubr.bf16.mxu0 0
      %6398 = vmatmul.mubr.bf16.gmra.mrb[0].mxu0 %v6354
      %v6399 = vpop.f32.mrb[0].mxu0
      %v6400 = vadd.f32 0.0, %v6399
      %v6401 = vpop.f32.mrb[0].mxu0
      %v6402 = vpop.f32.mrb[0].mxu0
      %v6403 = vadd.f32 0.0, %v6402
      %v6404 = vpop.f32.mrb[0].mxu0
      %6405 = vmatprep.mubr.bf16.mxu0 0
      %6406 = vmatmul.mubr.bf16.gmra.mrb[0].mxu0 %v6357
      %v6407 = vpop.f32.mrb[0].mxu0
      %v6408 = vadd.f32 0.0, %v6407
      %v6409 = vpop.f32.mrb[0].mxu0
      %v6410 = vpop.f32.mrb[0].mxu0
      %v6411 = vadd.f32 0.0, %v6410
      %v6412 = vpop.f32.mrb[0].mxu0
      %6413 = vmatprep.mubr.bf16.mxu0 0
      %6414 = vmatmul.mubr.bf16.gmra.mrb[0].mxu0 %v6360
      %v6415 = vpop.f32.mrb[0].mxu0
      %v6416 = vadd.f32 0.0, %v6415
      %v6417 = vpop.f32.mrb[0].mxu0
      %v6418 = vpop.f32.mrb[0].mxu0
      %v6419 = vadd.f32 0.0, %v6418
      %v6420 = vpop.f32.mrb[0].mxu0
      %6421 = vmatprep.mubr.bf16.mxu0 0
      %6422 = vmatmul.mubr.bf16.gmra.mrb[0].mxu0 %v6363
      %v6423 = vpop.f32.mrb[0].mxu0
      %v6424 = vadd.f32 0.0, %v6423
      %v6425 = vpop.f32.mrb[0].mxu0
      %v6426 = vpop.f32.mrb[0].mxu0
      %v6427 = vadd.f32 0.0, %v6426
      %v6428 = vpop.f32.mrb[0].mxu0
      %6429 = vdwg.mxu0
      %v6431 = vsel %vm4520, %v5709, 0
      %v6434 = vsel %vm4520, %v5710, 0
      %v6437 = vsel %vm4520, %v5711, 0
      %v6440 = vsel %vm4520, %v5712, 0
      %6442 = vmatprep.subr.bf16.mxu0 0
      %6443 = vmatpush1.bf16.msra.mxu0 %v2875
      %6444 = vmatprep.subr.bf16.mxu0 0
      %6445 = vmatpush1.bf16.msra.mxu0 %v2876
      %6446 = vmatprep.subr.bf16.mxu0 0
      %6447 = vmatpush1.bf16.msra.mxu0 %v2877
      %6448 = vmatprep.subr.bf16.mxu0 0
      %6449 = vmatpush1.bf16.msra.mxu0 %v2878
      %6450 = vmatprep.subr.bf16.mxu0 0
      %6451 = vmatpush1.bf16.msra.mxu0 0
      %6452 = vmatprep.subr.bf16.mxu0 0
      %6453 = vmatpush1.bf16.msra.mxu0 0
      %6454 = vmatprep.subr.bf16.mxu0 0
      %6455 = vmatpush1.bf16.msra.mxu0 0
      %6456 = vmatprep.subr.bf16.mxu0 0
      %6457 = vmatpush1.bf16.msra.mxu0 0
      %6458 = vmatprep.subr.bf16.mxu0 0
      %6459 = vmatpush1.bf16.msra.mxu0 0
      %6460 = vmatprep.subr.bf16.mxu0 0
      %6461 = vmatpush1.bf16.msra.mxu0 0
      %6462 = vmatprep.subr.bf16.mxu0 0
      %6463 = vmatpush1.bf16.msra.mxu0 0
      %6464 = vmatprep.subr.bf16.mxu0 0
      %6465 = vmatpush1.bf16.msra.mxu0 0
      %6466 = vmatprep.subr.bf16.mxu0 0
      %6467 = vmatpush1.bf16.msra.mxu0 0
      %6468 = vmatprep.subr.bf16.mxu0 0
      %6469 = vmatpush1.bf16.msra.mxu0 0
      %6470 = vmatprep.subr.bf16.mxu0 0
      %6471 = vmatpush1.bf16.msra.mxu0 0
      %6472 = vmatprep.subr.bf16.mxu0 0
      %6473 = vmatpush1.bf16.msra.mxu0 0
      %6474 = vmatprep.mubr.bf16.mxu0 0
      %6475 = vmatmul.mubr.bf16.gmra.mrb[0].mxu0 %v6431
      %v6476 = vpop.f32.mrb[0].mxu0
      %v6477 = vadd.f32 0.0, %v6476
      %v6478 = vpop.f32.mrb[0].mxu0
      %v6479 = vpop.f32.mrb[0].mxu0
      %v6480 = vadd.f32 0.0, %v6479
      %v6481 = vpop.f32.mrb[0].mxu0
      %6482 = vmatprep.mubr.bf16.mxu0 0
      %6483 = vmatmul.mubr.bf16.gmra.mrb[0].mxu0 %v6434
      %v6484 = vpop.f32.mrb[0].mxu0
      %v6485 = vadd.f32 0.0, %v6484
      %v6486 = vpop.f32.mrb[0].mxu0
      %v6487 = vpop.f32.mrb[0].mxu0
      %v6488 = vadd.f32 0.0, %v6487
      %v6489 = vpop.f32.mrb[0].mxu0
      %6490 = vmatprep.mubr.bf16.mxu0 0
      %6491 = vmatmul.mubr.bf16.gmra.mrb[0].mxu0 %v6437
      %v6492 = vpop.f32.mrb[0].mxu0
      %v6493 = vadd.f32 0.0, %v6492
      %v6494 = vpop.f32.mrb[0].mxu0
      %v6495 = vpop.f32.mrb[0].mxu0
      %v6496 = vadd.f32 0.0, %v6495
      %v6497 = vpop.f32.mrb[0].mxu0
      %6498 = vmatprep.mubr.bf16.mxu0 0
      %6499 = vmatmul.mubr.bf16.gmra.mrb[0].mxu0 %v6440
      %v6500 = vpop.f32.mrb[0].mxu0
      %v6501 = vadd.f32 0.0, %v6500
      %v6502 = vpop.f32.mrb[0].mxu0
      %v6503 = vpop.f32.mrb[0].mxu0
      %v6504 = vadd.f32 0.0, %v6503
      %v6505 = vpop.f32.mrb[0].mxu0
      %6506 = vdwg.mxu0
      %v6508 = vsel %vm4520, %v5713, 0
      %v6511 = vsel %vm4520, %v5714, 0
      %v6514 = vsel %vm4520, %v5715, 0
      %v6517 = vsel %vm4520, %v5716, 0
      %6519 = vmatprep.subr.bf16.mxu0 0
      %6520 = vmatpush1.bf16.msra.mxu0 %v2879
      %6521 = vmatprep.subr.bf16.mxu0 0
      %6522 = vmatpush1.bf16.msra.mxu0 %v2880
      %6523 = vmatprep.subr.bf16.mxu0 0
      %6524 = vmatpush1.bf16.msra.mxu0 %v2881
      %6525 = vmatprep.subr.bf16.mxu0 0
      %6526 = vmatpush1.bf16.msra.mxu0 %v2882
      %6527 = vmatprep.subr.bf16.mxu0 0
      %6528 = vmatpush1.bf16.msra.mxu0 0
      %6529 = vmatprep.subr.bf16.mxu0 0
      %6530 = vmatpush1.bf16.msra.mxu0 0
      %6531 = vmatprep.subr.bf16.mxu0 0
      %6532 = vmatpush1.bf16.msra.mxu0 0
      %6533 = vmatprep.subr.bf16.mxu0 0
      %6534 = vmatpush1.bf16.msra.mxu0 0
      %6535 = vmatprep.subr.bf16.mxu0 0
      %6536 = vmatpush1.bf16.msra.mxu0 0
      %6537 = vmatprep.subr.bf16.mxu0 0
      %6538 = vmatpush1.bf16.msra.mxu0 0
      %6539 = vmatprep.subr.bf16.mxu0 0
      %6540 = vmatpush1.bf16.msra.mxu0 0
      %6541 = vmatprep.subr.bf16.mxu0 0
      %6542 = vmatpush1.bf16.msra.mxu0 0
      %6543 = vmatprep.subr.bf16.mxu0 0
      %6544 = vmatpush1.bf16.msra.mxu0 0
      %6545 = vmatprep.subr.bf16.mxu0 0
      %6546 = vmatpush1.bf16.msra.mxu0 0
      %6547 = vmatprep.subr.bf16.mxu0 0
      %6548 = vmatpush1.bf16.msra.mxu0 0
      %6549 = vmatprep.subr.bf16.mxu0 0
      %6550 = vmatpush1.bf16.msra.mxu0 0
      %6551 = vmatprep.mubr.bf16.mxu0 0
      %6552 = vmatmul.mubr.bf16.gmra.mrb[0].mxu0 %v6508
      %v6553 = vpop.f32.mrb[0].mxu0
      %v6554 = vadd.f32 0.0, %v6553
      %v6555 = vpop.f32.mrb[0].mxu0
      %v6556 = vpop.f32.mrb[0].mxu0
      %v6557 = vadd.f32 0.0, %v6556
      %v6558 = vpop.f32.mrb[0].mxu0
      %6559 = vmatprep.mubr.bf16.mxu0 0
      %6560 = vmatmul.mubr.bf16.gmra.mrb[0].mxu0 %v6511
      %v6561 = vpop.f32.mrb[0].mxu0
      %v6562 = vadd.f32 0.0, %v6561
      %v6563 = vpop.f32.mrb[0].mxu0
      %v6564 = vpop.f32.mrb[0].mxu0
      %v6565 = vadd.f32 0.0, %v6564
      %v6566 = vpop.f32.mrb[0].mxu0
      %6567 = vmatprep.mubr.bf16.mxu0 0
      %6568 = vmatmul.mubr.bf16.gmra.mrb[0].mxu0 %v6514
      %v6569 = vpop.f32.mrb[0].mxu0
      %v6570 = vadd.f32 0.0, %v6569
      %v6571 = vpop.f32.mrb[0].mxu0
      %v6572 = vpop.f32.mrb[0].mxu0
      %v6573 = vadd.f32 0.0, %v6572
      %v6574 = vpop.f32.mrb[0].mxu0
      %6575 = vmatprep.mubr.bf16.mxu0 0
      %6576 = vmatmul.mubr.bf16.gmra.mrb[0].mxu0 %v6517
      %v6577 = vpop.f32.mrb[0].mxu0
      %v6578 = vadd.f32 0.0, %v6577
      %v6579 = vpop.f32.mrb[0].mxu0
      %v6580 = vpop.f32.mrb[0].mxu0
      %v6581 = vadd.f32 0.0, %v6580
      %v6582 = vpop.f32.mrb[0].mxu0
      %6583 = vdwg.mxu0
      %v6585 = vsel %vm4520, %v5717, 0
      %v6588 = vsel %vm4520, %v5718, 0
      %v6591 = vsel %vm4520, %v5719, 0
      %v6594 = vsel %vm4520, %v5720, 0
      %6596 = vmatprep.subr.bf16.mxu0 0
      %6597 = vmatpush1.bf16.msra.mxu0 %v2883
      %6598 = vmatprep.subr.bf16.mxu0 0
      %6599 = vmatpush1.bf16.msra.mxu0 %v2884
      %6600 = vmatprep.subr.bf16.mxu0 0
      %6601 = vmatpush1.bf16.msra.mxu0 %v2885
      %6602 = vmatprep.subr.bf16.mxu0 0
      %6603 = vmatpush1.bf16.msra.mxu0 %v2886
      %6604 = vmatprep.subr.bf16.mxu0 0
      %6605 = vmatpush1.bf16.msra.mxu0 0
      %6606 = vmatprep.subr.bf16.mxu0 0
      %6607 = vmatpush1.bf16.msra.mxu0 0
      %6608 = vmatprep.subr.bf16.mxu0 0
      %6609 = vmatpush1.bf16.msra.mxu0 0
      %6610 = vmatprep.subr.bf16.mxu0 0
      %6611 = vmatpush1.bf16.msra.mxu0 0
      %6612 = vmatprep.subr.bf16.mxu0 0
      %6613 = vmatpush1.bf16.msra.mxu0 0
      %6614 = vmatprep.subr.bf16.mxu0 0
      %6615 = vmatpush1.bf16.msra.mxu0 0
      %6616 = vmatprep.subr.bf16.mxu0 0
      %6617 = vmatpush1.bf16.msra.mxu0 0
      %6618 = vmatprep.subr.bf16.mxu0 0
      %6619 = vmatpush1.bf16.msra.mxu0 0
      %6620 = vmatprep.subr.bf16.mxu0 0
      %6621 = vmatpush1.bf16.msra.mxu0 0
      %6622 = vmatprep.subr.bf16.mxu0 0
      %6623 = vmatpush1.bf16.msra.mxu0 0
      %6624 = vmatprep.subr.bf16.mxu0 0
      %6625 = vmatpush1.bf16.msra.mxu0 0
      %6626 = vmatprep.subr.bf16.mxu0 0
      %6627 = vmatpush1.bf16.msra.mxu0 0
      %6628 = vmatprep.mubr.bf16.mxu0 0
      %6629 = vmatmul.mubr.bf16.gmra.mrb[0].mxu0 %v6585
      %v6630 = vpop.f32.mrb[0].mxu0
      %v6631 = vadd.f32 0.0, %v6630
      %v6632 = vpop.f32.mrb[0].mxu0
      %v6633 = vpop.f32.mrb[0].mxu0
      %v6634 = vadd.f32 0.0, %v6633
      %v6635 = vpop.f32.mrb[0].mxu0
      %6636 = vmatprep.mubr.bf16.mxu0 0
      %6637 = vmatmul.mubr.bf16.gmra.mrb[0].mxu0 %v6588
      %v6638 = vpop.f32.mrb[0].mxu0
      %v6639 = vadd.f32 0.0, %v6638
      %v6640 = vpop.f32.mrb[0].mxu0
      %v6641 = vpop.f32.mrb[0].mxu0
      %v6642 = vadd.f32 0.0, %v6641
      %v6643 = vpop.f32.mrb[0].mxu0
      %6644 = vmatprep.mubr.bf16.mxu0 0
      %6645 = vmatmul.mubr.bf16.gmra.mrb[0].mxu0 %v6591
      %v6646 = vpop.f32.mrb[0].mxu0
      %v6647 = vadd.f32 0.0, %v6646
      %v6648 = vpop.f32.mrb[0].mxu0
      %v6649 = vpop.f32.mrb[0].mxu0
      %v6650 = vadd.f32 0.0, %v6649
      %v6651 = vpop.f32.mrb[0].mxu0
      %6652 = vmatprep.mubr.bf16.mxu0 0
      %6653 = vmatmul.mubr.bf16.gmra.mrb[0].mxu0 %v6594
      %v6654 = vpop.f32.mrb[0].mxu0
      %v6655 = vadd.f32 0.0, %v6654
      %v6656 = vpop.f32.mrb[0].mxu0
      %v6657 = vpop.f32.mrb[0].mxu0
      %v6658 = vadd.f32 0.0, %v6657
      %v6659 = vpop.f32.mrb[0].mxu0
      %6660 = vdwg.mxu0
      %v6662 = vsel %vm4520, %v5721, 0
      %v6665 = vsel %vm4520, %v5722, 0
      %v6668 = vsel %vm4520, %v5723, 0
      %v6671 = vsel %vm4520, %v5724, 0
      %6673 = vmatprep.subr.bf16.mxu0 0
      %6674 = vmatpush1.bf16.msra.mxu0 %v2887
      %6675 = vmatprep.subr.bf16.mxu0 0
      %6676 = vmatpush1.bf16.msra.mxu0 %v2888
      %6677 = vmatprep.subr.bf16.mxu0 0
      %6678 = vmatpush1.bf16.msra.mxu0 %v2889
      %6679 = vmatprep.subr.bf16.mxu0 0
      %6680 = vmatpush1.bf16.msra.mxu0 %v2890
      %6681 = vmatprep.subr.bf16.mxu0 0
      %6682 = vmatpush1.bf16.msra.mxu0 0
      %6683 = vmatprep.subr.bf16.mxu0 0
      %6684 = vmatpush1.bf16.msra.mxu0 0
      %6685 = vmatprep.subr.bf16.mxu0 0
      %6686 = vmatpush1.bf16.msra.mxu0 0
      %6687 = vmatprep.subr.bf16.mxu0 0
      %6688 = vmatpush1.bf16.msra.mxu0 0
      %6689 = vmatprep.subr.bf16.mxu0 0
      %6690 = vmatpush1.bf16.msra.mxu0 0
      %6691 = vmatprep.subr.bf16.mxu0 0
      %6692 = vmatpush1.bf16.msra.mxu0 0
      %6693 = vmatprep.subr.bf16.mxu0 0
      %6694 = vmatpush1.bf16.msra.mxu0 0
      %6695 = vmatprep.subr.bf16.mxu0 0
      %6696 = vmatpush1.bf16.msra.mxu0 0
      %6697 = vmatprep.subr.bf16.mxu0 0
      %6698 = vmatpush1.bf16.msra.mxu0 0
      %6699 = vmatprep.subr.bf16.mxu0 0
      %6700 = vmatpush1.bf16.msra.mxu0 0
      %6701 = vmatprep.subr.bf16.mxu0 0
      %6702 = vmatpush1.bf16.msra.mxu0 0
      %6703 = vmatprep.subr.bf16.mxu0 0
      %6704 = vmatpush1.bf16.msra.mxu0 0
      %6705 = vmatprep.mubr.bf16.mxu0 0
      %6706 = vmatmul.mubr.bf16.gmra.mrb[0].mxu0 %v6662
      %v6707 = vpop.f32.mrb[0].mxu0
      %v6708 = vadd.f32 0.0, %v6707
      %v6709 = vpop.f32.mrb[0].mxu0
      %v6710 = vpop.f32.mrb[0].mxu0
      %v6711 = vadd.f32 0.0, %v6710
      %v6712 = vpop.f32.mrb[0].mxu0
      %6713 = vmatprep.mubr.bf16.mxu0 0
      %6714 = vmatmul.mubr.bf16.gmra.mrb[0].mxu0 %v6665
      %v6715 = vpop.f32.mrb[0].mxu0
      %v6716 = vadd.f32 0.0, %v6715
      %v6717 = vpop.f32.mrb[0].mxu0
      %v6718 = vpop.f32.mrb[0].mxu0
      %v6719 = vadd.f32 0.0, %v6718
      %v6720 = vpop.f32.mrb[0].mxu0
      %6721 = vmatprep.mubr.bf16.mxu0 0
      %6722 = vmatmul.mubr.bf16.gmra.mrb[0].mxu0 %v6668
      %v6723 = vpop.f32.mrb[0].mxu0
      %v6724 = vadd.f32 0.0, %v6723
      %v6725 = vpop.f32.mrb[0].mxu0
      %v6726 = vpop.f32.mrb[0].mxu0
      %v6727 = vadd.f32 0.0, %v6726
      %v6728 = vpop.f32.mrb[0].mxu0
      %6729 = vmatprep.mubr.bf16.mxu0 0
      %6730 = vmatmul.mubr.bf16.gmra.mrb[0].mxu0 %v6671
      %v6731 = vpop.f32.mrb[0].mxu0
      %v6732 = vadd.f32 0.0, %v6731
      %v6733 = vpop.f32.mrb[0].mxu0
      %v6734 = vpop.f32.mrb[0].mxu0
      %v6735 = vadd.f32 0.0, %v6734
      %v6736 = vpop.f32.mrb[0].mxu0
      %6737 = vdwg.mxu0
      %v6739 = vsel %vm4520, %v5725, 0
      %v6742 = vsel %vm4520, %v5726, 0
      %v6745 = vsel %vm4520, %v5727, 0
      %v6748 = vsel %vm4520, %v5728, 0
      %6750 = vmatprep.subr.bf16.mxu0 0
      %6751 = vmatpush1.bf16.msra.mxu0 %v2891
      %6752 = vmatprep.subr.bf16.mxu0 0
      %6753 = vmatpush1.bf16.msra.mxu0 %v2892
      %6754 = vmatprep.subr.bf16.mxu0 0
      %6755 = vmatpush1.bf16.msra.mxu0 %v2893
      %6756 = vmatprep.subr.bf16.mxu0 0
      %6757 = vmatpush1.bf16.msra.mxu0 %v2894
      %6758 = vmatprep.subr.bf16.mxu0 0
      %6759 = vmatpush1.bf16.msra.mxu0 0
      %6760 = vmatprep.subr.bf16.mxu0 0
      %6761 = vmatpush1.bf16.msra.mxu0 0
      %6762 = vmatprep.subr.bf16.mxu0 0
      %6763 = vmatpush1.bf16.msra.mxu0 0
      %6764 = vmatprep.subr.bf16.mxu0 0
      %6765 = vmatpush1.bf16.msra.mxu0 0
      %6766 = vmatprep.subr.bf16.mxu0 0
      %6767 = vmatpush1.bf16.msra.mxu0 0
      %6768 = vmatprep.subr.bf16.mxu0 0
      %6769 = vmatpush1.bf16.msra.mxu0 0
      %6770 = vmatprep.subr.bf16.mxu0 0
      %6771 = vmatpush1.bf16.msra.mxu0 0
      %6772 = vmatprep.subr.bf16.mxu0 0
      %6773 = vmatpush1.bf16.msra.mxu0 0
      %6774 = vmatprep.subr.bf16.mxu0 0
      %6775 = vmatpush1.bf16.msra.mxu0 0
      %6776 = vmatprep.subr.bf16.mxu0 0
      %6777 = vmatpush1.bf16.msra.mxu0 0
      %6778 = vmatprep.subr.bf16.mxu0 0
      %6779 = vmatpush1.bf16.msra.mxu0 0
      %6780 = vmatprep.subr.bf16.mxu0 0
      %6781 = vmatpush1.bf16.msra.mxu0 0
      %6782 = vmatprep.mubr.bf16.mxu0 0
      %6783 = vmatmul.mubr.bf16.gmra.mrb[0].mxu0 %v6739
      %v6784 = vpop.f32.mrb[0].mxu0
      %v6785 = vadd.f32 0.0, %v6784
      %v6786 = vpop.f32.mrb[0].mxu0
      %v6787 = vpop.f32.mrb[0].mxu0
      %v6788 = vadd.f32 0.0, %v6787
      %v6789 = vpop.f32.mrb[0].mxu0
      %6790 = vmatprep.mubr.bf16.mxu0 0
      %6791 = vmatmul.mubr.bf16.gmra.mrb[0].mxu0 %v6742
      %v6792 = vpop.f32.mrb[0].mxu0
      %v6793 = vadd.f32 0.0, %v6792
      %v6794 = vpop.f32.mrb[0].mxu0
      %v6795 = vpop.f32.mrb[0].mxu0
      %v6796 = vadd.f32 0.0, %v6795
      %v6797 = vpop.f32.mrb[0].mxu0
      %6798 = vmatprep.mubr.bf16.mxu0 0
      %6799 = vmatmul.mubr.bf16.gmra.mrb[0].mxu0 %v6745
      %v6800 = vpop.f32.mrb[0].mxu0
      %v6801 = vadd.f32 0.0, %v6800
      %v6802 = vpop.f32.mrb[0].mxu0
      %v6803 = vpop.f32.mrb[0].mxu0
      %v6804 = vadd.f32 0.0, %v6803
      %v6805 = vpop.f32.mrb[0].mxu0
      %6806 = vmatprep.mubr.bf16.mxu0 0
      %6807 = vmatmul.mubr.bf16.gmra.mrb[0].mxu0 %v6748
      %v6808 = vpop.f32.mrb[0].mxu0
      %v6809 = vadd.f32 0.0, %v6808
      %v6810 = vpop.f32.mrb[0].mxu0
      %v6811 = vpop.f32.mrb[0].mxu0
      %v6812 = vadd.f32 0.0, %v6811
      %v6813 = vpop.f32.mrb[0].mxu0
      %6814 = vdwg.mxu0
      %v6816 = vsel %vm4520, %v5729, 0
      %v6819 = vsel %vm4520, %v5730, 0
      %v6822 = vsel %vm4520, %v5731, 0
      %v6825 = vsel %vm4520, %v5732, 0
      %6827 = vmatprep.subr.bf16.mxu0 0
      %6828 = vmatpush1.bf16.msra.mxu0 %v2895
      %6829 = vmatprep.subr.bf16.mxu0 0
      %6830 = vmatpush1.bf16.msra.mxu0 %v2896
      %6831 = vmatprep.subr.bf16.mxu0 0
      %6832 = vmatpush1.bf16.msra.mxu0 %v2897
      %6833 = vmatprep.subr.bf16.mxu0 0
      %6834 = vmatpush1.bf16.msra.mxu0 %v2898
      %6835 = vmatprep.subr.bf16.mxu0 0
      %6836 = vmatpush1.bf16.msra.mxu0 0
      %6837 = vmatprep.subr.bf16.mxu0 0
      %6838 = vmatpush1.bf16.msra.mxu0 0
      %6839 = vmatprep.subr.bf16.mxu0 0
      %6840 = vmatpush1.bf16.msra.mxu0 0
      %6841 = vmatprep.subr.bf16.mxu0 0
      %6842 = vmatpush1.bf16.msra.mxu0 0
      %6843 = vmatprep.subr.bf16.mxu0 0
      %6844 = vmatpush1.bf16.msra.mxu0 0
      %6845 = vmatprep.subr.bf16.mxu0 0
      %6846 = vmatpush1.bf16.msra.mxu0 0
      %6847 = vmatprep.subr.bf16.mxu0 0
      %6848 = vmatpush1.bf16.msra.mxu0 0
      %6849 = vmatprep.subr.bf16.mxu0 0
      %6850 = vmatpush1.bf16.msra.mxu0 0
      %6851 = vmatprep.subr.bf16.mxu0 0
      %6852 = vmatpush1.bf16.msra.mxu0 0
      %6853 = vmatprep.subr.bf16.mxu0 0
      %6854 = vmatpush1.bf16.msra.mxu0 0
      %6855 = vmatprep.subr.bf16.mxu0 0
      %6856 = vmatpush1.bf16.msra.mxu0 0
      %6857 = vmatprep.subr.bf16.mxu0 0
      %6858 = vmatpush1.bf16.msra.mxu0 0
      %6859 = vmatprep.mubr.bf16.mxu0 0
      %6860 = vmatmul.mubr.bf16.gmra.mrb[0].mxu0 %v6816
      %v6861 = vpop.f32.mrb[0].mxu0
      %v6862 = vadd.f32 0.0, %v6861
      %v6863 = vpop.f32.mrb[0].mxu0
      %v6864 = vpop.f32.mrb[0].mxu0
      %v6865 = vadd.f32 0.0, %v6864
      %v6866 = vpop.f32.mrb[0].mxu0
      %6867 = vmatprep.mubr.bf16.mxu0 0
      %6868 = vmatmul.mubr.bf16.gmra.mrb[0].mxu0 %v6819
      %v6869 = vpop.f32.mrb[0].mxu0
      %v6870 = vadd.f32 0.0, %v6869
      %v6871 = vpop.f32.mrb[0].mxu0
      %v6872 = vpop.f32.mrb[0].mxu0
      %v6873 = vadd.f32 0.0, %v6872
      %v6874 = vpop.f32.mrb[0].mxu0
      %6875 = vmatprep.mubr.bf16.mxu0 0
      %6876 = vmatmul.mubr.bf16.gmra.mrb[0].mxu0 %v6822
      %v6877 = vpop.f32.mrb[0].mxu0
      %v6878 = vadd.f32 0.0, %v6877
      %v6879 = vpop.f32.mrb[0].mxu0
      %v6880 = vpop.f32.mrb[0].mxu0
      %v6881 = vadd.f32 0.0, %v6880
      %v6882 = vpop.f32.mrb[0].mxu0
      %6883 = vmatprep.mubr.bf16.mxu0 0
      %6884 = vmatmul.mubr.bf16.gmra.mrb[0].mxu0 %v6825
      %v6885 = vpop.f32.mrb[0].mxu0
      %v6886 = vadd.f32 0.0, %v6885
      %v6887 = vpop.f32.mrb[0].mxu0
      %v6888 = vpop.f32.mrb[0].mxu0
      %v6889 = vadd.f32 0.0, %v6888
      %v6890 = vpop.f32.mrb[0].mxu0
      %6891 = vdwg.mxu0
      %v6893 = vsel %vm4520, %v5733, 0
      %v6896 = vsel %vm4520, %v5734, 0
      %v6899 = vsel %vm4520, %v5735, 0
      %v6902 = vsel %vm4520, %v5736, 0
      %6904 = vmatprep.subr.bf16.mxu0 0
      %6905 = vmatpush1.bf16.msra.mxu0 %v2899
      %6906 = vmatprep.subr.bf16.mxu0 0
      %6907 = vmatpush1.bf16.msra.mxu0 %v2900
      %6908 = vmatprep.subr.bf16.mxu0 0
      %6909 = vmatpush1.bf16.msra.mxu0 %v2901
      %6910 = vmatprep.subr.bf16.mxu0 0
      %6911 = vmatpush1.bf16.msra.mxu0 %v2902
      %6912 = vmatprep.subr.bf16.mxu0 0
      %6913 = vmatpush1.bf16.msra.mxu0 0
      %6914 = vmatprep.subr.bf16.mxu0 0
      %6915 = vmatpush1.bf16.msra.mxu0 0
      %6916 = vmatprep.subr.bf16.mxu0 0
      %6917 = vmatpush1.bf16.msra.mxu0 0
      %6918 = vmatprep.subr.bf16.mxu0 0
      %6919 = vmatpush1.bf16.msra.mxu0 0
      %6920 = vmatprep.subr.bf16.mxu0 0
      %6921 = vmatpush1.bf16.msra.mxu0 0
      %6922 = vmatprep.subr.bf16.mxu0 0
      %6923 = vmatpush1.bf16.msra.mxu0 0
      %6924 = vmatprep.subr.bf16.mxu0 0
      %6925 = vmatpush1.bf16.msra.mxu0 0
      %6926 = vmatprep.subr.bf16.mxu0 0
      %6927 = vmatpush1.bf16.msra.mxu0 0
      %6928 = vmatprep.subr.bf16.mxu0 0
      %6929 = vmatpush1.bf16.msra.mxu0 0
      %6930 = vmatprep.subr.bf16.mxu0 0
      %6931 = vmatpush1.bf16.msra.mxu0 0
      %6932 = vmatprep.subr.bf16.mxu0 0
      %6933 = vmatpush1.bf16.msra.mxu0 0
      %6934 = vmatprep.subr.bf16.mxu0 0
      %6935 = vmatpush1.bf16.msra.mxu0 0
      %6936 = vmatprep.mubr.bf16.mxu0 0
      %6937 = vmatmul.mubr.bf16.gmra.mrb[0].mxu0 %v6893
      %v6938 = vpop.f32.mrb[0].mxu0
      %v6939 = vadd.f32 0.0, %v6938
      %v6940 = vpop.f32.mrb[0].mxu0
      %v6941 = vpop.f32.mrb[0].mxu0
      %v6942 = vadd.f32 0.0, %v6941
      %v6943 = vpop.f32.mrb[0].mxu0
      %6944 = vmatprep.mubr.bf16.mxu0 0
      %6945 = vmatmul.mubr.bf16.gmra.mrb[0].mxu0 %v6896
      %v6946 = vpop.f32.mrb[0].mxu0
      %v6947 = vadd.f32 0.0, %v6946
      %v6948 = vpop.f32.mrb[0].mxu0
      %v6949 = vpop.f32.mrb[0].mxu0
      %v6950 = vadd.f32 0.0, %v6949
      %v6951 = vpop.f32.mrb[0].mxu0
      %6952 = vmatprep.mubr.bf16.mxu0 0
      %6953 = vmatmul.mubr.bf16.gmra.mrb[0].mxu0 %v6899
      %v6954 = vpop.f32.mrb[0].mxu0
      %v6955 = vadd.f32 0.0, %v6954
      %v6956 = vpop.f32.mrb[0].mxu0
      %v6957 = vpop.f32.mrb[0].mxu0
      %v6958 = vadd.f32 0.0, %v6957
      %v6959 = vpop.f32.mrb[0].mxu0
      %6960 = vmatprep.mubr.bf16.mxu0 0
      %6961 = vmatmul.mubr.bf16.gmra.mrb[0].mxu0 %v6902
      %v6962 = vpop.f32.mrb[0].mxu0
      %v6963 = vadd.f32 0.0, %v6962
      %v6964 = vpop.f32.mrb[0].mxu0
      %v6965 = vpop.f32.mrb[0].mxu0
      %v6966 = vadd.f32 0.0, %v6965
      %v6967 = vpop.f32.mrb[0].mxu0
      %6968 = vdwg.mxu0
      %v6969 = vrcp.pop %v5291
      %v6970 = vrcp.pop %v5294
      %v6971 = vrcp.pop %v5297
      %v6972 = vrcp.pop %v5300
      %v6973 = vrcp.pop %v5303
      %v6974 = vrcp.pop %v5306
      %v6975 = vrcp.pop %v5309
      %v6976 = vrcp.pop %v5312
      %v6977 = vrcp.pop %v5315
      %v6978 = vrcp.pop %v5318
      %v6979 = vrcp.pop %v5321
      %v6980 = vrcp.pop %v5324
      %v6981 = vrcp.pop %v5327
      %v6982 = vrcp.pop %v5330
      %v6983 = vrcp.pop %v5333
      %v6984 = vrcp.pop %v5336
      %v6985 = vrcp.pop %v5339
      %v6986 = vrcp.pop %v5342
      %v6987 = vrcp.pop %v5345
      %v6988 = vrcp.pop %v5348
      %v6989 = vrcp.pop %v5351
      %v6990 = vrcp.pop %v5354
      %v6991 = vrcp.pop %v5357
      %v6992 = vrcp.pop %v5360
      %v6993 = vrcp.pop %v5363
      %v6994 = vrcp.pop %v5366
      %v6995 = vrcp.pop %v5369
      %v6996 = vrcp.pop %v5372
      %v6997 = vrcp.pop %v5375
      %v6998 = vrcp.pop %v5378
      %v6999 = vrcp.pop %v5381
      %v7000 = vrcp.pop %v5384
      %v7001 = vrcp.pop %v5387
      %v7002 = vrcp.pop %v5390
      %v7003 = vrcp.pop %v5393
      %v7004 = vrcp.pop %v5396
      %v7005 = vrcp.pop %v5399
      %v7006 = vrcp.pop %v5402
      %v7007 = vrcp.pop %v5405
      %v7008 = vrcp.pop %v5408
      %v7009 = vrcp.pop %v5411
      %v7010 = vrcp.pop %v5414
      %v7011 = vrcp.pop %v5417
      %v7012 = vrcp.pop %v5420
      %v7013 = vrcp.pop %v5423
      %v7014 = vrcp.pop %v5426
      %v7015 = vrcp.pop %v5429
      %v7016 = vrcp.pop %v5432
      %v7017 = vrcp.pop %v5435
      %v7018 = vrcp.pop %v5438
      %v7019 = vrcp.pop %v5441
      %v7020 = vrcp.pop %v5444
      %v7021 = vrcp.pop %v5447
      %v7022 = vrcp.pop %v5450
      %v7023 = vrcp.pop %v5453
      %v7024 = vrcp.pop %v5456
      %v7025 = vrcp.pop %v5459
      %v7026 = vrcp.pop %v5462
      %v7027 = vrcp.pop %v5465
      %v7028 = vrcp.pop %v5468
      %v7029 = vrcp.pop %v5471
      %v7030 = vrcp.pop %v5474
      %v7031 = vrcp.pop %v5477
      %v7032 = vrcp.pop %v5480
      %v7033 = vrcp.pop %v5483
      %v7034 = vrcp.pop %v5486
      %v7035 = vrcp.pop %v5489
      %v7036 = vrcp.pop %v5492
      %v7037 = vrcp.pop %v5495
      %v7038 = vrcp.pop %v5498
      %v7039 = vrcp.pop %v5501
      %v7040 = vrcp.pop %v5504
      %v7041 = vrcp.pop %v5507
      %v7042 = vrcp.pop %v5510
      %v7043 = vrcp.pop %v5513
      %v7044 = vrcp.pop %v5516
      %v7045 = vrcp.pop %v5519
      %v7046 = vrcp.pop %v5522
      %v7047 = vrcp.pop %v5525
      %v7048 = vrcp.pop %v5528
      %v7049 = vrcp.pop %v5531
      %v7050 = vrcp.pop %v5534
      %v7051 = vrcp.pop %v5537
      %v7052 = vrcp.pop %v5540
      %v7053 = vrcp.pop %v5543
      %v7054 = vrcp.pop %v5546
      %v7055 = vrcp.pop %v5549
      %v7056 = vrcp.pop %v5552
      %v7057 = vrcp.pop %v5555
      %v7058 = vrcp.pop %v5558
      %v7059 = vrcp.pop %v5561
      %v7060 = vrcp.pop %v5564
      %v7061 = vrcp.pop %v5567
      %v7062 = vrcp.pop %v5570
      %v7063 = vrcp.pop %v5573
      %v7064 = vrcp.pop %v5576
      %v7065 = vrcp.pop %v5579
      %v7066 = vrcp.pop %v5582
      %v7067 = vrcp.pop %v5585
      %v7068 = vrcp.pop %v5588
      %v7069 = vrcp.pop %v5591
      %v7070 = vrcp.pop %v5594
      %v7071 = vrcp.pop %v5597
      %v7072 = vrcp.pop %v5600
      %v7073 = vrcp.pop %v5603
      %v7074 = vrcp.pop %v5606
      %v7075 = vrcp.pop %v5609
      %v7076 = vrcp.pop %v5612
      %v7077 = vrcp.pop %v5615
      %v7078 = vrcp.pop %v5618
      %v7079 = vrcp.pop %v5621
      %v7080 = vrcp.pop %v5624
      %v7081 = vrcp.pop %v5627
      %v7082 = vrcp.pop %v5630
      %v7083 = vrcp.pop %v5633
      %v7084 = vrcp.pop %v5636
      %v7085 = vrcp.pop %v5639
      %v7086 = vrcp.pop %v5642
      %v7087 = vrcp.pop %v5645
      %v7088 = vrcp.pop %v5648
      %v7089 = vrcp.pop %v5651
      %v7090 = vrcp.pop %v5654
      %v7091 = vrcp.pop %v5657
      %v7092 = vrcp.pop %v5660
      %v7093 = vrcp.pop %v5663
      %v7094 = vrcp.pop %v5666
      %v7095 = vrcp.pop %v5669
      %v7096 = vrcp.pop %v5672
      %v7097 = vmul.f32 %v5784, %v6969
      %v7098 = vmul.f32 %v5787, %v6970
      %v7099 = vmul.f32 %v5792, %v6971
      %v7100 = vmul.f32 %v5795, %v6972
      %v7101 = vmul.f32 %v5800, %v6973
      %v7102 = vmul.f32 %v5803, %v6974
      %v7103 = vmul.f32 %v5808, %v6975
      %v7104 = vmul.f32 %v5811, %v6976
      %v7105 = vmul.f32 %v5861, %v6977
      %v7106 = vmul.f32 %v5864, %v6978
      %v7107 = vmul.f32 %v5869, %v6979
      %v7108 = vmul.f32 %v5872, %v6980
      %v7109 = vmul.f32 %v5877, %v6981
      %v7110 = vmul.f32 %v5880, %v6982
      %v7111 = vmul.f32 %v5885, %v6983
      %v7112 = vmul.f32 %v5888, %v6984
      %v7113 = vmul.f32 %v5938, %v6985
      %v7114 = vmul.f32 %v5941, %v6986
      %v7115 = vmul.f32 %v5946, %v6987
      %v7116 = vmul.f32 %v5949, %v6988
      %v7117 = vmul.f32 %v5954, %v6989
      %v7118 = vmul.f32 %v5957, %v6990
      %v7119 = vmul.f32 %v5962, %v6991
      %v7120 = vmul.f32 %v5965, %v6992
      %v7121 = vmul.f32 %v6015, %v6993
      %v7122 = vmul.f32 %v6018, %v6994
      %v7123 = vmul.f32 %v6023, %v6995
      %v7124 = vmul.f32 %v6026, %v6996
      %v7125 = vmul.f32 %v6031, %v6997
      %v7126 = vmul.f32 %v6034, %v6998
      %v7127 = vmul.f32 %v6039, %v6999
      %v7128 = vmul.f32 %v6042, %v7000
      %v7129 = vmul.f32 %v6092, %v7001
      %v7130 = vmul.f32 %v6095, %v7002
      %v7131 = vmul.f32 %v6100, %v7003
      %v7132 = vmul.f32 %v6103, %v7004
      %v7133 = vmul.f32 %v6108, %v7005
      %v7134 = vmul.f32 %v6111, %v7006
      %v7135 = vmul.f32 %v6116, %v7007
      %v7136 = vmul.f32 %v6119, %v7008
      %v7137 = vmul.f32 %v6169, %v7009
      %v7138 = vmul.f32 %v6172, %v7010
      %v7139 = vmul.f32 %v6177, %v7011
      %v7140 = vmul.f32 %v6180, %v7012
      %v7141 = vmul.f32 %v6185, %v7013
      %v7142 = vmul.f32 %v6188, %v7014
      %v7143 = vmul.f32 %v6193, %v7015
      %v7144 = vmul.f32 %v6196, %v7016
      %v7145 = vmul.f32 %v6246, %v7017
      %v7146 = vmul.f32 %v6249, %v7018
      %v7147 = vmul.f32 %v6254, %v7019
      %v7148 = vmul.f32 %v6257, %v7020
      %v7149 = vmul.f32 %v6262, %v7021
      %v7150 = vmul.f32 %v6265, %v7022
      %v7151 = vmul.f32 %v6270, %v7023
      %v7152 = vmul.f32 %v6273, %v7024
      %v7153 = vmul.f32 %v6323, %v7025
      %v7154 = vmul.f32 %v6326, %v7026
      %v7155 = vmul.f32 %v6331, %v7027
      %v7156 = vmul.f32 %v6334, %v7028
      %v7157 = vmul.f32 %v6339, %v7029
      %v7158 = vmul.f32 %v6342, %v7030
      %v7159 = vmul.f32 %v6347, %v7031
      %v7160 = vmul.f32 %v6350, %v7032
      %v7161 = vmul.f32 %v6400, %v7033
      %v7162 = vmul.f32 %v6403, %v7034
      %v7163 = vmul.f32 %v6408, %v7035
      %v7164 = vmul.f32 %v6411, %v7036
      %v7165 = vmul.f32 %v6416, %v7037
      %v7166 = vmul.f32 %v6419, %v7038
      %v7167 = vmul.f32 %v6424, %v7039
      %v7168 = vmul.f32 %v6427, %v7040
      %v7169 = vmul.f32 %v6477, %v7041
      %v7170 = vmul.f32 %v6480, %v7042
      %v7171 = vmul.f32 %v6485, %v7043
      %v7172 = vmul.f32 %v6488, %v7044
      %v7173 = vmul.f32 %v6493, %v7045
      %v7174 = vmul.f32 %v6496, %v7046
      %v7175 = vmul.f32 %v6501, %v7047
      %v7176 = vmul.f32 %v6504, %v7048
      %v7177 = vmul.f32 %v6554, %v7049
      %v7178 = vmul.f32 %v6557, %v7050
      %v7179 = vmul.f32 %v6562, %v7051
      %v7180 = vmul.f32 %v6565, %v7052
      %v7181 = vmul.f32 %v6570, %v7053
      %v7182 = vmul.f32 %v6573, %v7054
      %v7183 = vmul.f32 %v6578, %v7055
      %v7184 = vmul.f32 %v6581, %v7056
      %v7185 = vmul.f32 %v6631, %v7057
      %v7186 = vmul.f32 %v6634, %v7058
      %v7187 = vmul.f32 %v6639, %v7059
      %v7188 = vmul.f32 %v6642, %v7060
      %v7189 = vmul.f32 %v6647, %v7061
      %v7190 = vmul.f32 %v6650, %v7062
      %v7191 = vmul.f32 %v6655, %v7063
      %v7192 = vmul.f32 %v6658, %v7064
      %v7193 = vmul.f32 %v6708, %v7065
      %v7194 = vmul.f32 %v6711, %v7066
      %v7195 = vmul.f32 %v6716, %v7067
      %v7196 = vmul.f32 %v6719, %v7068
      %v7197 = vmul.f32 %v6724, %v7069
      %v7198 = vmul.f32 %v6727, %v7070
      %v7199 = vmul.f32 %v6732, %v7071
      %v7200 = vmul.f32 %v6735, %v7072
      %v7201 = vmul.f32 %v6785, %v7073
      %v7202 = vmul.f32 %v6788, %v7074
      %v7203 = vmul.f32 %v6793, %v7075
      %v7204 = vmul.f32 %v6796, %v7076
      %v7205 = vmul.f32 %v6801, %v7077
      %v7206 = vmul.f32 %v6804, %v7078
      %v7207 = vmul.f32 %v6809, %v7079
      %v7208 = vmul.f32 %v6812, %v7080
      %v7209 = vmul.f32 %v6862, %v7081
      %v7210 = vmul.f32 %v6865, %v7082
      %v7211 = vmul.f32 %v6870, %v7083
      %v7212 = vmul.f32 %v6873, %v7084
      %v7213 = vmul.f32 %v6878, %v7085
      %v7214 = vmul.f32 %v6881, %v7086
      %v7215 = vmul.f32 %v6886, %v7087
      %v7216 = vmul.f32 %v6889, %v7088
      %v7217 = vmul.f32 %v6939, %v7089
      %v7218 = vmul.f32 %v6942, %v7090
      %v7219 = vmul.f32 %v6947, %v7091
      %v7220 = vmul.f32 %v6950, %v7092
      %v7221 = vmul.f32 %v6955, %v7093
      %v7222 = vmul.f32 %v6958, %v7094
      %v7223 = vmul.f32 %v6963, %v7095
      %v7224 = vmul.f32 %v6966, %v7096
      %v7225 = vpack.c.bf16 %v7098, %v7097
      %v7226 = vpack.c.bf16 %v7100, %v7099
      %v7227 = vpack.c.bf16 %v7102, %v7101
      %v7228 = vpack.c.bf16 %v7104, %v7103
      %v7229 = vpack.c.bf16 %v7106, %v7105
      %v7230 = vpack.c.bf16 %v7108, %v7107
      %v7231 = vpack.c.bf16 %v7110, %v7109
      %v7232 = vpack.c.bf16 %v7112, %v7111
      %v7233 = vpack.c.bf16 %v7114, %v7113
      %v7234 = vpack.c.bf16 %v7116, %v7115
      %v7235 = vpack.c.bf16 %v7118, %v7117
      %v7236 = vpack.c.bf16 %v7120, %v7119
      %v7237 = vpack.c.bf16 %v7122, %v7121
      %v7238 = vpack.c.bf16 %v7124, %v7123
      %v7239 = vpack.c.bf16 %v7126, %v7125
      %v7240 = vpack.c.bf16 %v7128, %v7127
      %v7241 = vld [vmem:[%s9] sm:$0xf]
      %v7242 = vpack.c.bf16 %v7130, %v7129
      %v7243 = vpack.c.bf16 %v7132, %v7131
      %v7244 = vpack.c.bf16 %v7134, %v7133
      %v7245 = vpack.c.bf16 %v7136, %v7135
      %v7246 = vpack.c.bf16 %v7138, %v7137
      %v7247 = vpack.c.bf16 %v7140, %v7139
      %v7248 = vpack.c.bf16 %v7142, %v7141
      %v7249 = vpack.c.bf16 %v7144, %v7143
      %v7250 = vpack.c.bf16 %v7146, %v7145
      %v7251 = vpack.c.bf16 %v7148, %v7147
      %v7252 = vpack.c.bf16 %v7150, %v7149
      %v7253 = vpack.c.bf16 %v7152, %v7151
      %v7254 = vpack.c.bf16 %v7154, %v7153
      %v7255 = vpack.c.bf16 %v7156, %v7155
      %v7256 = vpack.c.bf16 %v7158, %v7157
      %v7257 = vpack.c.bf16 %v7160, %v7159
      %s7258 = scalar_lea.vmem %s9, 4
      %v7259 = vld [vmem:[%s7258] sm:$0xf]
      %v7261 = vsel %vm2903, %v7242, 0
      %v7264 = vsel %vm2903, %v7243, 0
      %v7267 = vsel %vm2903, %v7244, 0
      %v7270 = vsel %vm2903, %v7245, 0
      %v7273 = vsel %vm2903, %v7246, 0
      %v7276 = vsel %vm2903, %v7247, 0
      %v7279 = vsel %vm2903, %v7248, 0
      %v7282 = vsel %vm2903, %v7249, 0
      %v7285 = vsel %vm2903, %v7250, 0
      %v7288 = vsel %vm2903, %v7251, 0
      %v7291 = vsel %vm2903, %v7252, 0
      %v7294 = vsel %vm2903, %v7253, 0
      %v7297 = vsel %vm2903, %v7254, 0
      %v7300 = vsel %vm2903, %v7255, 0
      %v7303 = vsel %vm2903, %v7256, 0
      %v7306 = vsel %vm2903, %v7257, 0
      %vm7308 = vcmask 1043456
      %v7310 = vsel %vm7308, %v7259, 0
      %7312 = vmatprep.subr.bf16.mxu0 0
      %7313 = vmatpush1.bf16.msra.mxu0 %v7310
      %7314 = vmatprep.subr.bf16.mxu0 0
      %7315 = vmatpush1.bf16.msra.mxu0 0
      %7316 = vmatprep.subr.bf16.mxu0 0
      %7317 = vmatpush1.bf16.msra.mxu0 0
      %7318 = vmatprep.subr.bf16.mxu0 0
      %7319 = vmatpush1.bf16.msra.mxu0 0
      %7320 = vmatprep.subr.bf16.mxu0 0
      %7321 = vmatpush1.bf16.msra.mxu0 0
      %7322 = vmatprep.subr.bf16.mxu0 0
      %7323 = vmatpush1.bf16.msra.mxu0 0
      %7324 = vmatprep.subr.bf16.mxu0 0
      %7325 = vmatpush1.bf16.msra.mxu0 0
      %7326 = vmatprep.subr.bf16.mxu0 0
      %7327 = vmatpush1.bf16.msra.mxu0 0
      %7328 = vmatprep.subr.bf16.mxu0 0
      %7329 = vmatpush1.bf16.msra.mxu0 0
      %7330 = vmatprep.subr.bf16.mxu0 0
      %7331 = vmatpush1.bf16.msra.mxu0 0
      %7332 = vmatprep.subr.bf16.mxu0 0
      %7333 = vmatpush1.bf16.msra.mxu0 0
      %7334 = vmatprep.subr.bf16.mxu0 0
      %7335 = vmatpush1.bf16.msra.mxu0 0
      %7336 = vmatprep.subr.bf16.mxu0 0
      %7337 = vmatpush1.bf16.msra.mxu0 0
      %7338 = vmatprep.subr.bf16.mxu0 0
      %7339 = vmatpush1.bf16.msra.mxu0 0
      %7340 = vmatprep.subr.bf16.mxu0 0
      %7341 = vmatpush1.bf16.msra.mxu0 0
      %7342 = vmatprep.subr.bf16.mxu0 0
      %7343 = vmatpush1.bf16.msra.mxu0 0
      %7344 = vmatprep.mubr.bf16.mxu0 0
      %7345 = vmatmul.mubr.bf16.gmra.mrb[0].mxu0 %v7261
      %v7346 = vpop.f32.mrb[0].mxu0
      %v7347 = vadd.f32 0.0, %v7346
      %v7348 = vpop.f32.mrb[0].mxu0
      %v7349 = vpop.f32.mrb[0].mxu0
      %v7350 = vadd.f32 0.0, %v7349
      %v7351 = vpop.f32.mrb[0].mxu0
      %7352 = vmatprep.mubr.bf16.mxu0 0
      %7353 = vmatmul.mubr.bf16.gmra.mrb[0].mxu0 %v7264
      %v7354 = vpop.f32.mrb[0].mxu0
      %v7355 = vadd.f32 0.0, %v7354
      %v7356 = vpop.f32.mrb[0].mxu0
      %v7357 = vpop.f32.mrb[0].mxu0
      %v7358 = vadd.f32 0.0, %v7357
      %v7359 = vpop.f32.mrb[0].mxu0
      %7360 = vmatprep.mubr.bf16.mxu0 0
      %7361 = vmatmul.mubr.bf16.gmra.mrb[0].mxu0 %v7267
      %v7362 = vpop.f32.mrb[0].mxu0
      %v7363 = vadd.f32 0.0, %v7362
      %v7364 = vpop.f32.mrb[0].mxu0
      %v7365 = vpop.f32.mrb[0].mxu0
      %v7366 = vadd.f32 0.0, %v7365
      %v7367 = vpop.f32.mrb[0].mxu0
      %7368 = vmatprep.mubr.bf16.mxu0 0
      %7369 = vmatmul.mubr.bf16.gmra.mrb[0].mxu0 %v7270
      %v7370 = vpop.f32.mrb[0].mxu0
      %v7371 = vadd.f32 0.0, %v7370
      %v7372 = vpop.f32.mrb[0].mxu0
      %v7373 = vpop.f32.mrb[0].mxu0
      %v7374 = vadd.f32 0.0, %v7373
      %v7375 = vpop.f32.mrb[0].mxu0
      %7376 = vmatprep.mubr.bf16.mxu0 0
      %7377 = vmatmul.mubr.bf16.gmra.mrb[0].mxu0 %v7273
      %v7378 = vpop.f32.mrb[0].mxu0
      %v7379 = vadd.f32 0.0, %v7378
      %v7380 = vpop.f32.mrb[0].mxu0
      %v7381 = vpop.f32.mrb[0].mxu0
      %v7382 = vadd.f32 0.0, %v7381
      %v7383 = vpop.f32.mrb[0].mxu0
      %7384 = vmatprep.mubr.bf16.mxu0 0
      %7385 = vmatmul.mubr.bf16.gmra.mrb[0].mxu0 %v7276
      %v7386 = vpop.f32.mrb[0].mxu0
      %v7387 = vadd.f32 0.0, %v7386
      %v7388 = vpop.f32.mrb[0].mxu0
      %v7389 = vpop.f32.mrb[0].mxu0
      %v7390 = vadd.f32 0.0, %v7389
      %v7391 = vpop.f32.mrb[0].mxu0
      %7392 = vmatprep.mubr.bf16.mxu0 0
      %7393 = vmatmul.mubr.bf16.gmra.mrb[0].mxu0 %v7279
      %v7394 = vpop.f32.mrb[0].mxu0
      %v7395 = vadd.f32 0.0, %v7394
      %v7396 = vpop.f32.mrb[0].mxu0
      %v7397 = vpop.f32.mrb[0].mxu0
      %v7398 = vadd.f32 0.0, %v7397
      %v7399 = vpop.f32.mrb[0].mxu0
      %7400 = vmatprep.mubr.bf16.mxu0 0
      %7401 = vmatmul.mubr.bf16.gmra.mrb[0].mxu0 %v7282
      %v7402 = vpop.f32.mrb[0].mxu0
      %v7403 = vadd.f32 0.0, %v7402
      %v7404 = vpop.f32.mrb[0].mxu0
      %v7405 = vpop.f32.mrb[0].mxu0
      %v7406 = vadd.f32 0.0, %v7405
      %v7407 = vpop.f32.mrb[0].mxu0
      %7408 = vmatprep.mubr.bf16.mxu0 0
      %7409 = vmatmul.mubr.bf16.gmra.mrb[0].mxu0 %v7285
      %v7410 = vpop.f32.mrb[0].mxu0
      %v7411 = vadd.f32 0.0, %v7410
      %v7412 = vpop.f32.mrb[0].mxu0
      %v7413 = vpop.f32.mrb[0].mxu0
      %v7414 = vadd.f32 0.0, %v7413
      %v7415 = vpop.f32.mrb[0].mxu0
      %7416 = vmatprep.mubr.bf16.mxu0 0
      %7417 = vmatmul.mubr.bf16.gmra.mrb[0].mxu0 %v7288
      %v7418 = vpop.f32.mrb[0].mxu0
      %v7419 = vadd.f32 0.0, %v7418
      %v7420 = vpop.f32.mrb[0].mxu0
      %v7421 = vpop.f32.mrb[0].mxu0
      %v7422 = vadd.f32 0.0, %v7421
      %v7423 = vpop.f32.mrb[0].mxu0
      %7424 = vmatprep.mubr.bf16.mxu0 0
      %7425 = vmatmul.mubr.bf16.gmra.mrb[0].mxu0 %v7291
      %v7426 = vpop.f32.mrb[0].mxu0
      %v7427 = vadd.f32 0.0, %v7426
      %v7428 = vpop.f32.mrb[0].mxu0
      %v7429 = vpop.f32.mrb[0].mxu0
      %v7430 = vadd.f32 0.0, %v7429
      %v7431 = vpop.f32.mrb[0].mxu0
      %7432 = vmatprep.mubr.bf16.mxu0 0
      %7433 = vmatmul.mubr.bf16.gmra.mrb[0].mxu0 %v7294
      %v7434 = vpop.f32.mrb[0].mxu0
      %v7435 = vadd.f32 0.0, %v7434
      %v7436 = vpop.f32.mrb[0].mxu0
      %v7437 = vpop.f32.mrb[0].mxu0
      %v7438 = vadd.f32 0.0, %v7437
      %v7439 = vpop.f32.mrb[0].mxu0
      %7440 = vmatprep.mubr.bf16.mxu0 0
      %7441 = vmatmul.mubr.bf16.gmra.mrb[0].mxu0 %v7297
      %v7442 = vpop.f32.mrb[0].mxu0
      %v7443 = vadd.f32 0.0, %v7442
      %v7444 = vpop.f32.mrb[0].mxu0
      %v7445 = vpop.f32.mrb[0].mxu0
      %v7446 = vadd.f32 0.0, %v7445
      %v7447 = vpop.f32.mrb[0].mxu0
      %7448 = vmatprep.mubr.bf16.mxu0 0
      %7449 = vmatmul.mubr.bf16.gmra.mrb[0].mxu0 %v7300
      %v7450 = vpop.f32.mrb[0].mxu0
      %v7451 = vadd.f32 0.0, %v7450
      %v7452 = vpop.f32.mrb[0].mxu0
      %v7453 = vpop.f32.mrb[0].mxu0
      %v7454 = vadd.f32 0.0, %v7453
      %v7455 = vpop.f32.mrb[0].mxu0
      %7456 = vmatprep.mubr.bf16.mxu0 0
      %7457 = vmatmul.mubr.bf16.gmra.mrb[0].mxu0 %v7303
      %v7458 = vpop.f32.mrb[0].mxu0
      %v7459 = vadd.f32 0.0, %v7458
      %v7460 = vpop.f32.mrb[0].mxu0
      %v7461 = vpop.f32.mrb[0].mxu0
      %v7462 = vadd.f32 0.0, %v7461
      %v7463 = vpop.f32.mrb[0].mxu0
      %7464 = vmatprep.mubr.bf16.mxu0 0
      %7465 = vmatmul.mubr.bf16.gmra.mrb[0].mxu0 %v7306
      %v7466 = vpop.f32.mrb[0].mxu0
      %v7467 = vadd.f32 0.0, %v7466
      %v7468 = vpop.f32.mrb[0].mxu0
      %v7469 = vpop.f32.mrb[0].mxu0
      %v7470 = vadd.f32 0.0, %v7469
      %v7471 = vpop.f32.mrb[0].mxu0
      %7472 = vdwg.mxu0
      %v7474 = vsel %vm2903, %v7225, 0
      %v7477 = vsel %vm2903, %v7226, 0
      %v7480 = vsel %vm2903, %v7227, 0
      %v7483 = vsel %vm2903, %v7228, 0
      %v7486 = vsel %vm2903, %v7229, 0
      %v7489 = vsel %vm2903, %v7230, 0
      %v7492 = vsel %vm2903, %v7231, 0
      %v7495 = vsel %vm2903, %v7232, 0
      %v7498 = vsel %vm2903, %v7233, 0
      %v7501 = vsel %vm2903, %v7234, 0
      %v7504 = vsel %vm2903, %v7235, 0
      %v7507 = vsel %vm2903, %v7236, 0
      %v7510 = vsel %vm2903, %v7237, 0
      %v7513 = vsel %vm2903, %v7238, 0
      %v7516 = vsel %vm2903, %v7239, 0
      %v7519 = vsel %vm2903, %v7240, 0
      %v7522 = vsel %vm7308, %v7241, 0
      %7524 = vmatprep.subr.bf16.mxu0 0
      %7525 = vmatpush1.bf16.msra.mxu0 %v7522
      %7526 = vmatprep.subr.bf16.mxu0 0
      %7527 = vmatpush1.bf16.msra.mxu0 0
      %7528 = vmatprep.subr.bf16.mxu0 0
      %7529 = vmatpush1.bf16.msra.mxu0 0
      %7530 = vmatprep.subr.bf16.mxu0 0
      %7531 = vmatpush1.bf16.msra.mxu0 0
      %7532 = vmatprep.subr.bf16.mxu0 0
      %7533 = vmatpush1.bf16.msra.mxu0 0
      %7534 = vmatprep.subr.bf16.mxu0 0
      %7535 = vmatpush1.bf16.msra.mxu0 0
      %7536 = vmatprep.subr.bf16.mxu0 0
      %7537 = vmatpush1.bf16.msra.mxu0 0
      %7538 = vmatprep.subr.bf16.mxu0 0
      %7539 = vmatpush1.bf16.msra.mxu0 0
      %7540 = vmatprep.subr.bf16.mxu0 0
      %7541 = vmatpush1.bf16.msra.mxu0 0
      %7542 = vmatprep.subr.bf16.mxu0 0
      %7543 = vmatpush1.bf16.msra.mxu0 0
      %7544 = vmatprep.subr.bf16.mxu0 0
      %7545 = vmatpush1.bf16.msra.mxu0 0
      %7546 = vmatprep.subr.bf16.mxu0 0
      %7547 = vmatpush1.bf16.msra.mxu0 0
      %7548 = vmatprep.subr.bf16.mxu0 0
      %7549 = vmatpush1.bf16.msra.mxu0 0
      %7550 = vmatprep.subr.bf16.mxu0 0
      %7551 = vmatpush1.bf16.msra.mxu0 0
      %7552 = vmatprep.subr.bf16.mxu0 0
      %7553 = vmatpush1.bf16.msra.mxu0 0
      %7554 = vmatprep.subr.bf16.mxu0 0
      %7555 = vmatpush1.bf16.msra.mxu0 0
      %7556 = vmatprep.mubr.bf16.mxu0 0
      %7557 = vmatmul.mubr.bf16.gmra.mrb[0].mxu0 %v7474
      %v7558 = vpop.f32.mrb[0].mxu0
      %v7559 = vadd.f32 %v7347, %v7558
      %v7560 = vpop.f32.mrb[0].mxu0
      %v7561 = vpop.f32.mrb[0].mxu0
      %v7562 = vadd.f32 %v7350, %v7561
      %v7563 = vpop.f32.mrb[0].mxu0
      %7564 = vmatprep.mubr.bf16.mxu0 0
      %7565 = vmatmul.mubr.bf16.gmra.mrb[0].mxu0 %v7477
      %v7566 = vpop.f32.mrb[0].mxu0
      %v7567 = vadd.f32 %v7355, %v7566
      %v7568 = vpop.f32.mrb[0].mxu0
      %v7569 = vpop.f32.mrb[0].mxu0
      %v7570 = vadd.f32 %v7358, %v7569
      %v7571 = vpop.f32.mrb[0].mxu0
      %7572 = vmatprep.mubr.bf16.mxu0 0
      %7573 = vmatmul.mubr.bf16.gmra.mrb[0].mxu0 %v7480
      %v7574 = vpop.f32.mrb[0].mxu0
      %v7575 = vadd.f32 %v7363, %v7574
      %v7576 = vpop.f32.mrb[0].mxu0
      %v7577 = vpop.f32.mrb[0].mxu0
      %v7578 = vadd.f32 %v7366, %v7577
      %v7579 = vpop.f32.mrb[0].mxu0
      %7580 = vmatprep.mubr.bf16.mxu0 0
      %7581 = vmatmul.mubr.bf16.gmra.mrb[0].mxu0 %v7483
      %v7582 = vpop.f32.mrb[0].mxu0
      %v7583 = vadd.f32 %v7371, %v7582
      %v7584 = vpop.f32.mrb[0].mxu0
      %v7585 = vpop.f32.mrb[0].mxu0
      %v7586 = vadd.f32 %v7374, %v7585
      %v7587 = vpop.f32.mrb[0].mxu0
      %7588 = vmatprep.mubr.bf16.mxu0 0
      %7589 = vmatmul.mubr.bf16.gmra.mrb[0].mxu0 %v7486
      %v7590 = vpop.f32.mrb[0].mxu0
      %v7591 = vadd.f32 %v7379, %v7590
      %v7592 = vpop.f32.mrb[0].mxu0
      %v7593 = vpop.f32.mrb[0].mxu0
      %v7594 = vadd.f32 %v7382, %v7593
      %v7595 = vpop.f32.mrb[0].mxu0
      %7596 = vmatprep.mubr.bf16.mxu0 0
      %7597 = vmatmul.mubr.bf16.gmra.mrb[0].mxu0 %v7489
      %v7598 = vpop.f32.mrb[0].mxu0
      %v7599 = vadd.f32 %v7387, %v7598
      %v7600 = vpop.f32.mrb[0].mxu0
      %v7601 = vpop.f32.mrb[0].mxu0
      %v7602 = vadd.f32 %v7390, %v7601
      %v7603 = vpop.f32.mrb[0].mxu0
      %7604 = vmatprep.mubr.bf16.mxu0 0
      %7605 = vmatmul.mubr.bf16.gmra.mrb[0].mxu0 %v7492
      %v7606 = vpop.f32.mrb[0].mxu0
      %v7607 = vadd.f32 %v7395, %v7606
      %v7608 = vpop.f32.mrb[0].mxu0
      %v7609 = vpop.f32.mrb[0].mxu0
      %v7610 = vadd.f32 %v7398, %v7609
      %v7611 = vpop.f32.mrb[0].mxu0
      %7612 = vmatprep.mubr.bf16.mxu0 0
      %7613 = vmatmul.mubr.bf16.gmra.mrb[0].mxu0 %v7495
      %v7614 = vpop.f32.mrb[0].mxu0
      %v7615 = vadd.f32 %v7403, %v7614
      %v7616 = vpop.f32.mrb[0].mxu0
      %v7617 = vpop.f32.mrb[0].mxu0
      %v7618 = vadd.f32 %v7406, %v7617
      %v7619 = vpop.f32.mrb[0].mxu0
      %7620 = vmatprep.mubr.bf16.mxu0 0
      %7621 = vmatmul.mubr.bf16.gmra.mrb[0].mxu0 %v7498
      %v7622 = vpop.f32.mrb[0].mxu0
      %v7623 = vadd.f32 %v7411, %v7622
      %v7624 = vpop.f32.mrb[0].mxu0
      %v7625 = vpop.f32.mrb[0].mxu0
      %v7626 = vadd.f32 %v7414, %v7625
      %v7627 = vpop.f32.mrb[0].mxu0
      %7628 = vmatprep.mubr.bf16.mxu0 0
      %7629 = vmatmul.mubr.bf16.gmra.mrb[0].mxu0 %v7501
      %v7630 = vpop.f32.mrb[0].mxu0
      %v7631 = vadd.f32 %v7419, %v7630
      %v7632 = vpop.f32.mrb[0].mxu0
      %v7633 = vpop.f32.mrb[0].mxu0
      %v7634 = vadd.f32 %v7422, %v7633
      %v7635 = vpop.f32.mrb[0].mxu0
      %7636 = vmatprep.mubr.bf16.mxu0 0
      %7637 = vmatmul.mubr.bf16.gmra.mrb[0].mxu0 %v7504
      %v7638 = vpop.f32.mrb[0].mxu0
      %v7639 = vadd.f32 %v7427, %v7638
      %v7640 = vpop.f32.mrb[0].mxu0
      %v7641 = vpop.f32.mrb[0].mxu0
      %v7642 = vadd.f32 %v7430, %v7641
      %v7643 = vpop.f32.mrb[0].mxu0
      %7644 = vmatprep.mubr.bf16.mxu0 0
      %7645 = vmatmul.mubr.bf16.gmra.mrb[0].mxu0 %v7507
      %v7646 = vpop.f32.mrb[0].mxu0
      %v7647 = vadd.f32 %v7435, %v7646
      %v7648 = vpop.f32.mrb[0].mxu0
      %v7649 = vpop.f32.mrb[0].mxu0
      %v7650 = vadd.f32 %v7438, %v7649
      %v7651 = vpop.f32.mrb[0].mxu0
      %7652 = vmatprep.mubr.bf16.mxu0 0
      %7653 = vmatmul.mubr.bf16.gmra.mrb[0].mxu0 %v7510
      %v7654 = vpop.f32.mrb[0].mxu0
      %v7655 = vadd.f32 %v7443, %v7654
      %v7656 = vpop.f32.mrb[0].mxu0
      %v7657 = vpop.f32.mrb[0].mxu0
      %v7658 = vadd.f32 %v7446, %v7657
      %v7659 = vpop.f32.mrb[0].mxu0
      %7660 = vmatprep.mubr.bf16.mxu0 0
      %7661 = vmatmul.mubr.bf16.gmra.mrb[0].mxu0 %v7513
      %v7662 = vpop.f32.mrb[0].mxu0
      %v7663 = vadd.f32 %v7451, %v7662
      %v7664 = vpop.f32.mrb[0].mxu0
      %v7665 = vpop.f32.mrb[0].mxu0
      %v7666 = vadd.f32 %v7454, %v7665
      %v7667 = vpop.f32.mrb[0].mxu0
      %7668 = vmatprep.mubr.bf16.mxu0 0
      %7669 = vmatmul.mubr.bf16.gmra.mrb[0].mxu0 %v7516
      %v7670 = vpop.f32.mrb[0].mxu0
      %v7671 = vadd.f32 %v7459, %v7670
      %v7672 = vpop.f32.mrb[0].mxu0
      %v7673 = vpop.f32.mrb[0].mxu0
      %v7674 = vadd.f32 %v7462, %v7673
      %v7675 = vpop.f32.mrb[0].mxu0
      %7676 = vmatprep.mubr.bf16.mxu0 0
      %7677 = vmatmul.mubr.bf16.gmra.mrb[0].mxu0 %v7519
      %v7678 = vpop.f32.mrb[0].mxu0
      %v7679 = vadd.f32 %v7467, %v7678
      %v7680 = vpop.f32.mrb[0].mxu0
      %v7681 = vpop.f32.mrb[0].mxu0
      %v7682 = vadd.f32 %v7470, %v7681
      %v7683 = vpop.f32.mrb[0].mxu0
      %7684 = vdwg.mxu0
      %v7685 = vpack.c.bf16 %v7162, %v7161
      %v7686 = vpack.c.bf16 %v7164, %v7163
      %v7687 = vpack.c.bf16 %v7166, %v7165
      %v7688 = vpack.c.bf16 %v7168, %v7167
      %v7689 = vpack.c.bf16 %v7170, %v7169
      %v7690 = vpack.c.bf16 %v7172, %v7171
      %v7691 = vpack.c.bf16 %v7174, %v7173
      %v7692 = vpack.c.bf16 %v7176, %v7175
      %v7693 = vpack.c.bf16 %v7178, %v7177
      %v7694 = vpack.c.bf16 %v7180, %v7179
      %v7695 = vpack.c.bf16 %v7182, %v7181
      %v7696 = vpack.c.bf16 %v7184, %v7183
      %v7697 = vpack.c.bf16 %v7186, %v7185
      %v7698 = vpack.c.bf16 %v7188, %v7187
      %v7699 = vpack.c.bf16 %v7190, %v7189
      %v7700 = vpack.c.bf16 %v7192, %v7191
      %s7701 = scalar_lea.vmem %s9, 8
      %v7702 = vld [vmem:[%s7701] sm:$0xf]
      %v7704 = vsel %vm2903, %v7685, 0
      %v7707 = vsel %vm2903, %v7686, 0
      %v7710 = vsel %vm2903, %v7687, 0
      %v7713 = vsel %vm2903, %v7688, 0
      %v7716 = vsel %vm2903, %v7689, 0
      %v7719 = vsel %vm2903, %v7690, 0
      %v7722 = vsel %vm2903, %v7691, 0
      %v7725 = vsel %vm2903, %v7692, 0
      %v7728 = vsel %vm2903, %v7693, 0
      %v7731 = vsel %vm2903, %v7694, 0
      %v7734 = vsel %vm2903, %v7695, 0
      %v7737 = vsel %vm2903, %v7696, 0
      %v7740 = vsel %vm2903, %v7697, 0
      %v7743 = vsel %vm2903, %v7698, 0
      %v7746 = vsel %vm2903, %v7699, 0
      %v7749 = vsel %vm2903, %v7700, 0
      %v7752 = vsel %vm7308, %v7702, 0
      %7754 = vmatprep.subr.bf16.mxu0 0
      %7755 = vmatpush1.bf16.msra.mxu0 %v7752
      %7756 = vmatprep.subr.bf16.mxu0 0
      %7757 = vmatpush1.bf16.msra.mxu0 0
      %7758 = vmatprep.subr.bf16.mxu0 0
      %7759 = vmatpush1.bf16.msra.mxu0 0
      %7760 = vmatprep.subr.bf16.mxu0 0
      %7761 = vmatpush1.bf16.msra.mxu0 0
      %7762 = vmatprep.subr.bf16.mxu0 0
      %7763 = vmatpush1.bf16.msra.mxu0 0
      %7764 = vmatprep.subr.bf16.mxu0 0
      %7765 = vmatpush1.bf16.msra.mxu0 0
      %7766 = vmatprep.subr.bf16.mxu0 0
      %7767 = vmatpush1.bf16.msra.mxu0 0
      %7768 = vmatprep.subr.bf16.mxu0 0
      %7769 = vmatpush1.bf16.msra.mxu0 0
      %7770 = vmatprep.subr.bf16.mxu0 0
      %7771 = vmatpush1.bf16.msra.mxu0 0
      %7772 = vmatprep.subr.bf16.mxu0 0
      %7773 = vmatpush1.bf16.msra.mxu0 0
      %7774 = vmatprep.subr.bf16.mxu0 0
      %7775 = vmatpush1.bf16.msra.mxu0 0
      %7776 = vmatprep.subr.bf16.mxu0 0
      %7777 = vmatpush1.bf16.msra.mxu0 0
      %7778 = vmatprep.subr.bf16.mxu0 0
      %7779 = vmatpush1.bf16.msra.mxu0 0
      %7780 = vmatprep.subr.bf16.mxu0 0
      %7781 = vmatpush1.bf16.msra.mxu0 0
      %7782 = vmatprep.subr.bf16.mxu0 0
      %7783 = vmatpush1.bf16.msra.mxu0 0
      %7784 = vmatprep.subr.bf16.mxu0 0
      %7785 = vmatpush1.bf16.msra.mxu0 0
      %7786 = vmatprep.mubr.bf16.mxu0 0
      %7787 = vmatmul.mubr.bf16.gmra.mrb[0].mxu0 %v7704
      %v7788 = vpop.f32.mrb[0].mxu0
      %v7789 = vadd.f32 0.0, %v7788
      %v7790 = vpop.f32.mrb[0].mxu0
      %v7791 = vpop.f32.mrb[0].mxu0
      %v7792 = vadd.f32 0.0, %v7791
      %v7793 = vpop.f32.mrb[0].mxu0
      %7794 = vmatprep.mubr.bf16.mxu0 0
      %7795 = vmatmul.mubr.bf16.gmra.mrb[0].mxu0 %v7707
      %v7796 = vpop.f32.mrb[0].mxu0
      %v7797 = vadd.f32 0.0, %v7796
      %v7798 = vpop.f32.mrb[0].mxu0
      %v7799 = vpop.f32.mrb[0].mxu0
      %v7800 = vadd.f32 0.0, %v7799
      %v7801 = vpop.f32.mrb[0].mxu0
      %7802 = vmatprep.mubr.bf16.mxu0 0
      %7803 = vmatmul.mubr.bf16.gmra.mrb[0].mxu0 %v7710
      %v7804 = vpop.f32.mrb[0].mxu0
      %v7805 = vadd.f32 0.0, %v7804
      %v7806 = vpop.f32.mrb[0].mxu0
      %v7807 = vpop.f32.mrb[0].mxu0
      %v7808 = vadd.f32 0.0, %v7807
      %v7809 = vpop.f32.mrb[0].mxu0
      %7810 = vmatprep.mubr.bf16.mxu0 0
      %7811 = vmatmul.mubr.bf16.gmra.mrb[0].mxu0 %v7713
      %v7812 = vpop.f32.mrb[0].mxu0
      %v7813 = vadd.f32 0.0, %v7812
      %v7814 = vpop.f32.mrb[0].mxu0
      %v7815 = vpop.f32.mrb[0].mxu0
      %v7816 = vadd.f32 0.0, %v7815
      %v7817 = vpop.f32.mrb[0].mxu0
      %7818 = vmatprep.mubr.bf16.mxu0 0
      %7819 = vmatmul.mubr.bf16.gmra.mrb[0].mxu0 %v7716
      %v7820 = vpop.f32.mrb[0].mxu0
      %v7821 = vadd.f32 0.0, %v7820
      %v7822 = vpop.f32.mrb[0].mxu0
      %v7823 = vpop.f32.mrb[0].mxu0
      %v7824 = vadd.f32 0.0, %v7823
      %v7825 = vpop.f32.mrb[0].mxu0
      %7826 = vmatprep.mubr.bf16.mxu0 0
      %7827 = vmatmul.mubr.bf16.gmra.mrb[0].mxu0 %v7719
      %v7828 = vpop.f32.mrb[0].mxu0
      %v7829 = vadd.f32 0.0, %v7828
      %v7830 = vpop.f32.mrb[0].mxu0
      %v7831 = vpop.f32.mrb[0].mxu0
      %v7832 = vadd.f32 0.0, %v7831
      %v7833 = vpop.f32.mrb[0].mxu0
      %7834 = vmatprep.mubr.bf16.mxu0 0
      %7835 = vmatmul.mubr.bf16.gmra.mrb[0].mxu0 %v7722
      %v7836 = vpop.f32.mrb[0].mxu0
      %v7837 = vadd.f32 0.0, %v7836
      %v7838 = vpop.f32.mrb[0].mxu0
      %v7839 = vpop.f32.mrb[0].mxu0
      %v7840 = vadd.f32 0.0, %v7839
      %v7841 = vpop.f32.mrb[0].mxu0
      %7842 = vmatprep.mubr.bf16.mxu0 0
      %7843 = vmatmul.mubr.bf16.gmra.mrb[0].mxu0 %v7725
      %v7844 = vpop.f32.mrb[0].mxu0
      %v7845 = vadd.f32 0.0, %v7844
      %v7846 = vpop.f32.mrb[0].mxu0
      %v7847 = vpop.f32.mrb[0].mxu0
      %v7848 = vadd.f32 0.0, %v7847
      %v7849 = vpop.f32.mrb[0].mxu0
      %7850 = vmatprep.mubr.bf16.mxu0 0
      %7851 = vmatmul.mubr.bf16.gmra.mrb[0].mxu0 %v7728
      %v7852 = vpop.f32.mrb[0].mxu0
      %v7853 = vadd.f32 0.0, %v7852
      %v7854 = vpop.f32.mrb[0].mxu0
      %v7855 = vpop.f32.mrb[0].mxu0
      %v7856 = vadd.f32 0.0, %v7855
      %v7857 = vpop.f32.mrb[0].mxu0
      %7858 = vmatprep.mubr.bf16.mxu0 0
      %7859 = vmatmul.mubr.bf16.gmra.mrb[0].mxu0 %v7731
      %v7860 = vpop.f32.mrb[0].mxu0
      %v7861 = vadd.f32 0.0, %v7860
      %v7862 = vpop.f32.mrb[0].mxu0
      %v7863 = vpop.f32.mrb[0].mxu0
      %v7864 = vadd.f32 0.0, %v7863
      %v7865 = vpop.f32.mrb[0].mxu0
      %7866 = vmatprep.mubr.bf16.mxu0 0
      %7867 = vmatmul.mubr.bf16.gmra.mrb[0].mxu0 %v7734
      %v7868 = vpop.f32.mrb[0].mxu0
      %v7869 = vadd.f32 0.0, %v7868
      %v7870 = vpop.f32.mrb[0].mxu0
      %v7871 = vpop.f32.mrb[0].mxu0
      %v7872 = vadd.f32 0.0, %v7871
      %v7873 = vpop.f32.mrb[0].mxu0
      %7874 = vmatprep.mubr.bf16.mxu0 0
      %7875 = vmatmul.mubr.bf16.gmra.mrb[0].mxu0 %v7737
      %v7876 = vpop.f32.mrb[0].mxu0
      %v7877 = vadd.f32 0.0, %v7876
      %v7878 = vpop.f32.mrb[0].mxu0
      %v7879 = vpop.f32.mrb[0].mxu0
      %v7880 = vadd.f32 0.0, %v7879
      %v7881 = vpop.f32.mrb[0].mxu0
      %7882 = vmatprep.mubr.bf16.mxu0 0
      %7883 = vmatmul.mubr.bf16.gmra.mrb[0].mxu0 %v7740
      %v7884 = vpop.f32.mrb[0].mxu0
      %v7885 = vadd.f32 0.0, %v7884
      %v7886 = vpop.f32.mrb[0].mxu0
      %v7887 = vpop.f32.mrb[0].mxu0
      %v7888 = vadd.f32 0.0, %v7887
      %v7889 = vpop.f32.mrb[0].mxu0
      %7890 = vmatprep.mubr.bf16.mxu0 0
      %7891 = vmatmul.mubr.bf16.gmra.mrb[0].mxu0 %v7743
      %v7892 = vpop.f32.mrb[0].mxu0
      %v7893 = vadd.f32 0.0, %v7892
      %v7894 = vpop.f32.mrb[0].mxu0
      %v7895 = vpop.f32.mrb[0].mxu0
      %v7896 = vadd.f32 0.0, %v7895
      %v7897 = vpop.f32.mrb[0].mxu0
      %7898 = vmatprep.mubr.bf16.mxu0 0
      %7899 = vmatmul.mubr.bf16.gmra.mrb[0].mxu0 %v7746
      %v7900 = vpop.f32.mrb[0].mxu0
      %v7901 = vadd.f32 0.0, %v7900
      %v7902 = vpop.f32.mrb[0].mxu0
      %v7903 = vpop.f32.mrb[0].mxu0
      %v7904 = vadd.f32 0.0, %v7903
      %v7905 = vpop.f32.mrb[0].mxu0
      %7906 = vmatprep.mubr.bf16.mxu0 0
      %7907 = vmatmul.mubr.bf16.gmra.mrb[0].mxu0 %v7749
      %v7908 = vpop.f32.mrb[0].mxu0
      %v7909 = vadd.f32 0.0, %v7908
      %v7910 = vpop.f32.mrb[0].mxu0
      %v7911 = vpop.f32.mrb[0].mxu0
      %v7912 = vadd.f32 0.0, %v7911
      %v7913 = vpop.f32.mrb[0].mxu0
      %7914 = vdwg.mxu0
      %v7915 = vadd.f32 %v7559, %v7789
      %v7916 = vadd.f32 %v7562, %v7792
      %v7917 = vadd.f32 %v7567, %v7797
      %v7918 = vadd.f32 %v7570, %v7800
      %v7919 = vadd.f32 %v7575, %v7805
      %v7920 = vadd.f32 %v7578, %v7808
      %v7921 = vadd.f32 %v7583, %v7813
      %v7922 = vadd.f32 %v7586, %v7816
      %v7923 = vadd.f32 %v7591, %v7821
      %v7924 = vadd.f32 %v7594, %v7824
      %v7925 = vadd.f32 %v7599, %v7829
      %v7926 = vadd.f32 %v7602, %v7832
      %v7927 = vadd.f32 %v7607, %v7837
      %v7928 = vadd.f32 %v7610, %v7840
      %v7929 = vadd.f32 %v7615, %v7845
      %v7930 = vadd.f32 %v7618, %v7848
      %v7931 = vadd.f32 %v7623, %v7853
      %v7932 = vadd.f32 %v7626, %v7856
      %v7933 = vadd.f32 %v7631, %v7861
      %v7934 = vadd.f32 %v7634, %v7864
      %v7935 = vadd.f32 %v7639, %v7869
      %v7936 = vadd.f32 %v7642, %v7872
      %v7937 = vadd.f32 %v7647, %v7877
      %v7938 = vadd.f32 %v7650, %v7880
      %v7939 = vadd.f32 %v7655, %v7885
      %v7940 = vadd.f32 %v7658, %v7888
      %v7941 = vadd.f32 %v7663, %v7893
      %v7942 = vadd.f32 %v7666, %v7896
      %v7943 = vadd.f32 %v7671, %v7901
      %v7944 = vadd.f32 %v7674, %v7904
      %v7945 = vadd.f32 %v7679, %v7909
      %v7946 = vadd.f32 %v7682, %v7912
      %v7947 = vpack.c.bf16 %v7194, %v7193
      %v7948 = vpack.c.bf16 %v7196, %v7195
      %v7949 = vpack.c.bf16 %v7198, %v7197
      %v7950 = vpack.c.bf16 %v7200, %v7199
      %v7951 = vpack.c.bf16 %v7202, %v7201
      %v7952 = vpack.c.bf16 %v7204, %v7203
      %v7953 = vpack.c.bf16 %v7206, %v7205
      %v7954 = vpack.c.bf16 %v7208, %v7207
      %v7955 = vpack.c.bf16 %v7210, %v7209
      %v7956 = vpack.c.bf16 %v7212, %v7211
      %v7957 = vpack.c.bf16 %v7214, %v7213
      %v7958 = vpack.c.bf16 %v7216, %v7215
      %v7959 = vpack.c.bf16 %v7218, %v7217
      %v7960 = vpack.c.bf16 %v7220, %v7219
      %v7961 = vpack.c.bf16 %v7222, %v7221
      %v7962 = vpack.c.bf16 %v7224, %v7223
      %s7963 = scalar_lea.vmem %s9, 12
      %v7964 = vld [vmem:[%s7963] sm:$0xf]
      %v7966 = vsel %vm2903, %v7947, 0
      %v7969 = vsel %vm2903, %v7948, 0
      %v7972 = vsel %vm2903, %v7949, 0
      %v7975 = vsel %vm2903, %v7950, 0
      %v7978 = vsel %vm2903, %v7951, 0
      %v7981 = vsel %vm2903, %v7952, 0
      %v7984 = vsel %vm2903, %v7953, 0
      %v7987 = vsel %vm2903, %v7954, 0
      %v7990 = vsel %vm2903, %v7955, 0
      %v7993 = vsel %vm2903, %v7956, 0
      %v7996 = vsel %vm2903, %v7957, 0
      %v7999 = vsel %vm2903, %v7958, 0
      %v8002 = vsel %vm2903, %v7959, 0
      %v8005 = vsel %vm2903, %v7960, 0
      %v8008 = vsel %vm2903, %v7961, 0
      %v8011 = vsel %vm2903, %v7962, 0
      %v8014 = vsel %vm7308, %v7964, 0
      %8016 = vmatprep.subr.bf16.mxu0 0
      %8017 = vmatpush1.bf16.msra.mxu0 %v8014
      %8018 = vmatprep.subr.bf16.mxu0 0
      %8019 = vmatpush1.bf16.msra.mxu0 0
      %8020 = vmatprep.subr.bf16.mxu0 0
      %8021 = vmatpush1.bf16.msra.mxu0 0
      %8022 = vmatprep.subr.bf16.mxu0 0
      %8023 = vmatpush1.bf16.msra.mxu0 0
      %8024 = vmatprep.subr.bf16.mxu0 0
      %8025 = vmatpush1.bf16.msra.mxu0 0
      %8026 = vmatprep.subr.bf16.mxu0 0
      %8027 = vmatpush1.bf16.msra.mxu0 0
      %8028 = vmatprep.subr.bf16.mxu0 0
      %8029 = vmatpush1.bf16.msra.mxu0 0
      %8030 = vmatprep.subr.bf16.mxu0 0
      %8031 = vmatpush1.bf16.msra.mxu0 0
      %8032 = vmatprep.subr.bf16.mxu0 0
      %8033 = vmatpush1.bf16.msra.mxu0 0
      %8034 = vmatprep.subr.bf16.mxu0 0
      %8035 = vmatpush1.bf16.msra.mxu0 0
      %8036 = vmatprep.subr.bf16.mxu0 0
      %8037 = vmatpush1.bf16.msra.mxu0 0
      %8038 = vmatprep.subr.bf16.mxu0 0
      %8039 = vmatpush1.bf16.msra.mxu0 0
      %8040 = vmatprep.subr.bf16.mxu0 0
      %8041 = vmatpush1.bf16.msra.mxu0 0
      %8042 = vmatprep.subr.bf16.mxu0 0
      %8043 = vmatpush1.bf16.msra.mxu0 0
      %8044 = vmatprep.subr.bf16.mxu0 0
      %8045 = vmatpush1.bf16.msra.mxu0 0
      %8046 = vmatprep.subr.bf16.mxu0 0
      %8047 = vmatpush1.bf16.msra.mxu0 0
      %8048 = vmatprep.mubr.bf16.mxu0 0
      %8049 = vmatmul.mubr.bf16.gmra.mrb[0].mxu0 %v7966
      %v8050 = vpop.f32.mrb[0].mxu0
      %v8051 = vadd.f32 0.0, %v8050
      %v8052 = vpop.f32.mrb[0].mxu0
      %v8053 = vpop.f32.mrb[0].mxu0
      %v8054 = vadd.f32 0.0, %v8053
      %v8055 = vpop.f32.mrb[0].mxu0
      %8056 = vmatprep.mubr.bf16.mxu0 0
      %8057 = vmatmul.mubr.bf16.gmra.mrb[0].mxu0 %v7969
      %v8058 = vpop.f32.mrb[0].mxu0
      %v8059 = vadd.f32 0.0, %v8058
      %v8060 = vpop.f32.mrb[0].mxu0
      %v8061 = vpop.f32.mrb[0].mxu0
      %v8062 = vadd.f32 0.0, %v8061
      %v8063 = vpop.f32.mrb[0].mxu0
      %8064 = vmatprep.mubr.bf16.mxu0 0
      %8065 = vmatmul.mubr.bf16.gmra.mrb[0].mxu0 %v7972
      %v8066 = vpop.f32.mrb[0].mxu0
      %v8067 = vadd.f32 0.0, %v8066
      %v8068 = vpop.f32.mrb[0].mxu0
      %v8069 = vpop.f32.mrb[0].mxu0
      %v8070 = vadd.f32 0.0, %v8069
      %v8071 = vpop.f32.mrb[0].mxu0
      %8072 = vmatprep.mubr.bf16.mxu0 0
      %8073 = vmatmul.mubr.bf16.gmra.mrb[0].mxu0 %v7975
      %v8074 = vpop.f32.mrb[0].mxu0
      %v8075 = vadd.f32 0.0, %v8074
      %v8076 = vpop.f32.mrb[0].mxu0
      %v8077 = vpop.f32.mrb[0].mxu0
      %v8078 = vadd.f32 0.0, %v8077
      %v8079 = vpop.f32.mrb[0].mxu0
      %8080 = vmatprep.mubr.bf16.mxu0 0
      %8081 = vmatmul.mubr.bf16.gmra.mrb[0].mxu0 %v7978
      %v8082 = vpop.f32.mrb[0].mxu0
      %v8083 = vadd.f32 0.0, %v8082
      %v8084 = vpop.f32.mrb[0].mxu0
      %v8085 = vpop.f32.mrb[0].mxu0
      %v8086 = vadd.f32 0.0, %v8085
      %v8087 = vpop.f32.mrb[0].mxu0
      %8088 = vmatprep.mubr.bf16.mxu0 0
      %8089 = vmatmul.mubr.bf16.gmra.mrb[0].mxu0 %v7981
      %v8090 = vpop.f32.mrb[0].mxu0
      %v8091 = vadd.f32 0.0, %v8090
      %v8092 = vpop.f32.mrb[0].mxu0
      %v8093 = vpop.f32.mrb[0].mxu0
      %v8094 = vadd.f32 0.0, %v8093
      %v8095 = vpop.f32.mrb[0].mxu0
      %8096 = vmatprep.mubr.bf16.mxu0 0
      %8097 = vmatmul.mubr.bf16.gmra.mrb[0].mxu0 %v7984
      %v8098 = vpop.f32.mrb[0].mxu0
      %v8099 = vadd.f32 0.0, %v8098
      %v8100 = vpop.f32.mrb[0].mxu0
      %v8101 = vpop.f32.mrb[0].mxu0
      %v8102 = vadd.f32 0.0, %v8101
      %v8103 = vpop.f32.mrb[0].mxu0
      %8104 = vmatprep.mubr.bf16.mxu0 0
      %8105 = vmatmul.mubr.bf16.gmra.mrb[0].mxu0 %v7987
      %v8106 = vpop.f32.mrb[0].mxu0
      %v8107 = vadd.f32 0.0, %v8106
      %v8108 = vpop.f32.mrb[0].mxu0
      %v8109 = vpop.f32.mrb[0].mxu0
      %v8110 = vadd.f32 0.0, %v8109
      %v8111 = vpop.f32.mrb[0].mxu0
      %8112 = vmatprep.mubr.bf16.mxu0 0
      %8113 = vmatmul.mubr.bf16.gmra.mrb[0].mxu0 %v7990
      %v8114 = vpop.f32.mrb[0].mxu0
      %v8115 = vadd.f32 0.0, %v8114
      %v8116 = vpop.f32.mrb[0].mxu0
      %v8117 = vpop.f32.mrb[0].mxu0
      %v8118 = vadd.f32 0.0, %v8117
      %v8119 = vpop.f32.mrb[0].mxu0
      %8120 = vmatprep.mubr.bf16.mxu0 0
      %8121 = vmatmul.mubr.bf16.gmra.mrb[0].mxu0 %v7993
      %v8122 = vpop.f32.mrb[0].mxu0
      %v8123 = vadd.f32 0.0, %v8122
      %v8124 = vpop.f32.mrb[0].mxu0
      %v8125 = vpop.f32.mrb[0].mxu0
      %v8126 = vadd.f32 0.0, %v8125
      %v8127 = vpop.f32.mrb[0].mxu0
      %8128 = vmatprep.mubr.bf16.mxu0 0
      %8129 = vmatmul.mubr.bf16.gmra.mrb[0].mxu0 %v7996
      %v8130 = vpop.f32.mrb[0].mxu0
      %v8131 = vadd.f32 0.0, %v8130
      %v8132 = vpop.f32.mrb[0].mxu0
      %v8133 = vpop.f32.mrb[0].mxu0
      %v8134 = vadd.f32 0.0, %v8133
      %v8135 = vpop.f32.mrb[0].mxu0
      %8136 = vmatprep.mubr.bf16.mxu0 0
      %8137 = vmatmul.mubr.bf16.gmra.mrb[0].mxu0 %v7999
      %v8138 = vpop.f32.mrb[0].mxu0
      %v8139 = vadd.f32 0.0, %v8138
      %v8140 = vpop.f32.mrb[0].mxu0
      %v8141 = vpop.f32.mrb[0].mxu0
      %v8142 = vadd.f32 0.0, %v8141
      %v8143 = vpop.f32.mrb[0].mxu0
      %8144 = vmatprep.mubr.bf16.mxu0 0
      %8145 = vmatmul.mubr.bf16.gmra.mrb[0].mxu0 %v8002
      %v8146 = vpop.f32.mrb[0].mxu0
      %v8147 = vadd.f32 0.0, %v8146
      %v8148 = vpop.f32.mrb[0].mxu0
      %v8149 = vpop.f32.mrb[0].mxu0
      %v8150 = vadd.f32 0.0, %v8149
      %v8151 = vpop.f32.mrb[0].mxu0
      %8152 = vmatprep.mubr.bf16.mxu0 0
      %8153 = vmatmul.mubr.bf16.gmra.mrb[0].mxu0 %v8005
      %v8154 = vpop.f32.mrb[0].mxu0
      %v8155 = vadd.f32 0.0, %v8154
      %v8156 = vpop.f32.mrb[0].mxu0
      %v8157 = vpop.f32.mrb[0].mxu0
      %v8158 = vadd.f32 0.0, %v8157
      %v8159 = vpop.f32.mrb[0].mxu0
      %8160 = vmatprep.mubr.bf16.mxu0 0
      %8161 = vmatmul.mubr.bf16.gmra.mrb[0].mxu0 %v8008
      %v8162 = vpop.f32.mrb[0].mxu0
      %v8163 = vadd.f32 0.0, %v8162
      %v8164 = vpop.f32.mrb[0].mxu0
      %v8165 = vpop.f32.mrb[0].mxu0
      %v8166 = vadd.f32 0.0, %v8165
      %v8167 = vpop.f32.mrb[0].mxu0
      %8168 = vmatprep.mubr.bf16.mxu0 0
      %8169 = vmatmul.mubr.bf16.gmra.mrb[0].mxu0 %v8011
      %v8170 = vpop.f32.mrb[0].mxu0
      %v8171 = vadd.f32 0.0, %v8170
      %v8172 = vpop.f32.mrb[0].mxu0
      %v8173 = vpop.f32.mrb[0].mxu0
      %v8174 = vadd.f32 0.0, %v8173
      %v8175 = vpop.f32.mrb[0].mxu0
      %8176 = vdwg.mxu0
      %v8177 = vadd.f32 %v7915, %v8051
      %v8178 = vadd.f32 %v7916, %v8054
      %v8179 = vadd.f32 %v7917, %v8059
      %v8180 = vadd.f32 %v7918, %v8062
      %v8181 = vadd.f32 %v7919, %v8067
      %v8182 = vadd.f32 %v7920, %v8070
      %v8183 = vadd.f32 %v7921, %v8075
      %v8184 = vadd.f32 %v7922, %v8078
      %v8185 = vadd.f32 %v7923, %v8083
      %v8186 = vadd.f32 %v7924, %v8086
      %v8187 = vadd.f32 %v7925, %v8091
      %v8188 = vadd.f32 %v7926, %v8094
      %v8189 = vadd.f32 %v7927, %v8099
      %v8190 = vadd.f32 %v7928, %v8102
      %v8191 = vadd.f32 %v7929, %v8107
      %v8192 = vadd.f32 %v7930, %v8110
      %v8193 = vadd.f32 %v7931, %v8115
      %v8194 = vadd.f32 %v7932, %v8118
      %v8195 = vadd.f32 %v7933, %v8123
      %v8196 = vadd.f32 %v7934, %v8126
      %v8197 = vadd.f32 %v7935, %v8131
      %v8198 = vadd.f32 %v7936, %v8134
      %v8199 = vadd.f32 %v7937, %v8139
      %v8200 = vadd.f32 %v7938, %v8142
      %v8201 = vadd.f32 %v7939, %v8147
      %v8202 = vadd.f32 %v7940, %v8150
      %v8203 = vadd.f32 %v7941, %v8155
      %v8204 = vadd.f32 %v7942, %v8158
      %v8205 = vadd.f32 %v7943, %v8163
      %v8206 = vadd.f32 %v7944, %v8166
      %v8207 = vadd.f32 %v7945, %v8171
      %v8208 = vadd.f32 %v7946, %v8174
      %v8209 = vld [vmem:[%s10] sm:$0x1]
      %v8211 = vlaneseq
      %v8212 = vshrl.u32 %v8211, 7
      %v8213 = vsub.s32 0, %v8212
      %v8214 = vrot.slane %v8209, %v8213
      %v8216 = vadd.f32 %v8177, %v8214
      %v8217 = vadd.f32 %v8178, %v8214
      %v8218 = vadd.f32 %v8179, %v8214
      %v8219 = vadd.f32 %v8180, %v8214
      %v8220 = vadd.f32 %v8181, %v8214
      %v8221 = vadd.f32 %v8182, %v8214
      %v8222 = vadd.f32 %v8183, %v8214
      %v8223 = vadd.f32 %v8184, %v8214
      %v8224 = vadd.f32 %v8185, %v8214
      %v8225 = vadd.f32 %v8186, %v8214
      %v8226 = vadd.f32 %v8187, %v8214
      %v8227 = vadd.f32 %v8188, %v8214
      %v8228 = vadd.f32 %v8189, %v8214
      %v8229 = vadd.f32 %v8190, %v8214
      %v8230 = vadd.f32 %v8191, %v8214
      %v8231 = vadd.f32 %v8192, %v8214
      %v8232 = vadd.f32 %v8193, %v8214
      %v8233 = vadd.f32 %v8194, %v8214
      %v8234 = vadd.f32 %v8195, %v8214
      %v8235 = vadd.f32 %v8196, %v8214
      %v8236 = vadd.f32 %v8197, %v8214
      %v8237 = vadd.f32 %v8198, %v8214
      %v8238 = vadd.f32 %v8199, %v8214
      %v8239 = vadd.f32 %v8200, %v8214
      %v8240 = vadd.f32 %v8201, %v8214
      %v8241 = vadd.f32 %v8202, %v8214
      %v8242 = vadd.f32 %v8203, %v8214
      %v8243 = vadd.f32 %v8204, %v8214
      %v8244 = vadd.f32 %v8205, %v8214
      %v8245 = vadd.f32 %v8206, %v8214
      %v8246 = vadd.f32 %v8207, %v8214
      %v8247 = vadd.f32 %v8208, %v8214
      %8248 = vst.msk [vmem:[%s386] sm:$0xff] %vm459, %v8216
      %8249 = vst.msk [vmem:[%s386 + $0x8] sm:$0xff] %vm459, %v8217
      %8250 = vst.msk [vmem:[%s386 + $0x10] sm:$0xff] %vm459, %v8218
      %8251 = vst.msk [vmem:[%s386 + $0x18] sm:$0xff] %vm459, %v8219
      %8252 = vst.msk [vmem:[%s386 + $0x20] sm:$0xff] %vm459, %v8220
      %8253 = vst.msk [vmem:[%s386 + $0x28] sm:$0xff] %vm459, %v8221
      %8254 = vst.msk [vmem:[%s386 + $0x30] sm:$0xff] %vm459, %v8222
      %8255 = vst.msk [vmem:[%s386 + $0x38] sm:$0xff] %vm459, %v8223
      %8256 = vst.msk [vmem:[%s386 + $0x40] sm:$0xff] %vm459, %v8224
      %8257 = vst.msk [vmem:[%s386 + $0x48] sm:$0xff] %vm459, %v8225
      %8258 = vst.msk [vmem:[%s386 + $0x50] sm:$0xff] %vm459, %v8226
      %8259 = vst.msk [vmem:[%s386 + $0x58] sm:$0xff] %vm459, %v8227
      %8260 = vst.msk [vmem:[%s386 + $0x60] sm:$0xff] %vm459, %v8228
      %8261 = vst.msk [vmem:[%s386 + $0x68] sm:$0xff] %vm459, %v8229
      %8262 = vst.msk [vmem:[%s386 + $0x70] sm:$0xff] %vm459, %v8230
      %8263 = vst.msk [vmem:[%s386 + $0x78] sm:$0xff] %vm459, %v8231
      %8264 = vst.msk [vmem:[%s386 + $0x80] sm:$0xff] %vm459, %v8232
      %8265 = vst.msk [vmem:[%s386 + $0x88] sm:$0xff] %vm459, %v8233
      %8266 = vst.msk [vmem:[%s386 + $0x90] sm:$0xff] %vm459, %v8234
      %8267 = vst.msk [vmem:[%s386 + $0x98] sm:$0xff] %vm459, %v8235
      %8268 = vst.msk [vmem:[%s386 + $0xa0] sm:$0xff] %vm459, %v8236
      %8269 = vst.msk [vmem:[%s386 + $0xa8] sm:$0xff] %vm459, %v8237
      %8270 = vst.msk [vmem:[%s386 + $0xb0] sm:$0xff] %vm459, %v8238
      %8271 = vst.msk [vmem:[%s386 + $0xb8] sm:$0xff] %vm459, %v8239
      %8272 = vst.msk [vmem:[%s386 + $0xc0] sm:$0xff] %vm459, %v8240
      %8273 = vst.msk [vmem:[%s386 + $0xc8] sm:$0xff] %vm459, %v8241
      %8274 = vst.msk [vmem:[%s386 + $0xd0] sm:$0xff] %vm459, %v8242
      %8275 = vst.msk [vmem:[%s386 + $0xd8] sm:$0xff] %vm459, %v8243
      %8276 = vst.msk [vmem:[%s386 + $0xe0] sm:$0xff] %vm459, %v8244
      %8277 = vst.msk [vmem:[%s386 + $0xe8] sm:$0xff] %vm459, %v8245
      %8278 = vst.msk [vmem:[%s386 + $0xf0] sm:$0xff] %vm459, %v8246
      %8279 = vst.msk [vmem:[%s386 + $0xf8] sm:$0xff] %vm459, %v8247
      %p8280 = scmp.lt.s32.totalorder %s22, 1
      %s8281 = scalar_select %p8280, %s22, 1
      %s8282 = smul.addr %s8281, 32
      %s8283 = smul.addr %s8282, 8
      %s8284 = scalar_lea.vmem %s11, %s8283
      // Predicated region
      $region65: #{tpu_custom_call.1} parent=63 // pred_check
        %p8285 = pneg %p276
      $region66: #{tpu_custom_call.1} parent=63 // pred_check_branch
        %8287 = sbr.rel (%p8285) target = $region68
      $region67: #{tpu_custom_call.1} parent=63 // pred_region
        _
      $region68: #{tpu_custom_call.1} parent=63 // pred_fallthru
        _
    $region64: #{tpu_custom_call.1} parent=5 // pred_fallthru
      _
    %p8288 = scmp.le.s32.totalorder 2, %s17
    // Predicated region
    $region69: #{tpu_custom_call.1} parent=5 // pred_check
      %p8289 = pneg %p8288
    $region70: #{tpu_custom_call.1} parent=5 // pred_check_branch
      %8291 = sbr.rel (%p8289) target = $region72
    $region71: #{tpu_custom_call.1} parent=5 // pred_region
      %s8292 = ssub.s32 %s17, 2
      // Predicated region
      $region73: #{tpu_custom_call.1} parent=71 // pred_check
        %p8293 = pneg %p282
      $region74: #{tpu_custom_call.1} parent=71 // pred_check_branch
        %8295 = sbr.rel (%p8293) target = $region76
      $region75: #{tpu_custom_call.1} parent=71 // pred_region
        %p8296 = scmp.lt.s32.totalorder %s23, 1
        %s8297 = scalar_select %p8296, %s23, 1
        %s8298 = smul.addr %s8297, 32
        %s8299 = smul.addr %s8298, 8
        %s8300 = scalar_lea.vmem %s11, %s8299
      $region76: #{tpu_custom_call.1} parent=71 // pred_fallthru
        _
    $region72: #{tpu_custom_call.1} parent=5 // pred_fallthru
      _
  $region6: #{tpu_custom_call.1} parent=0 // loop_footer
    %s21 = sadd.s32 1, %s17
  $region7: #{tpu_custom_call.1} parent=0 // loop_footer_branch
    %16 = sbr.rel target = $region3
  $region8: #{tpu_custom_call.1} parent=0 // loop_exit
    _

</llo_original>
